<compile_context>
chip_gen: v7x
topology: tpu7x:2x2x1
jax: 0.10.0
libtpu: 0.0.40
codegen_flags: <defaults>
</compile_context>

<pallas_src>
import jax
import jax.numpy as jnp
import numpy as np
from jax import lax
from jax.experimental import pallas as pl
from jax.experimental.pallas import tpu as pltpu

J = 15  # number of body joints (fixed by link_mat in the reference module)


def _link_mat_np(j_num, bone_link, double_link):
    a = np.eye(j_num, dtype=np.float32)
    a[bone_link[:, 0], bone_link[:, 1]] = 0.5
    a[bone_link[:, 1], bone_link[:, 0]] = 0.5
    a[double_link[:, 0], double_link[:, 1]] = 0.1
    a[double_link[:, 1], double_link[:, 0]] = 0.1
    return a


def make_link_mat():
    bone_link = np.array([[1, 0], [2, 1], [1, 3], [1, 4], [3, 5], [4, 6],
                          [5, 7], [6, 8], [2, 9], [2, 10], [9, 11], [10, 12],
                          [11, 13], [12, 14]])
    double_link = np.array([[0, 2], [0, 3], [0, 4], [1, 5], [1, 6], [1, 9],
                            [1, 10], [2, 3], [2, 4], [2, 11], [2, 12], [3, 4],
                            [3, 7], [9, 10], [9, 13], [10, 14]])
    return jnp.asarray(_link_mat_np(J, bone_link, double_link))


def _ln_relu(v, g, b, eps=1e-12):
    """BertLayerNorm (TF style, eps inside the sqrt) fused with the ReLU that
    always follows it in this block.

    Row mean and mean-of-squares are produced by one constant averaging matmul
    each (MXU) instead of cross-lane XLU reductions; variance is the one-pass
    E[x^2] - mean^2 form (clamped at 0); rsqrt goes to the EUP slot.
    """
    d = v.shape[-1]
    avg = jnp.full((d, d), 1.0 / d, dtype=v.dtype)
    u = jnp.dot(v, avg, preferred_element_type=jnp.float32)
    e2 = jnp.dot(v * v, avg, preferred_element_type=jnp.float32)
    var = jnp.maximum(e2 - u * u, 0.0)
    return jnp.maximum(g * ((v - u) * lax.rsqrt(var + eps)) + b, 0.0)


# Packed parameter slab rows (each row zero-padded to C lanes):
#   0: pre_norm.gamma  1: pre_norm.beta
#   2: lin1.b          3: norm1.gamma     4: norm1.beta
#   5: gcn.bias        6: norm2.gamma     7: norm2.beta
#   8: lin2.b
def res_block_kernel(x_ref, seg_ref, segT_ref, A_ref, prm_ref,
                     w1t_ref, wg_ref, w2t_ref, out_ref):
    Bt, N, Jdim = seg_ref.shape
    M, C = x_ref.shape          # M = Bt * N (flattened rows)
    H = wg_ref.shape[0]

    g_pre = prm_ref[0:1, :]
    b_pre = prm_ref[1:2, :]
    b1 = prm_ref[2:3, :H]
    g1 = prm_ref[3:4, :H]
    bn1 = prm_ref[4:5, :H]
    bg = prm_ref[5:6, :H]
    g2 = prm_ref[6:7, :H]
    bn2 = prm_ref[7:8, :H]
    b2 = prm_ref[8:9, :]

    x = x_ref[...]                                                    # (M, C)

    # pre_norm + relu + lin1 (in -> out//2), channel-last: h @ W1^T + b1
    h = _ln_relu(x, g_pre, b_pre)
    y = jnp.dot(h, w1t_ref[...], preferred_element_type=jnp.float32) + b1
    y = _ln_relu(y, g1, bn1)                                          # (M, H)

    # DynamicGraphConvolution, reassociated so the (Bt, N, N) adjacency is
    # never materialised:
    #   (seg A seg^T - I) @ support  ==  (seg A) @ (seg^T @ support) - support
    support = jnp.dot(y, wg_ref[...],
                      preferred_element_type=jnp.float32)             # (M, H)
    support3 = support.reshape(Bt, N, H)
    sA = jnp.dot(seg_ref[...].reshape(M, Jdim), A_ref[...],
                 preferred_element_type=jnp.float32).reshape(Bt, N, Jdim)
    t = jnp.einsum('bjn,bnh->bjh', segT_ref[...], support3,
                   preferred_element_type=jnp.float32)                # (Bt, J, H)
    gcn = jnp.einsum('bnj,bjh->bnh', sA, t,
                     preferred_element_type=jnp.float32).reshape(M, H)
    y = gcn - support + bg                                            # (adj-I)@supp + b

    # norm2 + relu + lin2 (out//2 -> out), then residual.
    y = _ln_relu(y, g2, bn2)
    y = jnp.dot(y, w2t_ref[...], preferred_element_type=jnp.float32) + b2
    out_ref[...] = x + y


def _full_spec(a):
    nd = a.ndim
    return pl.BlockSpec(a.shape, lambda i, nd=nd: (0,) * nd)


def dynamic_graph_res_block(x, seg, params, *, block_b=None,
                            max_rows_per_step=4096):
    """x: (B, N, C) float32, seg: (B, N, J) float32 (soft joint assignment)."""
    B, N, C = x.shape
    Jdim = seg.shape[-1]
    H = params["w1"].shape[0]          # out_channels // 2
    assert params["w2"].shape[0] == C and params["w1"].shape[1] == C and H <= C

    if block_b is None:
        # Single grid step whenever the whole batch fits under the row cap;
        # extra steps only add fixed per-step overhead on single-TC chips.
        divs = [d for d in range(1, B + 1)
                if B % d == 0 and d * N <= max_rows_per_step]
        block_b = max(divs) if divs else 1
    assert B % block_b == 0
    M = block_b * N
    grid = (B // block_b,)

    # Wrapper-side layout plumbing (one-off, no in-kernel transposes needed):
    w1t = params["w1"].T                       # (C, H)
    w2t = params["w2"].T                       # (H, C)
    wg = params["wg"]                          # (H, H)
    A = params["link_mat"]                     # (J, J)
    segT = jnp.swapaxes(seg, 1, 2)             # (B, J, N)
    x2d = x.reshape(B * N, C)                  # row-major, layout preserving

    # Pack all 1-D broadcast params into one (9, C) slab -> 1 DMA.
    pad = lambda v: jnp.pad(v, (0, C - v.shape[0]))
    prm = jnp.stack([
        pad(params["g_pre"]), pad(params["b_pre"]),
        pad(params["b1"]), pad(params["g1"]), pad(params["bn1"]),
        pad(params["bg"]), pad(params["g2"]), pad(params["bn2"]),
        pad(params["b2"]),
    ]).astype(jnp.float32)

    flops = (2 * B * N * (C * H + H * H + H * C)       # lin1 / gcn weight / lin2
             + 2 * B * N * Jdim * Jdim                 # seg @ A
             + 4 * B * N * Jdim * H                    # seg^T@support, sA@t
             + 4 * B * N * (C * C + 2 * H * H)         # LN mean / E[x^2] matmuls
             + 12 * B * N * (C + 2 * H))               # elementwise
    bytes_accessed = 4 * (2 * x2d.size + seg.size + segT.size + prm.size
                          + w1t.size + w2t.size + wg.size + A.size)
    cost = pl.CostEstimate(flops=flops, transcendentals=3 * B * N,
                           bytes_accessed=bytes_accessed)

    out2d = pl.pallas_call(
        res_block_kernel,
        out_shape=jax.ShapeDtypeStruct((B * N, C), jnp.float32),
        grid=grid,
        in_specs=[
            pl.BlockSpec((M, C), lambda i: (i, 0)),                 # x rows
            pl.BlockSpec((block_b, N, Jdim), lambda i: (i, 0, 0)),  # seg
            pl.BlockSpec((block_b, Jdim, N), lambda i: (i, 0, 0)),  # seg^T
            _full_spec(A),                                          # link_mat
            _full_spec(prm),                                        # packed 1-D params
            _full_spec(w1t),                                        # lin1 W^T
            _full_spec(wg),                                         # gcn weight
            _full_spec(w2t),                                        # lin2 W^T
        ],
        out_specs=pl.BlockSpec((M, C), lambda i: (i, 0)),
        compiler_params=pltpu.CompilerParams(
            dimension_semantics=("parallel",)),
        cost_estimate=cost,
    )(x2d, seg, segT, A, prm, w1t, wg, w2t)
    return out2d.reshape(B, N, C)


def reference(x, seg, params):
    """Pure-JAX reference reproducing the PyTorch forward pass.

    einsums run at HIGHEST precision so the f32 reference is trustworthy for
    the 1e-4 comparison (the Pallas kernel keeps full f32 matmuls as well).
    """
    A = params["link_mat"]
    hp = jax.lax.Precision.HIGHEST

    def ln(v, g, b, eps=1e-12):
        u = jnp.mean(v, -1, keepdims=True)
        s = jnp.mean((v - u) ** 2, -1, keepdims=True)
        return g * ((v - u) / jnp.sqrt(s + eps)) + b

    h = jnp.maximum(ln(x, params["g_pre"], params["b_pre"]), 0.0)
    y = jnp.einsum("bnc,hc->bnh", h, params["w1"], precision=hp) + params["b1"]
    y = jnp.maximum(ln(y, params["g1"], params["bn1"]), 0.0)
    adjmat = (jnp.einsum("bnj,jk,bmk->bnm", seg, A, seg, precision=hp)
              - jnp.eye(x.shape[1]))
    support = jnp.einsum("bnh,hk->bnk", y, params["wg"], precision=hp)
    y = jnp.einsum("bnm,bmk->bnk", adjmat, support, precision=hp) + params["bg"]
    y = jnp.maximum(ln(y, params["g2"], params["bn2"]), 0.0)
    y = jnp.einsum("bnh,ch->bnc", y, params["w2"], precision=hp) + params["b2"]
    return x + y


def init_params(key, in_channels, out_channels):
    H = out_channels // 2
    ks = jax.random.split(key, 6)
    # GraphLinear lin1
    w1_std = 1.0 / (in_channels * H)
    w1 = jax.random.uniform(ks[0], (H, in_channels), minval=-w1_std, maxval=w1_std)
    b1 = jax.random.uniform(ks[1], (H,), minval=-w1_std, maxval=w1_std)
    # GraphLinear lin2
    w2_std = 1.0 / (H * out_channels)
    w2 = jax.random.uniform(ks[2], (out_channels, H), minval=-w2_std, maxval=w2_std)
    b2 = jax.random.uniform(ks[3], (out_channels,), minval=-w2_std, maxval=w2_std)
    # DynamicGraphConvolution (H -> H)
    g_std = 6.0 / np.sqrt(H + H)
    wg = jax.random.uniform(ks[4], (H, H), minval=-g_std, maxval=g_std)
    bg = jax.random.uniform(ks[5], (H,), minval=-g_std, maxval=g_std)
    return dict(
        w1=w1.astype(jnp.float32), b1=b1.astype(jnp.float32),
        w2=w2.astype(jnp.float32), b2=b2.astype(jnp.float32),
        wg=wg.astype(jnp.float32), bg=bg.astype(jnp.float32),
        # BertLayerNorm params (ones / zeros as in __init__)
        g_pre=jnp.ones((in_channels,), jnp.float32),
        b_pre=jnp.zeros((in_channels,), jnp.float32),
        g1=jnp.ones((H,), jnp.float32), bn1=jnp.zeros((H,), jnp.float32),
        g2=jnp.ones((H,), jnp.float32), bn2=jnp.zeros((H,), jnp.float32),
        link_mat=make_link_mat(),
    )


if __name__ == "__main__":
    # residual add requires in_channels == out_channels
    B, N, C = 16, 16, 32
    key = jax.random.PRNGKey(0)
    kx, kseg, kp = jax.random.split(key, 3)

    x = jax.random.normal(kx, (B, N, C), dtype=jnp.float32)
    # seg: soft assignment of the N graph nodes to the 15 body joints
    seg = jax.nn.softmax(jax.random.normal(kseg, (B, N, J), dtype=jnp.float32),
                         axis=-1)
    params = init_params(kp, C, C)

    out = jax.block_until_ready(dynamic_graph_res_block(x, seg, params))

    ref = reference(x, seg, params)
    if not jnp.allclose(out, ref, atol=1e-4, rtol=1e-4):
        raise AssertionError("Pallas kernel does not match JAX reference")

    print("KERNEL_OK")
</pallas_src>

<mosaic_0001>
module attributes {stable_mosaic.version = 11 : i64} {
  func.func @res_block_kernel(%arg0: i32, %arg1: memref<256x32xf32, #tpu.memory_space<vmem>>, %arg2: memref<16x16x15xf32, #tpu.memory_space<vmem>>, %arg3: memref<16x15x16xf32, #tpu.memory_space<vmem>>, %arg4: memref<15x15xf32, #tpu.memory_space<vmem>>, %arg5: memref<9x32xf32, #tpu.memory_space<vmem>>, %arg6: memref<32x16xf32, #tpu.memory_space<vmem>>, %arg7: memref<16x16xf32, #tpu.memory_space<vmem>>, %arg8: memref<16x32xf32, #tpu.memory_space<vmem>>, %arg9: memref<256x32xf32, #tpu.memory_space<vmem>>) attributes {dimension_semantics = [#tpu.dimension_semantics<parallel>], iteration_bounds = array<i64: 1>, scalar_prefetch = 0 : i64, scratch_operands = 0 : i64, tpu.core_type = #tpu.core_type<tc>, window_params = [{transform_indices = @transform_0, window_bounds = array<i64: 256, 32>}, {transform_indices = @transform_1, window_bounds = array<i64: 16, 16, 15>}, {transform_indices = @transform_2, window_bounds = array<i64: 16, 15, 16>}, {pipeline_mode = #tpu.pipeline_mode<synchronous>, transform_indices = @transform_3, window_bounds = array<i64: 15, 15>}, {pipeline_mode = #tpu.pipeline_mode<synchronous>, transform_indices = @transform_4, window_bounds = array<i64: 9, 32>}, {pipeline_mode = #tpu.pipeline_mode<synchronous>, transform_indices = @transform_5, window_bounds = array<i64: 32, 16>}, {pipeline_mode = #tpu.pipeline_mode<synchronous>, transform_indices = @transform_6, window_bounds = array<i64: 16, 16>}, {pipeline_mode = #tpu.pipeline_mode<synchronous>, transform_indices = @transform_7, window_bounds = array<i64: 16, 32>}, {transform_indices = @transform_8, window_bounds = array<i64: 256, 32>}]} {
    %c0 = arith.constant 0 : index
    %c0_0 = arith.constant 0 : index
    %0 = vector.load %arg5[%c0, %c0_0] : memref<9x32xf32, #tpu.memory_space<vmem>>, vector<1x32xf32>
    %c1 = arith.constant 1 : index
    %c0_1 = arith.constant 0 : index
    %1 = vector.load %arg5[%c1, %c0_1] : memref<9x32xf32, #tpu.memory_space<vmem>>, vector<1x32xf32>
    %c2 = arith.constant 2 : index
    %c0_2 = arith.constant 0 : index
    %2 = vector.load %arg5[%c2, %c0_2] : memref<9x32xf32, #tpu.memory_space<vmem>>, vector<1x16xf32>
    %c3 = arith.constant 3 : index
    %c0_3 = arith.constant 0 : index
    %3 = vector.load %arg5[%c3, %c0_3] : memref<9x32xf32, #tpu.memory_space<vmem>>, vector<1x16xf32>
    %c4 = arith.constant 4 : index
    %c0_4 = arith.constant 0 : index
    %4 = vector.load %arg5[%c4, %c0_4] : memref<9x32xf32, #tpu.memory_space<vmem>>, vector<1x16xf32>
    %c5 = arith.constant 5 : index
    %c0_5 = arith.constant 0 : index
    %5 = vector.load %arg5[%c5, %c0_5] : memref<9x32xf32, #tpu.memory_space<vmem>>, vector<1x16xf32>
    %c6 = arith.constant 6 : index
    %c0_6 = arith.constant 0 : index
    %6 = vector.load %arg5[%c6, %c0_6] : memref<9x32xf32, #tpu.memory_space<vmem>>, vector<1x16xf32>
    %c7 = arith.constant 7 : index
    %c0_7 = arith.constant 0 : index
    %7 = vector.load %arg5[%c7, %c0_7] : memref<9x32xf32, #tpu.memory_space<vmem>>, vector<1x16xf32>
    %c8 = arith.constant 8 : index
    %c0_8 = arith.constant 0 : index
    %8 = vector.load %arg5[%c8, %c0_8] : memref<9x32xf32, #tpu.memory_space<vmem>>, vector<1x32xf32>
    %c0_9 = arith.constant 0 : index
    %c0_10 = arith.constant 0 : index
    %9 = vector.load %arg1[%c0_9, %c0_10] : memref<256x32xf32, #tpu.memory_space<vmem>>, vector<256x32xf32>
    %cst = arith.constant 3.125000e-02 : f32
    %10 = vector.broadcast %cst : f32 to vector<32x32xf32>
    %cst_11 = arith.constant dense<0.000000e+00> : vector<256x32xf32>
    %11 = tpu.matmul %9, %10, %cst_11 {dimension_numbers = #tpu.dot_dimension_numbers<[1], [0], [0], [1], [0, 0, 1, 1], [], []>} : vector<256x32xf32>, vector<32x32xf32>, vector<256x32xf32> -> vector<256x32xf32>
    %12 = arith.mulf %9, %9 : vector<256x32xf32>
    %cst_12 = arith.constant dense<0.000000e+00> : vector<256x32xf32>
    %13 = tpu.matmul %12, %10, %cst_12 {dimension_numbers = #tpu.dot_dimension_numbers<[1], [0], [0], [1], [0, 0, 1, 1], [], []>} : vector<256x32xf32>, vector<32x32xf32>, vector<256x32xf32> -> vector<256x32xf32>
    %14 = arith.mulf %11, %11 : vector<256x32xf32>
    %15 = arith.subf %13, %14 : vector<256x32xf32>
    %cst_13 = arith.constant 0.000000e+00 : f32
    %16 = vector.broadcast %cst_13 : f32 to vector<256x32xf32>
    %17 = arith.maximumf %15, %16 : vector<256x32xf32>
    %18 = arith.subf %9, %11 : vector<256x32xf32>
    %cst_14 = arith.constant 9.99999996E-13 : f32
    %19 = vector.broadcast %cst_14 : f32 to vector<256x32xf32>
    %20 = arith.addf %17, %19 : vector<256x32xf32>
    %21 = math.rsqrt %20 : vector<256x32xf32>
    %22 = arith.mulf %18, %21 : vector<256x32xf32>
    %23 = vector.broadcast %0 : vector<1x32xf32> to vector<256x32xf32>
    %24 = arith.mulf %23, %22 : vector<256x32xf32>
    %25 = vector.broadcast %1 : vector<1x32xf32> to vector<256x32xf32>
    %26 = arith.addf %24, %25 : vector<256x32xf32>
    %cst_15 = arith.constant 0.000000e+00 : f32
    %27 = vector.broadcast %cst_15 : f32 to vector<256x32xf32>
    %28 = arith.maximumf %26, %27 : vector<256x32xf32>
    %c0_16 = arith.constant 0 : index
    %c0_17 = arith.constant 0 : index
    %29 = vector.load %arg6[%c0_16, %c0_17] : memref<32x16xf32, #tpu.memory_space<vmem>>, vector<32x16xf32>
    %cst_18 = arith.constant dense<0.000000e+00> : vector<256x16xf32>
    %30 = tpu.matmul %28, %29, %cst_18 {dimension_numbers = #tpu.dot_dimension_numbers<[1], [0], [0], [1], [0, 0, 1, 1], [], []>} : vector<256x32xf32>, vector<32x16xf32>, vector<256x16xf32> -> vector<256x16xf32>
    %31 = vector.broadcast %2 : vector<1x16xf32> to vector<256x16xf32>
    %32 = arith.addf %30, %31 : vector<256x16xf32>
    %cst_19 = arith.constant 6.250000e-02 : f32
    %33 = vector.broadcast %cst_19 : f32 to vector<16x16xf32>
    %cst_20 = arith.constant dense<0.000000e+00> : vector<256x16xf32>
    %34 = tpu.matmul %32, %33, %cst_20 {dimension_numbers = #tpu.dot_dimension_numbers<[1], [0], [0], [1], [0, 0, 1, 1], [], []>} : vector<256x16xf32>, vector<16x16xf32>, vector<256x16xf32> -> vector<256x16xf32>
    %35 = arith.mulf %32, %32 : vector<256x16xf32>
    %cst_21 = arith.constant dense<0.000000e+00> : vector<256x16xf32>
    %36 = tpu.matmul %35, %33, %cst_21 {dimension_numbers = #tpu.dot_dimension_numbers<[1], [0], [0], [1], [0, 0, 1, 1], [], []>} : vector<256x16xf32>, vector<16x16xf32>, vector<256x16xf32> -> vector<256x16xf32>
    %37 = arith.mulf %34, %34 : vector<256x16xf32>
    %38 = arith.subf %36, %37 : vector<256x16xf32>
    %cst_22 = arith.constant 0.000000e+00 : f32
    %39 = vector.broadcast %cst_22 : f32 to vector<256x16xf32>
    %40 = arith.maximumf %38, %39 : vector<256x16xf32>
    %41 = arith.subf %32, %34 : vector<256x16xf32>
    %cst_23 = arith.constant 9.99999996E-13 : f32
    %42 = vector.broadcast %cst_23 : f32 to vector<256x16xf32>
    %43 = arith.addf %40, %42 : vector<256x16xf32>
    %44 = math.rsqrt %43 : vector<256x16xf32>
    %45 = arith.mulf %41, %44 : vector<256x16xf32>
    %46 = vector.broadcast %3 : vector<1x16xf32> to vector<256x16xf32>
    %47 = arith.mulf %46, %45 : vector<256x16xf32>
    %48 = vector.broadcast %4 : vector<1x16xf32> to vector<256x16xf32>
    %49 = arith.addf %47, %48 : vector<256x16xf32>
    %cst_24 = arith.constant 0.000000e+00 : f32
    %50 = vector.broadcast %cst_24 : f32 to vector<256x16xf32>
    %51 = arith.maximumf %49, %50 : vector<256x16xf32>
    %c0_25 = arith.constant 0 : index
    %c0_26 = arith.constant 0 : index
    %52 = vector.load %arg7[%c0_25, %c0_26] : memref<16x16xf32, #tpu.memory_space<vmem>>, vector<16x16xf32>
    %cst_27 = arith.constant dense<0.000000e+00> : vector<256x16xf32>
    %53 = tpu.matmul %51, %52, %cst_27 {dimension_numbers = #tpu.dot_dimension_numbers<[1], [0], [0], [1], [0, 0, 1, 1], [], []>} : vector<256x16xf32>, vector<16x16xf32>, vector<256x16xf32> -> vector<256x16xf32>
    %54 = vector.shape_cast %53 : vector<256x16xf32> to vector<16x16x16xf32>
    %c0_28 = arith.constant 0 : index
    %c0_29 = arith.constant 0 : index
    %c0_30 = arith.constant 0 : index
    %55 = vector.load %arg2[%c0_28, %c0_29, %c0_30] : memref<16x16x15xf32, #tpu.memory_space<vmem>>, vector<16x16x15xf32>
    %56 = vector.shape_cast %55 : vector<16x16x15xf32> to vector<256x15xf32>
    %c0_31 = arith.constant 0 : index
    %c0_32 = arith.constant 0 : index
    %57 = vector.load %arg4[%c0_31, %c0_32] : memref<15x15xf32, #tpu.memory_space<vmem>>, vector<15x15xf32>
    %cst_33 = arith.constant dense<0.000000e+00> : vector<256x15xf32>
    %58 = tpu.matmul %56, %57, %cst_33 {dimension_numbers = #tpu.dot_dimension_numbers<[1], [0], [0], [1], [0, 0, 1, 1], [], []>} : vector<256x15xf32>, vector<15x15xf32>, vector<256x15xf32> -> vector<256x15xf32>
    %59 = vector.shape_cast %58 : vector<256x15xf32> to vector<16x16x15xf32>
    %c0_34 = arith.constant 0 : index
    %c0_35 = arith.constant 0 : index
    %c0_36 = arith.constant 0 : index
    %60 = vector.load %arg3[%c0_34, %c0_35, %c0_36] : memref<16x15x16xf32, #tpu.memory_space<vmem>>, vector<16x15x16xf32>
    "tpu.trace_start"() <{level = 10 : i32, message = "bjn,bnh->bjh"}> : () -> ()
    %cst_37 = arith.constant dense<0.000000e+00> : vector<16x15x16xf32>
    %61 = tpu.matmul %60, %54, %cst_37 {dimension_numbers = #tpu.dot_dimension_numbers<[2], [1], [1], [2], [0, 0, 0, 1, 1, 2], [0], [0]>} : vector<16x15x16xf32>, vector<16x16x16xf32>, vector<16x15x16xf32> -> vector<16x15x16xf32>
    "tpu.trace_stop"() : () -> ()
    "tpu.trace_start"() <{level = 10 : i32, message = "bnj,bjh->bnh"}> : () -> ()
    %cst_38 = arith.constant dense<0.000000e+00> : vector<16x16x16xf32>
    %62 = tpu.matmul %59, %61, %cst_38 {dimension_numbers = #tpu.dot_dimension_numbers<[2], [1], [1], [2], [0, 0, 0, 1, 1, 2], [0], [0]>} : vector<16x16x15xf32>, vector<16x15x16xf32>, vector<16x16x16xf32> -> vector<16x16x16xf32>
    "tpu.trace_stop"() : () -> ()
    %63 = vector.shape_cast %62 : vector<16x16x16xf32> to vector<256x16xf32>
    %64 = arith.subf %63, %53 : vector<256x16xf32>
    %65 = vector.broadcast %5 : vector<1x16xf32> to vector<256x16xf32>
    %66 = arith.addf %64, %65 : vector<256x16xf32>
    %cst_39 = arith.constant 6.250000e-02 : f32
    %67 = vector.broadcast %cst_39 : f32 to vector<16x16xf32>
    %cst_40 = arith.constant dense<0.000000e+00> : vector<256x16xf32>
    %68 = tpu.matmul %66, %67, %cst_40 {dimension_numbers = #tpu.dot_dimension_numbers<[1], [0], [0], [1], [0, 0, 1, 1], [], []>} : vector<256x16xf32>, vector<16x16xf32>, vector<256x16xf32> -> vector<256x16xf32>
    %69 = arith.mulf %66, %66 : vector<256x16xf32>
    %cst_41 = arith.constant dense<0.000000e+00> : vector<256x16xf32>
    %70 = tpu.matmul %69, %67, %cst_41 {dimension_numbers = #tpu.dot_dimension_numbers<[1], [0], [0], [1], [0, 0, 1, 1], [], []>} : vector<256x16xf32>, vector<16x16xf32>, vector<256x16xf32> -> vector<256x16xf32>
    %71 = arith.mulf %68, %68 : vector<256x16xf32>
    %72 = arith.subf %70, %71 : vector<256x16xf32>
    %cst_42 = arith.constant 0.000000e+00 : f32
    %73 = vector.broadcast %cst_42 : f32 to vector<256x16xf32>
    %74 = arith.maximumf %72, %73 : vector<256x16xf32>
    %75 = arith.subf %66, %68 : vector<256x16xf32>
    %cst_43 = arith.constant 9.99999996E-13 : f32
    %76 = vector.broadcast %cst_43 : f32 to vector<256x16xf32>
    %77 = arith.addf %74, %76 : vector<256x16xf32>
    %78 = math.rsqrt %77 : vector<256x16xf32>
    %79 = arith.mulf %75, %78 : vector<256x16xf32>
    %80 = vector.broadcast %6 : vector<1x16xf32> to vector<256x16xf32>
    %81 = arith.mulf %80, %79 : vector<256x16xf32>
    %82 = vector.broadcast %7 : vector<1x16xf32> to vector<256x16xf32>
    %83 = arith.addf %81, %82 : vector<256x16xf32>
    %cst_44 = arith.constant 0.000000e+00 : f32
    %84 = vector.broadcast %cst_44 : f32 to vector<256x16xf32>
    %85 = arith.maximumf %83, %84 : vector<256x16xf32>
    %c0_45 = arith.constant 0 : index
    %c0_46 = arith.constant 0 : index
    %86 = vector.load %arg8[%c0_45, %c0_46] : memref<16x32xf32, #tpu.memory_space<vmem>>, vector<16x32xf32>
    %cst_47 = arith.constant dense<0.000000e+00> : vector<256x32xf32>
    %87 = tpu.matmul %85, %86, %cst_47 {dimension_numbers = #tpu.dot_dimension_numbers<[1], [0], [0], [1], [0, 0, 1, 1], [], []>} : vector<256x16xf32>, vector<16x32xf32>, vector<256x32xf32> -> vector<256x32xf32>
    %88 = vector.broadcast %8 : vector<1x32xf32> to vector<256x32xf32>
    %89 = arith.addf %87, %88 : vector<256x32xf32>
    %90 = arith.addf %9, %89 : vector<256x32xf32>
    %c0_48 = arith.constant 0 : index
    %c0_49 = arith.constant 0 : index
    %91 = vector.load %arg9[%c0_48, %c0_49] : memref<256x32xf32, #tpu.memory_space<vmem>>, vector<256x32xf32>
    tpu.vector_store %arg9[%c0_48, %c0_49], %90 {strides = array<i32>} : memref<256x32xf32, #tpu.memory_space<vmem>>, vector<256x32xf32>,
    return
  }
  func.func @transform_0(%arg0: i32) -> (i32, i32) {
    %c0_i32 = arith.constant 0 : i32
    %c0_i32_0 = arith.constant 0 : i32
    return %arg0, %c0_i32 : i32, i32
  }
  func.func @transform_1(%arg0: i32) -> (i32, i32, i32) {
    %c0_i32 = arith.constant 0 : i32
    %c0_i32_0 = arith.constant 0 : i32
    %c0_i32_1 = arith.constant 0 : i32
    return %arg0, %c0_i32, %c0_i32_0 : i32, i32, i32
  }
  func.func @transform_2(%arg0: i32) -> (i32, i32, i32) {
    %c0_i32 = arith.constant 0 : i32
    %c0_i32_0 = arith.constant 0 : i32
    %c0_i32_1 = arith.constant 0 : i32
    return %arg0, %c0_i32, %c0_i32_0 : i32, i32, i32
  }
  func.func @transform_3(%arg0: i32) -> (i32, i32) {
    %c0_i32 = arith.constant 0 : i32
    %c0_i32_0 = arith.constant 0 : i32
    %c0_i32_1 = arith.constant 0 : i32
    return %c0_i32, %c0_i32_0 : i32, i32
  }
  func.func @transform_4(%arg0: i32) -> (i32, i32) {
    %c0_i32 = arith.constant 0 : i32
    %c0_i32_0 = arith.constant 0 : i32
    %c0_i32_1 = arith.constant 0 : i32
    return %c0_i32, %c0_i32_0 : i32, i32
  }
  func.func @transform_5(%arg0: i32) -> (i32, i32) {
    %c0_i32 = arith.constant 0 : i32
    %c0_i32_0 = arith.constant 0 : i32
    %c0_i32_1 = arith.constant 0 : i32
    return %c0_i32, %c0_i32_0 : i32, i32
  }
  func.func @transform_6(%arg0: i32) -> (i32, i32) {
    %c0_i32 = arith.constant 0 : i32
    %c0_i32_0 = arith.constant 0 : i32
    %c0_i32_1 = arith.constant 0 : i32
    return %c0_i32, %c0_i32_0 : i32, i32
  }
  func.func @transform_7(%arg0: i32) -> (i32, i32) {
    %c0_i32 = arith.constant 0 : i32
    %c0_i32_0 = arith.constant 0 : i32
    %c0_i32_1 = arith.constant 0 : i32
    return %c0_i32, %c0_i32_0 : i32, i32
  }
  func.func @transform_8(%arg0: i32) -> (i32, i32) {
    %c0_i32 = arith.constant 0 : i32
    %c0_i32_0 = arith.constant 0 : i32
    return %arg0, %c0_i32 : i32, i32
  }
}

</mosaic_0001>

<llo_original>
// kernel: tpu_custom_call.1
$region0: #{tpu_custom_call.1}
  #allocation0 [shape = 'u32[]', space=smem, size = 0x4, offset = 0x4, fixed_abs, tag = 'smem constant byte address 0x4 - core index']
  #allocation1 [shape = 'u32[144,128]{1,0:T(1,128)}', space=vmem, size = 0x12000, scoped, tag = 'internal scratch']
  %s0 = inlined_call_operand.vmem [shape: f32[256,32], index: 0, kind: input, shape index: {}]
  %s1 = inlined_call_operand.vmem [shape: f32[16,16,15], index: 1, kind: input, shape index: {}]
  %s2 = inlined_call_operand.vmem [shape: f32[16,15,16], index: 2, kind: input, shape index: {}]
  %s3 = inlined_call_operand.vmem [shape: f32[15,15], index: 3, kind: input, shape index: {}]
  %s4 = inlined_call_operand.vmem [shape: f32[9,32], index: 4, kind: input, shape index: {}]
  %s5 = inlined_call_operand.vmem [shape: f32[32,16], index: 5, kind: input, shape index: {}]
  %s6 = inlined_call_operand.vmem [shape: f32[16,16], index: 6, kind: input, shape index: {}]
  %s7 = inlined_call_operand.vmem [shape: f32[16,32], index: 7, kind: input, shape index: {}]
  %s8 = inlined_call_operand.vmem [shape: f32[256,32], index: 8, kind: output, shape index: {}]
  %s9 = sld [smem:[#allocation0]]
  $region42: #{tpu_custom_call.1} parent=0
    _
  %s11 = ssub.s32 1, %s9
  %s12 = scalar_select 0, %s11, %s9
  // Predicated region
  $region2: #{tpu_custom_call.1} parent=0 // pred_check
    _
  $region3: #{tpu_custom_call.1} parent=0 // pred_check_branch
    %14 = sbr.rel (0) target = $region5
  $region4: #{tpu_custom_call.1} parent=0 // pred_region
    _
  $region5: #{tpu_custom_call.1} parent=0 // pred_fallthru
    _
  // Predicated region
  $region6: #{tpu_custom_call.1} parent=0 // pred_check
    _
  $region7: #{tpu_custom_call.1} parent=0 // pred_check_branch
    %16 = sbr.rel (0) target = $region9
  $region8: #{tpu_custom_call.1} parent=0 // pred_region
    _
  $region9: #{tpu_custom_call.1} parent=0 // pred_fallthru
    _
  // Predicated region
  $region10: #{tpu_custom_call.1} parent=0 // pred_check
    _
  $region11: #{tpu_custom_call.1} parent=0 // pred_check_branch
    %18 = sbr.rel (0) target = $region13
  $region12: #{tpu_custom_call.1} parent=0 // pred_region
    _
  $region13: #{tpu_custom_call.1} parent=0 // pred_fallthru
    _
  // Predicated region
  $region14: #{tpu_custom_call.1} parent=0 // pred_check
    _
  $region15: #{tpu_custom_call.1} parent=0 // pred_check_branch
    %20 = sbr.rel (0) target = $region17
  $region16: #{tpu_custom_call.1} parent=0 // pred_region
    _
  $region17: #{tpu_custom_call.1} parent=0 // pred_fallthru
    _
  // Predicated region
  $region18: #{tpu_custom_call.1} parent=0 // pred_check
    _
  $region19: #{tpu_custom_call.1} parent=0 // pred_check_branch
    %22 = sbr.rel (0) target = $region21
  $region20: #{tpu_custom_call.1} parent=0 // pred_region
    _
  $region21: #{tpu_custom_call.1} parent=0 // pred_fallthru
    _
  // Predicated region
  $region22: #{tpu_custom_call.1} parent=0 // pred_check
    _
  $region23: #{tpu_custom_call.1} parent=0 // pred_check_branch
    %24 = sbr.rel (0) target = $region25
  $region24: #{tpu_custom_call.1} parent=0 // pred_region
    _
  $region25: #{tpu_custom_call.1} parent=0 // pred_fallthru
    _
  // Predicated region
  $region26: #{tpu_custom_call.1} parent=0 // pred_check
    _
  $region27: #{tpu_custom_call.1} parent=0 // pred_check_branch
    %26 = sbr.rel (0) target = $region29
  $region28: #{tpu_custom_call.1} parent=0 // pred_region
    _
  $region29: #{tpu_custom_call.1} parent=0 // pred_fallthru
    _
  // Predicated region
  $region30: #{tpu_custom_call.1} parent=0 // pred_check
    _
  $region31: #{tpu_custom_call.1} parent=0 // pred_check_branch
    %28 = sbr.rel (0) target = $region33
  $region32: #{tpu_custom_call.1} parent=0 // pred_region
    _
  $region33: #{tpu_custom_call.1} parent=0 // pred_fallthru
    _
  %v29 = vld [vmem:[%s4] sm:$0x1]
  %v30 = vld [vmem:[%s4 + $0x1] sm:$0x1]
  %v31 = vld [vmem:[%s4 + $0x2] sm:$0x1]
  %v32 = vld [vmem:[%s4 + $0x3] sm:$0x1]
  %v33 = vld [vmem:[%s4 + $0x4] sm:$0x1]
  %v34 = vld [vmem:[%s4 + $0x5] sm:$0x1]
  %v35 = vld [vmem:[%s4 + $0x6] sm:$0x1]
  %v36 = vld [vmem:[%s4 + $0x7] sm:$0x1]
  %v37 = vld [vmem:[%s4 + $0x8] sm:$0x1]
  %v38 = vld [vmem:[%s0] sm:$0xff]
  %v39 = vld [vmem:[%s0 + $0x8] sm:$0xff]
  %v40 = vld [vmem:[%s0 + $0x10] sm:$0xff]
  %v41 = vld [vmem:[%s0 + $0x18] sm:$0xff]
  %v42 = vld [vmem:[%s0 + $0x20] sm:$0xff]
  %v43 = vld [vmem:[%s0 + $0x28] sm:$0xff]
  %v44 = vld [vmem:[%s0 + $0x30] sm:$0xff]
  %v45 = vld [vmem:[%s0 + $0x38] sm:$0xff]
  %v46 = vld [vmem:[%s0 + $0x40] sm:$0xff]
  %v47 = vld [vmem:[%s0 + $0x48] sm:$0xff]
  %v48 = vld [vmem:[%s0 + $0x50] sm:$0xff]
  %v49 = vld [vmem:[%s0 + $0x58] sm:$0xff]
  %v50 = vld [vmem:[%s0 + $0x60] sm:$0xff]
  %v51 = vld [vmem:[%s0 + $0x68] sm:$0xff]
  %v52 = vld [vmem:[%s0 + $0x70] sm:$0xff]
  %v53 = vld [vmem:[%s0 + $0x78] sm:$0xff]
  %v54 = vld [vmem:[%s0 + $0x80] sm:$0xff]
  %v55 = vld [vmem:[%s0 + $0x88] sm:$0xff]
  %v56 = vld [vmem:[%s0 + $0x90] sm:$0xff]
  %v57 = vld [vmem:[%s0 + $0x98] sm:$0xff]
  %v58 = vld [vmem:[%s0 + $0xa0] sm:$0xff]
  %v59 = vld [vmem:[%s0 + $0xa8] sm:$0xff]
  %v60 = vld [vmem:[%s0 + $0xb0] sm:$0xff]
  %v61 = vld [vmem:[%s0 + $0xb8] sm:$0xff]
  %v62 = vld [vmem:[%s0 + $0xc0] sm:$0xff]
  %v63 = vld [vmem:[%s0 + $0xc8] sm:$0xff]
  %v64 = vld [vmem:[%s0 + $0xd0] sm:$0xff]
  %v65 = vld [vmem:[%s0 + $0xd8] sm:$0xff]
  %v66 = vld [vmem:[%s0 + $0xe0] sm:$0xff]
  %v67 = vld [vmem:[%s0 + $0xe8] sm:$0xff]
  %v68 = vld [vmem:[%s0 + $0xf0] sm:$0xff]
  %v69 = vld [vmem:[%s0 + $0xf8] sm:$0xff]
  %vm70 = vcmask 261120
  %v72 = vsel %vm70, %v38, 0
  %v75 = vsel %vm70, %v39, 0
  %v78 = vsel %vm70, %v40, 0
  %v81 = vsel %vm70, %v41, 0
  %v84 = vsel %vm70, %v42, 0
  %v87 = vsel %vm70, %v43, 0
  %v90 = vsel %vm70, %v44, 0
  %v93 = vsel %vm70, %v45, 0
  %v96 = vsel %vm70, %v46, 0
  %v99 = vsel %vm70, %v47, 0
  %v102 = vsel %vm70, %v48, 0
  %v105 = vsel %vm70, %v49, 0
  %v108 = vsel %vm70, %v50, 0
  %v111 = vsel %vm70, %v51, 0
  %v114 = vsel %vm70, %v52, 0
  %v117 = vsel %vm70, %v53, 0
  %v120 = vsel %vm70, %v54, 0
  %v123 = vsel %vm70, %v55, 0
  %v126 = vsel %vm70, %v56, 0
  %v129 = vsel %vm70, %v57, 0
  %v132 = vsel %vm70, %v58, 0
  %v135 = vsel %vm70, %v59, 0
  %v138 = vsel %vm70, %v60, 0
  %v141 = vsel %vm70, %v61, 0
  %v144 = vsel %vm70, %v62, 0
  %v147 = vsel %vm70, %v63, 0
  %v150 = vsel %vm70, %v64, 0
  %v153 = vsel %vm70, %v65, 0
  %v156 = vsel %vm70, %v66, 0
  %v159 = vsel %vm70, %v67, 0
  %v162 = vsel %vm70, %v68, 0
  %v165 = vsel %vm70, %v69, 0
  %167 = vmatprep.subr.mxu0 0.0
  %168 = vmatpush1.msra.mxu0 0.03125
  %169 = vmatprep.subr.mxu0 0.0
  %170 = vmatpush1.msra.mxu0 0.03125
  %171 = vmatprep.subr.mxu0 0.0
  %172 = vmatpush1.msra.mxu0 0.03125
  %173 = vmatprep.subr.mxu0 0.0
  %174 = vmatpush1.msra.mxu0 0.03125
  %175 = vmatprep.subr.mxu0 0.0
  %176 = vmatpush1.msra.mxu0 0.0
  %177 = vmatprep.subr.mxu0 0.0
  %178 = vmatpush1.msra.mxu0 0.0
  %179 = vmatprep.subr.mxu0 0.0
  %180 = vmatpush1.msra.mxu0 0.0
  %181 = vmatprep.subr.mxu0 0.0
  %182 = vmatpush1.msra.mxu0 0.0
  %183 = vmatprep.subr.mxu0 0.0
  %184 = vmatpush1.msra.mxu0 0.0
  %185 = vmatprep.subr.mxu0 0.0
  %186 = vmatpush1.msra.mxu0 0.0
  %187 = vmatprep.subr.mxu0 0.0
  %188 = vmatpush1.msra.mxu0 0.0
  %189 = vmatprep.subr.mxu0 0.0
  %190 = vmatpush1.msra.mxu0 0.0
  %191 = vmatprep.subr.mxu0 0.0
  %192 = vmatpush1.msra.mxu0 0.0
  %193 = vmatprep.subr.mxu0 0.0
  %194 = vmatpush1.msra.mxu0 0.0
  %195 = vmatprep.subr.mxu0 0.0
  %196 = vmatpush1.msra.mxu0 0.0
  %197 = vmatprep.subr.mxu0 0.0
  %198 = vmatpush1.msra.mxu0 0.0
  %199 = vmatprep.subr.mxu0 0.0
  %200 = vmatpush1.msra.mxu0 0.0
  %201 = vmatprep.subr.mxu0 0.0
  %202 = vmatpush1.msra.mxu0 0.0
  %203 = vmatprep.subr.mxu0 0.0
  %204 = vmatpush1.msra.mxu0 0.0
  %205 = vmatprep.subr.mxu0 0.0
  %206 = vmatpush1.msra.mxu0 0.0
  %207 = vmatprep.subr.mxu0 0.0
  %208 = vmatpush1.msra.mxu0 0.0
  %209 = vmatprep.subr.mxu0 0.0
  %210 = vmatpush1.msra.mxu0 0.0
  %211 = vmatprep.subr.mxu0 0.0
  %212 = vmatpush1.msra.mxu0 0.0
  %213 = vmatprep.subr.mxu0 0.0
  %214 = vmatpush1.msra.mxu0 0.0
  %215 = vmatprep.subr.mxu0 0.0
  %216 = vmatpush1.msra.mxu0 0.0
  %217 = vmatprep.subr.mxu0 0.0
  %218 = vmatpush1.msra.mxu0 0.0
  %219 = vmatprep.subr.mxu0 0.0
  %220 = vmatpush1.msra.mxu0 0.0
  %221 = vmatprep.subr.mxu0 0.0
  %222 = vmatpush1.msra.mxu0 0.0
  %223 = vmatprep.subr.mxu0 0.0
  %224 = vmatpush1.msra.mxu0 0.0
  %225 = vmatprep.subr.mxu0 0.0
  %226 = vmatpush1.msra.mxu0 0.0
  %227 = vmatprep.subr.mxu0 0.0
  %228 = vmatpush1.msra.mxu0 0.0
  %229 = vmatprep.subr.mxu0 0.0
  %230 = vmatpush1.msra.mxu0 0.0
  %231 = vmatprep.mubr.f32.mxu0 0.0
  %232 = vmatmul.mubr.f32.gmra.mrb[0].mxu0 %v72
  %v233 = vpop.f32.mrb[0].mxu0
  %v234 = vadd.f32 0.0, %v233
  %v235 = vpop.f32.mrb[0].mxu0
  %236 = vmatprep.mubr.f32.mxu0 0.0
  %237 = vmatmul.mubr.f32.gmra.mrb[0].mxu0 %v75
  %v238 = vpop.f32.mrb[0].mxu0
  %v239 = vadd.f32 0.0, %v238
  %v240 = vpop.f32.mrb[0].mxu0
  %241 = vmatprep.mubr.f32.mxu0 0.0
  %242 = vmatmul.mubr.f32.gmra.mrb[0].mxu0 %v78
  %v243 = vpop.f32.mrb[0].mxu0
  %v244 = vadd.f32 0.0, %v243
  %v245 = vpop.f32.mrb[0].mxu0
  %246 = vmatprep.mubr.f32.mxu0 0.0
  %247 = vmatmul.mubr.f32.gmra.mrb[0].mxu0 %v81
  %v248 = vpop.f32.mrb[0].mxu0
  %v249 = vadd.f32 0.0, %v248
  %v250 = vpop.f32.mrb[0].mxu0
  %251 = vmatprep.mubr.f32.mxu0 0.0
  %252 = vmatmul.mubr.f32.gmra.mrb[0].mxu0 %v84
  %v253 = vpop.f32.mrb[0].mxu0
  %v254 = vadd.f32 0.0, %v253
  %v255 = vpop.f32.mrb[0].mxu0
  %256 = vmatprep.mubr.f32.mxu0 0.0
  %257 = vmatmul.mubr.f32.gmra.mrb[0].mxu0 %v87
  %v258 = vpop.f32.mrb[0].mxu0
  %v259 = vadd.f32 0.0, %v258
  %v260 = vpop.f32.mrb[0].mxu0
  %261 = vmatprep.mubr.f32.mxu0 0.0
  %262 = vmatmul.mubr.f32.gmra.mrb[0].mxu0 %v90
  %v263 = vpop.f32.mrb[0].mxu0
  %v264 = vadd.f32 0.0, %v263
  %v265 = vpop.f32.mrb[0].mxu0
  %266 = vmatprep.mubr.f32.mxu0 0.0
  %267 = vmatmul.mubr.f32.gmra.mrb[0].mxu0 %v93
  %v268 = vpop.f32.mrb[0].mxu0
  %v269 = vadd.f32 0.0, %v268
  %v270 = vpop.f32.mrb[0].mxu0
  %271 = vmatprep.mubr.f32.mxu0 0.0
  %272 = vmatmul.mubr.f32.gmra.mrb[0].mxu0 %v96
  %v273 = vpop.f32.mrb[0].mxu0
  %v274 = vadd.f32 0.0, %v273
  %v275 = vpop.f32.mrb[0].mxu0
  %276 = vmatprep.mubr.f32.mxu0 0.0
  %277 = vmatmul.mubr.f32.gmra.mrb[0].mxu0 %v99
  %v278 = vpop.f32.mrb[0].mxu0
  %v279 = vadd.f32 0.0, %v278
  %v280 = vpop.f32.mrb[0].mxu0
  %281 = vmatprep.mubr.f32.mxu0 0.0
  %282 = vmatmul.mubr.f32.gmra.mrb[0].mxu0 %v102
  %v283 = vpop.f32.mrb[0].mxu0
  %v284 = vadd.f32 0.0, %v283
  %v285 = vpop.f32.mrb[0].mxu0
  %286 = vmatprep.mubr.f32.mxu0 0.0
  %287 = vmatmul.mubr.f32.gmra.mrb[0].mxu0 %v105
  %v288 = vpop.f32.mrb[0].mxu0
  %v289 = vadd.f32 0.0, %v288
  %v290 = vpop.f32.mrb[0].mxu0
  %291 = vmatprep.mubr.f32.mxu0 0.0
  %292 = vmatmul.mubr.f32.gmra.mrb[0].mxu0 %v108
  %v293 = vpop.f32.mrb[0].mxu0
  %v294 = vadd.f32 0.0, %v293
  %v295 = vpop.f32.mrb[0].mxu0
  %296 = vmatprep.mubr.f32.mxu0 0.0
  %297 = vmatmul.mubr.f32.gmra.mrb[0].mxu0 %v111
  %v298 = vpop.f32.mrb[0].mxu0
  %v299 = vadd.f32 0.0, %v298
  %v300 = vpop.f32.mrb[0].mxu0
  %301 = vmatprep.mubr.f32.mxu0 0.0
  %302 = vmatmul.mubr.f32.gmra.mrb[0].mxu0 %v114
  %v303 = vpop.f32.mrb[0].mxu0
  %v304 = vadd.f32 0.0, %v303
  %v305 = vpop.f32.mrb[0].mxu0
  %306 = vmatprep.mubr.f32.mxu0 0.0
  %307 = vmatmul.mubr.f32.gmra.mrb[0].mxu0 %v117
  %v308 = vpop.f32.mrb[0].mxu0
  %v309 = vadd.f32 0.0, %v308
  %v310 = vpop.f32.mrb[0].mxu0
  %311 = vmatprep.mubr.f32.mxu0 0.0
  %312 = vmatmul.mubr.f32.gmra.mrb[0].mxu0 %v120
  %v313 = vpop.f32.mrb[0].mxu0
  %v314 = vadd.f32 0.0, %v313
  %v315 = vpop.f32.mrb[0].mxu0
  %316 = vmatprep.mubr.f32.mxu0 0.0
  %317 = vmatmul.mubr.f32.gmra.mrb[0].mxu0 %v123
  %v318 = vpop.f32.mrb[0].mxu0
  %v319 = vadd.f32 0.0, %v318
  %v320 = vpop.f32.mrb[0].mxu0
  %321 = vmatprep.mubr.f32.mxu0 0.0
  %322 = vmatmul.mubr.f32.gmra.mrb[0].mxu0 %v126
  %v323 = vpop.f32.mrb[0].mxu0
  %v324 = vadd.f32 0.0, %v323
  %v325 = vpop.f32.mrb[0].mxu0
  %326 = vmatprep.mubr.f32.mxu0 0.0
  %327 = vmatmul.mubr.f32.gmra.mrb[0].mxu0 %v129
  %v328 = vpop.f32.mrb[0].mxu0
  %v329 = vadd.f32 0.0, %v328
  %v330 = vpop.f32.mrb[0].mxu0
  %331 = vmatprep.mubr.f32.mxu0 0.0
  %332 = vmatmul.mubr.f32.gmra.mrb[0].mxu0 %v132
  %v333 = vpop.f32.mrb[0].mxu0
  %v334 = vadd.f32 0.0, %v333
  %v335 = vpop.f32.mrb[0].mxu0
  %336 = vmatprep.mubr.f32.mxu0 0.0
  %337 = vmatmul.mubr.f32.gmra.mrb[0].mxu0 %v135
  %v338 = vpop.f32.mrb[0].mxu0
  %v339 = vadd.f32 0.0, %v338
  %v340 = vpop.f32.mrb[0].mxu0
  %341 = vmatprep.mubr.f32.mxu0 0.0
  %342 = vmatmul.mubr.f32.gmra.mrb[0].mxu0 %v138
  %v343 = vpop.f32.mrb[0].mxu0
  %v344 = vadd.f32 0.0, %v343
  %v345 = vpop.f32.mrb[0].mxu0
  %346 = vmatprep.mubr.f32.mxu0 0.0
  %347 = vmatmul.mubr.f32.gmra.mrb[0].mxu0 %v141
  %v348 = vpop.f32.mrb[0].mxu0
  %v349 = vadd.f32 0.0, %v348
  %v350 = vpop.f32.mrb[0].mxu0
  %351 = vmatprep.mubr.f32.mxu0 0.0
  %352 = vmatmul.mubr.f32.gmra.mrb[0].mxu0 %v144
  %v353 = vpop.f32.mrb[0].mxu0
  %v354 = vadd.f32 0.0, %v353
  %v355 = vpop.f32.mrb[0].mxu0
  %356 = vmatprep.mubr.f32.mxu0 0.0
  %357 = vmatmul.mubr.f32.gmra.mrb[0].mxu0 %v147
  %v358 = vpop.f32.mrb[0].mxu0
  %v359 = vadd.f32 0.0, %v358
  %v360 = vpop.f32.mrb[0].mxu0
  %361 = vmatprep.mubr.f32.mxu0 0.0
  %362 = vmatmul.mubr.f32.gmra.mrb[0].mxu0 %v150
  %v363 = vpop.f32.mrb[0].mxu0
  %v364 = vadd.f32 0.0, %v363
  %v365 = vpop.f32.mrb[0].mxu0
  %366 = vmatprep.mubr.f32.mxu0 0.0
  %367 = vmatmul.mubr.f32.gmra.mrb[0].mxu0 %v153
  %v368 = vpop.f32.mrb[0].mxu0
  %v369 = vadd.f32 0.0, %v368
  %v370 = vpop.f32.mrb[0].mxu0
  %371 = vmatprep.mubr.f32.mxu0 0.0
  %372 = vmatmul.mubr.f32.gmra.mrb[0].mxu0 %v156
  %v373 = vpop.f32.mrb[0].mxu0
  %v374 = vadd.f32 0.0, %v373
  %v375 = vpop.f32.mrb[0].mxu0
  %376 = vmatprep.mubr.f32.mxu0 0.0
  %377 = vmatmul.mubr.f32.gmra.mrb[0].mxu0 %v159
  %v378 = vpop.f32.mrb[0].mxu0
  %v379 = vadd.f32 0.0, %v378
  %v380 = vpop.f32.mrb[0].mxu0
  %381 = vmatprep.mubr.f32.mxu0 0.0
  %382 = vmatmul.mubr.f32.gmra.mrb[0].mxu0 %v162
  %v383 = vpop.f32.mrb[0].mxu0
  %v384 = vadd.f32 0.0, %v383
  %v385 = vpop.f32.mrb[0].mxu0
  %386 = vmatprep.mubr.f32.mxu0 0.0
  %387 = vmatmul.mubr.f32.gmra.mrb[0].mxu0 %v165
  %v388 = vpop.f32.mrb[0].mxu0
  %v389 = vadd.f32 0.0, %v388
  %v390 = vpop.f32.mrb[0].mxu0
  %391 = vdwg.mxu0
  %v392 = vmul.f32 %v38, %v38
  %v393 = vmul.f32 %v39, %v39
  %v394 = vmul.f32 %v40, %v40
  %v395 = vmul.f32 %v41, %v41
  %v396 = vmul.f32 %v42, %v42
  %v397 = vmul.f32 %v43, %v43
  %v398 = vmul.f32 %v44, %v44
  %v399 = vmul.f32 %v45, %v45
  %v400 = vmul.f32 %v46, %v46
  %v401 = vmul.f32 %v47, %v47
  %v402 = vmul.f32 %v48, %v48
  %v403 = vmul.f32 %v49, %v49
  %v404 = vmul.f32 %v50, %v50
  %v405 = vmul.f32 %v51, %v51
  %v406 = vmul.f32 %v52, %v52
  %v407 = vmul.f32 %v53, %v53
  %v408 = vmul.f32 %v54, %v54
  %v409 = vmul.f32 %v55, %v55
  %v410 = vmul.f32 %v56, %v56
  %v411 = vmul.f32 %v57, %v57
  %v412 = vmul.f32 %v58, %v58
  %v413 = vmul.f32 %v59, %v59
  %v414 = vmul.f32 %v60, %v60
  %v415 = vmul.f32 %v61, %v61
  %v416 = vmul.f32 %v62, %v62
  %v417 = vmul.f32 %v63, %v63
  %v418 = vmul.f32 %v64, %v64
  %v419 = vmul.f32 %v65, %v65
  %v420 = vmul.f32 %v66, %v66
  %v421 = vmul.f32 %v67, %v67
  %v422 = vmul.f32 %v68, %v68
  %v423 = vmul.f32 %v69, %v69
  %v425 = vsel %vm70, %v392, 0
  %v428 = vsel %vm70, %v393, 0
  %v431 = vsel %vm70, %v394, 0
  %v434 = vsel %vm70, %v395, 0
  %v437 = vsel %vm70, %v396, 0
  %v440 = vsel %vm70, %v397, 0
  %v443 = vsel %vm70, %v398, 0
  %v446 = vsel %vm70, %v399, 0
  %v449 = vsel %vm70, %v400, 0
  %v452 = vsel %vm70, %v401, 0
  %v455 = vsel %vm70, %v402, 0
  %v458 = vsel %vm70, %v403, 0
  %v461 = vsel %vm70, %v404, 0
  %v464 = vsel %vm70, %v405, 0
  %v467 = vsel %vm70, %v406, 0
  %v470 = vsel %vm70, %v407, 0
  %v473 = vsel %vm70, %v408, 0
  %v476 = vsel %vm70, %v409, 0
  %v479 = vsel %vm70, %v410, 0
  %v482 = vsel %vm70, %v411, 0
  %v485 = vsel %vm70, %v412, 0
  %v488 = vsel %vm70, %v413, 0
  %v491 = vsel %vm70, %v414, 0
  %v494 = vsel %vm70, %v415, 0
  %v497 = vsel %vm70, %v416, 0
  %v500 = vsel %vm70, %v417, 0
  %v503 = vsel %vm70, %v418, 0
  %v506 = vsel %vm70, %v419, 0
  %v509 = vsel %vm70, %v420, 0
  %v512 = vsel %vm70, %v421, 0
  %v515 = vsel %vm70, %v422, 0
  %v518 = vsel %vm70, %v423, 0
  %520 = vmatprep.subr.mxu0 0.0
  %521 = vmatpush1.msra.mxu0 0.03125
  %522 = vmatprep.subr.mxu0 0.0
  %523 = vmatpush1.msra.mxu0 0.03125
  %524 = vmatprep.subr.mxu0 0.0
  %525 = vmatpush1.msra.mxu0 0.03125
  %526 = vmatprep.subr.mxu0 0.0
  %527 = vmatpush1.msra.mxu0 0.03125
  %528 = vmatprep.subr.mxu0 0.0
  %529 = vmatpush1.msra.mxu0 0.0
  %530 = vmatprep.subr.mxu0 0.0
  %531 = vmatpush1.msra.mxu0 0.0
  %532 = vmatprep.subr.mxu0 0.0
  %533 = vmatpush1.msra.mxu0 0.0
  %534 = vmatprep.subr.mxu0 0.0
  %535 = vmatpush1.msra.mxu0 0.0
  %536 = vmatprep.subr.mxu0 0.0
  %537 = vmatpush1.msra.mxu0 0.0
  %538 = vmatprep.subr.mxu0 0.0
  %539 = vmatpush1.msra.mxu0 0.0
  %540 = vmatprep.subr.mxu0 0.0
  %541 = vmatpush1.msra.mxu0 0.0
  %542 = vmatprep.subr.mxu0 0.0
  %543 = vmatpush1.msra.mxu0 0.0
  %544 = vmatprep.subr.mxu0 0.0
  %545 = vmatpush1.msra.mxu0 0.0
  %546 = vmatprep.subr.mxu0 0.0
  %547 = vmatpush1.msra.mxu0 0.0
  %548 = vmatprep.subr.mxu0 0.0
  %549 = vmatpush1.msra.mxu0 0.0
  %550 = vmatprep.subr.mxu0 0.0
  %551 = vmatpush1.msra.mxu0 0.0
  %552 = vmatprep.subr.mxu0 0.0
  %553 = vmatpush1.msra.mxu0 0.0
  %554 = vmatprep.subr.mxu0 0.0
  %555 = vmatpush1.msra.mxu0 0.0
  %556 = vmatprep.subr.mxu0 0.0
  %557 = vmatpush1.msra.mxu0 0.0
  %558 = vmatprep.subr.mxu0 0.0
  %559 = vmatpush1.msra.mxu0 0.0
  %560 = vmatprep.subr.mxu0 0.0
  %561 = vmatpush1.msra.mxu0 0.0
  %562 = vmatprep.subr.mxu0 0.0
  %563 = vmatpush1.msra.mxu0 0.0
  %564 = vmatprep.subr.mxu0 0.0
  %565 = vmatpush1.msra.mxu0 0.0
  %566 = vmatprep.subr.mxu0 0.0
  %567 = vmatpush1.msra.mxu0 0.0
  %568 = vmatprep.subr.mxu0 0.0
  %569 = vmatpush1.msra.mxu0 0.0
  %570 = vmatprep.subr.mxu0 0.0
  %571 = vmatpush1.msra.mxu0 0.0
  %572 = vmatprep.subr.mxu0 0.0
  %573 = vmatpush1.msra.mxu0 0.0
  %574 = vmatprep.subr.mxu0 0.0
  %575 = vmatpush1.msra.mxu0 0.0
  %576 = vmatprep.subr.mxu0 0.0
  %577 = vmatpush1.msra.mxu0 0.0
  %578 = vmatprep.subr.mxu0 0.0
  %579 = vmatpush1.msra.mxu0 0.0
  %580 = vmatprep.subr.mxu0 0.0
  %581 = vmatpush1.msra.mxu0 0.0
  %582 = vmatprep.subr.mxu0 0.0
  %583 = vmatpush1.msra.mxu0 0.0
  %584 = vmatprep.mubr.f32.mxu0 0.0
  %585 = vmatmul.mubr.f32.gmra.mrb[0].mxu0 %v425
  %v586 = vpop.f32.mrb[0].mxu0
  %v587 = vadd.f32 0.0, %v586
  %v588 = vpop.f32.mrb[0].mxu0
  %589 = vmatprep.mubr.f32.mxu0 0.0
  %590 = vmatmul.mubr.f32.gmra.mrb[0].mxu0 %v428
  %v591 = vpop.f32.mrb[0].mxu0
  %v592 = vadd.f32 0.0, %v591
  %v593 = vpop.f32.mrb[0].mxu0
  %594 = vmatprep.mubr.f32.mxu0 0.0
  %595 = vmatmul.mubr.f32.gmra.mrb[0].mxu0 %v431
  %v596 = vpop.f32.mrb[0].mxu0
  %v597 = vadd.f32 0.0, %v596
  %v598 = vpop.f32.mrb[0].mxu0
  %599 = vmatprep.mubr.f32.mxu0 0.0
  %600 = vmatmul.mubr.f32.gmra.mrb[0].mxu0 %v434
  %v601 = vpop.f32.mrb[0].mxu0
  %v602 = vadd.f32 0.0, %v601
  %v603 = vpop.f32.mrb[0].mxu0
  %604 = vmatprep.mubr.f32.mxu0 0.0
  %605 = vmatmul.mubr.f32.gmra.mrb[0].mxu0 %v437
  %v606 = vpop.f32.mrb[0].mxu0
  %v607 = vadd.f32 0.0, %v606
  %v608 = vpop.f32.mrb[0].mxu0
  %609 = vmatprep.mubr.f32.mxu0 0.0
  %610 = vmatmul.mubr.f32.gmra.mrb[0].mxu0 %v440
  %v611 = vpop.f32.mrb[0].mxu0
  %v612 = vadd.f32 0.0, %v611
  %v613 = vpop.f32.mrb[0].mxu0
  %614 = vmatprep.mubr.f32.mxu0 0.0
  %615 = vmatmul.mubr.f32.gmra.mrb[0].mxu0 %v443
  %v616 = vpop.f32.mrb[0].mxu0
  %v617 = vadd.f32 0.0, %v616
  %v618 = vpop.f32.mrb[0].mxu0
  %619 = vmatprep.mubr.f32.mxu0 0.0
  %620 = vmatmul.mubr.f32.gmra.mrb[0].mxu0 %v446
  %v621 = vpop.f32.mrb[0].mxu0
  %v622 = vadd.f32 0.0, %v621
  %v623 = vpop.f32.mrb[0].mxu0
  %624 = vmatprep.mubr.f32.mxu0 0.0
  %625 = vmatmul.mubr.f32.gmra.mrb[0].mxu0 %v449
  %v626 = vpop.f32.mrb[0].mxu0
  %v627 = vadd.f32 0.0, %v626
  %v628 = vpop.f32.mrb[0].mxu0
  %629 = vmatprep.mubr.f32.mxu0 0.0
  %630 = vmatmul.mubr.f32.gmra.mrb[0].mxu0 %v452
  %v631 = vpop.f32.mrb[0].mxu0
  %v632 = vadd.f32 0.0, %v631
  %v633 = vpop.f32.mrb[0].mxu0
  %634 = vmatprep.mubr.f32.mxu0 0.0
  %635 = vmatmul.mubr.f32.gmra.mrb[0].mxu0 %v455
  %v636 = vpop.f32.mrb[0].mxu0
  %v637 = vadd.f32 0.0, %v636
  %v638 = vpop.f32.mrb[0].mxu0
  %639 = vmatprep.mubr.f32.mxu0 0.0
  %640 = vmatmul.mubr.f32.gmra.mrb[0].mxu0 %v458
  %v641 = vpop.f32.mrb[0].mxu0
  %v642 = vadd.f32 0.0, %v641
  %v643 = vpop.f32.mrb[0].mxu0
  %644 = vmatprep.mubr.f32.mxu0 0.0
  %645 = vmatmul.mubr.f32.gmra.mrb[0].mxu0 %v461
  %v646 = vpop.f32.mrb[0].mxu0
  %v647 = vadd.f32 0.0, %v646
  %v648 = vpop.f32.mrb[0].mxu0
  %649 = vmatprep.mubr.f32.mxu0 0.0
  %650 = vmatmul.mubr.f32.gmra.mrb[0].mxu0 %v464
  %v651 = vpop.f32.mrb[0].mxu0
  %v652 = vadd.f32 0.0, %v651
  %v653 = vpop.f32.mrb[0].mxu0
  %654 = vmatprep.mubr.f32.mxu0 0.0
  %655 = vmatmul.mubr.f32.gmra.mrb[0].mxu0 %v467
  %v656 = vpop.f32.mrb[0].mxu0
  %v657 = vadd.f32 0.0, %v656
  %v658 = vpop.f32.mrb[0].mxu0
  %659 = vmatprep.mubr.f32.mxu0 0.0
  %660 = vmatmul.mubr.f32.gmra.mrb[0].mxu0 %v470
  %v661 = vpop.f32.mrb[0].mxu0
  %v662 = vadd.f32 0.0, %v661
  %v663 = vpop.f32.mrb[0].mxu0
  %664 = vmatprep.mubr.f32.mxu0 0.0
  %665 = vmatmul.mubr.f32.gmra.mrb[0].mxu0 %v473
  %v666 = vpop.f32.mrb[0].mxu0
  %v667 = vadd.f32 0.0, %v666
  %v668 = vpop.f32.mrb[0].mxu0
  %669 = vmatprep.mubr.f32.mxu0 0.0
  %670 = vmatmul.mubr.f32.gmra.mrb[0].mxu0 %v476
  %v671 = vpop.f32.mrb[0].mxu0
  %v672 = vadd.f32 0.0, %v671
  %v673 = vpop.f32.mrb[0].mxu0
  %674 = vmatprep.mubr.f32.mxu0 0.0
  %675 = vmatmul.mubr.f32.gmra.mrb[0].mxu0 %v479
  %v676 = vpop.f32.mrb[0].mxu0
  %v677 = vadd.f32 0.0, %v676
  %v678 = vpop.f32.mrb[0].mxu0
  %679 = vmatprep.mubr.f32.mxu0 0.0
  %680 = vmatmul.mubr.f32.gmra.mrb[0].mxu0 %v482
  %v681 = vpop.f32.mrb[0].mxu0
  %v682 = vadd.f32 0.0, %v681
  %v683 = vpop.f32.mrb[0].mxu0
  %684 = vmatprep.mubr.f32.mxu0 0.0
  %685 = vmatmul.mubr.f32.gmra.mrb[0].mxu0 %v485
  %v686 = vpop.f32.mrb[0].mxu0
  %v687 = vadd.f32 0.0, %v686
  %v688 = vpop.f32.mrb[0].mxu0
  %689 = vmatprep.mubr.f32.mxu0 0.0
  %690 = vmatmul.mubr.f32.gmra.mrb[0].mxu0 %v488
  %v691 = vpop.f32.mrb[0].mxu0
  %v692 = vadd.f32 0.0, %v691
  %v693 = vpop.f32.mrb[0].mxu0
  %694 = vmatprep.mubr.f32.mxu0 0.0
  %695 = vmatmul.mubr.f32.gmra.mrb[0].mxu0 %v491
  %v696 = vpop.f32.mrb[0].mxu0
  %v697 = vadd.f32 0.0, %v696
  %v698 = vpop.f32.mrb[0].mxu0
  %699 = vmatprep.mubr.f32.mxu0 0.0
  %700 = vmatmul.mubr.f32.gmra.mrb[0].mxu0 %v494
  %v701 = vpop.f32.mrb[0].mxu0
  %v702 = vadd.f32 0.0, %v701
  %v703 = vpop.f32.mrb[0].mxu0
  %704 = vmatprep.mubr.f32.mxu0 0.0
  %705 = vmatmul.mubr.f32.gmra.mrb[0].mxu0 %v497
  %v706 = vpop.f32.mrb[0].mxu0
  %v707 = vadd.f32 0.0, %v706
  %v708 = vpop.f32.mrb[0].mxu0
  %709 = vmatprep.mubr.f32.mxu0 0.0
  %710 = vmatmul.mubr.f32.gmra.mrb[0].mxu0 %v500
  %v711 = vpop.f32.mrb[0].mxu0
  %v712 = vadd.f32 0.0, %v711
  %v713 = vpop.f32.mrb[0].mxu0
  %714 = vmatprep.mubr.f32.mxu0 0.0
  %715 = vmatmul.mubr.f32.gmra.mrb[0].mxu0 %v503
  %v716 = vpop.f32.mrb[0].mxu0
  %v717 = vadd.f32 0.0, %v716
  %v718 = vpop.f32.mrb[0].mxu0
  %719 = vmatprep.mubr.f32.mxu0 0.0
  %720 = vmatmul.mubr.f32.gmra.mrb[0].mxu0 %v506
  %v721 = vpop.f32.mrb[0].mxu0
  %v722 = vadd.f32 0.0, %v721
  %v723 = vpop.f32.mrb[0].mxu0
  %724 = vmatprep.mubr.f32.mxu0 0.0
  %725 = vmatmul.mubr.f32.gmra.mrb[0].mxu0 %v509
  %v726 = vpop.f32.mrb[0].mxu0
  %v727 = vadd.f32 0.0, %v726
  %v728 = vpop.f32.mrb[0].mxu0
  %729 = vmatprep.mubr.f32.mxu0 0.0
  %730 = vmatmul.mubr.f32.gmra.mrb[0].mxu0 %v512
  %v731 = vpop.f32.mrb[0].mxu0
  %v732 = vadd.f32 0.0, %v731
  %v733 = vpop.f32.mrb[0].mxu0
  %734 = vmatprep.mubr.f32.mxu0 0.0
  %735 = vmatmul.mubr.f32.gmra.mrb[0].mxu0 %v515
  %v736 = vpop.f32.mrb[0].mxu0
  %v737 = vadd.f32 0.0, %v736
  %v738 = vpop.f32.mrb[0].mxu0
  %739 = vmatprep.mubr.f32.mxu0 0.0
  %740 = vmatmul.mubr.f32.gmra.mrb[0].mxu0 %v518
  %v741 = vpop.f32.mrb[0].mxu0
  %v742 = vadd.f32 0.0, %v741
  %v743 = vpop.f32.mrb[0].mxu0
  %744 = vdwg.mxu0
  %v745 = vmul.f32 %v234, %v234
  %v746 = vmul.f32 %v239, %v239
  %v747 = vmul.f32 %v244, %v244
  %v748 = vmul.f32 %v249, %v249
  %v749 = vmul.f32 %v254, %v254
  %v750 = vmul.f32 %v259, %v259
  %v751 = vmul.f32 %v264, %v264
  %v752 = vmul.f32 %v269, %v269
  %v753 = vmul.f32 %v274, %v274
  %v754 = vmul.f32 %v279, %v279
  %v755 = vmul.f32 %v284, %v284
  %v756 = vmul.f32 %v289, %v289
  %v757 = vmul.f32 %v294, %v294
  %v758 = vmul.f32 %v299, %v299
  %v759 = vmul.f32 %v304, %v304
  %v760 = vmul.f32 %v309, %v309
  %v761 = vmul.f32 %v314, %v314
  %v762 = vmul.f32 %v319, %v319
  %v763 = vmul.f32 %v324, %v324
  %v764 = vmul.f32 %v329, %v329
  %v765 = vmul.f32 %v334, %v334
  %v766 = vmul.f32 %v339, %v339
  %v767 = vmul.f32 %v344, %v344
  %v768 = vmul.f32 %v349, %v349
  %v769 = vmul.f32 %v354, %v354
  %v770 = vmul.f32 %v359, %v359
  %v771 = vmul.f32 %v364, %v364
  %v772 = vmul.f32 %v369, %v369
  %v773 = vmul.f32 %v374, %v374
  %v774 = vmul.f32 %v379, %v379
  %v775 = vmul.f32 %v384, %v384
  %v776 = vmul.f32 %v389, %v389
  %v777 = vsub.f32 %v587, %v745
  %v778 = vsub.f32 %v592, %v746
  %v779 = vsub.f32 %v597, %v747
  %v780 = vsub.f32 %v602, %v748
  %v781 = vsub.f32 %v607, %v749
  %v782 = vsub.f32 %v612, %v750
  %v783 = vsub.f32 %v617, %v751
  %v784 = vsub.f32 %v622, %v752
  %v785 = vsub.f32 %v627, %v753
  %v786 = vsub.f32 %v632, %v754
  %v787 = vsub.f32 %v637, %v755
  %v788 = vsub.f32 %v642, %v756
  %v789 = vsub.f32 %v647, %v757
  %v790 = vsub.f32 %v652, %v758
  %v791 = vsub.f32 %v657, %v759
  %v792 = vsub.f32 %v662, %v760
  %v793 = vsub.f32 %v667, %v761
  %v794 = vsub.f32 %v672, %v762
  %v795 = vsub.f32 %v677, %v763
  %v796 = vsub.f32 %v682, %v764
  %v797 = vsub.f32 %v687, %v765
  %v798 = vsub.f32 %v692, %v766
  %v799 = vsub.f32 %v697, %v767
  %v800 = vsub.f32 %v702, %v768
  %v801 = vsub.f32 %v707, %v769
  %v802 = vsub.f32 %v712, %v770
  %v803 = vsub.f32 %v717, %v771
  %v804 = vsub.f32 %v722, %v772
  %v805 = vsub.f32 %v727, %v773
  %v806 = vsub.f32 %v732, %v774
  %v807 = vsub.f32 %v737, %v775
  %v808 = vsub.f32 %v742, %v776
  %v809 = vmax.f32 %v777, 0.0
  %v810 = vmax.f32 %v778, 0.0
  %v811 = vmax.f32 %v779, 0.0
  %v812 = vmax.f32 %v780, 0.0
  %v813 = vmax.f32 %v781, 0.0
  %v814 = vmax.f32 %v782, 0.0
  %v815 = vmax.f32 %v783, 0.0
  %v816 = vmax.f32 %v784, 0.0
  %v817 = vmax.f32 %v785, 0.0
  %v818 = vmax.f32 %v786, 0.0
  %v819 = vmax.f32 %v787, 0.0
  %v820 = vmax.f32 %v788, 0.0
  %v821 = vmax.f32 %v789, 0.0
  %v822 = vmax.f32 %v790, 0.0
  %v823 = vmax.f32 %v791, 0.0
  %v824 = vmax.f32 %v792, 0.0
  %v825 = vmax.f32 %v793, 0.0
  %v826 = vmax.f32 %v794, 0.0
  %v827 = vmax.f32 %v795, 0.0
  %v828 = vmax.f32 %v796, 0.0
  %v829 = vmax.f32 %v797, 0.0
  %v830 = vmax.f32 %v798, 0.0
  %v831 = vmax.f32 %v799, 0.0
  %v832 = vmax.f32 %v800, 0.0
  %v833 = vmax.f32 %v801, 0.0
  %v834 = vmax.f32 %v802, 0.0
  %v835 = vmax.f32 %v803, 0.0
  %v836 = vmax.f32 %v804, 0.0
  %v837 = vmax.f32 %v805, 0.0
  %v838 = vmax.f32 %v806, 0.0
  %v839 = vmax.f32 %v807, 0.0
  %v840 = vmax.f32 %v808, 0.0
  %v841 = vsub.f32 %v38, %v234
  %v842 = vsub.f32 %v39, %v239
  %v843 = vsub.f32 %v40, %v244
  %v844 = vsub.f32 %v41, %v249
  %v845 = vsub.f32 %v42, %v254
  %v846 = vsub.f32 %v43, %v259
  %v847 = vsub.f32 %v44, %v264
  %v848 = vsub.f32 %v45, %v269
  %v849 = vsub.f32 %v46, %v274
  %v850 = vsub.f32 %v47, %v279
  %v851 = vsub.f32 %v48, %v284
  %v852 = vsub.f32 %v49, %v289
  %v853 = vsub.f32 %v50, %v294
  %v854 = vsub.f32 %v51, %v299
  %v855 = vsub.f32 %v52, %v304
  %v856 = vsub.f32 %v53, %v309
  %v857 = vsub.f32 %v54, %v314
  %v858 = vsub.f32 %v55, %v319
  %v859 = vsub.f32 %v56, %v324
  %v860 = vsub.f32 %v57, %v329
  %v861 = vsub.f32 %v58, %v334
  %v862 = vsub.f32 %v59, %v339
  %v863 = vsub.f32 %v60, %v344
  %v864 = vsub.f32 %v61, %v349
  %v865 = vsub.f32 %v62, %v354
  %v866 = vsub.f32 %v63, %v359
  %v867 = vsub.f32 %v64, %v364
  %v868 = vsub.f32 %v65, %v369
  %v869 = vsub.f32 %v66, %v374
  %v870 = vsub.f32 %v67, %v379
  %v871 = vsub.f32 %v68, %v384
  %v872 = vsub.f32 %v69, %v389
  %v873 = vadd.f32 %v809, 1e-12
  %v874 = vadd.f32 %v810, 1e-12
  %v875 = vadd.f32 %v811, 1e-12
  %v876 = vadd.f32 %v812, 1e-12
  %v877 = vadd.f32 %v813, 1e-12
  %v878 = vadd.f32 %v814, 1e-12
  %v879 = vadd.f32 %v815, 1e-12
  %v880 = vadd.f32 %v816, 1e-12
  %v881 = vadd.f32 %v817, 1e-12
  %v882 = vadd.f32 %v818, 1e-12
  %v883 = vadd.f32 %v819, 1e-12
  %v884 = vadd.f32 %v820, 1e-12
  %v885 = vadd.f32 %v821, 1e-12
  %v886 = vadd.f32 %v822, 1e-12
  %v887 = vadd.f32 %v823, 1e-12
  %v888 = vadd.f32 %v824, 1e-12
  %v889 = vadd.f32 %v825, 1e-12
  %v890 = vadd.f32 %v826, 1e-12
  %v891 = vadd.f32 %v827, 1e-12
  %v892 = vadd.f32 %v828, 1e-12
  %v893 = vadd.f32 %v829, 1e-12
  %v894 = vadd.f32 %v830, 1e-12
  %v895 = vadd.f32 %v831, 1e-12
  %v896 = vadd.f32 %v832, 1e-12
  %v897 = vadd.f32 %v833, 1e-12
  %v898 = vadd.f32 %v834, 1e-12
  %v899 = vadd.f32 %v835, 1e-12
  %v900 = vadd.f32 %v836, 1e-12
  %v901 = vadd.f32 %v837, 1e-12
  %v902 = vadd.f32 %v838, 1e-12
  %v903 = vadd.f32 %v839, 1e-12
  %v904 = vadd.f32 %v840, 1e-12
  %v905 = vrsqrt.pop %v873
  %v906 = vrsqrt.pop %v874
  %v907 = vrsqrt.pop %v875
  %v908 = vrsqrt.pop %v876
  %v909 = vrsqrt.pop %v877
  %v910 = vrsqrt.pop %v878
  %v911 = vrsqrt.pop %v879
  %v912 = vrsqrt.pop %v880
  %v913 = vrsqrt.pop %v881
  %v914 = vrsqrt.pop %v882
  %v915 = vrsqrt.pop %v883
  %v916 = vrsqrt.pop %v884
  %v917 = vrsqrt.pop %v885
  %v918 = vrsqrt.pop %v886
  %v919 = vrsqrt.pop %v887
  %v920 = vrsqrt.pop %v888
  %v921 = vrsqrt.pop %v889
  %v922 = vrsqrt.pop %v890
  %v923 = vrsqrt.pop %v891
  %v924 = vrsqrt.pop %v892
  %v925 = vrsqrt.pop %v893
  %v926 = vrsqrt.pop %v894
  %v927 = vrsqrt.pop %v895
  %v928 = vrsqrt.pop %v896
  %v929 = vrsqrt.pop %v897
  %v930 = vrsqrt.pop %v898
  %v931 = vrsqrt.pop %v899
  %v932 = vrsqrt.pop %v900
  %v933 = vrsqrt.pop %v901
  %v934 = vrsqrt.pop %v902
  %v935 = vrsqrt.pop %v903
  %v936 = vrsqrt.pop %v904
  %v937 = vmul.f32 %v841, %v905
  %v938 = vmul.f32 %v842, %v906
  %v939 = vmul.f32 %v843, %v907
  %v940 = vmul.f32 %v844, %v908
  %v941 = vmul.f32 %v845, %v909
  %v942 = vmul.f32 %v846, %v910
  %v943 = vmul.f32 %v847, %v911
  %v944 = vmul.f32 %v848, %v912
  %v945 = vmul.f32 %v849, %v913
  %v946 = vmul.f32 %v850, %v914
  %v947 = vmul.f32 %v851, %v915
  %v948 = vmul.f32 %v852, %v916
  %v949 = vmul.f32 %v853, %v917
  %v950 = vmul.f32 %v854, %v918
  %v951 = vmul.f32 %v855, %v919
  %v952 = vmul.f32 %v856, %v920
  %v953 = vmul.f32 %v857, %v921
  %v954 = vmul.f32 %v858, %v922
  %v955 = vmul.f32 %v859, %v923
  %v956 = vmul.f32 %v860, %v924
  %v957 = vmul.f32 %v861, %v925
  %v958 = vmul.f32 %v862, %v926
  %v959 = vmul.f32 %v863, %v927
  %v960 = vmul.f32 %v864, %v928
  %v961 = vmul.f32 %v865, %v929
  %v962 = vmul.f32 %v866, %v930
  %v963 = vmul.f32 %v867, %v931
  %v964 = vmul.f32 %v868, %v932
  %v965 = vmul.f32 %v869, %v933
  %v966 = vmul.f32 %v870, %v934
  %v967 = vmul.f32 %v871, %v935
  %v968 = vmul.f32 %v872, %v936
  %v969 = vlaneseq
  %v970 = vshrl.u32 %v969, 7
  %v971 = vsub.s32 0, %v970
  %v972 = vrot.slane %v29, %v971
  %v973 = vmul.f32 %v972, %v937
  %v974 = vmul.f32 %v972, %v938
  %v975 = vmul.f32 %v972, %v939
  %v976 = vmul.f32 %v972, %v940
  %v977 = vmul.f32 %v972, %v941
  %v978 = vmul.f32 %v972, %v942
  %v979 = vmul.f32 %v972, %v943
  %v980 = vmul.f32 %v972, %v944
  %v981 = vmul.f32 %v972, %v945
  %v982 = vmul.f32 %v972, %v946
  %v983 = vmul.f32 %v972, %v947
  %v984 = vmul.f32 %v972, %v948
  %v985 = vmul.f32 %v972, %v949
  %v986 = vmul.f32 %v972, %v950
  %v987 = vmul.f32 %v972, %v951
  %v988 = vmul.f32 %v972, %v952
  %v989 = vmul.f32 %v972, %v953
  %v990 = vmul.f32 %v972, %v954
  %v991 = vmul.f32 %v972, %v955
  %v992 = vmul.f32 %v972, %v956
  %v993 = vmul.f32 %v972, %v957
  %v994 = vmul.f32 %v972, %v958
  %v995 = vmul.f32 %v972, %v959
  %v996 = vmul.f32 %v972, %v960
  %v997 = vmul.f32 %v972, %v961
  %v998 = vmul.f32 %v972, %v962
  %v999 = vmul.f32 %v972, %v963
  %v1000 = vmul.f32 %v972, %v964
  %v1001 = vmul.f32 %v972, %v965
  %v1002 = vmul.f32 %v972, %v966
  %v1003 = vmul.f32 %v972, %v967
  %v1004 = vmul.f32 %v972, %v968
  %v1005 = vlaneseq
  %v1006 = vshrl.u32 %v1005, 7
  %v1007 = vsub.s32 0, %v1006
  %v1008 = vrot.slane %v30, %v1007
  %v1009 = vadd.f32 %v973, %v1008
  %v1010 = vadd.f32 %v974, %v1008
  %v1011 = vadd.f32 %v975, %v1008
  %v1012 = vadd.f32 %v976, %v1008
  %v1013 = vadd.f32 %v977, %v1008
  %v1014 = vadd.f32 %v978, %v1008
  %v1015 = vadd.f32 %v979, %v1008
  %v1016 = vadd.f32 %v980, %v1008
  %v1017 = vadd.f32 %v981, %v1008
  %v1018 = vadd.f32 %v982, %v1008
  %v1019 = vadd.f32 %v983, %v1008
  %v1020 = vadd.f32 %v984, %v1008
  %v1021 = vadd.f32 %v985, %v1008
  %v1022 = vadd.f32 %v986, %v1008
  %v1023 = vadd.f32 %v987, %v1008
  %v1024 = vadd.f32 %v988, %v1008
  %v1025 = vadd.f32 %v989, %v1008
  %v1026 = vadd.f32 %v990, %v1008
  %v1027 = vadd.f32 %v991, %v1008
  %v1028 = vadd.f32 %v992, %v1008
  %v1029 = vadd.f32 %v993, %v1008
  %v1030 = vadd.f32 %v994, %v1008
  %v1031 = vadd.f32 %v995, %v1008
  %v1032 = vadd.f32 %v996, %v1008
  %v1033 = vadd.f32 %v997, %v1008
  %v1034 = vadd.f32 %v998, %v1008
  %v1035 = vadd.f32 %v999, %v1008
  %v1036 = vadd.f32 %v1000, %v1008
  %v1037 = vadd.f32 %v1001, %v1008
  %v1038 = vadd.f32 %v1002, %v1008
  %v1039 = vadd.f32 %v1003, %v1008
  %v1040 = vadd.f32 %v1004, %v1008
  %v1041 = vmax.f32 %v1009, 0.0
  %v1042 = vmax.f32 %v1010, 0.0
  %v1043 = vmax.f32 %v1011, 0.0
  %v1044 = vmax.f32 %v1012, 0.0
  %v1045 = vmax.f32 %v1013, 0.0
  %v1046 = vmax.f32 %v1014, 0.0
  %v1047 = vmax.f32 %v1015, 0.0
  %v1048 = vmax.f32 %v1016, 0.0
  %v1049 = vmax.f32 %v1017, 0.0
  %v1050 = vmax.f32 %v1018, 0.0
  %v1051 = vmax.f32 %v1019, 0.0
  %v1052 = vmax.f32 %v1020, 0.0
  %v1053 = vmax.f32 %v1021, 0.0
  %v1054 = vmax.f32 %v1022, 0.0
  %v1055 = vmax.f32 %v1023, 0.0
  %v1056 = vmax.f32 %v1024, 0.0
  %v1057 = vmax.f32 %v1025, 0.0
  %v1058 = vmax.f32 %v1026, 0.0
  %v1059 = vmax.f32 %v1027, 0.0
  %v1060 = vmax.f32 %v1028, 0.0
  %v1061 = vmax.f32 %v1029, 0.0
  %v1062 = vmax.f32 %v1030, 0.0
  %v1063 = vmax.f32 %v1031, 0.0
  %v1064 = vmax.f32 %v1032, 0.0
  %v1065 = vmax.f32 %v1033, 0.0
  %v1066 = vmax.f32 %v1034, 0.0
  %v1067 = vmax.f32 %v1035, 0.0
  %v1068 = vmax.f32 %v1036, 0.0
  %v1069 = vmax.f32 %v1037, 0.0
  %v1070 = vmax.f32 %v1038, 0.0
  %v1071 = vmax.f32 %v1039, 0.0
  %v1072 = vmax.f32 %v1040, 0.0
  %v1073 = vld [vmem:[%s5] sm:$0xff]
  %v1074 = vld [vmem:[%s5 + $0x8] sm:$0xff]
  %v1075 = vld [vmem:[%s5 + $0x10] sm:$0xff]
  %v1076 = vld [vmem:[%s5 + $0x18] sm:$0xff]
  %v1077 = vlaneseq
  %v1078 = vshrl.u32 %v1077, 7
  %v1079 = vsub.s32 0, %v1078
  %v1080 = vrot.slane %v31, %v1079
  %v1082 = vsel %vm70, %v1041, 0
  %v1085 = vsel %vm70, %v1042, 0
  %v1088 = vsel %vm70, %v1043, 0
  %v1091 = vsel %vm70, %v1044, 0
  %v1094 = vsel %vm70, %v1045, 0
  %v1097 = vsel %vm70, %v1046, 0
  %v1100 = vsel %vm70, %v1047, 0
  %v1103 = vsel %vm70, %v1048, 0
  %v1106 = vsel %vm70, %v1049, 0
  %v1109 = vsel %vm70, %v1050, 0
  %v1112 = vsel %vm70, %v1051, 0
  %v1115 = vsel %vm70, %v1052, 0
  %v1118 = vsel %vm70, %v1053, 0
  %v1121 = vsel %vm70, %v1054, 0
  %v1124 = vsel %vm70, %v1055, 0
  %v1127 = vsel %vm70, %v1056, 0
  %v1130 = vsel %vm70, %v1057, 0
  %v1133 = vsel %vm70, %v1058, 0
  %v1136 = vsel %vm70, %v1059, 0
  %v1139 = vsel %vm70, %v1060, 0
  %v1142 = vsel %vm70, %v1061, 0
  %v1145 = vsel %vm70, %v1062, 0
  %v1148 = vsel %vm70, %v1063, 0
  %v1151 = vsel %vm70, %v1064, 0
  %v1154 = vsel %vm70, %v1065, 0
  %v1157 = vsel %vm70, %v1066, 0
  %v1160 = vsel %vm70, %v1067, 0
  %v1163 = vsel %vm70, %v1068, 0
  %v1166 = vsel %vm70, %v1069, 0
  %v1169 = vsel %vm70, %v1070, 0
  %v1172 = vsel %vm70, %v1071, 0
  %v1175 = vsel %vm70, %v1072, 0
  %1177 = vmatprep.subr.mxu0 0.0
  %1178 = vmatpush1.msra.mxu0 %v1073
  %1179 = vmatprep.subr.mxu0 0.0
  %1180 = vmatpush1.msra.mxu0 %v1074
  %1181 = vmatprep.subr.mxu0 0.0
  %1182 = vmatpush1.msra.mxu0 %v1075
  %1183 = vmatprep.subr.mxu0 0.0
  %1184 = vmatpush1.msra.mxu0 %v1076
  %1185 = vmatprep.subr.mxu0 0.0
  %1186 = vmatpush1.msra.mxu0 0.0
  %1187 = vmatprep.subr.mxu0 0.0
  %1188 = vmatpush1.msra.mxu0 0.0
  %1189 = vmatprep.subr.mxu0 0.0
  %1190 = vmatpush1.msra.mxu0 0.0
  %1191 = vmatprep.subr.mxu0 0.0
  %1192 = vmatpush1.msra.mxu0 0.0
  %1193 = vmatprep.subr.mxu0 0.0
  %1194 = vmatpush1.msra.mxu0 0.0
  %1195 = vmatprep.subr.mxu0 0.0
  %1196 = vmatpush1.msra.mxu0 0.0
  %1197 = vmatprep.subr.mxu0 0.0
  %1198 = vmatpush1.msra.mxu0 0.0
  %1199 = vmatprep.subr.mxu0 0.0
  %1200 = vmatpush1.msra.mxu0 0.0
  %1201 = vmatprep.subr.mxu0 0.0
  %1202 = vmatpush1.msra.mxu0 0.0
  %1203 = vmatprep.subr.mxu0 0.0
  %1204 = vmatpush1.msra.mxu0 0.0
  %1205 = vmatprep.subr.mxu0 0.0
  %1206 = vmatpush1.msra.mxu0 0.0
  %1207 = vmatprep.subr.mxu0 0.0
  %1208 = vmatpush1.msra.mxu0 0.0
  %1209 = vmatprep.subr.mxu0 0.0
  %1210 = vmatpush1.msra.mxu0 0.0
  %1211 = vmatprep.subr.mxu0 0.0
  %1212 = vmatpush1.msra.mxu0 0.0
  %1213 = vmatprep.subr.mxu0 0.0
  %1214 = vmatpush1.msra.mxu0 0.0
  %1215 = vmatprep.subr.mxu0 0.0
  %1216 = vmatpush1.msra.mxu0 0.0
  %1217 = vmatprep.subr.mxu0 0.0
  %1218 = vmatpush1.msra.mxu0 0.0
  %1219 = vmatprep.subr.mxu0 0.0
  %1220 = vmatpush1.msra.mxu0 0.0
  %1221 = vmatprep.subr.mxu0 0.0
  %1222 = vmatpush1.msra.mxu0 0.0
  %1223 = vmatprep.subr.mxu0 0.0
  %1224 = vmatpush1.msra.mxu0 0.0
  %1225 = vmatprep.subr.mxu0 0.0
  %1226 = vmatpush1.msra.mxu0 0.0
  %1227 = vmatprep.subr.mxu0 0.0
  %1228 = vmatpush1.msra.mxu0 0.0
  %1229 = vmatprep.subr.mxu0 0.0
  %1230 = vmatpush1.msra.mxu0 0.0
  %1231 = vmatprep.subr.mxu0 0.0
  %1232 = vmatpush1.msra.mxu0 0.0
  %1233 = vmatprep.subr.mxu0 0.0
  %1234 = vmatpush1.msra.mxu0 0.0
  %1235 = vmatprep.subr.mxu0 0.0
  %1236 = vmatpush1.msra.mxu0 0.0
  %1237 = vmatprep.subr.mxu0 0.0
  %1238 = vmatpush1.msra.mxu0 0.0
  %1239 = vmatprep.subr.mxu0 0.0
  %1240 = vmatpush1.msra.mxu0 0.0
  %1241 = vmatprep.mubr.f32.mxu0 0.0
  %1242 = vmatmul.mubr.f32.gmra.mrb[0].mxu0 %v1082
  %v1243 = vpop.f32.mrb[0].mxu0
  %v1244 = vadd.f32 %v1080, %v1243
  %v1245 = vpop.f32.mrb[0].mxu0
  %1246 = vmatprep.mubr.f32.mxu0 0.0
  %1247 = vmatmul.mubr.f32.gmra.mrb[0].mxu0 %v1085
  %v1248 = vpop.f32.mrb[0].mxu0
  %v1249 = vadd.f32 %v1080, %v1248
  %v1250 = vpop.f32.mrb[0].mxu0
  %1251 = vmatprep.mubr.f32.mxu0 0.0
  %1252 = vmatmul.mubr.f32.gmra.mrb[0].mxu0 %v1088
  %v1253 = vpop.f32.mrb[0].mxu0
  %v1254 = vadd.f32 %v1080, %v1253
  %v1255 = vpop.f32.mrb[0].mxu0
  %1256 = vmatprep.mubr.f32.mxu0 0.0
  %1257 = vmatmul.mubr.f32.gmra.mrb[0].mxu0 %v1091
  %v1258 = vpop.f32.mrb[0].mxu0
  %v1259 = vadd.f32 %v1080, %v1258
  %v1260 = vpop.f32.mrb[0].mxu0
  %1261 = vmatprep.mubr.f32.mxu0 0.0
  %1262 = vmatmul.mubr.f32.gmra.mrb[0].mxu0 %v1094
  %v1263 = vpop.f32.mrb[0].mxu0
  %v1264 = vadd.f32 %v1080, %v1263
  %v1265 = vpop.f32.mrb[0].mxu0
  %1266 = vmatprep.mubr.f32.mxu0 0.0
  %1267 = vmatmul.mubr.f32.gmra.mrb[0].mxu0 %v1097
  %v1268 = vpop.f32.mrb[0].mxu0
  %v1269 = vadd.f32 %v1080, %v1268
  %v1270 = vpop.f32.mrb[0].mxu0
  %1271 = vmatprep.mubr.f32.mxu0 0.0
  %1272 = vmatmul.mubr.f32.gmra.mrb[0].mxu0 %v1100
  %v1273 = vpop.f32.mrb[0].mxu0
  %v1274 = vadd.f32 %v1080, %v1273
  %v1275 = vpop.f32.mrb[0].mxu0
  %1276 = vmatprep.mubr.f32.mxu0 0.0
  %1277 = vmatmul.mubr.f32.gmra.mrb[0].mxu0 %v1103
  %v1278 = vpop.f32.mrb[0].mxu0
  %v1279 = vadd.f32 %v1080, %v1278
  %v1280 = vpop.f32.mrb[0].mxu0
  %1281 = vmatprep.mubr.f32.mxu0 0.0
  %1282 = vmatmul.mubr.f32.gmra.mrb[0].mxu0 %v1106
  %v1283 = vpop.f32.mrb[0].mxu0
  %v1284 = vadd.f32 %v1080, %v1283
  %v1285 = vpop.f32.mrb[0].mxu0
  %1286 = vmatprep.mubr.f32.mxu0 0.0
  %1287 = vmatmul.mubr.f32.gmra.mrb[0].mxu0 %v1109
  %v1288 = vpop.f32.mrb[0].mxu0
  %v1289 = vadd.f32 %v1080, %v1288
  %v1290 = vpop.f32.mrb[0].mxu0
  %1291 = vmatprep.mubr.f32.mxu0 0.0
  %1292 = vmatmul.mubr.f32.gmra.mrb[0].mxu0 %v1112
  %v1293 = vpop.f32.mrb[0].mxu0
  %v1294 = vadd.f32 %v1080, %v1293
  %v1295 = vpop.f32.mrb[0].mxu0
  %1296 = vmatprep.mubr.f32.mxu0 0.0
  %1297 = vmatmul.mubr.f32.gmra.mrb[0].mxu0 %v1115
  %v1298 = vpop.f32.mrb[0].mxu0
  %v1299 = vadd.f32 %v1080, %v1298
  %v1300 = vpop.f32.mrb[0].mxu0
  %1301 = vmatprep.mubr.f32.mxu0 0.0
  %1302 = vmatmul.mubr.f32.gmra.mrb[0].mxu0 %v1118
  %v1303 = vpop.f32.mrb[0].mxu0
  %v1304 = vadd.f32 %v1080, %v1303
  %v1305 = vpop.f32.mrb[0].mxu0
  %1306 = vmatprep.mubr.f32.mxu0 0.0
  %1307 = vmatmul.mubr.f32.gmra.mrb[0].mxu0 %v1121
  %v1308 = vpop.f32.mrb[0].mxu0
  %v1309 = vadd.f32 %v1080, %v1308
  %v1310 = vpop.f32.mrb[0].mxu0
  %1311 = vmatprep.mubr.f32.mxu0 0.0
  %1312 = vmatmul.mubr.f32.gmra.mrb[0].mxu0 %v1124
  %v1313 = vpop.f32.mrb[0].mxu0
  %v1314 = vadd.f32 %v1080, %v1313
  %v1315 = vpop.f32.mrb[0].mxu0
  %1316 = vmatprep.mubr.f32.mxu0 0.0
  %1317 = vmatmul.mubr.f32.gmra.mrb[0].mxu0 %v1127
  %v1318 = vpop.f32.mrb[0].mxu0
  %v1319 = vadd.f32 %v1080, %v1318
  %v1320 = vpop.f32.mrb[0].mxu0
  %1321 = vmatprep.mubr.f32.mxu0 0.0
  %1322 = vmatmul.mubr.f32.gmra.mrb[0].mxu0 %v1130
  %v1323 = vpop.f32.mrb[0].mxu0
  %v1324 = vadd.f32 %v1080, %v1323
  %v1325 = vpop.f32.mrb[0].mxu0
  %1326 = vmatprep.mubr.f32.mxu0 0.0
  %1327 = vmatmul.mubr.f32.gmra.mrb[0].mxu0 %v1133
  %v1328 = vpop.f32.mrb[0].mxu0
  %v1329 = vadd.f32 %v1080, %v1328
  %v1330 = vpop.f32.mrb[0].mxu0
  %1331 = vmatprep.mubr.f32.mxu0 0.0
  %1332 = vmatmul.mubr.f32.gmra.mrb[0].mxu0 %v1136
  %v1333 = vpop.f32.mrb[0].mxu0
  %v1334 = vadd.f32 %v1080, %v1333
  %v1335 = vpop.f32.mrb[0].mxu0
  %1336 = vmatprep.mubr.f32.mxu0 0.0
  %1337 = vmatmul.mubr.f32.gmra.mrb[0].mxu0 %v1139
  %v1338 = vpop.f32.mrb[0].mxu0
  %v1339 = vadd.f32 %v1080, %v1338
  %v1340 = vpop.f32.mrb[0].mxu0
  %1341 = vmatprep.mubr.f32.mxu0 0.0
  %1342 = vmatmul.mubr.f32.gmra.mrb[0].mxu0 %v1142
  %v1343 = vpop.f32.mrb[0].mxu0
  %v1344 = vadd.f32 %v1080, %v1343
  %v1345 = vpop.f32.mrb[0].mxu0
  %1346 = vmatprep.mubr.f32.mxu0 0.0
  %1347 = vmatmul.mubr.f32.gmra.mrb[0].mxu0 %v1145
  %v1348 = vpop.f32.mrb[0].mxu0
  %v1349 = vadd.f32 %v1080, %v1348
  %v1350 = vpop.f32.mrb[0].mxu0
  %1351 = vmatprep.mubr.f32.mxu0 0.0
  %1352 = vmatmul.mubr.f32.gmra.mrb[0].mxu0 %v1148
  %v1353 = vpop.f32.mrb[0].mxu0
  %v1354 = vadd.f32 %v1080, %v1353
  %v1355 = vpop.f32.mrb[0].mxu0
  %1356 = vmatprep.mubr.f32.mxu0 0.0
  %1357 = vmatmul.mubr.f32.gmra.mrb[0].mxu0 %v1151
  %v1358 = vpop.f32.mrb[0].mxu0
  %v1359 = vadd.f32 %v1080, %v1358
  %v1360 = vpop.f32.mrb[0].mxu0
  %1361 = vmatprep.mubr.f32.mxu0 0.0
  %1362 = vmatmul.mubr.f32.gmra.mrb[0].mxu0 %v1154
  %v1363 = vpop.f32.mrb[0].mxu0
  %v1364 = vadd.f32 %v1080, %v1363
  %v1365 = vpop.f32.mrb[0].mxu0
  %1366 = vmatprep.mubr.f32.mxu0 0.0
  %1367 = vmatmul.mubr.f32.gmra.mrb[0].mxu0 %v1157
  %v1368 = vpop.f32.mrb[0].mxu0
  %v1369 = vadd.f32 %v1080, %v1368
  %v1370 = vpop.f32.mrb[0].mxu0
  %1371 = vmatprep.mubr.f32.mxu0 0.0
  %1372 = vmatmul.mubr.f32.gmra.mrb[0].mxu0 %v1160
  %v1373 = vpop.f32.mrb[0].mxu0
  %v1374 = vadd.f32 %v1080, %v1373
  %v1375 = vpop.f32.mrb[0].mxu0
  %1376 = vmatprep.mubr.f32.mxu0 0.0
  %1377 = vmatmul.mubr.f32.gmra.mrb[0].mxu0 %v1163
  %v1378 = vpop.f32.mrb[0].mxu0
  %v1379 = vadd.f32 %v1080, %v1378
  %v1380 = vpop.f32.mrb[0].mxu0
  %1381 = vmatprep.mubr.f32.mxu0 0.0
  %1382 = vmatmul.mubr.f32.gmra.mrb[0].mxu0 %v1166
  %v1383 = vpop.f32.mrb[0].mxu0
  %v1384 = vadd.f32 %v1080, %v1383
  %v1385 = vpop.f32.mrb[0].mxu0
  %1386 = vmatprep.mubr.f32.mxu0 0.0
  %1387 = vmatmul.mubr.f32.gmra.mrb[0].mxu0 %v1169
  %v1388 = vpop.f32.mrb[0].mxu0
  %v1389 = vadd.f32 %v1080, %v1388
  %v1390 = vpop.f32.mrb[0].mxu0
  %1391 = vmatprep.mubr.f32.mxu0 0.0
  %1392 = vmatmul.mubr.f32.gmra.mrb[0].mxu0 %v1172
  %v1393 = vpop.f32.mrb[0].mxu0
  %v1394 = vadd.f32 %v1080, %v1393
  %v1395 = vpop.f32.mrb[0].mxu0
  %1396 = vmatprep.mubr.f32.mxu0 0.0
  %1397 = vmatmul.mubr.f32.gmra.mrb[0].mxu0 %v1175
  %v1398 = vpop.f32.mrb[0].mxu0
  %v1399 = vadd.f32 %v1080, %v1398
  %v1400 = vpop.f32.mrb[0].mxu0
  %1401 = vdwg.mxu0
  %vm1402 = vcmask 130048
  %v1404 = vsel %vm1402, %v1244, 0
  %v1407 = vsel %vm1402, %v1249, 0
  %v1410 = vsel %vm1402, %v1254, 0
  %v1413 = vsel %vm1402, %v1259, 0
  %v1416 = vsel %vm1402, %v1264, 0
  %v1419 = vsel %vm1402, %v1269, 0
  %v1422 = vsel %vm1402, %v1274, 0
  %v1425 = vsel %vm1402, %v1279, 0
  %v1428 = vsel %vm1402, %v1284, 0
  %v1431 = vsel %vm1402, %v1289, 0
  %v1434 = vsel %vm1402, %v1294, 0
  %v1437 = vsel %vm1402, %v1299, 0
  %v1440 = vsel %vm1402, %v1304, 0
  %v1443 = vsel %vm1402, %v1309, 0
  %v1446 = vsel %vm1402, %v1314, 0
  %v1449 = vsel %vm1402, %v1319, 0
  %v1452 = vsel %vm1402, %v1324, 0
  %v1455 = vsel %vm1402, %v1329, 0
  %v1458 = vsel %vm1402, %v1334, 0
  %v1461 = vsel %vm1402, %v1339, 0
  %v1464 = vsel %vm1402, %v1344, 0
  %v1467 = vsel %vm1402, %v1349, 0
  %v1470 = vsel %vm1402, %v1354, 0
  %v1473 = vsel %vm1402, %v1359, 0
  %v1476 = vsel %vm1402, %v1364, 0
  %v1479 = vsel %vm1402, %v1369, 0
  %v1482 = vsel %vm1402, %v1374, 0
  %v1485 = vsel %vm1402, %v1379, 0
  %v1488 = vsel %vm1402, %v1384, 0
  %v1491 = vsel %vm1402, %v1389, 0
  %v1494 = vsel %vm1402, %v1394, 0
  %v1497 = vsel %vm1402, %v1399, 0
  %1499 = vmatprep.subr.mxu0 0.0
  %1500 = vmatpush1.msra.mxu0 0.0625
  %1501 = vmatprep.subr.mxu0 0.0
  %1502 = vmatpush1.msra.mxu0 0.0625
  %1503 = vmatprep.subr.mxu0 0.0
  %1504 = vmatpush1.msra.mxu0 0.0
  %1505 = vmatprep.subr.mxu0 0.0
  %1506 = vmatpush1.msra.mxu0 0.0
  %1507 = vmatprep.subr.mxu0 0.0
  %1508 = vmatpush1.msra.mxu0 0.0
  %1509 = vmatprep.subr.mxu0 0.0
  %1510 = vmatpush1.msra.mxu0 0.0
  %1511 = vmatprep.subr.mxu0 0.0
  %1512 = vmatpush1.msra.mxu0 0.0
  %1513 = vmatprep.subr.mxu0 0.0
  %1514 = vmatpush1.msra.mxu0 0.0
  %1515 = vmatprep.subr.mxu0 0.0
  %1516 = vmatpush1.msra.mxu0 0.0
  %1517 = vmatprep.subr.mxu0 0.0
  %1518 = vmatpush1.msra.mxu0 0.0
  %1519 = vmatprep.subr.mxu0 0.0
  %1520 = vmatpush1.msra.mxu0 0.0
  %1521 = vmatprep.subr.mxu0 0.0
  %1522 = vmatpush1.msra.mxu0 0.0
  %1523 = vmatprep.subr.mxu0 0.0
  %1524 = vmatpush1.msra.mxu0 0.0
  %1525 = vmatprep.subr.mxu0 0.0
  %1526 = vmatpush1.msra.mxu0 0.0
  %1527 = vmatprep.subr.mxu0 0.0
  %1528 = vmatpush1.msra.mxu0 0.0
  %1529 = vmatprep.subr.mxu0 0.0
  %1530 = vmatpush1.msra.mxu0 0.0
  %1531 = vmatprep.subr.mxu0 0.0
  %1532 = vmatpush1.msra.mxu0 0.0
  %1533 = vmatprep.subr.mxu0 0.0
  %1534 = vmatpush1.msra.mxu0 0.0
  %1535 = vmatprep.subr.mxu0 0.0
  %1536 = vmatpush1.msra.mxu0 0.0
  %1537 = vmatprep.subr.mxu0 0.0
  %1538 = vmatpush1.msra.mxu0 0.0
  %1539 = vmatprep.subr.mxu0 0.0
  %1540 = vmatpush1.msra.mxu0 0.0
  %1541 = vmatprep.subr.mxu0 0.0
  %1542 = vmatpush1.msra.mxu0 0.0
  %1543 = vmatprep.subr.mxu0 0.0
  %1544 = vmatpush1.msra.mxu0 0.0
  %1545 = vmatprep.subr.mxu0 0.0
  %1546 = vmatpush1.msra.mxu0 0.0
  %1547 = vmatprep.subr.mxu0 0.0
  %1548 = vmatpush1.msra.mxu0 0.0
  %1549 = vmatprep.subr.mxu0 0.0
  %1550 = vmatpush1.msra.mxu0 0.0
  %1551 = vmatprep.subr.mxu0 0.0
  %1552 = vmatpush1.msra.mxu0 0.0
  %1553 = vmatprep.subr.mxu0 0.0
  %1554 = vmatpush1.msra.mxu0 0.0
  %1555 = vmatprep.subr.mxu0 0.0
  %1556 = vmatpush1.msra.mxu0 0.0
  %1557 = vmatprep.subr.mxu0 0.0
  %1558 = vmatpush1.msra.mxu0 0.0
  %1559 = vmatprep.subr.mxu0 0.0
  %1560 = vmatpush1.msra.mxu0 0.0
  %1561 = vmatprep.subr.mxu0 0.0
  %1562 = vmatpush1.msra.mxu0 0.0
  %1563 = vmatprep.mubr.f32.mxu0 0.0
  %1564 = vmatmul.mubr.f32.gmra.mrb[0].mxu0 %v1404
  %v1565 = vpop.f32.mrb[0].mxu0
  %v1566 = vadd.f32 0.0, %v1565
  %v1567 = vpop.f32.mrb[0].mxu0
  %1568 = vmatprep.mubr.f32.mxu0 0.0
  %1569 = vmatmul.mubr.f32.gmra.mrb[0].mxu0 %v1407
  %v1570 = vpop.f32.mrb[0].mxu0
  %v1571 = vadd.f32 0.0, %v1570
  %v1572 = vpop.f32.mrb[0].mxu0
  %1573 = vmatprep.mubr.f32.mxu0 0.0
  %1574 = vmatmul.mubr.f32.gmra.mrb[0].mxu0 %v1410
  %v1575 = vpop.f32.mrb[0].mxu0
  %v1576 = vadd.f32 0.0, %v1575
  %v1577 = vpop.f32.mrb[0].mxu0
  %1578 = vmatprep.mubr.f32.mxu0 0.0
  %1579 = vmatmul.mubr.f32.gmra.mrb[0].mxu0 %v1413
  %v1580 = vpop.f32.mrb[0].mxu0
  %v1581 = vadd.f32 0.0, %v1580
  %v1582 = vpop.f32.mrb[0].mxu0
  %1583 = vmatprep.mubr.f32.mxu0 0.0
  %1584 = vmatmul.mubr.f32.gmra.mrb[0].mxu0 %v1416
  %v1585 = vpop.f32.mrb[0].mxu0
  %v1586 = vadd.f32 0.0, %v1585
  %v1587 = vpop.f32.mrb[0].mxu0
  %1588 = vmatprep.mubr.f32.mxu0 0.0
  %1589 = vmatmul.mubr.f32.gmra.mrb[0].mxu0 %v1419
  %v1590 = vpop.f32.mrb[0].mxu0
  %v1591 = vadd.f32 0.0, %v1590
  %v1592 = vpop.f32.mrb[0].mxu0
  %1593 = vmatprep.mubr.f32.mxu0 0.0
  %1594 = vmatmul.mubr.f32.gmra.mrb[0].mxu0 %v1422
  %v1595 = vpop.f32.mrb[0].mxu0
  %v1596 = vadd.f32 0.0, %v1595
  %v1597 = vpop.f32.mrb[0].mxu0
  %1598 = vmatprep.mubr.f32.mxu0 0.0
  %1599 = vmatmul.mubr.f32.gmra.mrb[0].mxu0 %v1425
  %v1600 = vpop.f32.mrb[0].mxu0
  %v1601 = vadd.f32 0.0, %v1600
  %v1602 = vpop.f32.mrb[0].mxu0
  %1603 = vmatprep.mubr.f32.mxu0 0.0
  %1604 = vmatmul.mubr.f32.gmra.mrb[0].mxu0 %v1428
  %v1605 = vpop.f32.mrb[0].mxu0
  %v1606 = vadd.f32 0.0, %v1605
  %v1607 = vpop.f32.mrb[0].mxu0
  %1608 = vmatprep.mubr.f32.mxu0 0.0
  %1609 = vmatmul.mubr.f32.gmra.mrb[0].mxu0 %v1431
  %v1610 = vpop.f32.mrb[0].mxu0
  %v1611 = vadd.f32 0.0, %v1610
  %v1612 = vpop.f32.mrb[0].mxu0
  %1613 = vmatprep.mubr.f32.mxu0 0.0
  %1614 = vmatmul.mubr.f32.gmra.mrb[0].mxu0 %v1434
  %v1615 = vpop.f32.mrb[0].mxu0
  %v1616 = vadd.f32 0.0, %v1615
  %v1617 = vpop.f32.mrb[0].mxu0
  %1618 = vmatprep.mubr.f32.mxu0 0.0
  %1619 = vmatmul.mubr.f32.gmra.mrb[0].mxu0 %v1437
  %v1620 = vpop.f32.mrb[0].mxu0
  %v1621 = vadd.f32 0.0, %v1620
  %v1622 = vpop.f32.mrb[0].mxu0
  %1623 = vmatprep.mubr.f32.mxu0 0.0
  %1624 = vmatmul.mubr.f32.gmra.mrb[0].mxu0 %v1440
  %v1625 = vpop.f32.mrb[0].mxu0
  %v1626 = vadd.f32 0.0, %v1625
  %v1627 = vpop.f32.mrb[0].mxu0
  %1628 = vmatprep.mubr.f32.mxu0 0.0
  %1629 = vmatmul.mubr.f32.gmra.mrb[0].mxu0 %v1443
  %v1630 = vpop.f32.mrb[0].mxu0
  %v1631 = vadd.f32 0.0, %v1630
  %v1632 = vpop.f32.mrb[0].mxu0
  %1633 = vmatprep.mubr.f32.mxu0 0.0
  %1634 = vmatmul.mubr.f32.gmra.mrb[0].mxu0 %v1446
  %v1635 = vpop.f32.mrb[0].mxu0
  %v1636 = vadd.f32 0.0, %v1635
  %v1637 = vpop.f32.mrb[0].mxu0
  %1638 = vmatprep.mubr.f32.mxu0 0.0
  %1639 = vmatmul.mubr.f32.gmra.mrb[0].mxu0 %v1449
  %v1640 = vpop.f32.mrb[0].mxu0
  %v1641 = vadd.f32 0.0, %v1640
  %v1642 = vpop.f32.mrb[0].mxu0
  %1643 = vmatprep.mubr.f32.mxu0 0.0
  %1644 = vmatmul.mubr.f32.gmra.mrb[0].mxu0 %v1452
  %v1645 = vpop.f32.mrb[0].mxu0
  %v1646 = vadd.f32 0.0, %v1645
  %v1647 = vpop.f32.mrb[0].mxu0
  %1648 = vmatprep.mubr.f32.mxu0 0.0
  %1649 = vmatmul.mubr.f32.gmra.mrb[0].mxu0 %v1455
  %v1650 = vpop.f32.mrb[0].mxu0
  %v1651 = vadd.f32 0.0, %v1650
  %v1652 = vpop.f32.mrb[0].mxu0
  %1653 = vmatprep.mubr.f32.mxu0 0.0
  %1654 = vmatmul.mubr.f32.gmra.mrb[0].mxu0 %v1458
  %v1655 = vpop.f32.mrb[0].mxu0
  %v1656 = vadd.f32 0.0, %v1655
  %v1657 = vpop.f32.mrb[0].mxu0
  %1658 = vmatprep.mubr.f32.mxu0 0.0
  %1659 = vmatmul.mubr.f32.gmra.mrb[0].mxu0 %v1461
  %v1660 = vpop.f32.mrb[0].mxu0
  %v1661 = vadd.f32 0.0, %v1660
  %v1662 = vpop.f32.mrb[0].mxu0
  %1663 = vmatprep.mubr.f32.mxu0 0.0
  %1664 = vmatmul.mubr.f32.gmra.mrb[0].mxu0 %v1464
  %v1665 = vpop.f32.mrb[0].mxu0
  %v1666 = vadd.f32 0.0, %v1665
  %v1667 = vpop.f32.mrb[0].mxu0
  %1668 = vmatprep.mubr.f32.mxu0 0.0
  %1669 = vmatmul.mubr.f32.gmra.mrb[0].mxu0 %v1467
  %v1670 = vpop.f32.mrb[0].mxu0
  %v1671 = vadd.f32 0.0, %v1670
  %v1672 = vpop.f32.mrb[0].mxu0
  %1673 = vmatprep.mubr.f32.mxu0 0.0
  %1674 = vmatmul.mubr.f32.gmra.mrb[0].mxu0 %v1470
  %v1675 = vpop.f32.mrb[0].mxu0
  %v1676 = vadd.f32 0.0, %v1675
  %v1677 = vpop.f32.mrb[0].mxu0
  %1678 = vmatprep.mubr.f32.mxu0 0.0
  %1679 = vmatmul.mubr.f32.gmra.mrb[0].mxu0 %v1473
  %v1680 = vpop.f32.mrb[0].mxu0
  %v1681 = vadd.f32 0.0, %v1680
  %v1682 = vpop.f32.mrb[0].mxu0
  %1683 = vmatprep.mubr.f32.mxu0 0.0
  %1684 = vmatmul.mubr.f32.gmra.mrb[0].mxu0 %v1476
  %v1685 = vpop.f32.mrb[0].mxu0
  %v1686 = vadd.f32 0.0, %v1685
  %v1687 = vpop.f32.mrb[0].mxu0
  %1688 = vmatprep.mubr.f32.mxu0 0.0
  %1689 = vmatmul.mubr.f32.gmra.mrb[0].mxu0 %v1479
  %v1690 = vpop.f32.mrb[0].mxu0
  %v1691 = vadd.f32 0.0, %v1690
  %v1692 = vpop.f32.mrb[0].mxu0
  %1693 = vmatprep.mubr.f32.mxu0 0.0
  %1694 = vmatmul.mubr.f32.gmra.mrb[0].mxu0 %v1482
  %v1695 = vpop.f32.mrb[0].mxu0
  %v1696 = vadd.f32 0.0, %v1695
  %v1697 = vpop.f32.mrb[0].mxu0
  %1698 = vmatprep.mubr.f32.mxu0 0.0
  %1699 = vmatmul.mubr.f32.gmra.mrb[0].mxu0 %v1485
  %v1700 = vpop.f32.mrb[0].mxu0
  %v1701 = vadd.f32 0.0, %v1700
  %v1702 = vpop.f32.mrb[0].mxu0
  %1703 = vmatprep.mubr.f32.mxu0 0.0
  %1704 = vmatmul.mubr.f32.gmra.mrb[0].mxu0 %v1488
  %v1705 = vpop.f32.mrb[0].mxu0
  %v1706 = vadd.f32 0.0, %v1705
  %v1707 = vpop.f32.mrb[0].mxu0
  %1708 = vmatprep.mubr.f32.mxu0 0.0
  %1709 = vmatmul.mubr.f32.gmra.mrb[0].mxu0 %v1491
  %v1710 = vpop.f32.mrb[0].mxu0
  %v1711 = vadd.f32 0.0, %v1710
  %v1712 = vpop.f32.mrb[0].mxu0
  %1713 = vmatprep.mubr.f32.mxu0 0.0
  %1714 = vmatmul.mubr.f32.gmra.mrb[0].mxu0 %v1494
  %v1715 = vpop.f32.mrb[0].mxu0
  %v1716 = vadd.f32 0.0, %v1715
  %v1717 = vpop.f32.mrb[0].mxu0
  %1718 = vmatprep.mubr.f32.mxu0 0.0
  %1719 = vmatmul.mubr.f32.gmra.mrb[0].mxu0 %v1497
  %v1720 = vpop.f32.mrb[0].mxu0
  %v1721 = vadd.f32 0.0, %v1720
  %v1722 = vpop.f32.mrb[0].mxu0
  %1723 = vdwg.mxu0
  %v1724 = vmul.f32 %v1244, %v1244
  %v1725 = vmul.f32 %v1249, %v1249
  %v1726 = vmul.f32 %v1254, %v1254
  %v1727 = vmul.f32 %v1259, %v1259
  %v1728 = vmul.f32 %v1264, %v1264
  %v1729 = vmul.f32 %v1269, %v1269
  %v1730 = vmul.f32 %v1274, %v1274
  %v1731 = vmul.f32 %v1279, %v1279
  %v1732 = vmul.f32 %v1284, %v1284
  %v1733 = vmul.f32 %v1289, %v1289
  %v1734 = vmul.f32 %v1294, %v1294
  %v1735 = vmul.f32 %v1299, %v1299
  %v1736 = vmul.f32 %v1304, %v1304
  %v1737 = vmul.f32 %v1309, %v1309
  %v1738 = vmul.f32 %v1314, %v1314
  %v1739 = vmul.f32 %v1319, %v1319
  %v1740 = vmul.f32 %v1324, %v1324
  %v1741 = vmul.f32 %v1329, %v1329
  %v1742 = vmul.f32 %v1334, %v1334
  %v1743 = vmul.f32 %v1339, %v1339
  %v1744 = vmul.f32 %v1344, %v1344
  %v1745 = vmul.f32 %v1349, %v1349
  %v1746 = vmul.f32 %v1354, %v1354
  %v1747 = vmul.f32 %v1359, %v1359
  %v1748 = vmul.f32 %v1364, %v1364
  %v1749 = vmul.f32 %v1369, %v1369
  %v1750 = vmul.f32 %v1374, %v1374
  %v1751 = vmul.f32 %v1379, %v1379
  %v1752 = vmul.f32 %v1384, %v1384
  %v1753 = vmul.f32 %v1389, %v1389
  %v1754 = vmul.f32 %v1394, %v1394
  %v1755 = vmul.f32 %v1399, %v1399
  %v1757 = vsel %vm1402, %v1724, 0
  %v1760 = vsel %vm1402, %v1725, 0
  %v1763 = vsel %vm1402, %v1726, 0
  %v1766 = vsel %vm1402, %v1727, 0
  %v1769 = vsel %vm1402, %v1728, 0
  %v1772 = vsel %vm1402, %v1729, 0
  %v1775 = vsel %vm1402, %v1730, 0
  %v1778 = vsel %vm1402, %v1731, 0
  %v1781 = vsel %vm1402, %v1732, 0
  %v1784 = vsel %vm1402, %v1733, 0
  %v1787 = vsel %vm1402, %v1734, 0
  %v1790 = vsel %vm1402, %v1735, 0
  %v1793 = vsel %vm1402, %v1736, 0
  %v1796 = vsel %vm1402, %v1737, 0
  %v1799 = vsel %vm1402, %v1738, 0
  %v1802 = vsel %vm1402, %v1739, 0
  %v1805 = vsel %vm1402, %v1740, 0
  %v1808 = vsel %vm1402, %v1741, 0
  %v1811 = vsel %vm1402, %v1742, 0
  %v1814 = vsel %vm1402, %v1743, 0
  %v1817 = vsel %vm1402, %v1744, 0
  %v1820 = vsel %vm1402, %v1745, 0
  %v1823 = vsel %vm1402, %v1746, 0
  %v1826 = vsel %vm1402, %v1747, 0
  %v1829 = vsel %vm1402, %v1748, 0
  %v1832 = vsel %vm1402, %v1749, 0
  %v1835 = vsel %vm1402, %v1750, 0
  %v1838 = vsel %vm1402, %v1751, 0
  %v1841 = vsel %vm1402, %v1752, 0
  %v1844 = vsel %vm1402, %v1753, 0
  %v1847 = vsel %vm1402, %v1754, 0
  %v1850 = vsel %vm1402, %v1755, 0
  %1852 = vmatprep.subr.mxu0 0.0
  %1853 = vmatpush1.msra.mxu0 0.0625
  %1854 = vmatprep.subr.mxu0 0.0
  %1855 = vmatpush1.msra.mxu0 0.0625
  %1856 = vmatprep.subr.mxu0 0.0
  %1857 = vmatpush1.msra.mxu0 0.0
  %1858 = vmatprep.subr.mxu0 0.0
  %1859 = vmatpush1.msra.mxu0 0.0
  %1860 = vmatprep.subr.mxu0 0.0
  %1861 = vmatpush1.msra.mxu0 0.0
  %1862 = vmatprep.subr.mxu0 0.0
  %1863 = vmatpush1.msra.mxu0 0.0
  %1864 = vmatprep.subr.mxu0 0.0
  %1865 = vmatpush1.msra.mxu0 0.0
  %1866 = vmatprep.subr.mxu0 0.0
  %1867 = vmatpush1.msra.mxu0 0.0
  %1868 = vmatprep.subr.mxu0 0.0
  %1869 = vmatpush1.msra.mxu0 0.0
  %1870 = vmatprep.subr.mxu0 0.0
  %1871 = vmatpush1.msra.mxu0 0.0
  %1872 = vmatprep.subr.mxu0 0.0
  %1873 = vmatpush1.msra.mxu0 0.0
  %1874 = vmatprep.subr.mxu0 0.0
  %1875 = vmatpush1.msra.mxu0 0.0
  %1876 = vmatprep.subr.mxu0 0.0
  %1877 = vmatpush1.msra.mxu0 0.0
  %1878 = vmatprep.subr.mxu0 0.0
  %1879 = vmatpush1.msra.mxu0 0.0
  %1880 = vmatprep.subr.mxu0 0.0
  %1881 = vmatpush1.msra.mxu0 0.0
  %1882 = vmatprep.subr.mxu0 0.0
  %1883 = vmatpush1.msra.mxu0 0.0
  %1884 = vmatprep.subr.mxu0 0.0
  %1885 = vmatpush1.msra.mxu0 0.0
  %1886 = vmatprep.subr.mxu0 0.0
  %1887 = vmatpush1.msra.mxu0 0.0
  %1888 = vmatprep.subr.mxu0 0.0
  %1889 = vmatpush1.msra.mxu0 0.0
  %1890 = vmatprep.subr.mxu0 0.0
  %1891 = vmatpush1.msra.mxu0 0.0
  %1892 = vmatprep.subr.mxu0 0.0
  %1893 = vmatpush1.msra.mxu0 0.0
  %1894 = vmatprep.subr.mxu0 0.0
  %1895 = vmatpush1.msra.mxu0 0.0
  %1896 = vmatprep.subr.mxu0 0.0
  %1897 = vmatpush1.msra.mxu0 0.0
  %1898 = vmatprep.subr.mxu0 0.0
  %1899 = vmatpush1.msra.mxu0 0.0
  %1900 = vmatprep.subr.mxu0 0.0
  %1901 = vmatpush1.msra.mxu0 0.0
  %1902 = vmatprep.subr.mxu0 0.0
  %1903 = vmatpush1.msra.mxu0 0.0
  %1904 = vmatprep.subr.mxu0 0.0
  %1905 = vmatpush1.msra.mxu0 0.0
  %1906 = vmatprep.subr.mxu0 0.0
  %1907 = vmatpush1.msra.mxu0 0.0
  %1908 = vmatprep.subr.mxu0 0.0
  %1909 = vmatpush1.msra.mxu0 0.0
  %1910 = vmatprep.subr.mxu0 0.0
  %1911 = vmatpush1.msra.mxu0 0.0
  %1912 = vmatprep.subr.mxu0 0.0
  %1913 = vmatpush1.msra.mxu0 0.0
  %1914 = vmatprep.subr.mxu0 0.0
  %1915 = vmatpush1.msra.mxu0 0.0
  %1916 = vmatprep.mubr.f32.mxu0 0.0
  %1917 = vmatmul.mubr.f32.gmra.mrb[0].mxu0 %v1757
  %v1918 = vpop.f32.mrb[0].mxu0
  %v1919 = vadd.f32 0.0, %v1918
  %v1920 = vpop.f32.mrb[0].mxu0
  %1921 = vmatprep.mubr.f32.mxu0 0.0
  %1922 = vmatmul.mubr.f32.gmra.mrb[0].mxu0 %v1760
  %v1923 = vpop.f32.mrb[0].mxu0
  %v1924 = vadd.f32 0.0, %v1923
  %v1925 = vpop.f32.mrb[0].mxu0
  %1926 = vmatprep.mubr.f32.mxu0 0.0
  %1927 = vmatmul.mubr.f32.gmra.mrb[0].mxu0 %v1763
  %v1928 = vpop.f32.mrb[0].mxu0
  %v1929 = vadd.f32 0.0, %v1928
  %v1930 = vpop.f32.mrb[0].mxu0
  %1931 = vmatprep.mubr.f32.mxu0 0.0
  %1932 = vmatmul.mubr.f32.gmra.mrb[0].mxu0 %v1766
  %v1933 = vpop.f32.mrb[0].mxu0
  %v1934 = vadd.f32 0.0, %v1933
  %v1935 = vpop.f32.mrb[0].mxu0
  %1936 = vmatprep.mubr.f32.mxu0 0.0
  %1937 = vmatmul.mubr.f32.gmra.mrb[0].mxu0 %v1769
  %v1938 = vpop.f32.mrb[0].mxu0
  %v1939 = vadd.f32 0.0, %v1938
  %v1940 = vpop.f32.mrb[0].mxu0
  %1941 = vmatprep.mubr.f32.mxu0 0.0
  %1942 = vmatmul.mubr.f32.gmra.mrb[0].mxu0 %v1772
  %v1943 = vpop.f32.mrb[0].mxu0
  %v1944 = vadd.f32 0.0, %v1943
  %v1945 = vpop.f32.mrb[0].mxu0
  %1946 = vmatprep.mubr.f32.mxu0 0.0
  %1947 = vmatmul.mubr.f32.gmra.mrb[0].mxu0 %v1775
  %v1948 = vpop.f32.mrb[0].mxu0
  %v1949 = vadd.f32 0.0, %v1948
  %v1950 = vpop.f32.mrb[0].mxu0
  %1951 = vmatprep.mubr.f32.mxu0 0.0
  %1952 = vmatmul.mubr.f32.gmra.mrb[0].mxu0 %v1778
  %v1953 = vpop.f32.mrb[0].mxu0
  %v1954 = vadd.f32 0.0, %v1953
  %v1955 = vpop.f32.mrb[0].mxu0
  %1956 = vmatprep.mubr.f32.mxu0 0.0
  %1957 = vmatmul.mubr.f32.gmra.mrb[0].mxu0 %v1781
  %v1958 = vpop.f32.mrb[0].mxu0
  %v1959 = vadd.f32 0.0, %v1958
  %v1960 = vpop.f32.mrb[0].mxu0
  %1961 = vmatprep.mubr.f32.mxu0 0.0
  %1962 = vmatmul.mubr.f32.gmra.mrb[0].mxu0 %v1784
  %v1963 = vpop.f32.mrb[0].mxu0
  %v1964 = vadd.f32 0.0, %v1963
  %v1965 = vpop.f32.mrb[0].mxu0
  %1966 = vmatprep.mubr.f32.mxu0 0.0
  %1967 = vmatmul.mubr.f32.gmra.mrb[0].mxu0 %v1787
  %v1968 = vpop.f32.mrb[0].mxu0
  %v1969 = vadd.f32 0.0, %v1968
  %v1970 = vpop.f32.mrb[0].mxu0
  %1971 = vmatprep.mubr.f32.mxu0 0.0
  %1972 = vmatmul.mubr.f32.gmra.mrb[0].mxu0 %v1790
  %v1973 = vpop.f32.mrb[0].mxu0
  %v1974 = vadd.f32 0.0, %v1973
  %v1975 = vpop.f32.mrb[0].mxu0
  %1976 = vmatprep.mubr.f32.mxu0 0.0
  %1977 = vmatmul.mubr.f32.gmra.mrb[0].mxu0 %v1793
  %v1978 = vpop.f32.mrb[0].mxu0
  %v1979 = vadd.f32 0.0, %v1978
  %v1980 = vpop.f32.mrb[0].mxu0
  %1981 = vmatprep.mubr.f32.mxu0 0.0
  %1982 = vmatmul.mubr.f32.gmra.mrb[0].mxu0 %v1796
  %v1983 = vpop.f32.mrb[0].mxu0
  %v1984 = vadd.f32 0.0, %v1983
  %v1985 = vpop.f32.mrb[0].mxu0
  %1986 = vmatprep.mubr.f32.mxu0 0.0
  %1987 = vmatmul.mubr.f32.gmra.mrb[0].mxu0 %v1799
  %v1988 = vpop.f32.mrb[0].mxu0
  %v1989 = vadd.f32 0.0, %v1988
  %v1990 = vpop.f32.mrb[0].mxu0
  %1991 = vmatprep.mubr.f32.mxu0 0.0
  %1992 = vmatmul.mubr.f32.gmra.mrb[0].mxu0 %v1802
  %v1993 = vpop.f32.mrb[0].mxu0
  %v1994 = vadd.f32 0.0, %v1993
  %v1995 = vpop.f32.mrb[0].mxu0
  %1996 = vmatprep.mubr.f32.mxu0 0.0
  %1997 = vmatmul.mubr.f32.gmra.mrb[0].mxu0 %v1805
  %v1998 = vpop.f32.mrb[0].mxu0
  %v1999 = vadd.f32 0.0, %v1998
  %v2000 = vpop.f32.mrb[0].mxu0
  %2001 = vmatprep.mubr.f32.mxu0 0.0
  %2002 = vmatmul.mubr.f32.gmra.mrb[0].mxu0 %v1808
  %v2003 = vpop.f32.mrb[0].mxu0
  %v2004 = vadd.f32 0.0, %v2003
  %v2005 = vpop.f32.mrb[0].mxu0
  %2006 = vmatprep.mubr.f32.mxu0 0.0
  %2007 = vmatmul.mubr.f32.gmra.mrb[0].mxu0 %v1811
  %v2008 = vpop.f32.mrb[0].mxu0
  %v2009 = vadd.f32 0.0, %v2008
  %v2010 = vpop.f32.mrb[0].mxu0
  %2011 = vmatprep.mubr.f32.mxu0 0.0
  %2012 = vmatmul.mubr.f32.gmra.mrb[0].mxu0 %v1814
  %v2013 = vpop.f32.mrb[0].mxu0
  %v2014 = vadd.f32 0.0, %v2013
  %v2015 = vpop.f32.mrb[0].mxu0
  %2016 = vmatprep.mubr.f32.mxu0 0.0
  %2017 = vmatmul.mubr.f32.gmra.mrb[0].mxu0 %v1817
  %v2018 = vpop.f32.mrb[0].mxu0
  %v2019 = vadd.f32 0.0, %v2018
  %v2020 = vpop.f32.mrb[0].mxu0
  %2021 = vmatprep.mubr.f32.mxu0 0.0
  %2022 = vmatmul.mubr.f32.gmra.mrb[0].mxu0 %v1820
  %v2023 = vpop.f32.mrb[0].mxu0
  %v2024 = vadd.f32 0.0, %v2023
  %v2025 = vpop.f32.mrb[0].mxu0
  %2026 = vmatprep.mubr.f32.mxu0 0.0
  %2027 = vmatmul.mubr.f32.gmra.mrb[0].mxu0 %v1823
  %v2028 = vpop.f32.mrb[0].mxu0
  %v2029 = vadd.f32 0.0, %v2028
  %v2030 = vpop.f32.mrb[0].mxu0
  %2031 = vmatprep.mubr.f32.mxu0 0.0
  %2032 = vmatmul.mubr.f32.gmra.mrb[0].mxu0 %v1826
  %v2033 = vpop.f32.mrb[0].mxu0
  %v2034 = vadd.f32 0.0, %v2033
  %v2035 = vpop.f32.mrb[0].mxu0
  %2036 = vmatprep.mubr.f32.mxu0 0.0
  %2037 = vmatmul.mubr.f32.gmra.mrb[0].mxu0 %v1829
  %v2038 = vpop.f32.mrb[0].mxu0
  %v2039 = vadd.f32 0.0, %v2038
  %v2040 = vpop.f32.mrb[0].mxu0
  %2041 = vmatprep.mubr.f32.mxu0 0.0
  %2042 = vmatmul.mubr.f32.gmra.mrb[0].mxu0 %v1832
  %v2043 = vpop.f32.mrb[0].mxu0
  %v2044 = vadd.f32 0.0, %v2043
  %v2045 = vpop.f32.mrb[0].mxu0
  %2046 = vmatprep.mubr.f32.mxu0 0.0
  %2047 = vmatmul.mubr.f32.gmra.mrb[0].mxu0 %v1835
  %v2048 = vpop.f32.mrb[0].mxu0
  %v2049 = vadd.f32 0.0, %v2048
  %v2050 = vpop.f32.mrb[0].mxu0
  %2051 = vmatprep.mubr.f32.mxu0 0.0
  %2052 = vmatmul.mubr.f32.gmra.mrb[0].mxu0 %v1838
  %v2053 = vpop.f32.mrb[0].mxu0
  %v2054 = vadd.f32 0.0, %v2053
  %v2055 = vpop.f32.mrb[0].mxu0
  %2056 = vmatprep.mubr.f32.mxu0 0.0
  %2057 = vmatmul.mubr.f32.gmra.mrb[0].mxu0 %v1841
  %v2058 = vpop.f32.mrb[0].mxu0
  %v2059 = vadd.f32 0.0, %v2058
  %v2060 = vpop.f32.mrb[0].mxu0
  %2061 = vmatprep.mubr.f32.mxu0 0.0
  %2062 = vmatmul.mubr.f32.gmra.mrb[0].mxu0 %v1844
  %v2063 = vpop.f32.mrb[0].mxu0
  %v2064 = vadd.f32 0.0, %v2063
  %v2065 = vpop.f32.mrb[0].mxu0
  %2066 = vmatprep.mubr.f32.mxu0 0.0
  %2067 = vmatmul.mubr.f32.gmra.mrb[0].mxu0 %v1847
  %v2068 = vpop.f32.mrb[0].mxu0
  %v2069 = vadd.f32 0.0, %v2068
  %v2070 = vpop.f32.mrb[0].mxu0
  %2071 = vmatprep.mubr.f32.mxu0 0.0
  %2072 = vmatmul.mubr.f32.gmra.mrb[0].mxu0 %v1850
  %v2073 = vpop.f32.mrb[0].mxu0
  %v2074 = vadd.f32 0.0, %v2073
  %v2075 = vpop.f32.mrb[0].mxu0
  %2076 = vdwg.mxu0
  %v2077 = vmul.f32 %v1566, %v1566
  %v2078 = vmul.f32 %v1571, %v1571
  %v2079 = vmul.f32 %v1576, %v1576
  %v2080 = vmul.f32 %v1581, %v1581
  %v2081 = vmul.f32 %v1586, %v1586
  %v2082 = vmul.f32 %v1591, %v1591
  %v2083 = vmul.f32 %v1596, %v1596
  %v2084 = vmul.f32 %v1601, %v1601
  %v2085 = vmul.f32 %v1606, %v1606
  %v2086 = vmul.f32 %v1611, %v1611
  %v2087 = vmul.f32 %v1616, %v1616
  %v2088 = vmul.f32 %v1621, %v1621
  %v2089 = vmul.f32 %v1626, %v1626
  %v2090 = vmul.f32 %v1631, %v1631
  %v2091 = vmul.f32 %v1636, %v1636
  %v2092 = vmul.f32 %v1641, %v1641
  %v2093 = vmul.f32 %v1646, %v1646
  %v2094 = vmul.f32 %v1651, %v1651
  %v2095 = vmul.f32 %v1656, %v1656
  %v2096 = vmul.f32 %v1661, %v1661
  %v2097 = vmul.f32 %v1666, %v1666
  %v2098 = vmul.f32 %v1671, %v1671
  %v2099 = vmul.f32 %v1676, %v1676
  %v2100 = vmul.f32 %v1681, %v1681
  %v2101 = vmul.f32 %v1686, %v1686
  %v2102 = vmul.f32 %v1691, %v1691
  %v2103 = vmul.f32 %v1696, %v1696
  %v2104 = vmul.f32 %v1701, %v1701
  %v2105 = vmul.f32 %v1706, %v1706
  %v2106 = vmul.f32 %v1711, %v1711
  %v2107 = vmul.f32 %v1716, %v1716
  %v2108 = vmul.f32 %v1721, %v1721
  %v2109 = vsub.f32 %v1919, %v2077
  %v2110 = vsub.f32 %v1924, %v2078
  %v2111 = vsub.f32 %v1929, %v2079
  %v2112 = vsub.f32 %v1934, %v2080
  %v2113 = vsub.f32 %v1939, %v2081
  %v2114 = vsub.f32 %v1944, %v2082
  %v2115 = vsub.f32 %v1949, %v2083
  %v2116 = vsub.f32 %v1954, %v2084
  %v2117 = vsub.f32 %v1959, %v2085
  %v2118 = vsub.f32 %v1964, %v2086
  %v2119 = vsub.f32 %v1969, %v2087
  %v2120 = vsub.f32 %v1974, %v2088
  %v2121 = vsub.f32 %v1979, %v2089
  %v2122 = vsub.f32 %v1984, %v2090
  %v2123 = vsub.f32 %v1989, %v2091
  %v2124 = vsub.f32 %v1994, %v2092
  %v2125 = vsub.f32 %v1999, %v2093
  %v2126 = vsub.f32 %v2004, %v2094
  %v2127 = vsub.f32 %v2009, %v2095
  %v2128 = vsub.f32 %v2014, %v2096
  %v2129 = vsub.f32 %v2019, %v2097
  %v2130 = vsub.f32 %v2024, %v2098
  %v2131 = vsub.f32 %v2029, %v2099
  %v2132 = vsub.f32 %v2034, %v2100
  %v2133 = vsub.f32 %v2039, %v2101
  %v2134 = vsub.f32 %v2044, %v2102
  %v2135 = vsub.f32 %v2049, %v2103
  %v2136 = vsub.f32 %v2054, %v2104
  %v2137 = vsub.f32 %v2059, %v2105
  %v2138 = vsub.f32 %v2064, %v2106
  %v2139 = vsub.f32 %v2069, %v2107
  %v2140 = vsub.f32 %v2074, %v2108
  %v2141 = vmax.f32 %v2109, 0.0
  %v2142 = vmax.f32 %v2110, 0.0
  %v2143 = vmax.f32 %v2111, 0.0
  %v2144 = vmax.f32 %v2112, 0.0
  %v2145 = vmax.f32 %v2113, 0.0
  %v2146 = vmax.f32 %v2114, 0.0
  %v2147 = vmax.f32 %v2115, 0.0
  %v2148 = vmax.f32 %v2116, 0.0
  %v2149 = vmax.f32 %v2117, 0.0
  %v2150 = vmax.f32 %v2118, 0.0
  %v2151 = vmax.f32 %v2119, 0.0
  %v2152 = vmax.f32 %v2120, 0.0
  %v2153 = vmax.f32 %v2121, 0.0
  %v2154 = vmax.f32 %v2122, 0.0
  %v2155 = vmax.f32 %v2123, 0.0
  %v2156 = vmax.f32 %v2124, 0.0
  %v2157 = vmax.f32 %v2125, 0.0
  %v2158 = vmax.f32 %v2126, 0.0
  %v2159 = vmax.f32 %v2127, 0.0
  %v2160 = vmax.f32 %v2128, 0.0
  %v2161 = vmax.f32 %v2129, 0.0
  %v2162 = vmax.f32 %v2130, 0.0
  %v2163 = vmax.f32 %v2131, 0.0
  %v2164 = vmax.f32 %v2132, 0.0
  %v2165 = vmax.f32 %v2133, 0.0
  %v2166 = vmax.f32 %v2134, 0.0
  %v2167 = vmax.f32 %v2135, 0.0
  %v2168 = vmax.f32 %v2136, 0.0
  %v2169 = vmax.f32 %v2137, 0.0
  %v2170 = vmax.f32 %v2138, 0.0
  %v2171 = vmax.f32 %v2139, 0.0
  %v2172 = vmax.f32 %v2140, 0.0
  %v2173 = vsub.f32 %v1244, %v1566
  %v2174 = vsub.f32 %v1249, %v1571
  %v2175 = vsub.f32 %v1254, %v1576
  %v2176 = vsub.f32 %v1259, %v1581
  %v2177 = vsub.f32 %v1264, %v1586
  %v2178 = vsub.f32 %v1269, %v1591
  %v2179 = vsub.f32 %v1274, %v1596
  %v2180 = vsub.f32 %v1279, %v1601
  %v2181 = vsub.f32 %v1284, %v1606
  %v2182 = vsub.f32 %v1289, %v1611
  %v2183 = vsub.f32 %v1294, %v1616
  %v2184 = vsub.f32 %v1299, %v1621
  %v2185 = vsub.f32 %v1304, %v1626
  %v2186 = vsub.f32 %v1309, %v1631
  %v2187 = vsub.f32 %v1314, %v1636
  %v2188 = vsub.f32 %v1319, %v1641
  %v2189 = vsub.f32 %v1324, %v1646
  %v2190 = vsub.f32 %v1329, %v1651
  %v2191 = vsub.f32 %v1334, %v1656
  %v2192 = vsub.f32 %v1339, %v1661
  %v2193 = vsub.f32 %v1344, %v1666
  %v2194 = vsub.f32 %v1349, %v1671
  %v2195 = vsub.f32 %v1354, %v1676
  %v2196 = vsub.f32 %v1359, %v1681
  %v2197 = vsub.f32 %v1364, %v1686
  %v2198 = vsub.f32 %v1369, %v1691
  %v2199 = vsub.f32 %v1374, %v1696
  %v2200 = vsub.f32 %v1379, %v1701
  %v2201 = vsub.f32 %v1384, %v1706
  %v2202 = vsub.f32 %v1389, %v1711
  %v2203 = vsub.f32 %v1394, %v1716
  %v2204 = vsub.f32 %v1399, %v1721
  %v2205 = vadd.f32 %v2141, 1e-12
  %v2206 = vadd.f32 %v2142, 1e-12
  %v2207 = vadd.f32 %v2143, 1e-12
  %v2208 = vadd.f32 %v2144, 1e-12
  %v2209 = vadd.f32 %v2145, 1e-12
  %v2210 = vadd.f32 %v2146, 1e-12
  %v2211 = vadd.f32 %v2147, 1e-12
  %v2212 = vadd.f32 %v2148, 1e-12
  %v2213 = vadd.f32 %v2149, 1e-12
  %v2214 = vadd.f32 %v2150, 1e-12
  %v2215 = vadd.f32 %v2151, 1e-12
  %v2216 = vadd.f32 %v2152, 1e-12
  %v2217 = vadd.f32 %v2153, 1e-12
  %v2218 = vadd.f32 %v2154, 1e-12
  %v2219 = vadd.f32 %v2155, 1e-12
  %v2220 = vadd.f32 %v2156, 1e-12
  %v2221 = vadd.f32 %v2157, 1e-12
  %v2222 = vadd.f32 %v2158, 1e-12
  %v2223 = vadd.f32 %v2159, 1e-12
  %v2224 = vadd.f32 %v2160, 1e-12
  %v2225 = vadd.f32 %v2161, 1e-12
  %v2226 = vadd.f32 %v2162, 1e-12
  %v2227 = vadd.f32 %v2163, 1e-12
  %v2228 = vadd.f32 %v2164, 1e-12
  %v2229 = vadd.f32 %v2165, 1e-12
  %v2230 = vadd.f32 %v2166, 1e-12
  %v2231 = vadd.f32 %v2167, 1e-12
  %v2232 = vadd.f32 %v2168, 1e-12
  %v2233 = vadd.f32 %v2169, 1e-12
  %v2234 = vadd.f32 %v2170, 1e-12
  %v2235 = vadd.f32 %v2171, 1e-12
  %v2236 = vadd.f32 %v2172, 1e-12
  %v2237 = vrsqrt.pop %v2205
  %v2238 = vrsqrt.pop %v2206
  %v2239 = vrsqrt.pop %v2207
  %v2240 = vrsqrt.pop %v2208
  %v2241 = vrsqrt.pop %v2209
  %v2242 = vrsqrt.pop %v2210
  %v2243 = vrsqrt.pop %v2211
  %v2244 = vrsqrt.pop %v2212
  %v2245 = vrsqrt.pop %v2213
  %v2246 = vrsqrt.pop %v2214
  %v2247 = vrsqrt.pop %v2215
  %v2248 = vrsqrt.pop %v2216
  %v2249 = vrsqrt.pop %v2217
  %v2250 = vrsqrt.pop %v2218
  %v2251 = vrsqrt.pop %v2219
  %v2252 = vrsqrt.pop %v2220
  %v2253 = vrsqrt.pop %v2221
  %v2254 = vrsqrt.pop %v2222
  %v2255 = vrsqrt.pop %v2223
  %v2256 = vrsqrt.pop %v2224
  %v2257 = vrsqrt.pop %v2225
  %v2258 = vrsqrt.pop %v2226
  %v2259 = vrsqrt.pop %v2227
  %v2260 = vrsqrt.pop %v2228
  %v2261 = vrsqrt.pop %v2229
  %v2262 = vrsqrt.pop %v2230
  %v2263 = vrsqrt.pop %v2231
  %v2264 = vrsqrt.pop %v2232
  %v2265 = vrsqrt.pop %v2233
  %v2266 = vrsqrt.pop %v2234
  %v2267 = vrsqrt.pop %v2235
  %v2268 = vrsqrt.pop %v2236
  %v2269 = vmul.f32 %v2173, %v2237
  %v2270 = vmul.f32 %v2174, %v2238
  %v2271 = vmul.f32 %v2175, %v2239
  %v2272 = vmul.f32 %v2176, %v2240
  %v2273 = vmul.f32 %v2177, %v2241
  %v2274 = vmul.f32 %v2178, %v2242
  %v2275 = vmul.f32 %v2179, %v2243
  %v2276 = vmul.f32 %v2180, %v2244
  %v2277 = vmul.f32 %v2181, %v2245
  %v2278 = vmul.f32 %v2182, %v2246
  %v2279 = vmul.f32 %v2183, %v2247
  %v2280 = vmul.f32 %v2184, %v2248
  %v2281 = vmul.f32 %v2185, %v2249
  %v2282 = vmul.f32 %v2186, %v2250
  %v2283 = vmul.f32 %v2187, %v2251
  %v2284 = vmul.f32 %v2188, %v2252
  %v2285 = vmul.f32 %v2189, %v2253
  %v2286 = vmul.f32 %v2190, %v2254
  %v2287 = vmul.f32 %v2191, %v2255
  %v2288 = vmul.f32 %v2192, %v2256
  %v2289 = vmul.f32 %v2193, %v2257
  %v2290 = vmul.f32 %v2194, %v2258
  %v2291 = vmul.f32 %v2195, %v2259
  %v2292 = vmul.f32 %v2196, %v2260
  %v2293 = vmul.f32 %v2197, %v2261
  %v2294 = vmul.f32 %v2198, %v2262
  %v2295 = vmul.f32 %v2199, %v2263
  %v2296 = vmul.f32 %v2200, %v2264
  %v2297 = vmul.f32 %v2201, %v2265
  %v2298 = vmul.f32 %v2202, %v2266
  %v2299 = vmul.f32 %v2203, %v2267
  %v2300 = vmul.f32 %v2204, %v2268
  %v2301 = vlaneseq
  %v2302 = vshrl.u32 %v2301, 7
  %v2303 = vsub.s32 0, %v2302
  %v2304 = vrot.slane %v32, %v2303
  %v2305 = vmul.f32 %v2304, %v2269
  %v2306 = vmul.f32 %v2304, %v2270
  %v2307 = vmul.f32 %v2304, %v2271
  %v2308 = vmul.f32 %v2304, %v2272
  %v2309 = vmul.f32 %v2304, %v2273
  %v2310 = vmul.f32 %v2304, %v2274
  %v2311 = vmul.f32 %v2304, %v2275
  %v2312 = vmul.f32 %v2304, %v2276
  %v2313 = vmul.f32 %v2304, %v2277
  %v2314 = vmul.f32 %v2304, %v2278
  %v2315 = vmul.f32 %v2304, %v2279
  %v2316 = vmul.f32 %v2304, %v2280
  %v2317 = vmul.f32 %v2304, %v2281
  %v2318 = vmul.f32 %v2304, %v2282
  %v2319 = vmul.f32 %v2304, %v2283
  %v2320 = vmul.f32 %v2304, %v2284
  %v2321 = vmul.f32 %v2304, %v2285
  %v2322 = vmul.f32 %v2304, %v2286
  %v2323 = vmul.f32 %v2304, %v2287
  %v2324 = vmul.f32 %v2304, %v2288
  %v2325 = vmul.f32 %v2304, %v2289
  %v2326 = vmul.f32 %v2304, %v2290
  %v2327 = vmul.f32 %v2304, %v2291
  %v2328 = vmul.f32 %v2304, %v2292
  %v2329 = vmul.f32 %v2304, %v2293
  %v2330 = vmul.f32 %v2304, %v2294
  %v2331 = vmul.f32 %v2304, %v2295
  %v2332 = vmul.f32 %v2304, %v2296
  %v2333 = vmul.f32 %v2304, %v2297
  %v2334 = vmul.f32 %v2304, %v2298
  %v2335 = vmul.f32 %v2304, %v2299
  %v2336 = vmul.f32 %v2304, %v2300
  %v2337 = vlaneseq
  %v2338 = vshrl.u32 %v2337, 7
  %v2339 = vsub.s32 0, %v2338
  %v2340 = vrot.slane %v33, %v2339
  %v2341 = vadd.f32 %v2305, %v2340
  %v2342 = vadd.f32 %v2306, %v2340
  %v2343 = vadd.f32 %v2307, %v2340
  %v2344 = vadd.f32 %v2308, %v2340
  %v2345 = vadd.f32 %v2309, %v2340
  %v2346 = vadd.f32 %v2310, %v2340
  %v2347 = vadd.f32 %v2311, %v2340
  %v2348 = vadd.f32 %v2312, %v2340
  %v2349 = vadd.f32 %v2313, %v2340
  %v2350 = vadd.f32 %v2314, %v2340
  %v2351 = vadd.f32 %v2315, %v2340
  %v2352 = vadd.f32 %v2316, %v2340
  %v2353 = vadd.f32 %v2317, %v2340
  %v2354 = vadd.f32 %v2318, %v2340
  %v2355 = vadd.f32 %v2319, %v2340
  %v2356 = vadd.f32 %v2320, %v2340
  %v2357 = vadd.f32 %v2321, %v2340
  %v2358 = vadd.f32 %v2322, %v2340
  %v2359 = vadd.f32 %v2323, %v2340
  %v2360 = vadd.f32 %v2324, %v2340
  %v2361 = vadd.f32 %v2325, %v2340
  %v2362 = vadd.f32 %v2326, %v2340
  %v2363 = vadd.f32 %v2327, %v2340
  %v2364 = vadd.f32 %v2328, %v2340
  %v2365 = vadd.f32 %v2329, %v2340
  %v2366 = vadd.f32 %v2330, %v2340
  %v2367 = vadd.f32 %v2331, %v2340
  %v2368 = vadd.f32 %v2332, %v2340
  %v2369 = vadd.f32 %v2333, %v2340
  %v2370 = vadd.f32 %v2334, %v2340
  %v2371 = vadd.f32 %v2335, %v2340
  %v2372 = vadd.f32 %v2336, %v2340
  %v2373 = vmax.f32 %v2341, 0.0
  %v2374 = vmax.f32 %v2342, 0.0
  %v2375 = vmax.f32 %v2343, 0.0
  %v2376 = vmax.f32 %v2344, 0.0
  %v2377 = vmax.f32 %v2345, 0.0
  %v2378 = vmax.f32 %v2346, 0.0
  %v2379 = vmax.f32 %v2347, 0.0
  %v2380 = vmax.f32 %v2348, 0.0
  %v2381 = vmax.f32 %v2349, 0.0
  %v2382 = vmax.f32 %v2350, 0.0
  %v2383 = vmax.f32 %v2351, 0.0
  %v2384 = vmax.f32 %v2352, 0.0
  %v2385 = vmax.f32 %v2353, 0.0
  %v2386 = vmax.f32 %v2354, 0.0
  %v2387 = vmax.f32 %v2355, 0.0
  %v2388 = vmax.f32 %v2356, 0.0
  %v2389 = vmax.f32 %v2357, 0.0
  %v2390 = vmax.f32 %v2358, 0.0
  %v2391 = vmax.f32 %v2359, 0.0
  %v2392 = vmax.f32 %v2360, 0.0
  %v2393 = vmax.f32 %v2361, 0.0
  %v2394 = vmax.f32 %v2362, 0.0
  %v2395 = vmax.f32 %v2363, 0.0
  %v2396 = vmax.f32 %v2364, 0.0
  %v2397 = vmax.f32 %v2365, 0.0
  %v2398 = vmax.f32 %v2366, 0.0
  %v2399 = vmax.f32 %v2367, 0.0
  %v2400 = vmax.f32 %v2368, 0.0
  %v2401 = vmax.f32 %v2369, 0.0
  %v2402 = vmax.f32 %v2370, 0.0
  %v2403 = vmax.f32 %v2371, 0.0
  %v2404 = vmax.f32 %v2372, 0.0
  %v2405 = vld [vmem:[%s6] sm:$0xff]
  %v2406 = vld [vmem:[%s6 + $0x8] sm:$0xff]
  %v2408 = vsel %vm1402, %v2373, 0
  %v2411 = vsel %vm1402, %v2374, 0
  %v2414 = vsel %vm1402, %v2375, 0
  %v2417 = vsel %vm1402, %v2376, 0
  %v2420 = vsel %vm1402, %v2377, 0
  %v2423 = vsel %vm1402, %v2378, 0
  %v2426 = vsel %vm1402, %v2379, 0
  %v2429 = vsel %vm1402, %v2380, 0
  %v2432 = vsel %vm1402, %v2381, 0
  %v2435 = vsel %vm1402, %v2382, 0
  %v2438 = vsel %vm1402, %v2383, 0
  %v2441 = vsel %vm1402, %v2384, 0
  %v2444 = vsel %vm1402, %v2385, 0
  %v2447 = vsel %vm1402, %v2386, 0
  %v2450 = vsel %vm1402, %v2387, 0
  %v2453 = vsel %vm1402, %v2388, 0
  %v2456 = vsel %vm1402, %v2389, 0
  %v2459 = vsel %vm1402, %v2390, 0
  %v2462 = vsel %vm1402, %v2391, 0
  %v2465 = vsel %vm1402, %v2392, 0
  %v2468 = vsel %vm1402, %v2393, 0
  %v2471 = vsel %vm1402, %v2394, 0
  %v2474 = vsel %vm1402, %v2395, 0
  %v2477 = vsel %vm1402, %v2396, 0
  %v2480 = vsel %vm1402, %v2397, 0
  %v2483 = vsel %vm1402, %v2398, 0
  %v2486 = vsel %vm1402, %v2399, 0
  %v2489 = vsel %vm1402, %v2400, 0
  %v2492 = vsel %vm1402, %v2401, 0
  %v2495 = vsel %vm1402, %v2402, 0
  %v2498 = vsel %vm1402, %v2403, 0
  %v2501 = vsel %vm1402, %v2404, 0
  %2503 = vmatprep.subr.mxu0 0.0
  %2504 = vmatpush1.msra.mxu0 %v2405
  %2505 = vmatprep.subr.mxu0 0.0
  %2506 = vmatpush1.msra.mxu0 %v2406
  %2507 = vmatprep.subr.mxu0 0.0
  %2508 = vmatpush1.msra.mxu0 0.0
  %2509 = vmatprep.subr.mxu0 0.0
  %2510 = vmatpush1.msra.mxu0 0.0
  %2511 = vmatprep.subr.mxu0 0.0
  %2512 = vmatpush1.msra.mxu0 0.0
  %2513 = vmatprep.subr.mxu0 0.0
  %2514 = vmatpush1.msra.mxu0 0.0
  %2515 = vmatprep.subr.mxu0 0.0
  %2516 = vmatpush1.msra.mxu0 0.0
  %2517 = vmatprep.subr.mxu0 0.0
  %2518 = vmatpush1.msra.mxu0 0.0
  %2519 = vmatprep.subr.mxu0 0.0
  %2520 = vmatpush1.msra.mxu0 0.0
  %2521 = vmatprep.subr.mxu0 0.0
  %2522 = vmatpush1.msra.mxu0 0.0
  %2523 = vmatprep.subr.mxu0 0.0
  %2524 = vmatpush1.msra.mxu0 0.0
  %2525 = vmatprep.subr.mxu0 0.0
  %2526 = vmatpush1.msra.mxu0 0.0
  %2527 = vmatprep.subr.mxu0 0.0
  %2528 = vmatpush1.msra.mxu0 0.0
  %2529 = vmatprep.subr.mxu0 0.0
  %2530 = vmatpush1.msra.mxu0 0.0
  %2531 = vmatprep.subr.mxu0 0.0
  %2532 = vmatpush1.msra.mxu0 0.0
  %2533 = vmatprep.subr.mxu0 0.0
  %2534 = vmatpush1.msra.mxu0 0.0
  %2535 = vmatprep.subr.mxu0 0.0
  %2536 = vmatpush1.msra.mxu0 0.0
  %2537 = vmatprep.subr.mxu0 0.0
  %2538 = vmatpush1.msra.mxu0 0.0
  %2539 = vmatprep.subr.mxu0 0.0
  %2540 = vmatpush1.msra.mxu0 0.0
  %2541 = vmatprep.subr.mxu0 0.0
  %2542 = vmatpush1.msra.mxu0 0.0
  %2543 = vmatprep.subr.mxu0 0.0
  %2544 = vmatpush1.msra.mxu0 0.0
  %2545 = vmatprep.subr.mxu0 0.0
  %2546 = vmatpush1.msra.mxu0 0.0
  %2547 = vmatprep.subr.mxu0 0.0
  %2548 = vmatpush1.msra.mxu0 0.0
  %2549 = vmatprep.subr.mxu0 0.0
  %2550 = vmatpush1.msra.mxu0 0.0
  %2551 = vmatprep.subr.mxu0 0.0
  %2552 = vmatpush1.msra.mxu0 0.0
  %2553 = vmatprep.subr.mxu0 0.0
  %2554 = vmatpush1.msra.mxu0 0.0
  %2555 = vmatprep.subr.mxu0 0.0
  %2556 = vmatpush1.msra.mxu0 0.0
  %2557 = vmatprep.subr.mxu0 0.0
  %2558 = vmatpush1.msra.mxu0 0.0
  %2559 = vmatprep.subr.mxu0 0.0
  %2560 = vmatpush1.msra.mxu0 0.0
  %2561 = vmatprep.subr.mxu0 0.0
  %2562 = vmatpush1.msra.mxu0 0.0
  %2563 = vmatprep.subr.mxu0 0.0
  %2564 = vmatpush1.msra.mxu0 0.0
  %2565 = vmatprep.subr.mxu0 0.0
  %2566 = vmatpush1.msra.mxu0 0.0
  %2567 = vmatprep.mubr.f32.mxu0 0.0
  %2568 = vmatmul.mubr.f32.gmra.mrb[0].mxu0 %v2408
  %v2569 = vpop.f32.mrb[0].mxu0
  %v2570 = vadd.f32 0.0, %v2569
  %v2571 = vpop.f32.mrb[0].mxu0
  %2572 = vmatprep.mubr.f32.mxu0 0.0
  %2573 = vmatmul.mubr.f32.gmra.mrb[0].mxu0 %v2411
  %v2574 = vpop.f32.mrb[0].mxu0
  %v2575 = vadd.f32 0.0, %v2574
  %v2576 = vpop.f32.mrb[0].mxu0
  %2577 = vmatprep.mubr.f32.mxu0 0.0
  %2578 = vmatmul.mubr.f32.gmra.mrb[0].mxu0 %v2414
  %v2579 = vpop.f32.mrb[0].mxu0
  %v2580 = vadd.f32 0.0, %v2579
  %v2581 = vpop.f32.mrb[0].mxu0
  %2582 = vmatprep.mubr.f32.mxu0 0.0
  %2583 = vmatmul.mubr.f32.gmra.mrb[0].mxu0 %v2417
  %v2584 = vpop.f32.mrb[0].mxu0
  %v2585 = vadd.f32 0.0, %v2584
  %v2586 = vpop.f32.mrb[0].mxu0
  %2587 = vmatprep.mubr.f32.mxu0 0.0
  %2588 = vmatmul.mubr.f32.gmra.mrb[0].mxu0 %v2420
  %v2589 = vpop.f32.mrb[0].mxu0
  %v2590 = vadd.f32 0.0, %v2589
  %v2591 = vpop.f32.mrb[0].mxu0
  %2592 = vmatprep.mubr.f32.mxu0 0.0
  %2593 = vmatmul.mubr.f32.gmra.mrb[0].mxu0 %v2423
  %v2594 = vpop.f32.mrb[0].mxu0
  %v2595 = vadd.f32 0.0, %v2594
  %v2596 = vpop.f32.mrb[0].mxu0
  %2597 = vmatprep.mubr.f32.mxu0 0.0
  %2598 = vmatmul.mubr.f32.gmra.mrb[0].mxu0 %v2426
  %v2599 = vpop.f32.mrb[0].mxu0
  %v2600 = vadd.f32 0.0, %v2599
  %v2601 = vpop.f32.mrb[0].mxu0
  %2602 = vmatprep.mubr.f32.mxu0 0.0
  %2603 = vmatmul.mubr.f32.gmra.mrb[0].mxu0 %v2429
  %v2604 = vpop.f32.mrb[0].mxu0
  %v2605 = vadd.f32 0.0, %v2604
  %v2606 = vpop.f32.mrb[0].mxu0
  %2607 = vmatprep.mubr.f32.mxu0 0.0
  %2608 = vmatmul.mubr.f32.gmra.mrb[0].mxu0 %v2432
  %v2609 = vpop.f32.mrb[0].mxu0
  %v2610 = vadd.f32 0.0, %v2609
  %v2611 = vpop.f32.mrb[0].mxu0
  %2612 = vmatprep.mubr.f32.mxu0 0.0
  %2613 = vmatmul.mubr.f32.gmra.mrb[0].mxu0 %v2435
  %v2614 = vpop.f32.mrb[0].mxu0
  %v2615 = vadd.f32 0.0, %v2614
  %v2616 = vpop.f32.mrb[0].mxu0
  %2617 = vmatprep.mubr.f32.mxu0 0.0
  %2618 = vmatmul.mubr.f32.gmra.mrb[0].mxu0 %v2438
  %v2619 = vpop.f32.mrb[0].mxu0
  %v2620 = vadd.f32 0.0, %v2619
  %v2621 = vpop.f32.mrb[0].mxu0
  %2622 = vmatprep.mubr.f32.mxu0 0.0
  %2623 = vmatmul.mubr.f32.gmra.mrb[0].mxu0 %v2441
  %v2624 = vpop.f32.mrb[0].mxu0
  %v2625 = vadd.f32 0.0, %v2624
  %v2626 = vpop.f32.mrb[0].mxu0
  %2627 = vmatprep.mubr.f32.mxu0 0.0
  %2628 = vmatmul.mubr.f32.gmra.mrb[0].mxu0 %v2444
  %v2629 = vpop.f32.mrb[0].mxu0
  %v2630 = vadd.f32 0.0, %v2629
  %v2631 = vpop.f32.mrb[0].mxu0
  %2632 = vmatprep.mubr.f32.mxu0 0.0
  %2633 = vmatmul.mubr.f32.gmra.mrb[0].mxu0 %v2447
  %v2634 = vpop.f32.mrb[0].mxu0
  %v2635 = vadd.f32 0.0, %v2634
  %v2636 = vpop.f32.mrb[0].mxu0
  %2637 = vmatprep.mubr.f32.mxu0 0.0
  %2638 = vmatmul.mubr.f32.gmra.mrb[0].mxu0 %v2450
  %v2639 = vpop.f32.mrb[0].mxu0
  %v2640 = vadd.f32 0.0, %v2639
  %v2641 = vpop.f32.mrb[0].mxu0
  %2642 = vmatprep.mubr.f32.mxu0 0.0
  %2643 = vmatmul.mubr.f32.gmra.mrb[0].mxu0 %v2453
  %v2644 = vpop.f32.mrb[0].mxu0
  %v2645 = vadd.f32 0.0, %v2644
  %v2646 = vpop.f32.mrb[0].mxu0
  %2647 = vmatprep.mubr.f32.mxu0 0.0
  %2648 = vmatmul.mubr.f32.gmra.mrb[0].mxu0 %v2456
  %v2649 = vpop.f32.mrb[0].mxu0
  %v2650 = vadd.f32 0.0, %v2649
  %v2651 = vpop.f32.mrb[0].mxu0
  %2652 = vmatprep.mubr.f32.mxu0 0.0
  %2653 = vmatmul.mubr.f32.gmra.mrb[0].mxu0 %v2459
  %v2654 = vpop.f32.mrb[0].mxu0
  %v2655 = vadd.f32 0.0, %v2654
  %v2656 = vpop.f32.mrb[0].mxu0
  %2657 = vmatprep.mubr.f32.mxu0 0.0
  %2658 = vmatmul.mubr.f32.gmra.mrb[0].mxu0 %v2462
  %v2659 = vpop.f32.mrb[0].mxu0
  %v2660 = vadd.f32 0.0, %v2659
  %v2661 = vpop.f32.mrb[0].mxu0
  %2662 = vmatprep.mubr.f32.mxu0 0.0
  %2663 = vmatmul.mubr.f32.gmra.mrb[0].mxu0 %v2465
  %v2664 = vpop.f32.mrb[0].mxu0
  %v2665 = vadd.f32 0.0, %v2664
  %v2666 = vpop.f32.mrb[0].mxu0
  %2667 = vmatprep.mubr.f32.mxu0 0.0
  %2668 = vmatmul.mubr.f32.gmra.mrb[0].mxu0 %v2468
  %v2669 = vpop.f32.mrb[0].mxu0
  %v2670 = vadd.f32 0.0, %v2669
  %v2671 = vpop.f32.mrb[0].mxu0
  %2672 = vmatprep.mubr.f32.mxu0 0.0
  %2673 = vmatmul.mubr.f32.gmra.mrb[0].mxu0 %v2471
  %v2674 = vpop.f32.mrb[0].mxu0
  %v2675 = vadd.f32 0.0, %v2674
  %v2676 = vpop.f32.mrb[0].mxu0
  %2677 = vmatprep.mubr.f32.mxu0 0.0
  %2678 = vmatmul.mubr.f32.gmra.mrb[0].mxu0 %v2474
  %v2679 = vpop.f32.mrb[0].mxu0
  %v2680 = vadd.f32 0.0, %v2679
  %v2681 = vpop.f32.mrb[0].mxu0
  %2682 = vmatprep.mubr.f32.mxu0 0.0
  %2683 = vmatmul.mubr.f32.gmra.mrb[0].mxu0 %v2477
  %v2684 = vpop.f32.mrb[0].mxu0
  %v2685 = vadd.f32 0.0, %v2684
  %v2686 = vpop.f32.mrb[0].mxu0
  %2687 = vmatprep.mubr.f32.mxu0 0.0
  %2688 = vmatmul.mubr.f32.gmra.mrb[0].mxu0 %v2480
  %v2689 = vpop.f32.mrb[0].mxu0
  %v2690 = vadd.f32 0.0, %v2689
  %v2691 = vpop.f32.mrb[0].mxu0
  %2692 = vmatprep.mubr.f32.mxu0 0.0
  %2693 = vmatmul.mubr.f32.gmra.mrb[0].mxu0 %v2483
  %v2694 = vpop.f32.mrb[0].mxu0
  %v2695 = vadd.f32 0.0, %v2694
  %v2696 = vpop.f32.mrb[0].mxu0
  %2697 = vmatprep.mubr.f32.mxu0 0.0
  %2698 = vmatmul.mubr.f32.gmra.mrb[0].mxu0 %v2486
  %v2699 = vpop.f32.mrb[0].mxu0
  %v2700 = vadd.f32 0.0, %v2699
  %v2701 = vpop.f32.mrb[0].mxu0
  %2702 = vmatprep.mubr.f32.mxu0 0.0
  %2703 = vmatmul.mubr.f32.gmra.mrb[0].mxu0 %v2489
  %v2704 = vpop.f32.mrb[0].mxu0
  %v2705 = vadd.f32 0.0, %v2704
  %v2706 = vpop.f32.mrb[0].mxu0
  %2707 = vmatprep.mubr.f32.mxu0 0.0
  %2708 = vmatmul.mubr.f32.gmra.mrb[0].mxu0 %v2492
  %v2709 = vpop.f32.mrb[0].mxu0
  %v2710 = vadd.f32 0.0, %v2709
  %v2711 = vpop.f32.mrb[0].mxu0
  %2712 = vmatprep.mubr.f32.mxu0 0.0
  %2713 = vmatmul.mubr.f32.gmra.mrb[0].mxu0 %v2495
  %v2714 = vpop.f32.mrb[0].mxu0
  %v2715 = vadd.f32 0.0, %v2714
  %v2716 = vpop.f32.mrb[0].mxu0
  %2717 = vmatprep.mubr.f32.mxu0 0.0
  %2718 = vmatmul.mubr.f32.gmra.mrb[0].mxu0 %v2498
  %v2719 = vpop.f32.mrb[0].mxu0
  %v2720 = vadd.f32 0.0, %v2719
  %v2721 = vpop.f32.mrb[0].mxu0
  %2722 = vmatprep.mubr.f32.mxu0 0.0
  %2723 = vmatmul.mubr.f32.gmra.mrb[0].mxu0 %v2501
  %v2724 = vpop.f32.mrb[0].mxu0
  %v2725 = vadd.f32 0.0, %v2724
  %v2726 = vpop.f32.mrb[0].mxu0
  %2727 = vdwg.mxu0
  %v2728 = vld [vmem:[%s1] sm:$0xff]
  %v2729 = vld [vmem:[%s1 + $0x8] sm:$0xff]
  %v2730 = vld [vmem:[%s1 + $0x10] sm:$0xff]
  %v2731 = vld [vmem:[%s1 + $0x18] sm:$0xff]
  %v2732 = vld [vmem:[%s1 + $0x20] sm:$0xff]
  %v2733 = vld [vmem:[%s1 + $0x28] sm:$0xff]
  %v2734 = vld [vmem:[%s1 + $0x30] sm:$0xff]
  %v2735 = vld [vmem:[%s1 + $0x38] sm:$0xff]
  %v2736 = vld [vmem:[%s1 + $0x40] sm:$0xff]
  %v2737 = vld [vmem:[%s1 + $0x48] sm:$0xff]
  %v2738 = vld [vmem:[%s1 + $0x50] sm:$0xff]
  %v2739 = vld [vmem:[%s1 + $0x58] sm:$0xff]
  %v2740 = vld [vmem:[%s1 + $0x60] sm:$0xff]
  %v2741 = vld [vmem:[%s1 + $0x68] sm:$0xff]
  %v2742 = vld [vmem:[%s1 + $0x70] sm:$0xff]
  %v2743 = vld [vmem:[%s1 + $0x78] sm:$0xff]
  %v2744 = vld [vmem:[%s1 + $0x80] sm:$0xff]
  %v2745 = vld [vmem:[%s1 + $0x88] sm:$0xff]
  %v2746 = vld [vmem:[%s1 + $0x90] sm:$0xff]
  %v2747 = vld [vmem:[%s1 + $0x98] sm:$0xff]
  %v2748 = vld [vmem:[%s1 + $0xa0] sm:$0xff]
  %v2749 = vld [vmem:[%s1 + $0xa8] sm:$0xff]
  %v2750 = vld [vmem:[%s1 + $0xb0] sm:$0xff]
  %v2751 = vld [vmem:[%s1 + $0xb8] sm:$0xff]
  %v2752 = vld [vmem:[%s1 + $0xc0] sm:$0xff]
  %v2753 = vld [vmem:[%s1 + $0xc8] sm:$0xff]
  %v2754 = vld [vmem:[%s1 + $0xd0] sm:$0xff]
  %v2755 = vld [vmem:[%s1 + $0xd8] sm:$0xff]
  %v2756 = vld [vmem:[%s1 + $0xe0] sm:$0xff]
  %v2757 = vld [vmem:[%s1 + $0xe8] sm:$0xff]
  %v2758 = vld [vmem:[%s1 + $0xf0] sm:$0xff]
  %v2759 = vld [vmem:[%s1 + $0xf8] sm:$0xff]
  %v2760 = vld [vmem:[%s3] sm:$0xff]
  %v2761 = vld [vmem:[%s3 + $0x8] sm:$0x7f]
  %vm2762 = vcmask 121856
  %v2764 = vsel %vm2762, %v2728, 0
  %v2767 = vsel %vm2762, %v2729, 0
  %v2770 = vsel %vm2762, %v2730, 0
  %v2773 = vsel %vm2762, %v2731, 0
  %v2776 = vsel %vm2762, %v2732, 0
  %v2779 = vsel %vm2762, %v2733, 0
  %v2782 = vsel %vm2762, %v2734, 0
  %v2785 = vsel %vm2762, %v2735, 0
  %v2788 = vsel %vm2762, %v2736, 0
  %v2791 = vsel %vm2762, %v2737, 0
  %v2794 = vsel %vm2762, %v2738, 0
  %v2797 = vsel %vm2762, %v2739, 0
  %v2800 = vsel %vm2762, %v2740, 0
  %v2803 = vsel %vm2762, %v2741, 0
  %v2806 = vsel %vm2762, %v2742, 0
  %v2809 = vsel %vm2762, %v2743, 0
  %v2812 = vsel %vm2762, %v2744, 0
  %v2815 = vsel %vm2762, %v2745, 0
  %v2818 = vsel %vm2762, %v2746, 0
  %v2821 = vsel %vm2762, %v2747, 0
  %v2824 = vsel %vm2762, %v2748, 0
  %v2827 = vsel %vm2762, %v2749, 0
  %v2830 = vsel %vm2762, %v2750, 0
  %v2833 = vsel %vm2762, %v2751, 0
  %v2836 = vsel %vm2762, %v2752, 0
  %v2839 = vsel %vm2762, %v2753, 0
  %v2842 = vsel %vm2762, %v2754, 0
  %v2845 = vsel %vm2762, %v2755, 0
  %v2848 = vsel %vm2762, %v2756, 0
  %v2851 = vsel %vm2762, %v2757, 0
  %v2854 = vsel %vm2762, %v2758, 0
  %v2857 = vsel %vm2762, %v2759, 0
  %vm2859 = vcmask 1046528
  %v2861 = vsel %vm2859, %v2761, 0
  %2863 = vmatprep.subr.mxu0 0.0
  %2864 = vmatpush1.msra.mxu0 %v2760
  %2865 = vmatprep.subr.mxu0 0.0
  %2866 = vmatpush1.msra.mxu0 %v2861
  %2867 = vmatprep.subr.mxu0 0.0
  %2868 = vmatpush1.msra.mxu0 0.0
  %2869 = vmatprep.subr.mxu0 0.0
  %2870 = vmatpush1.msra.mxu0 0.0
  %2871 = vmatprep.subr.mxu0 0.0
  %2872 = vmatpush1.msra.mxu0 0.0
  %2873 = vmatprep.subr.mxu0 0.0
  %2874 = vmatpush1.msra.mxu0 0.0
  %2875 = vmatprep.subr.mxu0 0.0
  %2876 = vmatpush1.msra.mxu0 0.0
  %2877 = vmatprep.subr.mxu0 0.0
  %2878 = vmatpush1.msra.mxu0 0.0
  %2879 = vmatprep.subr.mxu0 0.0
  %2880 = vmatpush1.msra.mxu0 0.0
  %2881 = vmatprep.subr.mxu0 0.0
  %2882 = vmatpush1.msra.mxu0 0.0
  %2883 = vmatprep.subr.mxu0 0.0
  %2884 = vmatpush1.msra.mxu0 0.0
  %2885 = vmatprep.subr.mxu0 0.0
  %2886 = vmatpush1.msra.mxu0 0.0
  %2887 = vmatprep.subr.mxu0 0.0
  %2888 = vmatpush1.msra.mxu0 0.0
  %2889 = vmatprep.subr.mxu0 0.0
  %2890 = vmatpush1.msra.mxu0 0.0
  %2891 = vmatprep.subr.mxu0 0.0
  %2892 = vmatpush1.msra.mxu0 0.0
  %2893 = vmatprep.subr.mxu0 0.0
  %2894 = vmatpush1.msra.mxu0 0.0
  %2895 = vmatprep.subr.mxu0 0.0
  %2896 = vmatpush1.msra.mxu0 0.0
  %2897 = vmatprep.subr.mxu0 0.0
  %2898 = vmatpush1.msra.mxu0 0.0
  %2899 = vmatprep.subr.mxu0 0.0
  %2900 = vmatpush1.msra.mxu0 0.0
  %2901 = vmatprep.subr.mxu0 0.0
  %2902 = vmatpush1.msra.mxu0 0.0
  %2903 = vmatprep.subr.mxu0 0.0
  %2904 = vmatpush1.msra.mxu0 0.0
  %2905 = vmatprep.subr.mxu0 0.0
  %2906 = vmatpush1.msra.mxu0 0.0
  %2907 = vmatprep.subr.mxu0 0.0
  %2908 = vmatpush1.msra.mxu0 0.0
  %2909 = vmatprep.subr.mxu0 0.0
  %2910 = vmatpush1.msra.mxu0 0.0
  %2911 = vmatprep.subr.mxu0 0.0
  %2912 = vmatpush1.msra.mxu0 0.0
  %2913 = vmatprep.subr.mxu0 0.0
  %2914 = vmatpush1.msra.mxu0 0.0
  %2915 = vmatprep.subr.mxu0 0.0
  %2916 = vmatpush1.msra.mxu0 0.0
  %2917 = vmatprep.subr.mxu0 0.0
  %2918 = vmatpush1.msra.mxu0 0.0
  %2919 = vmatprep.subr.mxu0 0.0
  %2920 = vmatpush1.msra.mxu0 0.0
  %2921 = vmatprep.subr.mxu0 0.0
  %2922 = vmatpush1.msra.mxu0 0.0
  %2923 = vmatprep.subr.mxu0 0.0
  %2924 = vmatpush1.msra.mxu0 0.0
  %2925 = vmatprep.subr.mxu0 0.0
  %2926 = vmatpush1.msra.mxu0 0.0
  %2927 = vmatprep.mubr.f32.mxu0 0.0
  %2928 = vmatmul.mubr.f32.gmra.mrb[0].mxu0 %v2764
  %v2929 = vpop.f32.mrb[0].mxu0
  %v2930 = vadd.f32 0.0, %v2929
  %v2931 = vpop.f32.mrb[0].mxu0
  %2932 = vmatprep.mubr.f32.mxu0 0.0
  %2933 = vmatmul.mubr.f32.gmra.mrb[0].mxu0 %v2767
  %v2934 = vpop.f32.mrb[0].mxu0
  %v2935 = vadd.f32 0.0, %v2934
  %v2936 = vpop.f32.mrb[0].mxu0
  %2937 = vmatprep.mubr.f32.mxu0 0.0
  %2938 = vmatmul.mubr.f32.gmra.mrb[0].mxu0 %v2770
  %v2939 = vpop.f32.mrb[0].mxu0
  %v2940 = vadd.f32 0.0, %v2939
  %v2941 = vpop.f32.mrb[0].mxu0
  %2942 = vmatprep.mubr.f32.mxu0 0.0
  %2943 = vmatmul.mubr.f32.gmra.mrb[0].mxu0 %v2773
  %v2944 = vpop.f32.mrb[0].mxu0
  %v2945 = vadd.f32 0.0, %v2944
  %v2946 = vpop.f32.mrb[0].mxu0
  %2947 = vmatprep.mubr.f32.mxu0 0.0
  %2948 = vmatmul.mubr.f32.gmra.mrb[0].mxu0 %v2776
  %v2949 = vpop.f32.mrb[0].mxu0
  %v2950 = vadd.f32 0.0, %v2949
  %v2951 = vpop.f32.mrb[0].mxu0
  %2952 = vmatprep.mubr.f32.mxu0 0.0
  %2953 = vmatmul.mubr.f32.gmra.mrb[0].mxu0 %v2779
  %v2954 = vpop.f32.mrb[0].mxu0
  %v2955 = vadd.f32 0.0, %v2954
  %v2956 = vpop.f32.mrb[0].mxu0
  %2957 = vmatprep.mubr.f32.mxu0 0.0
  %2958 = vmatmul.mubr.f32.gmra.mrb[0].mxu0 %v2782
  %v2959 = vpop.f32.mrb[0].mxu0
  %v2960 = vadd.f32 0.0, %v2959
  %v2961 = vpop.f32.mrb[0].mxu0
  %2962 = vmatprep.mubr.f32.mxu0 0.0
  %2963 = vmatmul.mubr.f32.gmra.mrb[0].mxu0 %v2785
  %v2964 = vpop.f32.mrb[0].mxu0
  %v2965 = vadd.f32 0.0, %v2964
  %v2966 = vpop.f32.mrb[0].mxu0
  %2967 = vmatprep.mubr.f32.mxu0 0.0
  %2968 = vmatmul.mubr.f32.gmra.mrb[0].mxu0 %v2788
  %v2969 = vpop.f32.mrb[0].mxu0
  %v2970 = vadd.f32 0.0, %v2969
  %v2971 = vpop.f32.mrb[0].mxu0
  %2972 = vmatprep.mubr.f32.mxu0 0.0
  %2973 = vmatmul.mubr.f32.gmra.mrb[0].mxu0 %v2791
  %v2974 = vpop.f32.mrb[0].mxu0
  %v2975 = vadd.f32 0.0, %v2974
  %v2976 = vpop.f32.mrb[0].mxu0
  %2977 = vmatprep.mubr.f32.mxu0 0.0
  %2978 = vmatmul.mubr.f32.gmra.mrb[0].mxu0 %v2794
  %v2979 = vpop.f32.mrb[0].mxu0
  %v2980 = vadd.f32 0.0, %v2979
  %v2981 = vpop.f32.mrb[0].mxu0
  %2982 = vmatprep.mubr.f32.mxu0 0.0
  %2983 = vmatmul.mubr.f32.gmra.mrb[0].mxu0 %v2797
  %v2984 = vpop.f32.mrb[0].mxu0
  %v2985 = vadd.f32 0.0, %v2984
  %v2986 = vpop.f32.mrb[0].mxu0
  %2987 = vmatprep.mubr.f32.mxu0 0.0
  %2988 = vmatmul.mubr.f32.gmra.mrb[0].mxu0 %v2800
  %v2989 = vpop.f32.mrb[0].mxu0
  %v2990 = vadd.f32 0.0, %v2989
  %v2991 = vpop.f32.mrb[0].mxu0
  %2992 = vmatprep.mubr.f32.mxu0 0.0
  %2993 = vmatmul.mubr.f32.gmra.mrb[0].mxu0 %v2803
  %v2994 = vpop.f32.mrb[0].mxu0
  %v2995 = vadd.f32 0.0, %v2994
  %v2996 = vpop.f32.mrb[0].mxu0
  %2997 = vmatprep.mubr.f32.mxu0 0.0
  %2998 = vmatmul.mubr.f32.gmra.mrb[0].mxu0 %v2806
  %v2999 = vpop.f32.mrb[0].mxu0
  %v3000 = vadd.f32 0.0, %v2999
  %v3001 = vpop.f32.mrb[0].mxu0
  %3002 = vmatprep.mubr.f32.mxu0 0.0
  %3003 = vmatmul.mubr.f32.gmra.mrb[0].mxu0 %v2809
  %v3004 = vpop.f32.mrb[0].mxu0
  %v3005 = vadd.f32 0.0, %v3004
  %v3006 = vpop.f32.mrb[0].mxu0
  %3007 = vmatprep.mubr.f32.mxu0 0.0
  %3008 = vmatmul.mubr.f32.gmra.mrb[0].mxu0 %v2812
  %v3009 = vpop.f32.mrb[0].mxu0
  %v3010 = vadd.f32 0.0, %v3009
  %v3011 = vpop.f32.mrb[0].mxu0
  %3012 = vmatprep.mubr.f32.mxu0 0.0
  %3013 = vmatmul.mubr.f32.gmra.mrb[0].mxu0 %v2815
  %v3014 = vpop.f32.mrb[0].mxu0
  %v3015 = vadd.f32 0.0, %v3014
  %v3016 = vpop.f32.mrb[0].mxu0
  %3017 = vmatprep.mubr.f32.mxu0 0.0
  %3018 = vmatmul.mubr.f32.gmra.mrb[0].mxu0 %v2818
  %v3019 = vpop.f32.mrb[0].mxu0
  %v3020 = vadd.f32 0.0, %v3019
  %v3021 = vpop.f32.mrb[0].mxu0
  %3022 = vmatprep.mubr.f32.mxu0 0.0
  %3023 = vmatmul.mubr.f32.gmra.mrb[0].mxu0 %v2821
  %v3024 = vpop.f32.mrb[0].mxu0
  %v3025 = vadd.f32 0.0, %v3024
  %v3026 = vpop.f32.mrb[0].mxu0
  %3027 = vmatprep.mubr.f32.mxu0 0.0
  %3028 = vmatmul.mubr.f32.gmra.mrb[0].mxu0 %v2824
  %v3029 = vpop.f32.mrb[0].mxu0
  %v3030 = vadd.f32 0.0, %v3029
  %v3031 = vpop.f32.mrb[0].mxu0
  %3032 = vmatprep.mubr.f32.mxu0 0.0
  %3033 = vmatmul.mubr.f32.gmra.mrb[0].mxu0 %v2827
  %v3034 = vpop.f32.mrb[0].mxu0
  %v3035 = vadd.f32 0.0, %v3034
  %v3036 = vpop.f32.mrb[0].mxu0
  %3037 = vmatprep.mubr.f32.mxu0 0.0
  %3038 = vmatmul.mubr.f32.gmra.mrb[0].mxu0 %v2830
  %v3039 = vpop.f32.mrb[0].mxu0
  %v3040 = vadd.f32 0.0, %v3039
  %v3041 = vpop.f32.mrb[0].mxu0
  %3042 = vmatprep.mubr.f32.mxu0 0.0
  %3043 = vmatmul.mubr.f32.gmra.mrb[0].mxu0 %v2833
  %v3044 = vpop.f32.mrb[0].mxu0
  %v3045 = vadd.f32 0.0, %v3044
  %v3046 = vpop.f32.mrb[0].mxu0
  %3047 = vmatprep.mubr.f32.mxu0 0.0
  %3048 = vmatmul.mubr.f32.gmra.mrb[0].mxu0 %v2836
  %v3049 = vpop.f32.mrb[0].mxu0
  %v3050 = vadd.f32 0.0, %v3049
  %v3051 = vpop.f32.mrb[0].mxu0
  %3052 = vmatprep.mubr.f32.mxu0 0.0
  %3053 = vmatmul.mubr.f32.gmra.mrb[0].mxu0 %v2839
  %v3054 = vpop.f32.mrb[0].mxu0
  %v3055 = vadd.f32 0.0, %v3054
  %v3056 = vpop.f32.mrb[0].mxu0
  %3057 = vmatprep.mubr.f32.mxu0 0.0
  %3058 = vmatmul.mubr.f32.gmra.mrb[0].mxu0 %v2842
  %v3059 = vpop.f32.mrb[0].mxu0
  %v3060 = vadd.f32 0.0, %v3059
  %v3061 = vpop.f32.mrb[0].mxu0
  %3062 = vmatprep.mubr.f32.mxu0 0.0
  %3063 = vmatmul.mubr.f32.gmra.mrb[0].mxu0 %v2845
  %v3064 = vpop.f32.mrb[0].mxu0
  %v3065 = vadd.f32 0.0, %v3064
  %v3066 = vpop.f32.mrb[0].mxu0
  %3067 = vmatprep.mubr.f32.mxu0 0.0
  %3068 = vmatmul.mubr.f32.gmra.mrb[0].mxu0 %v2848
  %v3069 = vpop.f32.mrb[0].mxu0
  %v3070 = vadd.f32 0.0, %v3069
  %v3071 = vpop.f32.mrb[0].mxu0
  %3072 = vmatprep.mubr.f32.mxu0 0.0
  %3073 = vmatmul.mubr.f32.gmra.mrb[0].mxu0 %v2851
  %v3074 = vpop.f32.mrb[0].mxu0
  %v3075 = vadd.f32 0.0, %v3074
  %v3076 = vpop.f32.mrb[0].mxu0
  %3077 = vmatprep.mubr.f32.mxu0 0.0
  %3078 = vmatmul.mubr.f32.gmra.mrb[0].mxu0 %v2854
  %v3079 = vpop.f32.mrb[0].mxu0
  %v3080 = vadd.f32 0.0, %v3079
  %v3081 = vpop.f32.mrb[0].mxu0
  %3082 = vmatprep.mubr.f32.mxu0 0.0
  %3083 = vmatmul.mubr.f32.gmra.mrb[0].mxu0 %v2857
  %v3084 = vpop.f32.mrb[0].mxu0
  %v3085 = vadd.f32 0.0, %v3084
  %v3086 = vpop.f32.mrb[0].mxu0
  %3087 = vdwg.mxu0
  %v3088 = vld [vmem:[%s2] sm:$0xff]
  %v3089 = vld [vmem:[%s2 + $0x8] sm:$0x7f]
  %v3090 = vld [vmem:[%s2 + $0x10] sm:$0xff]
  %v3091 = vld [vmem:[%s2 + $0x18] sm:$0x7f]
  %v3092 = vld [vmem:[%s2 + $0x20] sm:$0xff]
  %v3093 = vld [vmem:[%s2 + $0x28] sm:$0x7f]
  %v3094 = vld [vmem:[%s2 + $0x30] sm:$0xff]
  %v3095 = vld [vmem:[%s2 + $0x38] sm:$0x7f]
  %v3096 = vld [vmem:[%s2 + $0x40] sm:$0xff]
  %v3097 = vld [vmem:[%s2 + $0x48] sm:$0x7f]
  %v3098 = vld [vmem:[%s2 + $0x50] sm:$0xff]
  %v3099 = vld [vmem:[%s2 + $0x58] sm:$0x7f]
  %v3100 = vld [vmem:[%s2 + $0x60] sm:$0xff]
  %v3101 = vld [vmem:[%s2 + $0x68] sm:$0x7f]
  %v3102 = vld [vmem:[%s2 + $0x70] sm:$0xff]
  %v3103 = vld [vmem:[%s2 + $0x78] sm:$0x7f]
  %v3104 = vld [vmem:[%s2 + $0x80] sm:$0xff]
  %v3105 = vld [vmem:[%s2 + $0x88] sm:$0x7f]
  %v3106 = vld [vmem:[%s2 + $0x90] sm:$0xff]
  %v3107 = vld [vmem:[%s2 + $0x98] sm:$0x7f]
  %v3108 = vld [vmem:[%s2 + $0xa0] sm:$0xff]
  %v3109 = vld [vmem:[%s2 + $0xa8] sm:$0x7f]
  %v3110 = vld [vmem:[%s2 + $0xb0] sm:$0xff]
  %v3111 = vld [vmem:[%s2 + $0xb8] sm:$0x7f]
  %v3112 = vld [vmem:[%s2 + $0xc0] sm:$0xff]
  %v3113 = vld [vmem:[%s2 + $0xc8] sm:$0x7f]
  %v3114 = vld [vmem:[%s2 + $0xd0] sm:$0xff]
  %v3115 = vld [vmem:[%s2 + $0xd8] sm:$0x7f]
  %v3116 = vld [vmem:[%s2 + $0xe0] sm:$0xff]
  %v3117 = vld [vmem:[%s2 + $0xe8] sm:$0x7f]
  %v3118 = vld [vmem:[%s2 + $0xf0] sm:$0xff]
  %v3119 = vld [vmem:[%s2 + $0xf8] sm:$0x7f]
  %v3121 = vsel %vm1402, %v3088, 0
  %v3124 = vsel %vm1402, %v3089, 0
  %3126 = vmatprep.subr.mxu0 0.0
  %3127 = vmatpush1.msra.mxu0 %v2570
  %3128 = vmatprep.subr.mxu0 0.0
  %3129 = vmatpush1.msra.mxu0 %v2575
  %3130 = vmatprep.subr.mxu0 0.0
  %3131 = vmatpush1.msra.mxu0 0.0
  %3132 = vmatprep.subr.mxu0 0.0
  %3133 = vmatpush1.msra.mxu0 0.0
  %3134 = vmatprep.subr.mxu0 0.0
  %3135 = vmatpush1.msra.mxu0 0.0
  %3136 = vmatprep.subr.mxu0 0.0
  %3137 = vmatpush1.msra.mxu0 0.0
  %3138 = vmatprep.subr.mxu0 0.0
  %3139 = vmatpush1.msra.mxu0 0.0
  %3140 = vmatprep.subr.mxu0 0.0
  %3141 = vmatpush1.msra.mxu0 0.0
  %3142 = vmatprep.subr.mxu0 0.0
  %3143 = vmatpush1.msra.mxu0 0.0
  %3144 = vmatprep.subr.mxu0 0.0
  %3145 = vmatpush1.msra.mxu0 0.0
  %3146 = vmatprep.subr.mxu0 0.0
  %3147 = vmatpush1.msra.mxu0 0.0
  %3148 = vmatprep.subr.mxu0 0.0
  %3149 = vmatpush1.msra.mxu0 0.0
  %3150 = vmatprep.subr.mxu0 0.0
  %3151 = vmatpush1.msra.mxu0 0.0
  %3152 = vmatprep.subr.mxu0 0.0
  %3153 = vmatpush1.msra.mxu0 0.0
  %3154 = vmatprep.subr.mxu0 0.0
  %3155 = vmatpush1.msra.mxu0 0.0
  %3156 = vmatprep.subr.mxu0 0.0
  %3157 = vmatpush1.msra.mxu0 0.0
  %3158 = vmatprep.subr.mxu0 0.0
  %3159 = vmatpush1.msra.mxu0 0.0
  %3160 = vmatprep.subr.mxu0 0.0
  %3161 = vmatpush1.msra.mxu0 0.0
  %3162 = vmatprep.subr.mxu0 0.0
  %3163 = vmatpush1.msra.mxu0 0.0
  %3164 = vmatprep.subr.mxu0 0.0
  %3165 = vmatpush1.msra.mxu0 0.0
  %3166 = vmatprep.subr.mxu0 0.0
  %3167 = vmatpush1.msra.mxu0 0.0
  %3168 = vmatprep.subr.mxu0 0.0
  %3169 = vmatpush1.msra.mxu0 0.0
  %3170 = vmatprep.subr.mxu0 0.0
  %3171 = vmatpush1.msra.mxu0 0.0
  %3172 = vmatprep.subr.mxu0 0.0
  %3173 = vmatpush1.msra.mxu0 0.0
  %3174 = vmatprep.subr.mxu0 0.0
  %3175 = vmatpush1.msra.mxu0 0.0
  %3176 = vmatprep.subr.mxu0 0.0
  %3177 = vmatpush1.msra.mxu0 0.0
  %3178 = vmatprep.subr.mxu0 0.0
  %3179 = vmatpush1.msra.mxu0 0.0
  %3180 = vmatprep.subr.mxu0 0.0
  %3181 = vmatpush1.msra.mxu0 0.0
  %3182 = vmatprep.subr.mxu0 0.0
  %3183 = vmatpush1.msra.mxu0 0.0
  %3184 = vmatprep.subr.mxu0 0.0
  %3185 = vmatpush1.msra.mxu0 0.0
  %3186 = vmatprep.subr.mxu0 0.0
  %3187 = vmatpush1.msra.mxu0 0.0
  %3188 = vmatprep.subr.mxu0 0.0
  %3189 = vmatpush1.msra.mxu0 0.0
  %3190 = vmatprep.mubr.f32.mxu0 0.0
  %3191 = vmatmul.mubr.f32.gmra.mrb[0].mxu0 %v3121
  %v3192 = vpop.f32.mrb[0].mxu0
  %v3193 = vadd.f32 0.0, %v3192
  %v3194 = vpop.f32.mrb[0].mxu0
  %3195 = vmatprep.mubr.f32.mxu0 0.0
  %3196 = vmatmul.mubr.f32.gmra.mrb[0].mxu0 %v3124
  %v3197 = vpop.f32.mrb[0].mxu0
  %v3198 = vadd.f32 0.0, %v3197
  %v3199 = vpop.f32.mrb[0].mxu0
  %3200 = vdwg.mxu0
  %v3202 = vsel %vm1402, %v3090, 0
  %v3205 = vsel %vm1402, %v3091, 0
  %3207 = vmatprep.subr.mxu0 0.0
  %3208 = vmatpush1.msra.mxu0 %v2580
  %3209 = vmatprep.subr.mxu0 0.0
  %3210 = vmatpush1.msra.mxu0 %v2585
  %3211 = vmatprep.subr.mxu0 0.0
  %3212 = vmatpush1.msra.mxu0 0.0
  %3213 = vmatprep.subr.mxu0 0.0
  %3214 = vmatpush1.msra.mxu0 0.0
  %3215 = vmatprep.subr.mxu0 0.0
  %3216 = vmatpush1.msra.mxu0 0.0
  %3217 = vmatprep.subr.mxu0 0.0
  %3218 = vmatpush1.msra.mxu0 0.0
  %3219 = vmatprep.subr.mxu0 0.0
  %3220 = vmatpush1.msra.mxu0 0.0
  %3221 = vmatprep.subr.mxu0 0.0
  %3222 = vmatpush1.msra.mxu0 0.0
  %3223 = vmatprep.subr.mxu0 0.0
  %3224 = vmatpush1.msra.mxu0 0.0
  %3225 = vmatprep.subr.mxu0 0.0
  %3226 = vmatpush1.msra.mxu0 0.0
  %3227 = vmatprep.subr.mxu0 0.0
  %3228 = vmatpush1.msra.mxu0 0.0
  %3229 = vmatprep.subr.mxu0 0.0
  %3230 = vmatpush1.msra.mxu0 0.0
  %3231 = vmatprep.subr.mxu0 0.0
  %3232 = vmatpush1.msra.mxu0 0.0
  %3233 = vmatprep.subr.mxu0 0.0
  %3234 = vmatpush1.msra.mxu0 0.0
  %3235 = vmatprep.subr.mxu0 0.0
  %3236 = vmatpush1.msra.mxu0 0.0
  %3237 = vmatprep.subr.mxu0 0.0
  %3238 = vmatpush1.msra.mxu0 0.0
  %3239 = vmatprep.subr.mxu0 0.0
  %3240 = vmatpush1.msra.mxu0 0.0
  %3241 = vmatprep.subr.mxu0 0.0
  %3242 = vmatpush1.msra.mxu0 0.0
  %3243 = vmatprep.subr.mxu0 0.0
  %3244 = vmatpush1.msra.mxu0 0.0
  %3245 = vmatprep.subr.mxu0 0.0
  %3246 = vmatpush1.msra.mxu0 0.0
  %3247 = vmatprep.subr.mxu0 0.0
  %3248 = vmatpush1.msra.mxu0 0.0
  %3249 = vmatprep.subr.mxu0 0.0
  %3250 = vmatpush1.msra.mxu0 0.0
  %3251 = vmatprep.subr.mxu0 0.0
  %3252 = vmatpush1.msra.mxu0 0.0
  %3253 = vmatprep.subr.mxu0 0.0
  %3254 = vmatpush1.msra.mxu0 0.0
  %3255 = vmatprep.subr.mxu0 0.0
  %3256 = vmatpush1.msra.mxu0 0.0
  %3257 = vmatprep.subr.mxu0 0.0
  %3258 = vmatpush1.msra.mxu0 0.0
  %3259 = vmatprep.subr.mxu0 0.0
  %3260 = vmatpush1.msra.mxu0 0.0
  %3261 = vmatprep.subr.mxu0 0.0
  %3262 = vmatpush1.msra.mxu0 0.0
  %3263 = vmatprep.subr.mxu0 0.0
  %3264 = vmatpush1.msra.mxu0 0.0
  %3265 = vmatprep.subr.mxu0 0.0
  %3266 = vmatpush1.msra.mxu0 0.0
  %3267 = vmatprep.subr.mxu0 0.0
  %3268 = vmatpush1.msra.mxu0 0.0
  %3269 = vmatprep.subr.mxu0 0.0
  %3270 = vmatpush1.msra.mxu0 0.0
  %3271 = vmatprep.mubr.f32.mxu0 0.0
  %3272 = vmatmul.mubr.f32.gmra.mrb[0].mxu0 %v3202
  %v3273 = vpop.f32.mrb[0].mxu0
  %v3274 = vadd.f32 0.0, %v3273
  %v3275 = vpop.f32.mrb[0].mxu0
  %3276 = vmatprep.mubr.f32.mxu0 0.0
  %3277 = vmatmul.mubr.f32.gmra.mrb[0].mxu0 %v3205
  %v3278 = vpop.f32.mrb[0].mxu0
  %v3279 = vadd.f32 0.0, %v3278
  %v3280 = vpop.f32.mrb[0].mxu0
  %3281 = vdwg.mxu0
  %v3283 = vsel %vm1402, %v3092, 0
  %v3286 = vsel %vm1402, %v3093, 0
  %3288 = vmatprep.subr.mxu0 0.0
  %3289 = vmatpush1.msra.mxu0 %v2590
  %3290 = vmatprep.subr.mxu0 0.0
  %3291 = vmatpush1.msra.mxu0 %v2595
  %3292 = vmatprep.subr.mxu0 0.0
  %3293 = vmatpush1.msra.mxu0 0.0
  %3294 = vmatprep.subr.mxu0 0.0
  %3295 = vmatpush1.msra.mxu0 0.0
  %3296 = vmatprep.subr.mxu0 0.0
  %3297 = vmatpush1.msra.mxu0 0.0
  %3298 = vmatprep.subr.mxu0 0.0
  %3299 = vmatpush1.msra.mxu0 0.0
  %3300 = vmatprep.subr.mxu0 0.0
  %3301 = vmatpush1.msra.mxu0 0.0
  %3302 = vmatprep.subr.mxu0 0.0
  %3303 = vmatpush1.msra.mxu0 0.0
  %3304 = vmatprep.subr.mxu0 0.0
  %3305 = vmatpush1.msra.mxu0 0.0
  %3306 = vmatprep.subr.mxu0 0.0
  %3307 = vmatpush1.msra.mxu0 0.0
  %3308 = vmatprep.subr.mxu0 0.0
  %3309 = vmatpush1.msra.mxu0 0.0
  %3310 = vmatprep.subr.mxu0 0.0
  %3311 = vmatpush1.msra.mxu0 0.0
  %3312 = vmatprep.subr.mxu0 0.0
  %3313 = vmatpush1.msra.mxu0 0.0
  %3314 = vmatprep.subr.mxu0 0.0
  %3315 = vmatpush1.msra.mxu0 0.0
  %3316 = vmatprep.subr.mxu0 0.0
  %3317 = vmatpush1.msra.mxu0 0.0
  %3318 = vmatprep.subr.mxu0 0.0
  %3319 = vmatpush1.msra.mxu0 0.0
  %3320 = vmatprep.subr.mxu0 0.0
  %3321 = vmatpush1.msra.mxu0 0.0
  %3322 = vmatprep.subr.mxu0 0.0
  %3323 = vmatpush1.msra.mxu0 0.0
  %3324 = vmatprep.subr.mxu0 0.0
  %3325 = vmatpush1.msra.mxu0 0.0
  %3326 = vmatprep.subr.mxu0 0.0
  %3327 = vmatpush1.msra.mxu0 0.0
  %3328 = vmatprep.subr.mxu0 0.0
  %3329 = vmatpush1.msra.mxu0 0.0
  %3330 = vmatprep.subr.mxu0 0.0
  %3331 = vmatpush1.msra.mxu0 0.0
  %3332 = vmatprep.subr.mxu0 0.0
  %3333 = vmatpush1.msra.mxu0 0.0
  %3334 = vmatprep.subr.mxu0 0.0
  %3335 = vmatpush1.msra.mxu0 0.0
  %3336 = vmatprep.subr.mxu0 0.0
  %3337 = vmatpush1.msra.mxu0 0.0
  %3338 = vmatprep.subr.mxu0 0.0
  %3339 = vmatpush1.msra.mxu0 0.0
  %3340 = vmatprep.subr.mxu0 0.0
  %3341 = vmatpush1.msra.mxu0 0.0
  %3342 = vmatprep.subr.mxu0 0.0
  %3343 = vmatpush1.msra.mxu0 0.0
  %3344 = vmatprep.subr.mxu0 0.0
  %3345 = vmatpush1.msra.mxu0 0.0
  %3346 = vmatprep.subr.mxu0 0.0
  %3347 = vmatpush1.msra.mxu0 0.0
  %3348 = vmatprep.subr.mxu0 0.0
  %3349 = vmatpush1.msra.mxu0 0.0
  %3350 = vmatprep.subr.mxu0 0.0
  %3351 = vmatpush1.msra.mxu0 0.0
  %3352 = vmatprep.mubr.f32.mxu0 0.0
  %3353 = vmatmul.mubr.f32.gmra.mrb[0].mxu0 %v3283
  %v3354 = vpop.f32.mrb[0].mxu0
  %v3355 = vadd.f32 0.0, %v3354
  %v3356 = vpop.f32.mrb[0].mxu0
  %3357 = vmatprep.mubr.f32.mxu0 0.0
  %3358 = vmatmul.mubr.f32.gmra.mrb[0].mxu0 %v3286
  %v3359 = vpop.f32.mrb[0].mxu0
  %v3360 = vadd.f32 0.0, %v3359
  %v3361 = vpop.f32.mrb[0].mxu0
  %3362 = vdwg.mxu0
  %v3364 = vsel %vm1402, %v3094, 0
  %v3367 = vsel %vm1402, %v3095, 0
  %3369 = vmatprep.subr.mxu0 0.0
  %3370 = vmatpush1.msra.mxu0 %v2600
  %3371 = vmatprep.subr.mxu0 0.0
  %3372 = vmatpush1.msra.mxu0 %v2605
  %3373 = vmatprep.subr.mxu0 0.0
  %3374 = vmatpush1.msra.mxu0 0.0
  %3375 = vmatprep.subr.mxu0 0.0
  %3376 = vmatpush1.msra.mxu0 0.0
  %3377 = vmatprep.subr.mxu0 0.0
  %3378 = vmatpush1.msra.mxu0 0.0
  %3379 = vmatprep.subr.mxu0 0.0
  %3380 = vmatpush1.msra.mxu0 0.0
  %3381 = vmatprep.subr.mxu0 0.0
  %3382 = vmatpush1.msra.mxu0 0.0
  %3383 = vmatprep.subr.mxu0 0.0
  %3384 = vmatpush1.msra.mxu0 0.0
  %3385 = vmatprep.subr.mxu0 0.0
  %3386 = vmatpush1.msra.mxu0 0.0
  %3387 = vmatprep.subr.mxu0 0.0
  %3388 = vmatpush1.msra.mxu0 0.0
  %3389 = vmatprep.subr.mxu0 0.0
  %3390 = vmatpush1.msra.mxu0 0.0
  %3391 = vmatprep.subr.mxu0 0.0
  %3392 = vmatpush1.msra.mxu0 0.0
  %3393 = vmatprep.subr.mxu0 0.0
  %3394 = vmatpush1.msra.mxu0 0.0
  %3395 = vmatprep.subr.mxu0 0.0
  %3396 = vmatpush1.msra.mxu0 0.0
  %3397 = vmatprep.subr.mxu0 0.0
  %3398 = vmatpush1.msra.mxu0 0.0
  %3399 = vmatprep.subr.mxu0 0.0
  %3400 = vmatpush1.msra.mxu0 0.0
  %3401 = vmatprep.subr.mxu0 0.0
  %3402 = vmatpush1.msra.mxu0 0.0
  %3403 = vmatprep.subr.mxu0 0.0
  %3404 = vmatpush1.msra.mxu0 0.0
  %3405 = vmatprep.subr.mxu0 0.0
  %3406 = vmatpush1.msra.mxu0 0.0
  %3407 = vmatprep.subr.mxu0 0.0
  %3408 = vmatpush1.msra.mxu0 0.0
  %3409 = vmatprep.subr.mxu0 0.0
  %3410 = vmatpush1.msra.mxu0 0.0
  %3411 = vmatprep.subr.mxu0 0.0
  %3412 = vmatpush1.msra.mxu0 0.0
  %3413 = vmatprep.subr.mxu0 0.0
  %3414 = vmatpush1.msra.mxu0 0.0
  %3415 = vmatprep.subr.mxu0 0.0
  %3416 = vmatpush1.msra.mxu0 0.0
  %3417 = vmatprep.subr.mxu0 0.0
  %3418 = vmatpush1.msra.mxu0 0.0
  %3419 = vmatprep.subr.mxu0 0.0
  %3420 = vmatpush1.msra.mxu0 0.0
  %3421 = vmatprep.subr.mxu0 0.0
  %3422 = vmatpush1.msra.mxu0 0.0
  %3423 = vmatprep.subr.mxu0 0.0
  %3424 = vmatpush1.msra.mxu0 0.0
  %3425 = vmatprep.subr.mxu0 0.0
  %3426 = vmatpush1.msra.mxu0 0.0
  %3427 = vmatprep.subr.mxu0 0.0
  %3428 = vmatpush1.msra.mxu0 0.0
  %3429 = vmatprep.subr.mxu0 0.0
  %3430 = vmatpush1.msra.mxu0 0.0
  %3431 = vmatprep.subr.mxu0 0.0
  %3432 = vmatpush1.msra.mxu0 0.0
  %3433 = vmatprep.mubr.f32.mxu0 0.0
  %3434 = vmatmul.mubr.f32.gmra.mrb[0].mxu0 %v3364
  %v3435 = vpop.f32.mrb[0].mxu0
  %v3436 = vadd.f32 0.0, %v3435
  %v3437 = vpop.f32.mrb[0].mxu0
  %3438 = vmatprep.mubr.f32.mxu0 0.0
  %3439 = vmatmul.mubr.f32.gmra.mrb[0].mxu0 %v3367
  %v3440 = vpop.f32.mrb[0].mxu0
  %v3441 = vadd.f32 0.0, %v3440
  %v3442 = vpop.f32.mrb[0].mxu0
  %3443 = vdwg.mxu0
  %v3445 = vsel %vm1402, %v3096, 0
  %v3448 = vsel %vm1402, %v3097, 0
  %3450 = vmatprep.subr.mxu0 0.0
  %3451 = vmatpush1.msra.mxu0 %v2610
  %3452 = vmatprep.subr.mxu0 0.0
  %3453 = vmatpush1.msra.mxu0 %v2615
  %3454 = vmatprep.subr.mxu0 0.0
  %3455 = vmatpush1.msra.mxu0 0.0
  %3456 = vmatprep.subr.mxu0 0.0
  %3457 = vmatpush1.msra.mxu0 0.0
  %3458 = vmatprep.subr.mxu0 0.0
  %3459 = vmatpush1.msra.mxu0 0.0
  %3460 = vmatprep.subr.mxu0 0.0
  %3461 = vmatpush1.msra.mxu0 0.0
  %3462 = vmatprep.subr.mxu0 0.0
  %3463 = vmatpush1.msra.mxu0 0.0
  %3464 = vmatprep.subr.mxu0 0.0
  %3465 = vmatpush1.msra.mxu0 0.0
  %3466 = vmatprep.subr.mxu0 0.0
  %3467 = vmatpush1.msra.mxu0 0.0
  %3468 = vmatprep.subr.mxu0 0.0
  %3469 = vmatpush1.msra.mxu0 0.0
  %3470 = vmatprep.subr.mxu0 0.0
  %3471 = vmatpush1.msra.mxu0 0.0
  %3472 = vmatprep.subr.mxu0 0.0
  %3473 = vmatpush1.msra.mxu0 0.0
  %3474 = vmatprep.subr.mxu0 0.0
  %3475 = vmatpush1.msra.mxu0 0.0
  %3476 = vmatprep.subr.mxu0 0.0
  %3477 = vmatpush1.msra.mxu0 0.0
  %3478 = vmatprep.subr.mxu0 0.0
  %3479 = vmatpush1.msra.mxu0 0.0
  %3480 = vmatprep.subr.mxu0 0.0
  %3481 = vmatpush1.msra.mxu0 0.0
  %3482 = vmatprep.subr.mxu0 0.0
  %3483 = vmatpush1.msra.mxu0 0.0
  %3484 = vmatprep.subr.mxu0 0.0
  %3485 = vmatpush1.msra.mxu0 0.0
  %3486 = vmatprep.subr.mxu0 0.0
  %3487 = vmatpush1.msra.mxu0 0.0
  %3488 = vmatprep.subr.mxu0 0.0
  %3489 = vmatpush1.msra.mxu0 0.0
  %3490 = vmatprep.subr.mxu0 0.0
  %3491 = vmatpush1.msra.mxu0 0.0
  %3492 = vmatprep.subr.mxu0 0.0
  %3493 = vmatpush1.msra.mxu0 0.0
  %3494 = vmatprep.subr.mxu0 0.0
  %3495 = vmatpush1.msra.mxu0 0.0
  %3496 = vmatprep.subr.mxu0 0.0
  %3497 = vmatpush1.msra.mxu0 0.0
  %3498 = vmatprep.subr.mxu0 0.0
  %3499 = vmatpush1.msra.mxu0 0.0
  %3500 = vmatprep.subr.mxu0 0.0
  %3501 = vmatpush1.msra.mxu0 0.0
  %3502 = vmatprep.subr.mxu0 0.0
  %3503 = vmatpush1.msra.mxu0 0.0
  %3504 = vmatprep.subr.mxu0 0.0
  %3505 = vmatpush1.msra.mxu0 0.0
  %3506 = vmatprep.subr.mxu0 0.0
  %3507 = vmatpush1.msra.mxu0 0.0
  %3508 = vmatprep.subr.mxu0 0.0
  %3509 = vmatpush1.msra.mxu0 0.0
  %3510 = vmatprep.subr.mxu0 0.0
  %3511 = vmatpush1.msra.mxu0 0.0
  %3512 = vmatprep.subr.mxu0 0.0
  %3513 = vmatpush1.msra.mxu0 0.0
  %3514 = vmatprep.mubr.f32.mxu0 0.0
  %3515 = vmatmul.mubr.f32.gmra.mrb[0].mxu0 %v3445
  %v3516 = vpop.f32.mrb[0].mxu0
  %v3517 = vadd.f32 0.0, %v3516
  %v3518 = vpop.f32.mrb[0].mxu0
  %3519 = vmatprep.mubr.f32.mxu0 0.0
  %3520 = vmatmul.mubr.f32.gmra.mrb[0].mxu0 %v3448
  %v3521 = vpop.f32.mrb[0].mxu0
  %v3522 = vadd.f32 0.0, %v3521
  %v3523 = vpop.f32.mrb[0].mxu0
  %3524 = vdwg.mxu0
  %v3526 = vsel %vm1402, %v3098, 0
  %v3529 = vsel %vm1402, %v3099, 0
  %3531 = vmatprep.subr.mxu0 0.0
  %3532 = vmatpush1.msra.mxu0 %v2620
  %3533 = vmatprep.subr.mxu0 0.0
  %3534 = vmatpush1.msra.mxu0 %v2625
  %3535 = vmatprep.subr.mxu0 0.0
  %3536 = vmatpush1.msra.mxu0 0.0
  %3537 = vmatprep.subr.mxu0 0.0
  %3538 = vmatpush1.msra.mxu0 0.0
  %3539 = vmatprep.subr.mxu0 0.0
  %3540 = vmatpush1.msra.mxu0 0.0
  %3541 = vmatprep.subr.mxu0 0.0
  %3542 = vmatpush1.msra.mxu0 0.0
  %3543 = vmatprep.subr.mxu0 0.0
  %3544 = vmatpush1.msra.mxu0 0.0
  %3545 = vmatprep.subr.mxu0 0.0
  %3546 = vmatpush1.msra.mxu0 0.0
  %3547 = vmatprep.subr.mxu0 0.0
  %3548 = vmatpush1.msra.mxu0 0.0
  %3549 = vmatprep.subr.mxu0 0.0
  %3550 = vmatpush1.msra.mxu0 0.0
  %3551 = vmatprep.subr.mxu0 0.0
  %3552 = vmatpush1.msra.mxu0 0.0
  %3553 = vmatprep.subr.mxu0 0.0
  %3554 = vmatpush1.msra.mxu0 0.0
  %3555 = vmatprep.subr.mxu0 0.0
  %3556 = vmatpush1.msra.mxu0 0.0
  %3557 = vmatprep.subr.mxu0 0.0
  %3558 = vmatpush1.msra.mxu0 0.0
  %3559 = vmatprep.subr.mxu0 0.0
  %3560 = vmatpush1.msra.mxu0 0.0
  %3561 = vmatprep.subr.mxu0 0.0
  %3562 = vmatpush1.msra.mxu0 0.0
  %3563 = vmatprep.subr.mxu0 0.0
  %3564 = vmatpush1.msra.mxu0 0.0
  %3565 = vmatprep.subr.mxu0 0.0
  %3566 = vmatpush1.msra.mxu0 0.0
  %3567 = vmatprep.subr.mxu0 0.0
  %3568 = vmatpush1.msra.mxu0 0.0
  %3569 = vmatprep.subr.mxu0 0.0
  %3570 = vmatpush1.msra.mxu0 0.0
  %3571 = vmatprep.subr.mxu0 0.0
  %3572 = vmatpush1.msra.mxu0 0.0
  %3573 = vmatprep.subr.mxu0 0.0
  %3574 = vmatpush1.msra.mxu0 0.0
  %3575 = vmatprep.subr.mxu0 0.0
  %3576 = vmatpush1.msra.mxu0 0.0
  %3577 = vmatprep.subr.mxu0 0.0
  %3578 = vmatpush1.msra.mxu0 0.0
  %3579 = vmatprep.subr.mxu0 0.0
  %3580 = vmatpush1.msra.mxu0 0.0
  %3581 = vmatprep.subr.mxu0 0.0
  %3582 = vmatpush1.msra.mxu0 0.0
  %3583 = vmatprep.subr.mxu0 0.0
  %3584 = vmatpush1.msra.mxu0 0.0
  %3585 = vmatprep.subr.mxu0 0.0
  %3586 = vmatpush1.msra.mxu0 0.0
  %3587 = vmatprep.subr.mxu0 0.0
  %3588 = vmatpush1.msra.mxu0 0.0
  %3589 = vmatprep.subr.mxu0 0.0
  %3590 = vmatpush1.msra.mxu0 0.0
  %3591 = vmatprep.subr.mxu0 0.0
  %3592 = vmatpush1.msra.mxu0 0.0
  %3593 = vmatprep.subr.mxu0 0.0
  %3594 = vmatpush1.msra.mxu0 0.0
  %3595 = vmatprep.mubr.f32.mxu0 0.0
  %3596 = vmatmul.mubr.f32.gmra.mrb[0].mxu0 %v3526
  %v3597 = vpop.f32.mrb[0].mxu0
  %v3598 = vadd.f32 0.0, %v3597
  %v3599 = vpop.f32.mrb[0].mxu0
  %3600 = vmatprep.mubr.f32.mxu0 0.0
  %3601 = vmatmul.mubr.f32.gmra.mrb[0].mxu0 %v3529
  %v3602 = vpop.f32.mrb[0].mxu0
  %v3603 = vadd.f32 0.0, %v3602
  %v3604 = vpop.f32.mrb[0].mxu0
  %3605 = vdwg.mxu0
  %v3607 = vsel %vm1402, %v3100, 0
  %v3610 = vsel %vm1402, %v3101, 0
  %3612 = vmatprep.subr.mxu0 0.0
  %3613 = vmatpush1.msra.mxu0 %v2630
  %3614 = vmatprep.subr.mxu0 0.0
  %3615 = vmatpush1.msra.mxu0 %v2635
  %3616 = vmatprep.subr.mxu0 0.0
  %3617 = vmatpush1.msra.mxu0 0.0
  %3618 = vmatprep.subr.mxu0 0.0
  %3619 = vmatpush1.msra.mxu0 0.0
  %3620 = vmatprep.subr.mxu0 0.0
  %3621 = vmatpush1.msra.mxu0 0.0
  %3622 = vmatprep.subr.mxu0 0.0
  %3623 = vmatpush1.msra.mxu0 0.0
  %3624 = vmatprep.subr.mxu0 0.0
  %3625 = vmatpush1.msra.mxu0 0.0
  %3626 = vmatprep.subr.mxu0 0.0
  %3627 = vmatpush1.msra.mxu0 0.0
  %3628 = vmatprep.subr.mxu0 0.0
  %3629 = vmatpush1.msra.mxu0 0.0
  %3630 = vmatprep.subr.mxu0 0.0
  %3631 = vmatpush1.msra.mxu0 0.0
  %3632 = vmatprep.subr.mxu0 0.0
  %3633 = vmatpush1.msra.mxu0 0.0
  %3634 = vmatprep.subr.mxu0 0.0
  %3635 = vmatpush1.msra.mxu0 0.0
  %3636 = vmatprep.subr.mxu0 0.0
  %3637 = vmatpush1.msra.mxu0 0.0
  %3638 = vmatprep.subr.mxu0 0.0
  %3639 = vmatpush1.msra.mxu0 0.0
  %3640 = vmatprep.subr.mxu0 0.0
  %3641 = vmatpush1.msra.mxu0 0.0
  %3642 = vmatprep.subr.mxu0 0.0
  %3643 = vmatpush1.msra.mxu0 0.0
  %3644 = vmatprep.subr.mxu0 0.0
  %3645 = vmatpush1.msra.mxu0 0.0
  %3646 = vmatprep.subr.mxu0 0.0
  %3647 = vmatpush1.msra.mxu0 0.0
  %3648 = vmatprep.subr.mxu0 0.0
  %3649 = vmatpush1.msra.mxu0 0.0
  %3650 = vmatprep.subr.mxu0 0.0
  %3651 = vmatpush1.msra.mxu0 0.0
  %3652 = vmatprep.subr.mxu0 0.0
  %3653 = vmatpush1.msra.mxu0 0.0
  %3654 = vmatprep.subr.mxu0 0.0
  %3655 = vmatpush1.msra.mxu0 0.0
  %3656 = vmatprep.subr.mxu0 0.0
  %3657 = vmatpush1.msra.mxu0 0.0
  %3658 = vmatprep.subr.mxu0 0.0
  %3659 = vmatpush1.msra.mxu0 0.0
  %3660 = vmatprep.subr.mxu0 0.0
  %3661 = vmatpush1.msra.mxu0 0.0
  %3662 = vmatprep.subr.mxu0 0.0
  %3663 = vmatpush1.msra.mxu0 0.0
  %3664 = vmatprep.subr.mxu0 0.0
  %3665 = vmatpush1.msra.mxu0 0.0
  %3666 = vmatprep.subr.mxu0 0.0
  %3667 = vmatpush1.msra.mxu0 0.0
  %3668 = vmatprep.subr.mxu0 0.0
  %3669 = vmatpush1.msra.mxu0 0.0
  %3670 = vmatprep.subr.mxu0 0.0
  %3671 = vmatpush1.msra.mxu0 0.0
  %3672 = vmatprep.subr.mxu0 0.0
  %3673 = vmatpush1.msra.mxu0 0.0
  %3674 = vmatprep.subr.mxu0 0.0
  %3675 = vmatpush1.msra.mxu0 0.0
  %3676 = vmatprep.mubr.f32.mxu0 0.0
  %3677 = vmatmul.mubr.f32.gmra.mrb[0].mxu0 %v3607
  %v3678 = vpop.f32.mrb[0].mxu0
  %v3679 = vadd.f32 0.0, %v3678
  %v3680 = vpop.f32.mrb[0].mxu0
  %3681 = vmatprep.mubr.f32.mxu0 0.0
  %3682 = vmatmul.mubr.f32.gmra.mrb[0].mxu0 %v3610
  %v3683 = vpop.f32.mrb[0].mxu0
  %v3684 = vadd.f32 0.0, %v3683
  %v3685 = vpop.f32.mrb[0].mxu0
  %3686 = vdwg.mxu0
  %v3688 = vsel %vm1402, %v3102, 0
  %v3691 = vsel %vm1402, %v3103, 0
  %3693 = vmatprep.subr.mxu0 0.0
  %3694 = vmatpush1.msra.mxu0 %v2640
  %3695 = vmatprep.subr.mxu0 0.0
  %3696 = vmatpush1.msra.mxu0 %v2645
  %3697 = vmatprep.subr.mxu0 0.0
  %3698 = vmatpush1.msra.mxu0 0.0
  %3699 = vmatprep.subr.mxu0 0.0
  %3700 = vmatpush1.msra.mxu0 0.0
  %3701 = vmatprep.subr.mxu0 0.0
  %3702 = vmatpush1.msra.mxu0 0.0
  %3703 = vmatprep.subr.mxu0 0.0
  %3704 = vmatpush1.msra.mxu0 0.0
  %3705 = vmatprep.subr.mxu0 0.0
  %3706 = vmatpush1.msra.mxu0 0.0
  %3707 = vmatprep.subr.mxu0 0.0
  %3708 = vmatpush1.msra.mxu0 0.0
  %3709 = vmatprep.subr.mxu0 0.0
  %3710 = vmatpush1.msra.mxu0 0.0
  %3711 = vmatprep.subr.mxu0 0.0
  %3712 = vmatpush1.msra.mxu0 0.0
  %3713 = vmatprep.subr.mxu0 0.0
  %3714 = vmatpush1.msra.mxu0 0.0
  %3715 = vmatprep.subr.mxu0 0.0
  %3716 = vmatpush1.msra.mxu0 0.0
  %3717 = vmatprep.subr.mxu0 0.0
  %3718 = vmatpush1.msra.mxu0 0.0
  %3719 = vmatprep.subr.mxu0 0.0
  %3720 = vmatpush1.msra.mxu0 0.0
  %3721 = vmatprep.subr.mxu0 0.0
  %3722 = vmatpush1.msra.mxu0 0.0
  %3723 = vmatprep.subr.mxu0 0.0
  %3724 = vmatpush1.msra.mxu0 0.0
  %3725 = vmatprep.subr.mxu0 0.0
  %3726 = vmatpush1.msra.mxu0 0.0
  %3727 = vmatprep.subr.mxu0 0.0
  %3728 = vmatpush1.msra.mxu0 0.0
  %3729 = vmatprep.subr.mxu0 0.0
  %3730 = vmatpush1.msra.mxu0 0.0
  %3731 = vmatprep.subr.mxu0 0.0
  %3732 = vmatpush1.msra.mxu0 0.0
  %3733 = vmatprep.subr.mxu0 0.0
  %3734 = vmatpush1.msra.mxu0 0.0
  %3735 = vmatprep.subr.mxu0 0.0
  %3736 = vmatpush1.msra.mxu0 0.0
  %3737 = vmatprep.subr.mxu0 0.0
  %3738 = vmatpush1.msra.mxu0 0.0
  %3739 = vmatprep.subr.mxu0 0.0
  %3740 = vmatpush1.msra.mxu0 0.0
  %3741 = vmatprep.subr.mxu0 0.0
  %3742 = vmatpush1.msra.mxu0 0.0
  %3743 = vmatprep.subr.mxu0 0.0
  %3744 = vmatpush1.msra.mxu0 0.0
  %3745 = vmatprep.subr.mxu0 0.0
  %3746 = vmatpush1.msra.mxu0 0.0
  %3747 = vmatprep.subr.mxu0 0.0
  %3748 = vmatpush1.msra.mxu0 0.0
  %3749 = vmatprep.subr.mxu0 0.0
  %3750 = vmatpush1.msra.mxu0 0.0
  %3751 = vmatprep.subr.mxu0 0.0
  %3752 = vmatpush1.msra.mxu0 0.0
  %3753 = vmatprep.subr.mxu0 0.0
  %3754 = vmatpush1.msra.mxu0 0.0
  %3755 = vmatprep.subr.mxu0 0.0
  %3756 = vmatpush1.msra.mxu0 0.0
  %3757 = vmatprep.mubr.f32.mxu0 0.0
  %3758 = vmatmul.mubr.f32.gmra.mrb[0].mxu0 %v3688
  %v3759 = vpop.f32.mrb[0].mxu0
  %v3760 = vadd.f32 0.0, %v3759
  %v3761 = vpop.f32.mrb[0].mxu0
  %3762 = vmatprep.mubr.f32.mxu0 0.0
  %3763 = vmatmul.mubr.f32.gmra.mrb[0].mxu0 %v3691
  %v3764 = vpop.f32.mrb[0].mxu0
  %v3765 = vadd.f32 0.0, %v3764
  %v3766 = vpop.f32.mrb[0].mxu0
  %3767 = vdwg.mxu0
  %v3769 = vsel %vm1402, %v3104, 0
  %v3772 = vsel %vm1402, %v3105, 0
  %3774 = vmatprep.subr.mxu0 0.0
  %3775 = vmatpush1.msra.mxu0 %v2650
  %3776 = vmatprep.subr.mxu0 0.0
  %3777 = vmatpush1.msra.mxu0 %v2655
  %3778 = vmatprep.subr.mxu0 0.0
  %3779 = vmatpush1.msra.mxu0 0.0
  %3780 = vmatprep.subr.mxu0 0.0
  %3781 = vmatpush1.msra.mxu0 0.0
  %3782 = vmatprep.subr.mxu0 0.0
  %3783 = vmatpush1.msra.mxu0 0.0
  %3784 = vmatprep.subr.mxu0 0.0
  %3785 = vmatpush1.msra.mxu0 0.0
  %3786 = vmatprep.subr.mxu0 0.0
  %3787 = vmatpush1.msra.mxu0 0.0
  %3788 = vmatprep.subr.mxu0 0.0
  %3789 = vmatpush1.msra.mxu0 0.0
  %3790 = vmatprep.subr.mxu0 0.0
  %3791 = vmatpush1.msra.mxu0 0.0
  %3792 = vmatprep.subr.mxu0 0.0
  %3793 = vmatpush1.msra.mxu0 0.0
  %3794 = vmatprep.subr.mxu0 0.0
  %3795 = vmatpush1.msra.mxu0 0.0
  %3796 = vmatprep.subr.mxu0 0.0
  %3797 = vmatpush1.msra.mxu0 0.0
  %3798 = vmatprep.subr.mxu0 0.0
  %3799 = vmatpush1.msra.mxu0 0.0
  %3800 = vmatprep.subr.mxu0 0.0
  %3801 = vmatpush1.msra.mxu0 0.0
  %3802 = vmatprep.subr.mxu0 0.0
  %3803 = vmatpush1.msra.mxu0 0.0
  %3804 = vmatprep.subr.mxu0 0.0
  %3805 = vmatpush1.msra.mxu0 0.0
  %3806 = vmatprep.subr.mxu0 0.0
  %3807 = vmatpush1.msra.mxu0 0.0
  %3808 = vmatprep.subr.mxu0 0.0
  %3809 = vmatpush1.msra.mxu0 0.0
  %3810 = vmatprep.subr.mxu0 0.0
  %3811 = vmatpush1.msra.mxu0 0.0
  %3812 = vmatprep.subr.mxu0 0.0
  %3813 = vmatpush1.msra.mxu0 0.0
  %3814 = vmatprep.subr.mxu0 0.0
  %3815 = vmatpush1.msra.mxu0 0.0
  %3816 = vmatprep.subr.mxu0 0.0
  %3817 = vmatpush1.msra.mxu0 0.0
  %3818 = vmatprep.subr.mxu0 0.0
  %3819 = vmatpush1.msra.mxu0 0.0
  %3820 = vmatprep.subr.mxu0 0.0
  %3821 = vmatpush1.msra.mxu0 0.0
  %3822 = vmatprep.subr.mxu0 0.0
  %3823 = vmatpush1.msra.mxu0 0.0
  %3824 = vmatprep.subr.mxu0 0.0
  %3825 = vmatpush1.msra.mxu0 0.0
  %3826 = vmatprep.subr.mxu0 0.0
  %3827 = vmatpush1.msra.mxu0 0.0
  %3828 = vmatprep.subr.mxu0 0.0
  %3829 = vmatpush1.msra.mxu0 0.0
  %3830 = vmatprep.subr.mxu0 0.0
  %3831 = vmatpush1.msra.mxu0 0.0
  %3832 = vmatprep.subr.mxu0 0.0
  %3833 = vmatpush1.msra.mxu0 0.0
  %3834 = vmatprep.subr.mxu0 0.0
  %3835 = vmatpush1.msra.mxu0 0.0
  %3836 = vmatprep.subr.mxu0 0.0
  %3837 = vmatpush1.msra.mxu0 0.0
  %3838 = vmatprep.mubr.f32.mxu0 0.0
  %3839 = vmatmul.mubr.f32.gmra.mrb[0].mxu0 %v3769
  %v3840 = vpop.f32.mrb[0].mxu0
  %v3841 = vadd.f32 0.0, %v3840
  %v3842 = vpop.f32.mrb[0].mxu0
  %3843 = vmatprep.mubr.f32.mxu0 0.0
  %3844 = vmatmul.mubr.f32.gmra.mrb[0].mxu0 %v3772
  %v3845 = vpop.f32.mrb[0].mxu0
  %v3846 = vadd.f32 0.0, %v3845
  %v3847 = vpop.f32.mrb[0].mxu0
  %3848 = vdwg.mxu0
  %v3850 = vsel %vm1402, %v3106, 0
  %v3853 = vsel %vm1402, %v3107, 0
  %3855 = vmatprep.subr.mxu0 0.0
  %3856 = vmatpush1.msra.mxu0 %v2660
  %3857 = vmatprep.subr.mxu0 0.0
  %3858 = vmatpush1.msra.mxu0 %v2665
  %3859 = vmatprep.subr.mxu0 0.0
  %3860 = vmatpush1.msra.mxu0 0.0
  %3861 = vmatprep.subr.mxu0 0.0
  %3862 = vmatpush1.msra.mxu0 0.0
  %3863 = vmatprep.subr.mxu0 0.0
  %3864 = vmatpush1.msra.mxu0 0.0
  %3865 = vmatprep.subr.mxu0 0.0
  %3866 = vmatpush1.msra.mxu0 0.0
  %3867 = vmatprep.subr.mxu0 0.0
  %3868 = vmatpush1.msra.mxu0 0.0
  %3869 = vmatprep.subr.mxu0 0.0
  %3870 = vmatpush1.msra.mxu0 0.0
  %3871 = vmatprep.subr.mxu0 0.0
  %3872 = vmatpush1.msra.mxu0 0.0
  %3873 = vmatprep.subr.mxu0 0.0
  %3874 = vmatpush1.msra.mxu0 0.0
  %3875 = vmatprep.subr.mxu0 0.0
  %3876 = vmatpush1.msra.mxu0 0.0
  %3877 = vmatprep.subr.mxu0 0.0
  %3878 = vmatpush1.msra.mxu0 0.0
  %3879 = vmatprep.subr.mxu0 0.0
  %3880 = vmatpush1.msra.mxu0 0.0
  %3881 = vmatprep.subr.mxu0 0.0
  %3882 = vmatpush1.msra.mxu0 0.0
  %3883 = vmatprep.subr.mxu0 0.0
  %3884 = vmatpush1.msra.mxu0 0.0
  %3885 = vmatprep.subr.mxu0 0.0
  %3886 = vmatpush1.msra.mxu0 0.0
  %3887 = vmatprep.subr.mxu0 0.0
  %3888 = vmatpush1.msra.mxu0 0.0
  %3889 = vmatprep.subr.mxu0 0.0
  %3890 = vmatpush1.msra.mxu0 0.0
  %3891 = vmatprep.subr.mxu0 0.0
  %3892 = vmatpush1.msra.mxu0 0.0
  %3893 = vmatprep.subr.mxu0 0.0
  %3894 = vmatpush1.msra.mxu0 0.0
  %3895 = vmatprep.subr.mxu0 0.0
  %3896 = vmatpush1.msra.mxu0 0.0
  %3897 = vmatprep.subr.mxu0 0.0
  %3898 = vmatpush1.msra.mxu0 0.0
  %3899 = vmatprep.subr.mxu0 0.0
  %3900 = vmatpush1.msra.mxu0 0.0
  %3901 = vmatprep.subr.mxu0 0.0
  %3902 = vmatpush1.msra.mxu0 0.0
  %3903 = vmatprep.subr.mxu0 0.0
  %3904 = vmatpush1.msra.mxu0 0.0
  %3905 = vmatprep.subr.mxu0 0.0
  %3906 = vmatpush1.msra.mxu0 0.0
  %3907 = vmatprep.subr.mxu0 0.0
  %3908 = vmatpush1.msra.mxu0 0.0
  %3909 = vmatprep.subr.mxu0 0.0
  %3910 = vmatpush1.msra.mxu0 0.0
  %3911 = vmatprep.subr.mxu0 0.0
  %3912 = vmatpush1.msra.mxu0 0.0
  %3913 = vmatprep.subr.mxu0 0.0
  %3914 = vmatpush1.msra.mxu0 0.0
  %3915 = vmatprep.subr.mxu0 0.0
  %3916 = vmatpush1.msra.mxu0 0.0
  %3917 = vmatprep.subr.mxu0 0.0
  %3918 = vmatpush1.msra.mxu0 0.0
  %3919 = vmatprep.mubr.f32.mxu0 0.0
  %3920 = vmatmul.mubr.f32.gmra.mrb[0].mxu0 %v3850
  %v3921 = vpop.f32.mrb[0].mxu0
  %v3922 = vadd.f32 0.0, %v3921
  %v3923 = vpop.f32.mrb[0].mxu0
  %3924 = vmatprep.mubr.f32.mxu0 0.0
  %3925 = vmatmul.mubr.f32.gmra.mrb[0].mxu0 %v3853
  %v3926 = vpop.f32.mrb[0].mxu0
  %v3927 = vadd.f32 0.0, %v3926
  %v3928 = vpop.f32.mrb[0].mxu0
  %3929 = vdwg.mxu0
  %v3931 = vsel %vm1402, %v3108, 0
  %v3934 = vsel %vm1402, %v3109, 0
  %3936 = vmatprep.subr.mxu0 0.0
  %3937 = vmatpush1.msra.mxu0 %v2670
  %3938 = vmatprep.subr.mxu0 0.0
  %3939 = vmatpush1.msra.mxu0 %v2675
  %3940 = vmatprep.subr.mxu0 0.0
  %3941 = vmatpush1.msra.mxu0 0.0
  %3942 = vmatprep.subr.mxu0 0.0
  %3943 = vmatpush1.msra.mxu0 0.0
  %3944 = vmatprep.subr.mxu0 0.0
  %3945 = vmatpush1.msra.mxu0 0.0
  %3946 = vmatprep.subr.mxu0 0.0
  %3947 = vmatpush1.msra.mxu0 0.0
  %3948 = vmatprep.subr.mxu0 0.0
  %3949 = vmatpush1.msra.mxu0 0.0
  %3950 = vmatprep.subr.mxu0 0.0
  %3951 = vmatpush1.msra.mxu0 0.0
  %3952 = vmatprep.subr.mxu0 0.0
  %3953 = vmatpush1.msra.mxu0 0.0
  %3954 = vmatprep.subr.mxu0 0.0
  %3955 = vmatpush1.msra.mxu0 0.0
  %3956 = vmatprep.subr.mxu0 0.0
  %3957 = vmatpush1.msra.mxu0 0.0
  %3958 = vmatprep.subr.mxu0 0.0
  %3959 = vmatpush1.msra.mxu0 0.0
  %3960 = vmatprep.subr.mxu0 0.0
  %3961 = vmatpush1.msra.mxu0 0.0
  %3962 = vmatprep.subr.mxu0 0.0
  %3963 = vmatpush1.msra.mxu0 0.0
  %3964 = vmatprep.subr.mxu0 0.0
  %3965 = vmatpush1.msra.mxu0 0.0
  %3966 = vmatprep.subr.mxu0 0.0
  %3967 = vmatpush1.msra.mxu0 0.0
  %3968 = vmatprep.subr.mxu0 0.0
  %3969 = vmatpush1.msra.mxu0 0.0
  %3970 = vmatprep.subr.mxu0 0.0
  %3971 = vmatpush1.msra.mxu0 0.0
  %3972 = vmatprep.subr.mxu0 0.0
  %3973 = vmatpush1.msra.mxu0 0.0
  %3974 = vmatprep.subr.mxu0 0.0
  %3975 = vmatpush1.msra.mxu0 0.0
  %3976 = vmatprep.subr.mxu0 0.0
  %3977 = vmatpush1.msra.mxu0 0.0
  %3978 = vmatprep.subr.mxu0 0.0
  %3979 = vmatpush1.msra.mxu0 0.0
  %3980 = vmatprep.subr.mxu0 0.0
  %3981 = vmatpush1.msra.mxu0 0.0
  %3982 = vmatprep.subr.mxu0 0.0
  %3983 = vmatpush1.msra.mxu0 0.0
  %3984 = vmatprep.subr.mxu0 0.0
  %3985 = vmatpush1.msra.mxu0 0.0
  %3986 = vmatprep.subr.mxu0 0.0
  %3987 = vmatpush1.msra.mxu0 0.0
  %3988 = vmatprep.subr.mxu0 0.0
  %3989 = vmatpush1.msra.mxu0 0.0
  %3990 = vmatprep.subr.mxu0 0.0
  %3991 = vmatpush1.msra.mxu0 0.0
  %3992 = vmatprep.subr.mxu0 0.0
  %3993 = vmatpush1.msra.mxu0 0.0
  %3994 = vmatprep.subr.mxu0 0.0
  %3995 = vmatpush1.msra.mxu0 0.0
  %3996 = vmatprep.subr.mxu0 0.0
  %3997 = vmatpush1.msra.mxu0 0.0
  %3998 = vmatprep.subr.mxu0 0.0
  %3999 = vmatpush1.msra.mxu0 0.0
  %4000 = vmatprep.mubr.f32.mxu0 0.0
  %4001 = vmatmul.mubr.f32.gmra.mrb[0].mxu0 %v3931
  %v4002 = vpop.f32.mrb[0].mxu0
  %v4003 = vadd.f32 0.0, %v4002
  %v4004 = vpop.f32.mrb[0].mxu0
  %4005 = vmatprep.mubr.f32.mxu0 0.0
  %4006 = vmatmul.mubr.f32.gmra.mrb[0].mxu0 %v3934
  %v4007 = vpop.f32.mrb[0].mxu0
  %v4008 = vadd.f32 0.0, %v4007
  %v4009 = vpop.f32.mrb[0].mxu0
  %4010 = vdwg.mxu0
  %v4012 = vsel %vm1402, %v3110, 0
  %v4015 = vsel %vm1402, %v3111, 0
  %4017 = vmatprep.subr.mxu0 0.0
  %4018 = vmatpush1.msra.mxu0 %v2680
  %4019 = vmatprep.subr.mxu0 0.0
  %4020 = vmatpush1.msra.mxu0 %v2685
  %4021 = vmatprep.subr.mxu0 0.0
  %4022 = vmatpush1.msra.mxu0 0.0
  %4023 = vmatprep.subr.mxu0 0.0
  %4024 = vmatpush1.msra.mxu0 0.0
  %4025 = vmatprep.subr.mxu0 0.0
  %4026 = vmatpush1.msra.mxu0 0.0
  %4027 = vmatprep.subr.mxu0 0.0
  %4028 = vmatpush1.msra.mxu0 0.0
  %4029 = vmatprep.subr.mxu0 0.0
  %4030 = vmatpush1.msra.mxu0 0.0
  %4031 = vmatprep.subr.mxu0 0.0
  %4032 = vmatpush1.msra.mxu0 0.0
  %4033 = vmatprep.subr.mxu0 0.0
  %4034 = vmatpush1.msra.mxu0 0.0
  %4035 = vmatprep.subr.mxu0 0.0
  %4036 = vmatpush1.msra.mxu0 0.0
  %4037 = vmatprep.subr.mxu0 0.0
  %4038 = vmatpush1.msra.mxu0 0.0
  %4039 = vmatprep.subr.mxu0 0.0
  %4040 = vmatpush1.msra.mxu0 0.0
  %4041 = vmatprep.subr.mxu0 0.0
  %4042 = vmatpush1.msra.mxu0 0.0
  %4043 = vmatprep.subr.mxu0 0.0
  %4044 = vmatpush1.msra.mxu0 0.0
  %4045 = vmatprep.subr.mxu0 0.0
  %4046 = vmatpush1.msra.mxu0 0.0
  %4047 = vmatprep.subr.mxu0 0.0
  %4048 = vmatpush1.msra.mxu0 0.0
  %4049 = vmatprep.subr.mxu0 0.0
  %4050 = vmatpush1.msra.mxu0 0.0
  %4051 = vmatprep.subr.mxu0 0.0
  %4052 = vmatpush1.msra.mxu0 0.0
  %4053 = vmatprep.subr.mxu0 0.0
  %4054 = vmatpush1.msra.mxu0 0.0
  %4055 = vmatprep.subr.mxu0 0.0
  %4056 = vmatpush1.msra.mxu0 0.0
  %4057 = vmatprep.subr.mxu0 0.0
  %4058 = vmatpush1.msra.mxu0 0.0
  %4059 = vmatprep.subr.mxu0 0.0
  %4060 = vmatpush1.msra.mxu0 0.0
  %4061 = vmatprep.subr.mxu0 0.0
  %4062 = vmatpush1.msra.mxu0 0.0
  %4063 = vmatprep.subr.mxu0 0.0
  %4064 = vmatpush1.msra.mxu0 0.0
  %4065 = vmatprep.subr.mxu0 0.0
  %4066 = vmatpush1.msra.mxu0 0.0
  %4067 = vmatprep.subr.mxu0 0.0
  %4068 = vmatpush1.msra.mxu0 0.0
  %4069 = vmatprep.subr.mxu0 0.0
  %4070 = vmatpush1.msra.mxu0 0.0
  %4071 = vmatprep.subr.mxu0 0.0
  %4072 = vmatpush1.msra.mxu0 0.0
  %4073 = vmatprep.subr.mxu0 0.0
  %4074 = vmatpush1.msra.mxu0 0.0
  %4075 = vmatprep.subr.mxu0 0.0
  %4076 = vmatpush1.msra.mxu0 0.0
  %4077 = vmatprep.subr.mxu0 0.0
  %4078 = vmatpush1.msra.mxu0 0.0
  %4079 = vmatprep.subr.mxu0 0.0
  %4080 = vmatpush1.msra.mxu0 0.0
  %4081 = vmatprep.mubr.f32.mxu0 0.0
  %4082 = vmatmul.mubr.f32.gmra.mrb[0].mxu0 %v4012
  %v4083 = vpop.f32.mrb[0].mxu0
  %v4084 = vadd.f32 0.0, %v4083
  %v4085 = vpop.f32.mrb[0].mxu0
  %4086 = vmatprep.mubr.f32.mxu0 0.0
  %4087 = vmatmul.mubr.f32.gmra.mrb[0].mxu0 %v4015
  %v4088 = vpop.f32.mrb[0].mxu0
  %v4089 = vadd.f32 0.0, %v4088
  %v4090 = vpop.f32.mrb[0].mxu0
  %4091 = vdwg.mxu0
  %v4093 = vsel %vm1402, %v3112, 0
  %v4096 = vsel %vm1402, %v3113, 0
  %4098 = vmatprep.subr.mxu0 0.0
  %4099 = vmatpush1.msra.mxu0 %v2690
  %4100 = vmatprep.subr.mxu0 0.0
  %4101 = vmatpush1.msra.mxu0 %v2695
  %4102 = vmatprep.subr.mxu0 0.0
  %4103 = vmatpush1.msra.mxu0 0.0
  %4104 = vmatprep.subr.mxu0 0.0
  %4105 = vmatpush1.msra.mxu0 0.0
  %4106 = vmatprep.subr.mxu0 0.0
  %4107 = vmatpush1.msra.mxu0 0.0
  %4108 = vmatprep.subr.mxu0 0.0
  %4109 = vmatpush1.msra.mxu0 0.0
  %4110 = vmatprep.subr.mxu0 0.0
  %4111 = vmatpush1.msra.mxu0 0.0
  %4112 = vmatprep.subr.mxu0 0.0
  %4113 = vmatpush1.msra.mxu0 0.0
  %4114 = vmatprep.subr.mxu0 0.0
  %4115 = vmatpush1.msra.mxu0 0.0
  %4116 = vmatprep.subr.mxu0 0.0
  %4117 = vmatpush1.msra.mxu0 0.0
  %4118 = vmatprep.subr.mxu0 0.0
  %4119 = vmatpush1.msra.mxu0 0.0
  %4120 = vmatprep.subr.mxu0 0.0
  %4121 = vmatpush1.msra.mxu0 0.0
  %4122 = vmatprep.subr.mxu0 0.0
  %4123 = vmatpush1.msra.mxu0 0.0
  %4124 = vmatprep.subr.mxu0 0.0
  %4125 = vmatpush1.msra.mxu0 0.0
  %4126 = vmatprep.subr.mxu0 0.0
  %4127 = vmatpush1.msra.mxu0 0.0
  %4128 = vmatprep.subr.mxu0 0.0
  %4129 = vmatpush1.msra.mxu0 0.0
  %4130 = vmatprep.subr.mxu0 0.0
  %4131 = vmatpush1.msra.mxu0 0.0
  %4132 = vmatprep.subr.mxu0 0.0
  %4133 = vmatpush1.msra.mxu0 0.0
  %4134 = vmatprep.subr.mxu0 0.0
  %4135 = vmatpush1.msra.mxu0 0.0
  %4136 = vmatprep.subr.mxu0 0.0
  %4137 = vmatpush1.msra.mxu0 0.0
  %4138 = vmatprep.subr.mxu0 0.0
  %4139 = vmatpush1.msra.mxu0 0.0
  %4140 = vmatprep.subr.mxu0 0.0
  %4141 = vmatpush1.msra.mxu0 0.0
  %4142 = vmatprep.subr.mxu0 0.0
  %4143 = vmatpush1.msra.mxu0 0.0
  %4144 = vmatprep.subr.mxu0 0.0
  %4145 = vmatpush1.msra.mxu0 0.0
  %4146 = vmatprep.subr.mxu0 0.0
  %4147 = vmatpush1.msra.mxu0 0.0
  %4148 = vmatprep.subr.mxu0 0.0
  %4149 = vmatpush1.msra.mxu0 0.0
  %4150 = vmatprep.subr.mxu0 0.0
  %4151 = vmatpush1.msra.mxu0 0.0
  %4152 = vmatprep.subr.mxu0 0.0
  %4153 = vmatpush1.msra.mxu0 0.0
  %4154 = vmatprep.subr.mxu0 0.0
  %4155 = vmatpush1.msra.mxu0 0.0
  %4156 = vmatprep.subr.mxu0 0.0
  %4157 = vmatpush1.msra.mxu0 0.0
  %4158 = vmatprep.subr.mxu0 0.0
  %4159 = vmatpush1.msra.mxu0 0.0
  %4160 = vmatprep.subr.mxu0 0.0
  %4161 = vmatpush1.msra.mxu0 0.0
  %4162 = vmatprep.mubr.f32.mxu0 0.0
  %4163 = vmatmul.mubr.f32.gmra.mrb[0].mxu0 %v4093
  %v4164 = vpop.f32.mrb[0].mxu0
  %v4165 = vadd.f32 0.0, %v4164
  %v4166 = vpop.f32.mrb[0].mxu0
  %4167 = vmatprep.mubr.f32.mxu0 0.0
  %4168 = vmatmul.mubr.f32.gmra.mrb[0].mxu0 %v4096
  %v4169 = vpop.f32.mrb[0].mxu0
  %v4170 = vadd.f32 0.0, %v4169
  %v4171 = vpop.f32.mrb[0].mxu0
  %4172 = vdwg.mxu0
  %v4174 = vsel %vm1402, %v3114, 0
  %v4177 = vsel %vm1402, %v3115, 0
  %4179 = vmatprep.subr.mxu0 0.0
  %4180 = vmatpush1.msra.mxu0 %v2700
  %4181 = vmatprep.subr.mxu0 0.0
  %4182 = vmatpush1.msra.mxu0 %v2705
  %4183 = vmatprep.subr.mxu0 0.0
  %4184 = vmatpush1.msra.mxu0 0.0
  %4185 = vmatprep.subr.mxu0 0.0
  %4186 = vmatpush1.msra.mxu0 0.0
  %4187 = vmatprep.subr.mxu0 0.0
  %4188 = vmatpush1.msra.mxu0 0.0
  %4189 = vmatprep.subr.mxu0 0.0
  %4190 = vmatpush1.msra.mxu0 0.0
  %4191 = vmatprep.subr.mxu0 0.0
  %4192 = vmatpush1.msra.mxu0 0.0
  %4193 = vmatprep.subr.mxu0 0.0
  %4194 = vmatpush1.msra.mxu0 0.0
  %4195 = vmatprep.subr.mxu0 0.0
  %4196 = vmatpush1.msra.mxu0 0.0
  %4197 = vmatprep.subr.mxu0 0.0
  %4198 = vmatpush1.msra.mxu0 0.0
  %4199 = vmatprep.subr.mxu0 0.0
  %4200 = vmatpush1.msra.mxu0 0.0
  %4201 = vmatprep.subr.mxu0 0.0
  %4202 = vmatpush1.msra.mxu0 0.0
  %4203 = vmatprep.subr.mxu0 0.0
  %4204 = vmatpush1.msra.mxu0 0.0
  %4205 = vmatprep.subr.mxu0 0.0
  %4206 = vmatpush1.msra.mxu0 0.0
  %4207 = vmatprep.subr.mxu0 0.0
  %4208 = vmatpush1.msra.mxu0 0.0
  %4209 = vmatprep.subr.mxu0 0.0
  %4210 = vmatpush1.msra.mxu0 0.0
  %4211 = vmatprep.subr.mxu0 0.0
  %4212 = vmatpush1.msra.mxu0 0.0
  %4213 = vmatprep.subr.mxu0 0.0
  %4214 = vmatpush1.msra.mxu0 0.0
  %4215 = vmatprep.subr.mxu0 0.0
  %4216 = vmatpush1.msra.mxu0 0.0
  %4217 = vmatprep.subr.mxu0 0.0
  %4218 = vmatpush1.msra.mxu0 0.0
  %4219 = vmatprep.subr.mxu0 0.0
  %4220 = vmatpush1.msra.mxu0 0.0
  %4221 = vmatprep.subr.mxu0 0.0
  %4222 = vmatpush1.msra.mxu0 0.0
  %4223 = vmatprep.subr.mxu0 0.0
  %4224 = vmatpush1.msra.mxu0 0.0
  %4225 = vmatprep.subr.mxu0 0.0
  %4226 = vmatpush1.msra.mxu0 0.0
  %4227 = vmatprep.subr.mxu0 0.0
  %4228 = vmatpush1.msra.mxu0 0.0
  %4229 = vmatprep.subr.mxu0 0.0
  %4230 = vmatpush1.msra.mxu0 0.0
  %4231 = vmatprep.subr.mxu0 0.0
  %4232 = vmatpush1.msra.mxu0 0.0
  %4233 = vmatprep.subr.mxu0 0.0
  %4234 = vmatpush1.msra.mxu0 0.0
  %4235 = vmatprep.subr.mxu0 0.0
  %4236 = vmatpush1.msra.mxu0 0.0
  %4237 = vmatprep.subr.mxu0 0.0
  %4238 = vmatpush1.msra.mxu0 0.0
  %4239 = vmatprep.subr.mxu0 0.0
  %4240 = vmatpush1.msra.mxu0 0.0
  %4241 = vmatprep.subr.mxu0 0.0
  %4242 = vmatpush1.msra.mxu0 0.0
  %4243 = vmatprep.mubr.f32.mxu0 0.0
  %4244 = vmatmul.mubr.f32.gmra.mrb[0].mxu0 %v4174
  %v4245 = vpop.f32.mrb[0].mxu0
  %v4246 = vadd.f32 0.0, %v4245
  %v4247 = vpop.f32.mrb[0].mxu0
  %4248 = vmatprep.mubr.f32.mxu0 0.0
  %4249 = vmatmul.mubr.f32.gmra.mrb[0].mxu0 %v4177
  %v4250 = vpop.f32.mrb[0].mxu0
  %v4251 = vadd.f32 0.0, %v4250
  %v4252 = vpop.f32.mrb[0].mxu0
  %4253 = vdwg.mxu0
  %v4255 = vsel %vm1402, %v3116, 0
  %v4258 = vsel %vm1402, %v3117, 0
  %4260 = vmatprep.subr.mxu0 0.0
  %4261 = vmatpush1.msra.mxu0 %v2710
  %4262 = vmatprep.subr.mxu0 0.0
  %4263 = vmatpush1.msra.mxu0 %v2715
  %4264 = vmatprep.subr.mxu0 0.0
  %4265 = vmatpush1.msra.mxu0 0.0
  %4266 = vmatprep.subr.mxu0 0.0
  %4267 = vmatpush1.msra.mxu0 0.0
  %4268 = vmatprep.subr.mxu0 0.0
  %4269 = vmatpush1.msra.mxu0 0.0
  %4270 = vmatprep.subr.mxu0 0.0
  %4271 = vmatpush1.msra.mxu0 0.0
  %4272 = vmatprep.subr.mxu0 0.0
  %4273 = vmatpush1.msra.mxu0 0.0
  %4274 = vmatprep.subr.mxu0 0.0
  %4275 = vmatpush1.msra.mxu0 0.0
  %4276 = vmatprep.subr.mxu0 0.0
  %4277 = vmatpush1.msra.mxu0 0.0
  %4278 = vmatprep.subr.mxu0 0.0
  %4279 = vmatpush1.msra.mxu0 0.0
  %4280 = vmatprep.subr.mxu0 0.0
  %4281 = vmatpush1.msra.mxu0 0.0
  %4282 = vmatprep.subr.mxu0 0.0
  %4283 = vmatpush1.msra.mxu0 0.0
  %4284 = vmatprep.subr.mxu0 0.0
  %4285 = vmatpush1.msra.mxu0 0.0
  %4286 = vmatprep.subr.mxu0 0.0
  %4287 = vmatpush1.msra.mxu0 0.0
  %4288 = vmatprep.subr.mxu0 0.0
  %4289 = vmatpush1.msra.mxu0 0.0
  %4290 = vmatprep.subr.mxu0 0.0
  %4291 = vmatpush1.msra.mxu0 0.0
  %4292 = vmatprep.subr.mxu0 0.0
  %4293 = vmatpush1.msra.mxu0 0.0
  %4294 = vmatprep.subr.mxu0 0.0
  %4295 = vmatpush1.msra.mxu0 0.0
  %4296 = vmatprep.subr.mxu0 0.0
  %4297 = vmatpush1.msra.mxu0 0.0
  %4298 = vmatprep.subr.mxu0 0.0
  %4299 = vmatpush1.msra.mxu0 0.0
  %4300 = vmatprep.subr.mxu0 0.0
  %4301 = vmatpush1.msra.mxu0 0.0
  %4302 = vmatprep.subr.mxu0 0.0
  %4303 = vmatpush1.msra.mxu0 0.0
  %4304 = vmatprep.subr.mxu0 0.0
  %4305 = vmatpush1.msra.mxu0 0.0
  %4306 = vmatprep.subr.mxu0 0.0
  %4307 = vmatpush1.msra.mxu0 0.0
  %4308 = vmatprep.subr.mxu0 0.0
  %4309 = vmatpush1.msra.mxu0 0.0
  %4310 = vmatprep.subr.mxu0 0.0
  %4311 = vmatpush1.msra.mxu0 0.0
  %4312 = vmatprep.subr.mxu0 0.0
  %4313 = vmatpush1.msra.mxu0 0.0
  %4314 = vmatprep.subr.mxu0 0.0
  %4315 = vmatpush1.msra.mxu0 0.0
  %4316 = vmatprep.subr.mxu0 0.0
  %4317 = vmatpush1.msra.mxu0 0.0
  %4318 = vmatprep.subr.mxu0 0.0
  %4319 = vmatpush1.msra.mxu0 0.0
  %4320 = vmatprep.subr.mxu0 0.0
  %4321 = vmatpush1.msra.mxu0 0.0
  %4322 = vmatprep.subr.mxu0 0.0
  %4323 = vmatpush1.msra.mxu0 0.0
  %4324 = vmatprep.mubr.f32.mxu0 0.0
  %4325 = vmatmul.mubr.f32.gmra.mrb[0].mxu0 %v4255
  %v4326 = vpop.f32.mrb[0].mxu0
  %v4327 = vadd.f32 0.0, %v4326
  %v4328 = vpop.f32.mrb[0].mxu0
  %4329 = vmatprep.mubr.f32.mxu0 0.0
  %4330 = vmatmul.mubr.f32.gmra.mrb[0].mxu0 %v4258
  %v4331 = vpop.f32.mrb[0].mxu0
  %v4332 = vadd.f32 0.0, %v4331
  %v4333 = vpop.f32.mrb[0].mxu0
  %4334 = vdwg.mxu0
  %v4336 = vsel %vm1402, %v3118, 0
  %v4339 = vsel %vm1402, %v3119, 0
  %4341 = vmatprep.subr.mxu0 0.0
  %4342 = vmatpush1.msra.mxu0 %v2720
  %4343 = vmatprep.subr.mxu0 0.0
  %4344 = vmatpush1.msra.mxu0 %v2725
  %4345 = vmatprep.subr.mxu0 0.0
  %4346 = vmatpush1.msra.mxu0 0.0
  %4347 = vmatprep.subr.mxu0 0.0
  %4348 = vmatpush1.msra.mxu0 0.0
  %4349 = vmatprep.subr.mxu0 0.0
  %4350 = vmatpush1.msra.mxu0 0.0
  %4351 = vmatprep.subr.mxu0 0.0
  %4352 = vmatpush1.msra.mxu0 0.0
  %4353 = vmatprep.subr.mxu0 0.0
  %4354 = vmatpush1.msra.mxu0 0.0
  %4355 = vmatprep.subr.mxu0 0.0
  %4356 = vmatpush1.msra.mxu0 0.0
  %4357 = vmatprep.subr.mxu0 0.0
  %4358 = vmatpush1.msra.mxu0 0.0
  %4359 = vmatprep.subr.mxu0 0.0
  %4360 = vmatpush1.msra.mxu0 0.0
  %4361 = vmatprep.subr.mxu0 0.0
  %4362 = vmatpush1.msra.mxu0 0.0
  %4363 = vmatprep.subr.mxu0 0.0
  %4364 = vmatpush1.msra.mxu0 0.0
  %4365 = vmatprep.subr.mxu0 0.0
  %4366 = vmatpush1.msra.mxu0 0.0
  %4367 = vmatprep.subr.mxu0 0.0
  %4368 = vmatpush1.msra.mxu0 0.0
  %4369 = vmatprep.subr.mxu0 0.0
  %4370 = vmatpush1.msra.mxu0 0.0
  %4371 = vmatprep.subr.mxu0 0.0
  %4372 = vmatpush1.msra.mxu0 0.0
  %4373 = vmatprep.subr.mxu0 0.0
  %4374 = vmatpush1.msra.mxu0 0.0
  %4375 = vmatprep.subr.mxu0 0.0
  %4376 = vmatpush1.msra.mxu0 0.0
  %4377 = vmatprep.subr.mxu0 0.0
  %4378 = vmatpush1.msra.mxu0 0.0
  %4379 = vmatprep.subr.mxu0 0.0
  %4380 = vmatpush1.msra.mxu0 0.0
  %4381 = vmatprep.subr.mxu0 0.0
  %4382 = vmatpush1.msra.mxu0 0.0
  %4383 = vmatprep.subr.mxu0 0.0
  %4384 = vmatpush1.msra.mxu0 0.0
  %4385 = vmatprep.subr.mxu0 0.0
  %4386 = vmatpush1.msra.mxu0 0.0
  %4387 = vmatprep.subr.mxu0 0.0
  %4388 = vmatpush1.msra.mxu0 0.0
  %4389 = vmatprep.subr.mxu0 0.0
  %4390 = vmatpush1.msra.mxu0 0.0
  %4391 = vmatprep.subr.mxu0 0.0
  %4392 = vmatpush1.msra.mxu0 0.0
  %4393 = vmatprep.subr.mxu0 0.0
  %4394 = vmatpush1.msra.mxu0 0.0
  %4395 = vmatprep.subr.mxu0 0.0
  %4396 = vmatpush1.msra.mxu0 0.0
  %4397 = vmatprep.subr.mxu0 0.0
  %4398 = vmatpush1.msra.mxu0 0.0
  %4399 = vmatprep.subr.mxu0 0.0
  %4400 = vmatpush1.msra.mxu0 0.0
  %4401 = vmatprep.subr.mxu0 0.0
  %4402 = vmatpush1.msra.mxu0 0.0
  %4403 = vmatprep.subr.mxu0 0.0
  %4404 = vmatpush1.msra.mxu0 0.0
  %4405 = vmatprep.mubr.f32.mxu0 0.0
  %4406 = vmatmul.mubr.f32.gmra.mrb[0].mxu0 %v4336
  %v4407 = vpop.f32.mrb[0].mxu0
  %v4408 = vadd.f32 0.0, %v4407
  %v4409 = vpop.f32.mrb[0].mxu0
  %4410 = vmatprep.mubr.f32.mxu0 0.0
  %4411 = vmatmul.mubr.f32.gmra.mrb[0].mxu0 %v4339
  %v4412 = vpop.f32.mrb[0].mxu0
  %v4413 = vadd.f32 0.0, %v4412
  %v4414 = vpop.f32.mrb[0].mxu0
  %4415 = vdwg.mxu0
  %v4417 = vsel %vm2762, %v2930, 0
  %v4420 = vsel %vm2762, %v2935, 0
  %v4423 = vsel %vm2859, %v3198, 0
  %4425 = vmatprep.subr.mxu0 0.0
  %4426 = vmatpush1.msra.mxu0 %v3193
  %4427 = vmatprep.subr.mxu0 0.0
  %4428 = vmatpush1.msra.mxu0 %v4423
  %4429 = vmatprep.subr.mxu0 0.0
  %4430 = vmatpush1.msra.mxu0 0.0
  %4431 = vmatprep.subr.mxu0 0.0
  %4432 = vmatpush1.msra.mxu0 0.0
  %4433 = vmatprep.subr.mxu0 0.0
  %4434 = vmatpush1.msra.mxu0 0.0
  %4435 = vmatprep.subr.mxu0 0.0
  %4436 = vmatpush1.msra.mxu0 0.0
  %4437 = vmatprep.subr.mxu0 0.0
  %4438 = vmatpush1.msra.mxu0 0.0
  %4439 = vmatprep.subr.mxu0 0.0
  %4440 = vmatpush1.msra.mxu0 0.0
  %4441 = vmatprep.subr.mxu0 0.0
  %4442 = vmatpush1.msra.mxu0 0.0
  %4443 = vmatprep.subr.mxu0 0.0
  %4444 = vmatpush1.msra.mxu0 0.0
  %4445 = vmatprep.subr.mxu0 0.0
  %4446 = vmatpush1.msra.mxu0 0.0
  %4447 = vmatprep.subr.mxu0 0.0
  %4448 = vmatpush1.msra.mxu0 0.0
  %4449 = vmatprep.subr.mxu0 0.0
  %4450 = vmatpush1.msra.mxu0 0.0
  %4451 = vmatprep.subr.mxu0 0.0
  %4452 = vmatpush1.msra.mxu0 0.0
  %4453 = vmatprep.subr.mxu0 0.0
  %4454 = vmatpush1.msra.mxu0 0.0
  %4455 = vmatprep.subr.mxu0 0.0
  %4456 = vmatpush1.msra.mxu0 0.0
  %4457 = vmatprep.subr.mxu0 0.0
  %4458 = vmatpush1.msra.mxu0 0.0
  %4459 = vmatprep.subr.mxu0 0.0
  %4460 = vmatpush1.msra.mxu0 0.0
  %4461 = vmatprep.subr.mxu0 0.0
  %4462 = vmatpush1.msra.mxu0 0.0
  %4463 = vmatprep.subr.mxu0 0.0
  %4464 = vmatpush1.msra.mxu0 0.0
  %4465 = vmatprep.subr.mxu0 0.0
  %4466 = vmatpush1.msra.mxu0 0.0
  %4467 = vmatprep.subr.mxu0 0.0
  %4468 = vmatpush1.msra.mxu0 0.0
  %4469 = vmatprep.subr.mxu0 0.0
  %4470 = vmatpush1.msra.mxu0 0.0
  %4471 = vmatprep.subr.mxu0 0.0
  %4472 = vmatpush1.msra.mxu0 0.0
  %4473 = vmatprep.subr.mxu0 0.0
  %4474 = vmatpush1.msra.mxu0 0.0
  %4475 = vmatprep.subr.mxu0 0.0
  %4476 = vmatpush1.msra.mxu0 0.0
  %4477 = vmatprep.subr.mxu0 0.0
  %4478 = vmatpush1.msra.mxu0 0.0
  %4479 = vmatprep.subr.mxu0 0.0
  %4480 = vmatpush1.msra.mxu0 0.0
  %4481 = vmatprep.subr.mxu0 0.0
  %4482 = vmatpush1.msra.mxu0 0.0
  %4483 = vmatprep.subr.mxu0 0.0
  %4484 = vmatpush1.msra.mxu0 0.0
  %4485 = vmatprep.subr.mxu0 0.0
  %4486 = vmatpush1.msra.mxu0 0.0
  %4487 = vmatprep.subr.mxu0 0.0
  %4488 = vmatpush1.msra.mxu0 0.0
  %4489 = vmatprep.mubr.f32.mxu0 0.0
  %4490 = vmatmul.mubr.f32.gmra.mrb[0].mxu0 %v4417
  %v4491 = vpop.f32.mrb[0].mxu0
  %v4492 = vadd.f32 0.0, %v4491
  %v4493 = vpop.f32.mrb[0].mxu0
  %4494 = vmatprep.mubr.f32.mxu0 0.0
  %4495 = vmatmul.mubr.f32.gmra.mrb[0].mxu0 %v4420
  %v4496 = vpop.f32.mrb[0].mxu0
  %v4497 = vadd.f32 0.0, %v4496
  %v4498 = vpop.f32.mrb[0].mxu0
  %4499 = vdwg.mxu0
  %v4501 = vsel %vm2762, %v2940, 0
  %v4504 = vsel %vm2762, %v2945, 0
  %v4507 = vsel %vm2859, %v3279, 0
  %4509 = vmatprep.subr.mxu0 0.0
  %4510 = vmatpush1.msra.mxu0 %v3274
  %4511 = vmatprep.subr.mxu0 0.0
  %4512 = vmatpush1.msra.mxu0 %v4507
  %4513 = vmatprep.subr.mxu0 0.0
  %4514 = vmatpush1.msra.mxu0 0.0
  %4515 = vmatprep.subr.mxu0 0.0
  %4516 = vmatpush1.msra.mxu0 0.0
  %4517 = vmatprep.subr.mxu0 0.0
  %4518 = vmatpush1.msra.mxu0 0.0
  %4519 = vmatprep.subr.mxu0 0.0
  %4520 = vmatpush1.msra.mxu0 0.0
  %4521 = vmatprep.subr.mxu0 0.0
  %4522 = vmatpush1.msra.mxu0 0.0
  %4523 = vmatprep.subr.mxu0 0.0
  %4524 = vmatpush1.msra.mxu0 0.0
  %4525 = vmatprep.subr.mxu0 0.0
  %4526 = vmatpush1.msra.mxu0 0.0
  %4527 = vmatprep.subr.mxu0 0.0
  %4528 = vmatpush1.msra.mxu0 0.0
  %4529 = vmatprep.subr.mxu0 0.0
  %4530 = vmatpush1.msra.mxu0 0.0
  %4531 = vmatprep.subr.mxu0 0.0
  %4532 = vmatpush1.msra.mxu0 0.0
  %4533 = vmatprep.subr.mxu0 0.0
  %4534 = vmatpush1.msra.mxu0 0.0
  %4535 = vmatprep.subr.mxu0 0.0
  %4536 = vmatpush1.msra.mxu0 0.0
  %4537 = vmatprep.subr.mxu0 0.0
  %4538 = vmatpush1.msra.mxu0 0.0
  %4539 = vmatprep.subr.mxu0 0.0
  %4540 = vmatpush1.msra.mxu0 0.0
  %4541 = vmatprep.subr.mxu0 0.0
  %4542 = vmatpush1.msra.mxu0 0.0
  %4543 = vmatprep.subr.mxu0 0.0
  %4544 = vmatpush1.msra.mxu0 0.0
  %4545 = vmatprep.subr.mxu0 0.0
  %4546 = vmatpush1.msra.mxu0 0.0
  %4547 = vmatprep.subr.mxu0 0.0
  %4548 = vmatpush1.msra.mxu0 0.0
  %4549 = vmatprep.subr.mxu0 0.0
  %4550 = vmatpush1.msra.mxu0 0.0
  %4551 = vmatprep.subr.mxu0 0.0
  %4552 = vmatpush1.msra.mxu0 0.0
  %4553 = vmatprep.subr.mxu0 0.0
  %4554 = vmatpush1.msra.mxu0 0.0
  %4555 = vmatprep.subr.mxu0 0.0
  %4556 = vmatpush1.msra.mxu0 0.0
  %4557 = vmatprep.subr.mxu0 0.0
  %4558 = vmatpush1.msra.mxu0 0.0
  %4559 = vmatprep.subr.mxu0 0.0
  %4560 = vmatpush1.msra.mxu0 0.0
  %4561 = vmatprep.subr.mxu0 0.0
  %4562 = vmatpush1.msra.mxu0 0.0
  %4563 = vmatprep.subr.mxu0 0.0
  %4564 = vmatpush1.msra.mxu0 0.0
  %4565 = vmatprep.subr.mxu0 0.0
  %4566 = vmatpush1.msra.mxu0 0.0
  %4567 = vmatprep.subr.mxu0 0.0
  %4568 = vmatpush1.msra.mxu0 0.0
  %4569 = vmatprep.subr.mxu0 0.0
  %4570 = vmatpush1.msra.mxu0 0.0
  %4571 = vmatprep.subr.mxu0 0.0
  %4572 = vmatpush1.msra.mxu0 0.0
  %4573 = vmatprep.mubr.f32.mxu0 0.0
  %4574 = vmatmul.mubr.f32.gmra.mrb[0].mxu0 %v4501
  %v4575 = vpop.f32.mrb[0].mxu0
  %v4576 = vadd.f32 0.0, %v4575
  %v4577 = vpop.f32.mrb[0].mxu0
  %4578 = vmatprep.mubr.f32.mxu0 0.0
  %4579 = vmatmul.mubr.f32.gmra.mrb[0].mxu0 %v4504
  %v4580 = vpop.f32.mrb[0].mxu0
  %v4581 = vadd.f32 0.0, %v4580
  %v4582 = vpop.f32.mrb[0].mxu0
  %4583 = vdwg.mxu0
  %v4585 = vsel %vm2762, %v2950, 0
  %v4588 = vsel %vm2762, %v2955, 0
  %v4591 = vsel %vm2859, %v3360, 0
  %4593 = vmatprep.subr.mxu0 0.0
  %4594 = vmatpush1.msra.mxu0 %v3355
  %4595 = vmatprep.subr.mxu0 0.0
  %4596 = vmatpush1.msra.mxu0 %v4591
  %4597 = vmatprep.subr.mxu0 0.0
  %4598 = vmatpush1.msra.mxu0 0.0
  %4599 = vmatprep.subr.mxu0 0.0
  %4600 = vmatpush1.msra.mxu0 0.0
  %4601 = vmatprep.subr.mxu0 0.0
  %4602 = vmatpush1.msra.mxu0 0.0
  %4603 = vmatprep.subr.mxu0 0.0
  %4604 = vmatpush1.msra.mxu0 0.0
  %4605 = vmatprep.subr.mxu0 0.0
  %4606 = vmatpush1.msra.mxu0 0.0
  %4607 = vmatprep.subr.mxu0 0.0
  %4608 = vmatpush1.msra.mxu0 0.0
  %4609 = vmatprep.subr.mxu0 0.0
  %4610 = vmatpush1.msra.mxu0 0.0
  %4611 = vmatprep.subr.mxu0 0.0
  %4612 = vmatpush1.msra.mxu0 0.0
  %4613 = vmatprep.subr.mxu0 0.0
  %4614 = vmatpush1.msra.mxu0 0.0
  %4615 = vmatprep.subr.mxu0 0.0
  %4616 = vmatpush1.msra.mxu0 0.0
  %4617 = vmatprep.subr.mxu0 0.0
  %4618 = vmatpush1.msra.mxu0 0.0
  %4619 = vmatprep.subr.mxu0 0.0
  %4620 = vmatpush1.msra.mxu0 0.0
  %4621 = vmatprep.subr.mxu0 0.0
  %4622 = vmatpush1.msra.mxu0 0.0
  %4623 = vmatprep.subr.mxu0 0.0
  %4624 = vmatpush1.msra.mxu0 0.0
  %4625 = vmatprep.subr.mxu0 0.0
  %4626 = vmatpush1.msra.mxu0 0.0
  %4627 = vmatprep.subr.mxu0 0.0
  %4628 = vmatpush1.msra.mxu0 0.0
  %4629 = vmatprep.subr.mxu0 0.0
  %4630 = vmatpush1.msra.mxu0 0.0
  %4631 = vmatprep.subr.mxu0 0.0
  %4632 = vmatpush1.msra.mxu0 0.0
  %4633 = vmatprep.subr.mxu0 0.0
  %4634 = vmatpush1.msra.mxu0 0.0
  %4635 = vmatprep.subr.mxu0 0.0
  %4636 = vmatpush1.msra.mxu0 0.0
  %4637 = vmatprep.subr.mxu0 0.0
  %4638 = vmatpush1.msra.mxu0 0.0
  %4639 = vmatprep.subr.mxu0 0.0
  %4640 = vmatpush1.msra.mxu0 0.0
  %4641 = vmatprep.subr.mxu0 0.0
  %4642 = vmatpush1.msra.mxu0 0.0
  %4643 = vmatprep.subr.mxu0 0.0
  %4644 = vmatpush1.msra.mxu0 0.0
  %4645 = vmatprep.subr.mxu0 0.0
  %4646 = vmatpush1.msra.mxu0 0.0
  %4647 = vmatprep.subr.mxu0 0.0
  %4648 = vmatpush1.msra.mxu0 0.0
  %4649 = vmatprep.subr.mxu0 0.0
  %4650 = vmatpush1.msra.mxu0 0.0
  %4651 = vmatprep.subr.mxu0 0.0
  %4652 = vmatpush1.msra.mxu0 0.0
  %4653 = vmatprep.subr.mxu0 0.0
  %4654 = vmatpush1.msra.mxu0 0.0
  %4655 = vmatprep.subr.mxu0 0.0
  %4656 = vmatpush1.msra.mxu0 0.0
  %4657 = vmatprep.mubr.f32.mxu0 0.0
  %4658 = vmatmul.mubr.f32.gmra.mrb[0].mxu0 %v4585
  %v4659 = vpop.f32.mrb[0].mxu0
  %v4660 = vadd.f32 0.0, %v4659
  %v4661 = vpop.f32.mrb[0].mxu0
  %4662 = vmatprep.mubr.f32.mxu0 0.0
  %4663 = vmatmul.mubr.f32.gmra.mrb[0].mxu0 %v4588
  %v4664 = vpop.f32.mrb[0].mxu0
  %v4665 = vadd.f32 0.0, %v4664
  %v4666 = vpop.f32.mrb[0].mxu0
  %4667 = vdwg.mxu0
  %v4669 = vsel %vm2762, %v2960, 0
  %v4672 = vsel %vm2762, %v2965, 0
  %v4675 = vsel %vm2859, %v3441, 0
  %4677 = vmatprep.subr.mxu0 0.0
  %4678 = vmatpush1.msra.mxu0 %v3436
  %4679 = vmatprep.subr.mxu0 0.0
  %4680 = vmatpush1.msra.mxu0 %v4675
  %4681 = vmatprep.subr.mxu0 0.0
  %4682 = vmatpush1.msra.mxu0 0.0
  %4683 = vmatprep.subr.mxu0 0.0
  %4684 = vmatpush1.msra.mxu0 0.0
  %4685 = vmatprep.subr.mxu0 0.0
  %4686 = vmatpush1.msra.mxu0 0.0
  %4687 = vmatprep.subr.mxu0 0.0
  %4688 = vmatpush1.msra.mxu0 0.0
  %4689 = vmatprep.subr.mxu0 0.0
  %4690 = vmatpush1.msra.mxu0 0.0
  %4691 = vmatprep.subr.mxu0 0.0
  %4692 = vmatpush1.msra.mxu0 0.0
  %4693 = vmatprep.subr.mxu0 0.0
  %4694 = vmatpush1.msra.mxu0 0.0
  %4695 = vmatprep.subr.mxu0 0.0
  %4696 = vmatpush1.msra.mxu0 0.0
  %4697 = vmatprep.subr.mxu0 0.0
  %4698 = vmatpush1.msra.mxu0 0.0
  %4699 = vmatprep.subr.mxu0 0.0
  %4700 = vmatpush1.msra.mxu0 0.0
  %4701 = vmatprep.subr.mxu0 0.0
  %4702 = vmatpush1.msra.mxu0 0.0
  %4703 = vmatprep.subr.mxu0 0.0
  %4704 = vmatpush1.msra.mxu0 0.0
  %4705 = vmatprep.subr.mxu0 0.0
  %4706 = vmatpush1.msra.mxu0 0.0
  %4707 = vmatprep.subr.mxu0 0.0
  %4708 = vmatpush1.msra.mxu0 0.0
  %4709 = vmatprep.subr.mxu0 0.0
  %4710 = vmatpush1.msra.mxu0 0.0
  %4711 = vmatprep.subr.mxu0 0.0
  %4712 = vmatpush1.msra.mxu0 0.0
  %4713 = vmatprep.subr.mxu0 0.0
  %4714 = vmatpush1.msra.mxu0 0.0
  %4715 = vmatprep.subr.mxu0 0.0
  %4716 = vmatpush1.msra.mxu0 0.0
  %4717 = vmatprep.subr.mxu0 0.0
  %4718 = vmatpush1.msra.mxu0 0.0
  %4719 = vmatprep.subr.mxu0 0.0
  %4720 = vmatpush1.msra.mxu0 0.0
  %4721 = vmatprep.subr.mxu0 0.0
  %4722 = vmatpush1.msra.mxu0 0.0
  %4723 = vmatprep.subr.mxu0 0.0
  %4724 = vmatpush1.msra.mxu0 0.0
  %4725 = vmatprep.subr.mxu0 0.0
  %4726 = vmatpush1.msra.mxu0 0.0
  %4727 = vmatprep.subr.mxu0 0.0
  %4728 = vmatpush1.msra.mxu0 0.0
  %4729 = vmatprep.subr.mxu0 0.0
  %4730 = vmatpush1.msra.mxu0 0.0
  %4731 = vmatprep.subr.mxu0 0.0
  %4732 = vmatpush1.msra.mxu0 0.0
  %4733 = vmatprep.subr.mxu0 0.0
  %4734 = vmatpush1.msra.mxu0 0.0
  %4735 = vmatprep.subr.mxu0 0.0
  %4736 = vmatpush1.msra.mxu0 0.0
  %4737 = vmatprep.subr.mxu0 0.0
  %4738 = vmatpush1.msra.mxu0 0.0
  %4739 = vmatprep.subr.mxu0 0.0
  %4740 = vmatpush1.msra.mxu0 0.0
  %4741 = vmatprep.mubr.f32.mxu0 0.0
  %4742 = vmatmul.mubr.f32.gmra.mrb[0].mxu0 %v4669
  %v4743 = vpop.f32.mrb[0].mxu0
  %v4744 = vadd.f32 0.0, %v4743
  %v4745 = vpop.f32.mrb[0].mxu0
  %4746 = vmatprep.mubr.f32.mxu0 0.0
  %4747 = vmatmul.mubr.f32.gmra.mrb[0].mxu0 %v4672
  %v4748 = vpop.f32.mrb[0].mxu0
  %v4749 = vadd.f32 0.0, %v4748
  %v4750 = vpop.f32.mrb[0].mxu0
  %4751 = vdwg.mxu0
  %v4753 = vsel %vm2762, %v2970, 0
  %v4756 = vsel %vm2762, %v2975, 0
  %v4759 = vsel %vm2859, %v3522, 0
  %4761 = vmatprep.subr.mxu0 0.0
  %4762 = vmatpush1.msra.mxu0 %v3517
  %4763 = vmatprep.subr.mxu0 0.0
  %4764 = vmatpush1.msra.mxu0 %v4759
  %4765 = vmatprep.subr.mxu0 0.0
  %4766 = vmatpush1.msra.mxu0 0.0
  %4767 = vmatprep.subr.mxu0 0.0
  %4768 = vmatpush1.msra.mxu0 0.0
  %4769 = vmatprep.subr.mxu0 0.0
  %4770 = vmatpush1.msra.mxu0 0.0
  %4771 = vmatprep.subr.mxu0 0.0
  %4772 = vmatpush1.msra.mxu0 0.0
  %4773 = vmatprep.subr.mxu0 0.0
  %4774 = vmatpush1.msra.mxu0 0.0
  %4775 = vmatprep.subr.mxu0 0.0
  %4776 = vmatpush1.msra.mxu0 0.0
  %4777 = vmatprep.subr.mxu0 0.0
  %4778 = vmatpush1.msra.mxu0 0.0
  %4779 = vmatprep.subr.mxu0 0.0
  %4780 = vmatpush1.msra.mxu0 0.0
  %4781 = vmatprep.subr.mxu0 0.0
  %4782 = vmatpush1.msra.mxu0 0.0
  %4783 = vmatprep.subr.mxu0 0.0
  %4784 = vmatpush1.msra.mxu0 0.0
  %4785 = vmatprep.subr.mxu0 0.0
  %4786 = vmatpush1.msra.mxu0 0.0
  %4787 = vmatprep.subr.mxu0 0.0
  %4788 = vmatpush1.msra.mxu0 0.0
  %4789 = vmatprep.subr.mxu0 0.0
  %4790 = vmatpush1.msra.mxu0 0.0
  %4791 = vmatprep.subr.mxu0 0.0
  %4792 = vmatpush1.msra.mxu0 0.0
  %4793 = vmatprep.subr.mxu0 0.0
  %4794 = vmatpush1.msra.mxu0 0.0
  %4795 = vmatprep.subr.mxu0 0.0
  %4796 = vmatpush1.msra.mxu0 0.0
  %4797 = vmatprep.subr.mxu0 0.0
  %4798 = vmatpush1.msra.mxu0 0.0
  %4799 = vmatprep.subr.mxu0 0.0
  %4800 = vmatpush1.msra.mxu0 0.0
  %4801 = vmatprep.subr.mxu0 0.0
  %4802 = vmatpush1.msra.mxu0 0.0
  %4803 = vmatprep.subr.mxu0 0.0
  %4804 = vmatpush1.msra.mxu0 0.0
  %4805 = vmatprep.subr.mxu0 0.0
  %4806 = vmatpush1.msra.mxu0 0.0
  %4807 = vmatprep.subr.mxu0 0.0
  %4808 = vmatpush1.msra.mxu0 0.0
  %4809 = vmatprep.subr.mxu0 0.0
  %4810 = vmatpush1.msra.mxu0 0.0
  %4811 = vmatprep.subr.mxu0 0.0
  %4812 = vmatpush1.msra.mxu0 0.0
  %4813 = vmatprep.subr.mxu0 0.0
  %4814 = vmatpush1.msra.mxu0 0.0
  %4815 = vmatprep.subr.mxu0 0.0
  %4816 = vmatpush1.msra.mxu0 0.0
  %4817 = vmatprep.subr.mxu0 0.0
  %4818 = vmatpush1.msra.mxu0 0.0
  %4819 = vmatprep.subr.mxu0 0.0
  %4820 = vmatpush1.msra.mxu0 0.0
  %4821 = vmatprep.subr.mxu0 0.0
  %4822 = vmatpush1.msra.mxu0 0.0
  %4823 = vmatprep.subr.mxu0 0.0
  %4824 = vmatpush1.msra.mxu0 0.0
  %4825 = vmatprep.mubr.f32.mxu0 0.0
  %4826 = vmatmul.mubr.f32.gmra.mrb[0].mxu0 %v4753
  %v4827 = vpop.f32.mrb[0].mxu0
  %v4828 = vadd.f32 0.0, %v4827
  %v4829 = vpop.f32.mrb[0].mxu0
  %4830 = vmatprep.mubr.f32.mxu0 0.0
  %4831 = vmatmul.mubr.f32.gmra.mrb[0].mxu0 %v4756
  %v4832 = vpop.f32.mrb[0].mxu0
  %v4833 = vadd.f32 0.0, %v4832
  %v4834 = vpop.f32.mrb[0].mxu0
  %4835 = vdwg.mxu0
  %v4837 = vsel %vm2762, %v2980, 0
  %v4840 = vsel %vm2762, %v2985, 0
  %v4843 = vsel %vm2859, %v3603, 0
  %4845 = vmatprep.subr.mxu0 0.0
  %4846 = vmatpush1.msra.mxu0 %v3598
  %4847 = vmatprep.subr.mxu0 0.0
  %4848 = vmatpush1.msra.mxu0 %v4843
  %4849 = vmatprep.subr.mxu0 0.0
  %4850 = vmatpush1.msra.mxu0 0.0
  %4851 = vmatprep.subr.mxu0 0.0
  %4852 = vmatpush1.msra.mxu0 0.0
  %4853 = vmatprep.subr.mxu0 0.0
  %4854 = vmatpush1.msra.mxu0 0.0
  %4855 = vmatprep.subr.mxu0 0.0
  %4856 = vmatpush1.msra.mxu0 0.0
  %4857 = vmatprep.subr.mxu0 0.0
  %4858 = vmatpush1.msra.mxu0 0.0
  %4859 = vmatprep.subr.mxu0 0.0
  %4860 = vmatpush1.msra.mxu0 0.0
  %4861 = vmatprep.subr.mxu0 0.0
  %4862 = vmatpush1.msra.mxu0 0.0
  %4863 = vmatprep.subr.mxu0 0.0
  %4864 = vmatpush1.msra.mxu0 0.0
  %4865 = vmatprep.subr.mxu0 0.0
  %4866 = vmatpush1.msra.mxu0 0.0
  %4867 = vmatprep.subr.mxu0 0.0
  %4868 = vmatpush1.msra.mxu0 0.0
  %4869 = vmatprep.subr.mxu0 0.0
  %4870 = vmatpush1.msra.mxu0 0.0
  %4871 = vmatprep.subr.mxu0 0.0
  %4872 = vmatpush1.msra.mxu0 0.0
  %4873 = vmatprep.subr.mxu0 0.0
  %4874 = vmatpush1.msra.mxu0 0.0
  %4875 = vmatprep.subr.mxu0 0.0
  %4876 = vmatpush1.msra.mxu0 0.0
  %4877 = vmatprep.subr.mxu0 0.0
  %4878 = vmatpush1.msra.mxu0 0.0
  %4879 = vmatprep.subr.mxu0 0.0
  %4880 = vmatpush1.msra.mxu0 0.0
  %4881 = vmatprep.subr.mxu0 0.0
  %4882 = vmatpush1.msra.mxu0 0.0
  %4883 = vmatprep.subr.mxu0 0.0
  %4884 = vmatpush1.msra.mxu0 0.0
  %4885 = vmatprep.subr.mxu0 0.0
  %4886 = vmatpush1.msra.mxu0 0.0
  %4887 = vmatprep.subr.mxu0 0.0
  %4888 = vmatpush1.msra.mxu0 0.0
  %4889 = vmatprep.subr.mxu0 0.0
  %4890 = vmatpush1.msra.mxu0 0.0
  %4891 = vmatprep.subr.mxu0 0.0
  %4892 = vmatpush1.msra.mxu0 0.0
  %4893 = vmatprep.subr.mxu0 0.0
  %4894 = vmatpush1.msra.mxu0 0.0
  %4895 = vmatprep.subr.mxu0 0.0
  %4896 = vmatpush1.msra.mxu0 0.0
  %4897 = vmatprep.subr.mxu0 0.0
  %4898 = vmatpush1.msra.mxu0 0.0
  %4899 = vmatprep.subr.mxu0 0.0
  %4900 = vmatpush1.msra.mxu0 0.0
  %4901 = vmatprep.subr.mxu0 0.0
  %4902 = vmatpush1.msra.mxu0 0.0
  %4903 = vmatprep.subr.mxu0 0.0
  %4904 = vmatpush1.msra.mxu0 0.0
  %4905 = vmatprep.subr.mxu0 0.0
  %4906 = vmatpush1.msra.mxu0 0.0
  %4907 = vmatprep.subr.mxu0 0.0
  %4908 = vmatpush1.msra.mxu0 0.0
  %4909 = vmatprep.mubr.f32.mxu0 0.0
  %4910 = vmatmul.mubr.f32.gmra.mrb[0].mxu0 %v4837
  %v4911 = vpop.f32.mrb[0].mxu0
  %v4912 = vadd.f32 0.0, %v4911
  %v4913 = vpop.f32.mrb[0].mxu0
  %4914 = vmatprep.mubr.f32.mxu0 0.0
  %4915 = vmatmul.mubr.f32.gmra.mrb[0].mxu0 %v4840
  %v4916 = vpop.f32.mrb[0].mxu0
  %v4917 = vadd.f32 0.0, %v4916
  %v4918 = vpop.f32.mrb[0].mxu0
  %4919 = vdwg.mxu0
  %v4921 = vsel %vm2762, %v2990, 0
  %v4924 = vsel %vm2762, %v2995, 0
  %v4927 = vsel %vm2859, %v3684, 0
  %4929 = vmatprep.subr.mxu0 0.0
  %4930 = vmatpush1.msra.mxu0 %v3679
  %4931 = vmatprep.subr.mxu0 0.0
  %4932 = vmatpush1.msra.mxu0 %v4927
  %4933 = vmatprep.subr.mxu0 0.0
  %4934 = vmatpush1.msra.mxu0 0.0
  %4935 = vmatprep.subr.mxu0 0.0
  %4936 = vmatpush1.msra.mxu0 0.0
  %4937 = vmatprep.subr.mxu0 0.0
  %4938 = vmatpush1.msra.mxu0 0.0
  %4939 = vmatprep.subr.mxu0 0.0
  %4940 = vmatpush1.msra.mxu0 0.0
  %4941 = vmatprep.subr.mxu0 0.0
  %4942 = vmatpush1.msra.mxu0 0.0
  %4943 = vmatprep.subr.mxu0 0.0
  %4944 = vmatpush1.msra.mxu0 0.0
  %4945 = vmatprep.subr.mxu0 0.0
  %4946 = vmatpush1.msra.mxu0 0.0
  %4947 = vmatprep.subr.mxu0 0.0
  %4948 = vmatpush1.msra.mxu0 0.0
  %4949 = vmatprep.subr.mxu0 0.0
  %4950 = vmatpush1.msra.mxu0 0.0
  %4951 = vmatprep.subr.mxu0 0.0
  %4952 = vmatpush1.msra.mxu0 0.0
  %4953 = vmatprep.subr.mxu0 0.0
  %4954 = vmatpush1.msra.mxu0 0.0
  %4955 = vmatprep.subr.mxu0 0.0
  %4956 = vmatpush1.msra.mxu0 0.0
  %4957 = vmatprep.subr.mxu0 0.0
  %4958 = vmatpush1.msra.mxu0 0.0
  %4959 = vmatprep.subr.mxu0 0.0
  %4960 = vmatpush1.msra.mxu0 0.0
  %4961 = vmatprep.subr.mxu0 0.0
  %4962 = vmatpush1.msra.mxu0 0.0
  %4963 = vmatprep.subr.mxu0 0.0
  %4964 = vmatpush1.msra.mxu0 0.0
  %4965 = vmatprep.subr.mxu0 0.0
  %4966 = vmatpush1.msra.mxu0 0.0
  %4967 = vmatprep.subr.mxu0 0.0
  %4968 = vmatpush1.msra.mxu0 0.0
  %4969 = vmatprep.subr.mxu0 0.0
  %4970 = vmatpush1.msra.mxu0 0.0
  %4971 = vmatprep.subr.mxu0 0.0
  %4972 = vmatpush1.msra.mxu0 0.0
  %4973 = vmatprep.subr.mxu0 0.0
  %4974 = vmatpush1.msra.mxu0 0.0
  %4975 = vmatprep.subr.mxu0 0.0
  %4976 = vmatpush1.msra.mxu0 0.0
  %4977 = vmatprep.subr.mxu0 0.0
  %4978 = vmatpush1.msra.mxu0 0.0
  %4979 = vmatprep.subr.mxu0 0.0
  %4980 = vmatpush1.msra.mxu0 0.0
  %4981 = vmatprep.subr.mxu0 0.0
  %4982 = vmatpush1.msra.mxu0 0.0
  %4983 = vmatprep.subr.mxu0 0.0
  %4984 = vmatpush1.msra.mxu0 0.0
  %4985 = vmatprep.subr.mxu0 0.0
  %4986 = vmatpush1.msra.mxu0 0.0
  %4987 = vmatprep.subr.mxu0 0.0
  %4988 = vmatpush1.msra.mxu0 0.0
  %4989 = vmatprep.subr.mxu0 0.0
  %4990 = vmatpush1.msra.mxu0 0.0
  %4991 = vmatprep.subr.mxu0 0.0
  %4992 = vmatpush1.msra.mxu0 0.0
  %4993 = vmatprep.mubr.f32.mxu0 0.0
  %4994 = vmatmul.mubr.f32.gmra.mrb[0].mxu0 %v4921
  %v4995 = vpop.f32.mrb[0].mxu0
  %v4996 = vadd.f32 0.0, %v4995
  %v4997 = vpop.f32.mrb[0].mxu0
  %4998 = vmatprep.mubr.f32.mxu0 0.0
  %4999 = vmatmul.mubr.f32.gmra.mrb[0].mxu0 %v4924
  %v5000 = vpop.f32.mrb[0].mxu0
  %v5001 = vadd.f32 0.0, %v5000
  %v5002 = vpop.f32.mrb[0].mxu0
  %5003 = vdwg.mxu0
  %v5005 = vsel %vm2762, %v3000, 0
  %v5008 = vsel %vm2762, %v3005, 0
  %v5011 = vsel %vm2859, %v3765, 0
  %5013 = vmatprep.subr.mxu0 0.0
  %5014 = vmatpush1.msra.mxu0 %v3760
  %5015 = vmatprep.subr.mxu0 0.0
  %5016 = vmatpush1.msra.mxu0 %v5011
  %5017 = vmatprep.subr.mxu0 0.0
  %5018 = vmatpush1.msra.mxu0 0.0
  %5019 = vmatprep.subr.mxu0 0.0
  %5020 = vmatpush1.msra.mxu0 0.0
  %5021 = vmatprep.subr.mxu0 0.0
  %5022 = vmatpush1.msra.mxu0 0.0
  %5023 = vmatprep.subr.mxu0 0.0
  %5024 = vmatpush1.msra.mxu0 0.0
  %5025 = vmatprep.subr.mxu0 0.0
  %5026 = vmatpush1.msra.mxu0 0.0
  %5027 = vmatprep.subr.mxu0 0.0
  %5028 = vmatpush1.msra.mxu0 0.0
  %5029 = vmatprep.subr.mxu0 0.0
  %5030 = vmatpush1.msra.mxu0 0.0
  %5031 = vmatprep.subr.mxu0 0.0
  %5032 = vmatpush1.msra.mxu0 0.0
  %5033 = vmatprep.subr.mxu0 0.0
  %5034 = vmatpush1.msra.mxu0 0.0
  %5035 = vmatprep.subr.mxu0 0.0
  %5036 = vmatpush1.msra.mxu0 0.0
  %5037 = vmatprep.subr.mxu0 0.0
  %5038 = vmatpush1.msra.mxu0 0.0
  %5039 = vmatprep.subr.mxu0 0.0
  %5040 = vmatpush1.msra.mxu0 0.0
  %5041 = vmatprep.subr.mxu0 0.0
  %5042 = vmatpush1.msra.mxu0 0.0
  %5043 = vmatprep.subr.mxu0 0.0
  %5044 = vmatpush1.msra.mxu0 0.0
  %5045 = vmatprep.subr.mxu0 0.0
  %5046 = vmatpush1.msra.mxu0 0.0
  %5047 = vmatprep.subr.mxu0 0.0
  %5048 = vmatpush1.msra.mxu0 0.0
  %5049 = vmatprep.subr.mxu0 0.0
  %5050 = vmatpush1.msra.mxu0 0.0
  %5051 = vmatprep.subr.mxu0 0.0
  %5052 = vmatpush1.msra.mxu0 0.0
  %5053 = vmatprep.subr.mxu0 0.0
  %5054 = vmatpush1.msra.mxu0 0.0
  %5055 = vmatprep.subr.mxu0 0.0
  %5056 = vmatpush1.msra.mxu0 0.0
  %5057 = vmatprep.subr.mxu0 0.0
  %5058 = vmatpush1.msra.mxu0 0.0
  %5059 = vmatprep.subr.mxu0 0.0
  %5060 = vmatpush1.msra.mxu0 0.0
  %5061 = vmatprep.subr.mxu0 0.0
  %5062 = vmatpush1.msra.mxu0 0.0
  %5063 = vmatprep.subr.mxu0 0.0
  %5064 = vmatpush1.msra.mxu0 0.0
  %5065 = vmatprep.subr.mxu0 0.0
  %5066 = vmatpush1.msra.mxu0 0.0
  %5067 = vmatprep.subr.mxu0 0.0
  %5068 = vmatpush1.msra.mxu0 0.0
  %5069 = vmatprep.subr.mxu0 0.0
  %5070 = vmatpush1.msra.mxu0 0.0
  %5071 = vmatprep.subr.mxu0 0.0
  %5072 = vmatpush1.msra.mxu0 0.0
  %5073 = vmatprep.subr.mxu0 0.0
  %5074 = vmatpush1.msra.mxu0 0.0
  %5075 = vmatprep.subr.mxu0 0.0
  %5076 = vmatpush1.msra.mxu0 0.0
  %5077 = vmatprep.mubr.f32.mxu0 0.0
  %5078 = vmatmul.mubr.f32.gmra.mrb[0].mxu0 %v5005
  %v5079 = vpop.f32.mrb[0].mxu0
  %v5080 = vadd.f32 0.0, %v5079
  %v5081 = vpop.f32.mrb[0].mxu0
  %5082 = vmatprep.mubr.f32.mxu0 0.0
  %5083 = vmatmul.mubr.f32.gmra.mrb[0].mxu0 %v5008
  %v5084 = vpop.f32.mrb[0].mxu0
  %v5085 = vadd.f32 0.0, %v5084
  %v5086 = vpop.f32.mrb[0].mxu0
  %5087 = vdwg.mxu0
  %v5089 = vsel %vm2762, %v3010, 0
  %v5092 = vsel %vm2762, %v3015, 0
  %v5095 = vsel %vm2859, %v3846, 0
  %5097 = vmatprep.subr.mxu0 0.0
  %5098 = vmatpush1.msra.mxu0 %v3841
  %5099 = vmatprep.subr.mxu0 0.0
  %5100 = vmatpush1.msra.mxu0 %v5095
  %5101 = vmatprep.subr.mxu0 0.0
  %5102 = vmatpush1.msra.mxu0 0.0
  %5103 = vmatprep.subr.mxu0 0.0
  %5104 = vmatpush1.msra.mxu0 0.0
  %5105 = vmatprep.subr.mxu0 0.0
  %5106 = vmatpush1.msra.mxu0 0.0
  %5107 = vmatprep.subr.mxu0 0.0
  %5108 = vmatpush1.msra.mxu0 0.0
  %5109 = vmatprep.subr.mxu0 0.0
  %5110 = vmatpush1.msra.mxu0 0.0
  %5111 = vmatprep.subr.mxu0 0.0
  %5112 = vmatpush1.msra.mxu0 0.0
  %5113 = vmatprep.subr.mxu0 0.0
  %5114 = vmatpush1.msra.mxu0 0.0
  %5115 = vmatprep.subr.mxu0 0.0
  %5116 = vmatpush1.msra.mxu0 0.0
  %5117 = vmatprep.subr.mxu0 0.0
  %5118 = vmatpush1.msra.mxu0 0.0
  %5119 = vmatprep.subr.mxu0 0.0
  %5120 = vmatpush1.msra.mxu0 0.0
  %5121 = vmatprep.subr.mxu0 0.0
  %5122 = vmatpush1.msra.mxu0 0.0
  %5123 = vmatprep.subr.mxu0 0.0
  %5124 = vmatpush1.msra.mxu0 0.0
  %5125 = vmatprep.subr.mxu0 0.0
  %5126 = vmatpush1.msra.mxu0 0.0
  %5127 = vmatprep.subr.mxu0 0.0
  %5128 = vmatpush1.msra.mxu0 0.0
  %5129 = vmatprep.subr.mxu0 0.0
  %5130 = vmatpush1.msra.mxu0 0.0
  %5131 = vmatprep.subr.mxu0 0.0
  %5132 = vmatpush1.msra.mxu0 0.0
  %5133 = vmatprep.subr.mxu0 0.0
  %5134 = vmatpush1.msra.mxu0 0.0
  %5135 = vmatprep.subr.mxu0 0.0
  %5136 = vmatpush1.msra.mxu0 0.0
  %5137 = vmatprep.subr.mxu0 0.0
  %5138 = vmatpush1.msra.mxu0 0.0
  %5139 = vmatprep.subr.mxu0 0.0
  %5140 = vmatpush1.msra.mxu0 0.0
  %5141 = vmatprep.subr.mxu0 0.0
  %5142 = vmatpush1.msra.mxu0 0.0
  %5143 = vmatprep.subr.mxu0 0.0
  %5144 = vmatpush1.msra.mxu0 0.0
  %5145 = vmatprep.subr.mxu0 0.0
  %5146 = vmatpush1.msra.mxu0 0.0
  %5147 = vmatprep.subr.mxu0 0.0
  %5148 = vmatpush1.msra.mxu0 0.0
  %5149 = vmatprep.subr.mxu0 0.0
  %5150 = vmatpush1.msra.mxu0 0.0
  %5151 = vmatprep.subr.mxu0 0.0
  %5152 = vmatpush1.msra.mxu0 0.0
  %5153 = vmatprep.subr.mxu0 0.0
  %5154 = vmatpush1.msra.mxu0 0.0
  %5155 = vmatprep.subr.mxu0 0.0
  %5156 = vmatpush1.msra.mxu0 0.0
  %5157 = vmatprep.subr.mxu0 0.0
  %5158 = vmatpush1.msra.mxu0 0.0
  %5159 = vmatprep.subr.mxu0 0.0
  %5160 = vmatpush1.msra.mxu0 0.0
  %5161 = vmatprep.mubr.f32.mxu0 0.0
  %5162 = vmatmul.mubr.f32.gmra.mrb[0].mxu0 %v5089
  %v5163 = vpop.f32.mrb[0].mxu0
  %v5164 = vadd.f32 0.0, %v5163
  %v5165 = vpop.f32.mrb[0].mxu0
  %5166 = vmatprep.mubr.f32.mxu0 0.0
  %5167 = vmatmul.mubr.f32.gmra.mrb[0].mxu0 %v5092
  %v5168 = vpop.f32.mrb[0].mxu0
  %v5169 = vadd.f32 0.0, %v5168
  %v5170 = vpop.f32.mrb[0].mxu0
  %5171 = vdwg.mxu0
  %v5173 = vsel %vm2762, %v3020, 0
  %v5176 = vsel %vm2762, %v3025, 0
  %v5179 = vsel %vm2859, %v3927, 0
  %5181 = vmatprep.subr.mxu0 0.0
  %5182 = vmatpush1.msra.mxu0 %v3922
  %5183 = vmatprep.subr.mxu0 0.0
  %5184 = vmatpush1.msra.mxu0 %v5179
  %5185 = vmatprep.subr.mxu0 0.0
  %5186 = vmatpush1.msra.mxu0 0.0
  %5187 = vmatprep.subr.mxu0 0.0
  %5188 = vmatpush1.msra.mxu0 0.0
  %5189 = vmatprep.subr.mxu0 0.0
  %5190 = vmatpush1.msra.mxu0 0.0
  %5191 = vmatprep.subr.mxu0 0.0
  %5192 = vmatpush1.msra.mxu0 0.0
  %5193 = vmatprep.subr.mxu0 0.0
  %5194 = vmatpush1.msra.mxu0 0.0
  %5195 = vmatprep.subr.mxu0 0.0
  %5196 = vmatpush1.msra.mxu0 0.0
  %5197 = vmatprep.subr.mxu0 0.0
  %5198 = vmatpush1.msra.mxu0 0.0
  %5199 = vmatprep.subr.mxu0 0.0
  %5200 = vmatpush1.msra.mxu0 0.0
  %5201 = vmatprep.subr.mxu0 0.0
  %5202 = vmatpush1.msra.mxu0 0.0
  %5203 = vmatprep.subr.mxu0 0.0
  %5204 = vmatpush1.msra.mxu0 0.0
  %5205 = vmatprep.subr.mxu0 0.0
  %5206 = vmatpush1.msra.mxu0 0.0
  %5207 = vmatprep.subr.mxu0 0.0
  %5208 = vmatpush1.msra.mxu0 0.0
  %5209 = vmatprep.subr.mxu0 0.0
  %5210 = vmatpush1.msra.mxu0 0.0
  %5211 = vmatprep.subr.mxu0 0.0
  %5212 = vmatpush1.msra.mxu0 0.0
  %5213 = vmatprep.subr.mxu0 0.0
  %5214 = vmatpush1.msra.mxu0 0.0
  %5215 = vmatprep.subr.mxu0 0.0
  %5216 = vmatpush1.msra.mxu0 0.0
  %5217 = vmatprep.subr.mxu0 0.0
  %5218 = vmatpush1.msra.mxu0 0.0
  %5219 = vmatprep.subr.mxu0 0.0
  %5220 = vmatpush1.msra.mxu0 0.0
  %5221 = vmatprep.subr.mxu0 0.0
  %5222 = vmatpush1.msra.mxu0 0.0
  %5223 = vmatprep.subr.mxu0 0.0
  %5224 = vmatpush1.msra.mxu0 0.0
  %5225 = vmatprep.subr.mxu0 0.0
  %5226 = vmatpush1.msra.mxu0 0.0
  %5227 = vmatprep.subr.mxu0 0.0
  %5228 = vmatpush1.msra.mxu0 0.0
  %5229 = vmatprep.subr.mxu0 0.0
  %5230 = vmatpush1.msra.mxu0 0.0
  %5231 = vmatprep.subr.mxu0 0.0
  %5232 = vmatpush1.msra.mxu0 0.0
  %5233 = vmatprep.subr.mxu0 0.0
  %5234 = vmatpush1.msra.mxu0 0.0
  %5235 = vmatprep.subr.mxu0 0.0
  %5236 = vmatpush1.msra.mxu0 0.0
  %5237 = vmatprep.subr.mxu0 0.0
  %5238 = vmatpush1.msra.mxu0 0.0
  %5239 = vmatprep.subr.mxu0 0.0
  %5240 = vmatpush1.msra.mxu0 0.0
  %5241 = vmatprep.subr.mxu0 0.0
  %5242 = vmatpush1.msra.mxu0 0.0
  %5243 = vmatprep.subr.mxu0 0.0
  %5244 = vmatpush1.msra.mxu0 0.0
  %5245 = vmatprep.mubr.f32.mxu0 0.0
  %5246 = vmatmul.mubr.f32.gmra.mrb[0].mxu0 %v5173
  %v5247 = vpop.f32.mrb[0].mxu0
  %v5248 = vadd.f32 0.0, %v5247
  %v5249 = vpop.f32.mrb[0].mxu0
  %5250 = vmatprep.mubr.f32.mxu0 0.0
  %5251 = vmatmul.mubr.f32.gmra.mrb[0].mxu0 %v5176
  %v5252 = vpop.f32.mrb[0].mxu0
  %v5253 = vadd.f32 0.0, %v5252
  %v5254 = vpop.f32.mrb[0].mxu0
  %5255 = vdwg.mxu0
  %v5257 = vsel %vm2762, %v3030, 0
  %v5260 = vsel %vm2762, %v3035, 0
  %v5263 = vsel %vm2859, %v4008, 0
  %5265 = vmatprep.subr.mxu0 0.0
  %5266 = vmatpush1.msra.mxu0 %v4003
  %5267 = vmatprep.subr.mxu0 0.0
  %5268 = vmatpush1.msra.mxu0 %v5263
  %5269 = vmatprep.subr.mxu0 0.0
  %5270 = vmatpush1.msra.mxu0 0.0
  %5271 = vmatprep.subr.mxu0 0.0
  %5272 = vmatpush1.msra.mxu0 0.0
  %5273 = vmatprep.subr.mxu0 0.0
  %5274 = vmatpush1.msra.mxu0 0.0
  %5275 = vmatprep.subr.mxu0 0.0
  %5276 = vmatpush1.msra.mxu0 0.0
  %5277 = vmatprep.subr.mxu0 0.0
  %5278 = vmatpush1.msra.mxu0 0.0
  %5279 = vmatprep.subr.mxu0 0.0
  %5280 = vmatpush1.msra.mxu0 0.0
  %5281 = vmatprep.subr.mxu0 0.0
  %5282 = vmatpush1.msra.mxu0 0.0
  %5283 = vmatprep.subr.mxu0 0.0
  %5284 = vmatpush1.msra.mxu0 0.0
  %5285 = vmatprep.subr.mxu0 0.0
  %5286 = vmatpush1.msra.mxu0 0.0
  %5287 = vmatprep.subr.mxu0 0.0
  %5288 = vmatpush1.msra.mxu0 0.0
  %5289 = vmatprep.subr.mxu0 0.0
  %5290 = vmatpush1.msra.mxu0 0.0
  %5291 = vmatprep.subr.mxu0 0.0
  %5292 = vmatpush1.msra.mxu0 0.0
  %5293 = vmatprep.subr.mxu0 0.0
  %5294 = vmatpush1.msra.mxu0 0.0
  %5295 = vmatprep.subr.mxu0 0.0
  %5296 = vmatpush1.msra.mxu0 0.0
  %5297 = vmatprep.subr.mxu0 0.0
  %5298 = vmatpush1.msra.mxu0 0.0
  %5299 = vmatprep.subr.mxu0 0.0
  %5300 = vmatpush1.msra.mxu0 0.0
  %5301 = vmatprep.subr.mxu0 0.0
  %5302 = vmatpush1.msra.mxu0 0.0
  %5303 = vmatprep.subr.mxu0 0.0
  %5304 = vmatpush1.msra.mxu0 0.0
  %5305 = vmatprep.subr.mxu0 0.0
  %5306 = vmatpush1.msra.mxu0 0.0
  %5307 = vmatprep.subr.mxu0 0.0
  %5308 = vmatpush1.msra.mxu0 0.0
  %5309 = vmatprep.subr.mxu0 0.0
  %5310 = vmatpush1.msra.mxu0 0.0
  %5311 = vmatprep.subr.mxu0 0.0
  %5312 = vmatpush1.msra.mxu0 0.0
  %5313 = vmatprep.subr.mxu0 0.0
  %5314 = vmatpush1.msra.mxu0 0.0
  %5315 = vmatprep.subr.mxu0 0.0
  %5316 = vmatpush1.msra.mxu0 0.0
  %5317 = vmatprep.subr.mxu0 0.0
  %5318 = vmatpush1.msra.mxu0 0.0
  %5319 = vmatprep.subr.mxu0 0.0
  %5320 = vmatpush1.msra.mxu0 0.0
  %5321 = vmatprep.subr.mxu0 0.0
  %5322 = vmatpush1.msra.mxu0 0.0
  %5323 = vmatprep.subr.mxu0 0.0
  %5324 = vmatpush1.msra.mxu0 0.0
  %5325 = vmatprep.subr.mxu0 0.0
  %5326 = vmatpush1.msra.mxu0 0.0
  %5327 = vmatprep.subr.mxu0 0.0
  %5328 = vmatpush1.msra.mxu0 0.0
  %5329 = vmatprep.mubr.f32.mxu0 0.0
  %5330 = vmatmul.mubr.f32.gmra.mrb[0].mxu0 %v5257
  %v5331 = vpop.f32.mrb[0].mxu0
  %v5332 = vadd.f32 0.0, %v5331
  %v5333 = vpop.f32.mrb[0].mxu0
  %5334 = vmatprep.mubr.f32.mxu0 0.0
  %5335 = vmatmul.mubr.f32.gmra.mrb[0].mxu0 %v5260
  %v5336 = vpop.f32.mrb[0].mxu0
  %v5337 = vadd.f32 0.0, %v5336
  %v5338 = vpop.f32.mrb[0].mxu0
  %5339 = vdwg.mxu0
  %v5341 = vsel %vm2762, %v3040, 0
  %v5344 = vsel %vm2762, %v3045, 0
  %v5347 = vsel %vm2859, %v4089, 0
  %5349 = vmatprep.subr.mxu0 0.0
  %5350 = vmatpush1.msra.mxu0 %v4084
  %5351 = vmatprep.subr.mxu0 0.0
  %5352 = vmatpush1.msra.mxu0 %v5347
  %5353 = vmatprep.subr.mxu0 0.0
  %5354 = vmatpush1.msra.mxu0 0.0
  %5355 = vmatprep.subr.mxu0 0.0
  %5356 = vmatpush1.msra.mxu0 0.0
  %5357 = vmatprep.subr.mxu0 0.0
  %5358 = vmatpush1.msra.mxu0 0.0
  %5359 = vmatprep.subr.mxu0 0.0
  %5360 = vmatpush1.msra.mxu0 0.0
  %5361 = vmatprep.subr.mxu0 0.0
  %5362 = vmatpush1.msra.mxu0 0.0
  %5363 = vmatprep.subr.mxu0 0.0
  %5364 = vmatpush1.msra.mxu0 0.0
  %5365 = vmatprep.subr.mxu0 0.0
  %5366 = vmatpush1.msra.mxu0 0.0
  %5367 = vmatprep.subr.mxu0 0.0
  %5368 = vmatpush1.msra.mxu0 0.0
  %5369 = vmatprep.subr.mxu0 0.0
  %5370 = vmatpush1.msra.mxu0 0.0
  %5371 = vmatprep.subr.mxu0 0.0
  %5372 = vmatpush1.msra.mxu0 0.0
  %5373 = vmatprep.subr.mxu0 0.0
  %5374 = vmatpush1.msra.mxu0 0.0
  %5375 = vmatprep.subr.mxu0 0.0
  %5376 = vmatpush1.msra.mxu0 0.0
  %5377 = vmatprep.subr.mxu0 0.0
  %5378 = vmatpush1.msra.mxu0 0.0
  %5379 = vmatprep.subr.mxu0 0.0
  %5380 = vmatpush1.msra.mxu0 0.0
  %5381 = vmatprep.subr.mxu0 0.0
  %5382 = vmatpush1.msra.mxu0 0.0
  %5383 = vmatprep.subr.mxu0 0.0
  %5384 = vmatpush1.msra.mxu0 0.0
  %5385 = vmatprep.subr.mxu0 0.0
  %5386 = vmatpush1.msra.mxu0 0.0
  %5387 = vmatprep.subr.mxu0 0.0
  %5388 = vmatpush1.msra.mxu0 0.0
  %5389 = vmatprep.subr.mxu0 0.0
  %5390 = vmatpush1.msra.mxu0 0.0
  %5391 = vmatprep.subr.mxu0 0.0
  %5392 = vmatpush1.msra.mxu0 0.0
  %5393 = vmatprep.subr.mxu0 0.0
  %5394 = vmatpush1.msra.mxu0 0.0
  %5395 = vmatprep.subr.mxu0 0.0
  %5396 = vmatpush1.msra.mxu0 0.0
  %5397 = vmatprep.subr.mxu0 0.0
  %5398 = vmatpush1.msra.mxu0 0.0
  %5399 = vmatprep.subr.mxu0 0.0
  %5400 = vmatpush1.msra.mxu0 0.0
  %5401 = vmatprep.subr.mxu0 0.0
  %5402 = vmatpush1.msra.mxu0 0.0
  %5403 = vmatprep.subr.mxu0 0.0
  %5404 = vmatpush1.msra.mxu0 0.0
  %5405 = vmatprep.subr.mxu0 0.0
  %5406 = vmatpush1.msra.mxu0 0.0
  %5407 = vmatprep.subr.mxu0 0.0
  %5408 = vmatpush1.msra.mxu0 0.0
  %5409 = vmatprep.subr.mxu0 0.0
  %5410 = vmatpush1.msra.mxu0 0.0
  %5411 = vmatprep.subr.mxu0 0.0
  %5412 = vmatpush1.msra.mxu0 0.0
  %5413 = vmatprep.mubr.f32.mxu0 0.0
  %5414 = vmatmul.mubr.f32.gmra.mrb[0].mxu0 %v5341
  %v5415 = vpop.f32.mrb[0].mxu0
  %v5416 = vadd.f32 0.0, %v5415
  %v5417 = vpop.f32.mrb[0].mxu0
  %5418 = vmatprep.mubr.f32.mxu0 0.0
  %5419 = vmatmul.mubr.f32.gmra.mrb[0].mxu0 %v5344
  %v5420 = vpop.f32.mrb[0].mxu0
  %v5421 = vadd.f32 0.0, %v5420
  %v5422 = vpop.f32.mrb[0].mxu0
  %5423 = vdwg.mxu0
  %v5425 = vsel %vm2762, %v3050, 0
  %v5428 = vsel %vm2762, %v3055, 0
  %v5431 = vsel %vm2859, %v4170, 0
  %5433 = vmatprep.subr.mxu0 0.0
  %5434 = vmatpush1.msra.mxu0 %v4165
  %5435 = vmatprep.subr.mxu0 0.0
  %5436 = vmatpush1.msra.mxu0 %v5431
  %5437 = vmatprep.subr.mxu0 0.0
  %5438 = vmatpush1.msra.mxu0 0.0
  %5439 = vmatprep.subr.mxu0 0.0
  %5440 = vmatpush1.msra.mxu0 0.0
  %5441 = vmatprep.subr.mxu0 0.0
  %5442 = vmatpush1.msra.mxu0 0.0
  %5443 = vmatprep.subr.mxu0 0.0
  %5444 = vmatpush1.msra.mxu0 0.0
  %5445 = vmatprep.subr.mxu0 0.0
  %5446 = vmatpush1.msra.mxu0 0.0
  %5447 = vmatprep.subr.mxu0 0.0
  %5448 = vmatpush1.msra.mxu0 0.0
  %5449 = vmatprep.subr.mxu0 0.0
  %5450 = vmatpush1.msra.mxu0 0.0
  %5451 = vmatprep.subr.mxu0 0.0
  %5452 = vmatpush1.msra.mxu0 0.0
  %5453 = vmatprep.subr.mxu0 0.0
  %5454 = vmatpush1.msra.mxu0 0.0
  %5455 = vmatprep.subr.mxu0 0.0
  %5456 = vmatpush1.msra.mxu0 0.0
  %5457 = vmatprep.subr.mxu0 0.0
  %5458 = vmatpush1.msra.mxu0 0.0
  %5459 = vmatprep.subr.mxu0 0.0
  %5460 = vmatpush1.msra.mxu0 0.0
  %5461 = vmatprep.subr.mxu0 0.0
  %5462 = vmatpush1.msra.mxu0 0.0
  %5463 = vmatprep.subr.mxu0 0.0
  %5464 = vmatpush1.msra.mxu0 0.0
  %5465 = vmatprep.subr.mxu0 0.0
  %5466 = vmatpush1.msra.mxu0 0.0
  %5467 = vmatprep.subr.mxu0 0.0
  %5468 = vmatpush1.msra.mxu0 0.0
  %5469 = vmatprep.subr.mxu0 0.0
  %5470 = vmatpush1.msra.mxu0 0.0
  %5471 = vmatprep.subr.mxu0 0.0
  %5472 = vmatpush1.msra.mxu0 0.0
  %5473 = vmatprep.subr.mxu0 0.0
  %5474 = vmatpush1.msra.mxu0 0.0
  %5475 = vmatprep.subr.mxu0 0.0
  %5476 = vmatpush1.msra.mxu0 0.0
  %5477 = vmatprep.subr.mxu0 0.0
  %5478 = vmatpush1.msra.mxu0 0.0
  %5479 = vmatprep.subr.mxu0 0.0
  %5480 = vmatpush1.msra.mxu0 0.0
  %5481 = vmatprep.subr.mxu0 0.0
  %5482 = vmatpush1.msra.mxu0 0.0
  %5483 = vmatprep.subr.mxu0 0.0
  %5484 = vmatpush1.msra.mxu0 0.0
  %5485 = vmatprep.subr.mxu0 0.0
  %5486 = vmatpush1.msra.mxu0 0.0
  %5487 = vmatprep.subr.mxu0 0.0
  %5488 = vmatpush1.msra.mxu0 0.0
  %5489 = vmatprep.subr.mxu0 0.0
  %5490 = vmatpush1.msra.mxu0 0.0
  %5491 = vmatprep.subr.mxu0 0.0
  %5492 = vmatpush1.msra.mxu0 0.0
  %5493 = vmatprep.subr.mxu0 0.0
  %5494 = vmatpush1.msra.mxu0 0.0
  %5495 = vmatprep.subr.mxu0 0.0
  %5496 = vmatpush1.msra.mxu0 0.0
  %5497 = vmatprep.mubr.f32.mxu0 0.0
  %5498 = vmatmul.mubr.f32.gmra.mrb[0].mxu0 %v5425
  %v5499 = vpop.f32.mrb[0].mxu0
  %v5500 = vadd.f32 0.0, %v5499
  %v5501 = vpop.f32.mrb[0].mxu0
  %5502 = vmatprep.mubr.f32.mxu0 0.0
  %5503 = vmatmul.mubr.f32.gmra.mrb[0].mxu0 %v5428
  %v5504 = vpop.f32.mrb[0].mxu0
  %v5505 = vadd.f32 0.0, %v5504
  %v5506 = vpop.f32.mrb[0].mxu0
  %5507 = vdwg.mxu0
  %v5509 = vsel %vm2762, %v3060, 0
  %v5512 = vsel %vm2762, %v3065, 0
  %v5515 = vsel %vm2859, %v4251, 0
  %5517 = vmatprep.subr.mxu0 0.0
  %5518 = vmatpush1.msra.mxu0 %v4246
  %5519 = vmatprep.subr.mxu0 0.0
  %5520 = vmatpush1.msra.mxu0 %v5515
  %5521 = vmatprep.subr.mxu0 0.0
  %5522 = vmatpush1.msra.mxu0 0.0
  %5523 = vmatprep.subr.mxu0 0.0
  %5524 = vmatpush1.msra.mxu0 0.0
  %5525 = vmatprep.subr.mxu0 0.0
  %5526 = vmatpush1.msra.mxu0 0.0
  %5527 = vmatprep.subr.mxu0 0.0
  %5528 = vmatpush1.msra.mxu0 0.0
  %5529 = vmatprep.subr.mxu0 0.0
  %5530 = vmatpush1.msra.mxu0 0.0
  %5531 = vmatprep.subr.mxu0 0.0
  %5532 = vmatpush1.msra.mxu0 0.0
  %5533 = vmatprep.subr.mxu0 0.0
  %5534 = vmatpush1.msra.mxu0 0.0
  %5535 = vmatprep.subr.mxu0 0.0
  %5536 = vmatpush1.msra.mxu0 0.0
  %5537 = vmatprep.subr.mxu0 0.0
  %5538 = vmatpush1.msra.mxu0 0.0
  %5539 = vmatprep.subr.mxu0 0.0
  %5540 = vmatpush1.msra.mxu0 0.0
  %5541 = vmatprep.subr.mxu0 0.0
  %5542 = vmatpush1.msra.mxu0 0.0
  %5543 = vmatprep.subr.mxu0 0.0
  %5544 = vmatpush1.msra.mxu0 0.0
  %5545 = vmatprep.subr.mxu0 0.0
  %5546 = vmatpush1.msra.mxu0 0.0
  %5547 = vmatprep.subr.mxu0 0.0
  %5548 = vmatpush1.msra.mxu0 0.0
  %5549 = vmatprep.subr.mxu0 0.0
  %5550 = vmatpush1.msra.mxu0 0.0
  %5551 = vmatprep.subr.mxu0 0.0
  %5552 = vmatpush1.msra.mxu0 0.0
  %5553 = vmatprep.subr.mxu0 0.0
  %5554 = vmatpush1.msra.mxu0 0.0
  %5555 = vmatprep.subr.mxu0 0.0
  %5556 = vmatpush1.msra.mxu0 0.0
  %5557 = vmatprep.subr.mxu0 0.0
  %5558 = vmatpush1.msra.mxu0 0.0
  %5559 = vmatprep.subr.mxu0 0.0
  %5560 = vmatpush1.msra.mxu0 0.0
  %5561 = vmatprep.subr.mxu0 0.0
  %5562 = vmatpush1.msra.mxu0 0.0
  %5563 = vmatprep.subr.mxu0 0.0
  %5564 = vmatpush1.msra.mxu0 0.0
  %5565 = vmatprep.subr.mxu0 0.0
  %5566 = vmatpush1.msra.mxu0 0.0
  %5567 = vmatprep.subr.mxu0 0.0
  %5568 = vmatpush1.msra.mxu0 0.0
  %5569 = vmatprep.subr.mxu0 0.0
  %5570 = vmatpush1.msra.mxu0 0.0
  %5571 = vmatprep.subr.mxu0 0.0
  %5572 = vmatpush1.msra.mxu0 0.0
  %5573 = vmatprep.subr.mxu0 0.0
  %5574 = vmatpush1.msra.mxu0 0.0
  %5575 = vmatprep.subr.mxu0 0.0
  %5576 = vmatpush1.msra.mxu0 0.0
  %5577 = vmatprep.subr.mxu0 0.0
  %5578 = vmatpush1.msra.mxu0 0.0
  %5579 = vmatprep.subr.mxu0 0.0
  %5580 = vmatpush1.msra.mxu0 0.0
  %5581 = vmatprep.mubr.f32.mxu0 0.0
  %5582 = vmatmul.mubr.f32.gmra.mrb[0].mxu0 %v5509
  %v5583 = vpop.f32.mrb[0].mxu0
  %v5584 = vadd.f32 0.0, %v5583
  %v5585 = vpop.f32.mrb[0].mxu0
  %5586 = vmatprep.mubr.f32.mxu0 0.0
  %5587 = vmatmul.mubr.f32.gmra.mrb[0].mxu0 %v5512
  %v5588 = vpop.f32.mrb[0].mxu0
  %v5589 = vadd.f32 0.0, %v5588
  %v5590 = vpop.f32.mrb[0].mxu0
  %5591 = vdwg.mxu0
  %v5593 = vsel %vm2762, %v3070, 0
  %v5596 = vsel %vm2762, %v3075, 0
  %v5599 = vsel %vm2859, %v4332, 0
  %5601 = vmatprep.subr.mxu0 0.0
  %5602 = vmatpush1.msra.mxu0 %v4327
  %5603 = vmatprep.subr.mxu0 0.0
  %5604 = vmatpush1.msra.mxu0 %v5599
  %5605 = vmatprep.subr.mxu0 0.0
  %5606 = vmatpush1.msra.mxu0 0.0
  %5607 = vmatprep.subr.mxu0 0.0
  %5608 = vmatpush1.msra.mxu0 0.0
  %5609 = vmatprep.subr.mxu0 0.0
  %5610 = vmatpush1.msra.mxu0 0.0
  %5611 = vmatprep.subr.mxu0 0.0
  %5612 = vmatpush1.msra.mxu0 0.0
  %5613 = vmatprep.subr.mxu0 0.0
  %5614 = vmatpush1.msra.mxu0 0.0
  %5615 = vmatprep.subr.mxu0 0.0
  %5616 = vmatpush1.msra.mxu0 0.0
  %5617 = vmatprep.subr.mxu0 0.0
  %5618 = vmatpush1.msra.mxu0 0.0
  %5619 = vmatprep.subr.mxu0 0.0
  %5620 = vmatpush1.msra.mxu0 0.0
  %5621 = vmatprep.subr.mxu0 0.0
  %5622 = vmatpush1.msra.mxu0 0.0
  %5623 = vmatprep.subr.mxu0 0.0
  %5624 = vmatpush1.msra.mxu0 0.0
  %5625 = vmatprep.subr.mxu0 0.0
  %5626 = vmatpush1.msra.mxu0 0.0
  %5627 = vmatprep.subr.mxu0 0.0
  %5628 = vmatpush1.msra.mxu0 0.0
  %5629 = vmatprep.subr.mxu0 0.0
  %5630 = vmatpush1.msra.mxu0 0.0
  %5631 = vmatprep.subr.mxu0 0.0
  %5632 = vmatpush1.msra.mxu0 0.0
  %5633 = vmatprep.subr.mxu0 0.0
  %5634 = vmatpush1.msra.mxu0 0.0
  %5635 = vmatprep.subr.mxu0 0.0
  %5636 = vmatpush1.msra.mxu0 0.0
  %5637 = vmatprep.subr.mxu0 0.0
  %5638 = vmatpush1.msra.mxu0 0.0
  %5639 = vmatprep.subr.mxu0 0.0
  %5640 = vmatpush1.msra.mxu0 0.0
  %5641 = vmatprep.subr.mxu0 0.0
  %5642 = vmatpush1.msra.mxu0 0.0
  %5643 = vmatprep.subr.mxu0 0.0
  %5644 = vmatpush1.msra.mxu0 0.0
  %5645 = vmatprep.subr.mxu0 0.0
  %5646 = vmatpush1.msra.mxu0 0.0
  %5647 = vmatprep.subr.mxu0 0.0
  %5648 = vmatpush1.msra.mxu0 0.0
  %5649 = vmatprep.subr.mxu0 0.0
  %5650 = vmatpush1.msra.mxu0 0.0
  %5651 = vmatprep.subr.mxu0 0.0
  %5652 = vmatpush1.msra.mxu0 0.0
  %5653 = vmatprep.subr.mxu0 0.0
  %5654 = vmatpush1.msra.mxu0 0.0
  %5655 = vmatprep.subr.mxu0 0.0
  %5656 = vmatpush1.msra.mxu0 0.0
  %5657 = vmatprep.subr.mxu0 0.0
  %5658 = vmatpush1.msra.mxu0 0.0
  %5659 = vmatprep.subr.mxu0 0.0
  %5660 = vmatpush1.msra.mxu0 0.0
  %5661 = vmatprep.subr.mxu0 0.0
  %5662 = vmatpush1.msra.mxu0 0.0
  %5663 = vmatprep.subr.mxu0 0.0
  %5664 = vmatpush1.msra.mxu0 0.0
  %5665 = vmatprep.mubr.f32.mxu0 0.0
  %5666 = vmatmul.mubr.f32.gmra.mrb[0].mxu0 %v5593
  %v5667 = vpop.f32.mrb[0].mxu0
  %v5668 = vadd.f32 0.0, %v5667
  %v5669 = vpop.f32.mrb[0].mxu0
  %5670 = vmatprep.mubr.f32.mxu0 0.0
  %5671 = vmatmul.mubr.f32.gmra.mrb[0].mxu0 %v5596
  %v5672 = vpop.f32.mrb[0].mxu0
  %v5673 = vadd.f32 0.0, %v5672
  %v5674 = vpop.f32.mrb[0].mxu0
  %5675 = vdwg.mxu0
  %v5677 = vsel %vm2762, %v3080, 0
  %v5680 = vsel %vm2762, %v3085, 0
  %v5683 = vsel %vm2859, %v4413, 0
  %5685 = vmatprep.subr.mxu0 0.0
  %5686 = vmatpush1.msra.mxu0 %v4408
  %5687 = vmatprep.subr.mxu0 0.0
  %5688 = vmatpush1.msra.mxu0 %v5683
  %5689 = vmatprep.subr.mxu0 0.0
  %5690 = vmatpush1.msra.mxu0 0.0
  %5691 = vmatprep.subr.mxu0 0.0
  %5692 = vmatpush1.msra.mxu0 0.0
  %5693 = vmatprep.subr.mxu0 0.0
  %5694 = vmatpush1.msra.mxu0 0.0
  %5695 = vmatprep.subr.mxu0 0.0
  %5696 = vmatpush1.msra.mxu0 0.0
  %5697 = vmatprep.subr.mxu0 0.0
  %5698 = vmatpush1.msra.mxu0 0.0
  %5699 = vmatprep.subr.mxu0 0.0
  %5700 = vmatpush1.msra.mxu0 0.0
  %5701 = vmatprep.subr.mxu0 0.0
  %5702 = vmatpush1.msra.mxu0 0.0
  %5703 = vmatprep.subr.mxu0 0.0
  %5704 = vmatpush1.msra.mxu0 0.0
  %5705 = vmatprep.subr.mxu0 0.0
  %5706 = vmatpush1.msra.mxu0 0.0
  %5707 = vmatprep.subr.mxu0 0.0
  %5708 = vmatpush1.msra.mxu0 0.0
  %5709 = vmatprep.subr.mxu0 0.0
  %5710 = vmatpush1.msra.mxu0 0.0
  %5711 = vmatprep.subr.mxu0 0.0
  %5712 = vmatpush1.msra.mxu0 0.0
  %5713 = vmatprep.subr.mxu0 0.0
  %5714 = vmatpush1.msra.mxu0 0.0
  %5715 = vmatprep.subr.mxu0 0.0
  %5716 = vmatpush1.msra.mxu0 0.0
  %5717 = vmatprep.subr.mxu0 0.0
  %5718 = vmatpush1.msra.mxu0 0.0
  %5719 = vmatprep.subr.mxu0 0.0
  %5720 = vmatpush1.msra.mxu0 0.0
  %5721 = vmatprep.subr.mxu0 0.0
  %5722 = vmatpush1.msra.mxu0 0.0
  %5723 = vmatprep.subr.mxu0 0.0
  %5724 = vmatpush1.msra.mxu0 0.0
  %5725 = vmatprep.subr.mxu0 0.0
  %5726 = vmatpush1.msra.mxu0 0.0
  %5727 = vmatprep.subr.mxu0 0.0
  %5728 = vmatpush1.msra.mxu0 0.0
  %5729 = vmatprep.subr.mxu0 0.0
  %5730 = vmatpush1.msra.mxu0 0.0
  %5731 = vmatprep.subr.mxu0 0.0
  %5732 = vmatpush1.msra.mxu0 0.0
  %5733 = vmatprep.subr.mxu0 0.0
  %5734 = vmatpush1.msra.mxu0 0.0
  %5735 = vmatprep.subr.mxu0 0.0
  %5736 = vmatpush1.msra.mxu0 0.0
  %5737 = vmatprep.subr.mxu0 0.0
  %5738 = vmatpush1.msra.mxu0 0.0
  %5739 = vmatprep.subr.mxu0 0.0
  %5740 = vmatpush1.msra.mxu0 0.0
  %5741 = vmatprep.subr.mxu0 0.0
  %5742 = vmatpush1.msra.mxu0 0.0
  %5743 = vmatprep.subr.mxu0 0.0
  %5744 = vmatpush1.msra.mxu0 0.0
  %5745 = vmatprep.subr.mxu0 0.0
  %5746 = vmatpush1.msra.mxu0 0.0
  %5747 = vmatprep.subr.mxu0 0.0
  %5748 = vmatpush1.msra.mxu0 0.0
  %5749 = vmatprep.mubr.f32.mxu0 0.0
  %5750 = vmatmul.mubr.f32.gmra.mrb[0].mxu0 %v5677
  %v5751 = vpop.f32.mrb[0].mxu0
  %v5752 = vadd.f32 0.0, %v5751
  %v5753 = vpop.f32.mrb[0].mxu0
  %5754 = vmatprep.mubr.f32.mxu0 0.0
  %5755 = vmatmul.mubr.f32.gmra.mrb[0].mxu0 %v5680
  %v5756 = vpop.f32.mrb[0].mxu0
  %v5757 = vadd.f32 0.0, %v5756
  %v5758 = vpop.f32.mrb[0].mxu0
  %5759 = vdwg.mxu0
  %v5760 = vsub.f32 %v4492, %v2570
  %v5761 = vsub.f32 %v4497, %v2575
  %v5762 = vsub.f32 %v4576, %v2580
  %v5763 = vsub.f32 %v4581, %v2585
  %v5764 = vsub.f32 %v4660, %v2590
  %v5765 = vsub.f32 %v4665, %v2595
  %v5766 = vsub.f32 %v4744, %v2600
  %v5767 = vsub.f32 %v4749, %v2605
  %v5768 = vsub.f32 %v4828, %v2610
  %v5769 = vsub.f32 %v4833, %v2615
  %v5770 = vsub.f32 %v4912, %v2620
  %v5771 = vsub.f32 %v4917, %v2625
  %v5772 = vsub.f32 %v4996, %v2630
  %v5773 = vsub.f32 %v5001, %v2635
  %v5774 = vsub.f32 %v5080, %v2640
  %v5775 = vsub.f32 %v5085, %v2645
  %v5776 = vsub.f32 %v5164, %v2650
  %v5777 = vsub.f32 %v5169, %v2655
  %v5778 = vsub.f32 %v5248, %v2660
  %v5779 = vsub.f32 %v5253, %v2665
  %v5780 = vsub.f32 %v5332, %v2670
  %v5781 = vsub.f32 %v5337, %v2675
  %v5782 = vsub.f32 %v5416, %v2680
  %v5783 = vsub.f32 %v5421, %v2685
  %v5784 = vsub.f32 %v5500, %v2690
  %v5785 = vsub.f32 %v5505, %v2695
  %v5786 = vsub.f32 %v5584, %v2700
  %v5787 = vsub.f32 %v5589, %v2705
  %v5788 = vsub.f32 %v5668, %v2710
  %v5789 = vsub.f32 %v5673, %v2715
  %v5790 = vsub.f32 %v5752, %v2720
  %v5791 = vsub.f32 %v5757, %v2725
  %v5792 = vlaneseq
  %v5793 = vshrl.u32 %v5792, 7
  %v5794 = vsub.s32 0, %v5793
  %v5795 = vrot.slane %v34, %v5794
  %v5796 = vadd.f32 %v5760, %v5795
  %v5797 = vadd.f32 %v5761, %v5795
  %v5798 = vadd.f32 %v5762, %v5795
  %v5799 = vadd.f32 %v5763, %v5795
  %v5800 = vadd.f32 %v5764, %v5795
  %v5801 = vadd.f32 %v5765, %v5795
  %v5802 = vadd.f32 %v5766, %v5795
  %v5803 = vadd.f32 %v5767, %v5795
  %v5804 = vadd.f32 %v5768, %v5795
  %v5805 = vadd.f32 %v5769, %v5795
  %v5806 = vadd.f32 %v5770, %v5795
  %v5807 = vadd.f32 %v5771, %v5795
  %v5808 = vadd.f32 %v5772, %v5795
  %v5809 = vadd.f32 %v5773, %v5795
  %v5810 = vadd.f32 %v5774, %v5795
  %v5811 = vadd.f32 %v5775, %v5795
  %v5812 = vadd.f32 %v5776, %v5795
  %v5813 = vadd.f32 %v5777, %v5795
  %v5814 = vadd.f32 %v5778, %v5795
  %v5815 = vadd.f32 %v5779, %v5795
  %v5816 = vadd.f32 %v5780, %v5795
  %v5817 = vadd.f32 %v5781, %v5795
  %v5818 = vadd.f32 %v5782, %v5795
  %v5819 = vadd.f32 %v5783, %v5795
  %v5820 = vadd.f32 %v5784, %v5795
  %v5821 = vadd.f32 %v5785, %v5795
  %v5822 = vadd.f32 %v5786, %v5795
  %v5823 = vadd.f32 %v5787, %v5795
  %v5824 = vadd.f32 %v5788, %v5795
  %v5825 = vadd.f32 %v5789, %v5795
  %v5826 = vadd.f32 %v5790, %v5795
  %v5827 = vadd.f32 %v5791, %v5795
  %v5829 = vsel %vm1402, %v5796, 0
  %v5832 = vsel %vm1402, %v5797, 0
  %v5835 = vsel %vm1402, %v5798, 0
  %v5838 = vsel %vm1402, %v5799, 0
  %v5841 = vsel %vm1402, %v5800, 0
  %v5844 = vsel %vm1402, %v5801, 0
  %v5847 = vsel %vm1402, %v5802, 0
  %v5850 = vsel %vm1402, %v5803, 0
  %v5853 = vsel %vm1402, %v5804, 0
  %v5856 = vsel %vm1402, %v5805, 0
  %v5859 = vsel %vm1402, %v5806, 0
  %v5862 = vsel %vm1402, %v5807, 0
  %v5865 = vsel %vm1402, %v5808, 0
  %v5868 = vsel %vm1402, %v5809, 0
  %v5871 = vsel %vm1402, %v5810, 0
  %v5874 = vsel %vm1402, %v5811, 0
  %v5877 = vsel %vm1402, %v5812, 0
  %v5880 = vsel %vm1402, %v5813, 0
  %v5883 = vsel %vm1402, %v5814, 0
  %v5886 = vsel %vm1402, %v5815, 0
  %v5889 = vsel %vm1402, %v5816, 0
  %v5892 = vsel %vm1402, %v5817, 0
  %v5895 = vsel %vm1402, %v5818, 0
  %v5898 = vsel %vm1402, %v5819, 0
  %v5901 = vsel %vm1402, %v5820, 0
  %v5904 = vsel %vm1402, %v5821, 0
  %v5907 = vsel %vm1402, %v5822, 0
  %v5910 = vsel %vm1402, %v5823, 0
  %v5913 = vsel %vm1402, %v5824, 0
  %v5916 = vsel %vm1402, %v5825, 0
  %v5919 = vsel %vm1402, %v5826, 0
  %v5922 = vsel %vm1402, %v5827, 0
  %5924 = vmatprep.subr.mxu0 0.0
  %5925 = vmatpush1.msra.mxu0 0.0625
  %5926 = vmatprep.subr.mxu0 0.0
  %5927 = vmatpush1.msra.mxu0 0.0625
  %5928 = vmatprep.subr.mxu0 0.0
  %5929 = vmatpush1.msra.mxu0 0.0
  %5930 = vmatprep.subr.mxu0 0.0
  %5931 = vmatpush1.msra.mxu0 0.0
  %5932 = vmatprep.subr.mxu0 0.0
  %5933 = vmatpush1.msra.mxu0 0.0
  %5934 = vmatprep.subr.mxu0 0.0
  %5935 = vmatpush1.msra.mxu0 0.0
  %5936 = vmatprep.subr.mxu0 0.0
  %5937 = vmatpush1.msra.mxu0 0.0
  %5938 = vmatprep.subr.mxu0 0.0
  %5939 = vmatpush1.msra.mxu0 0.0
  %5940 = vmatprep.subr.mxu0 0.0
  %5941 = vmatpush1.msra.mxu0 0.0
  %5942 = vmatprep.subr.mxu0 0.0
  %5943 = vmatpush1.msra.mxu0 0.0
  %5944 = vmatprep.subr.mxu0 0.0
  %5945 = vmatpush1.msra.mxu0 0.0
  %5946 = vmatprep.subr.mxu0 0.0
  %5947 = vmatpush1.msra.mxu0 0.0
  %5948 = vmatprep.subr.mxu0 0.0
  %5949 = vmatpush1.msra.mxu0 0.0
  %5950 = vmatprep.subr.mxu0 0.0
  %5951 = vmatpush1.msra.mxu0 0.0
  %5952 = vmatprep.subr.mxu0 0.0
  %5953 = vmatpush1.msra.mxu0 0.0
  %5954 = vmatprep.subr.mxu0 0.0
  %5955 = vmatpush1.msra.mxu0 0.0
  %5956 = vmatprep.subr.mxu0 0.0
  %5957 = vmatpush1.msra.mxu0 0.0
  %5958 = vmatprep.subr.mxu0 0.0
  %5959 = vmatpush1.msra.mxu0 0.0
  %5960 = vmatprep.subr.mxu0 0.0
  %5961 = vmatpush1.msra.mxu0 0.0
  %5962 = vmatprep.subr.mxu0 0.0
  %5963 = vmatpush1.msra.mxu0 0.0
  %5964 = vmatprep.subr.mxu0 0.0
  %5965 = vmatpush1.msra.mxu0 0.0
  %5966 = vmatprep.subr.mxu0 0.0
  %5967 = vmatpush1.msra.mxu0 0.0
  %5968 = vmatprep.subr.mxu0 0.0
  %5969 = vmatpush1.msra.mxu0 0.0
  %5970 = vmatprep.subr.mxu0 0.0
  %5971 = vmatpush1.msra.mxu0 0.0
  %5972 = vmatprep.subr.mxu0 0.0
  %5973 = vmatpush1.msra.mxu0 0.0
  %5974 = vmatprep.subr.mxu0 0.0
  %5975 = vmatpush1.msra.mxu0 0.0
  %5976 = vmatprep.subr.mxu0 0.0
  %5977 = vmatpush1.msra.mxu0 0.0
  %5978 = vmatprep.subr.mxu0 0.0
  %5979 = vmatpush1.msra.mxu0 0.0
  %5980 = vmatprep.subr.mxu0 0.0
  %5981 = vmatpush1.msra.mxu0 0.0
  %5982 = vmatprep.subr.mxu0 0.0
  %5983 = vmatpush1.msra.mxu0 0.0
  %5984 = vmatprep.subr.mxu0 0.0
  %5985 = vmatpush1.msra.mxu0 0.0
  %5986 = vmatprep.subr.mxu0 0.0
  %5987 = vmatpush1.msra.mxu0 0.0
  %5988 = vmatprep.mubr.f32.mxu0 0.0
  %5989 = vmatmul.mubr.f32.gmra.mrb[0].mxu0 %v5829
  %v5990 = vpop.f32.mrb[0].mxu0
  %v5991 = vadd.f32 0.0, %v5990
  %v5992 = vpop.f32.mrb[0].mxu0
  %5993 = vmatprep.mubr.f32.mxu0 0.0
  %5994 = vmatmul.mubr.f32.gmra.mrb[0].mxu0 %v5832
  %v5995 = vpop.f32.mrb[0].mxu0
  %v5996 = vadd.f32 0.0, %v5995
  %v5997 = vpop.f32.mrb[0].mxu0
  %5998 = vmatprep.mubr.f32.mxu0 0.0
  %5999 = vmatmul.mubr.f32.gmra.mrb[0].mxu0 %v5835
  %v6000 = vpop.f32.mrb[0].mxu0
  %v6001 = vadd.f32 0.0, %v6000
  %v6002 = vpop.f32.mrb[0].mxu0
  %6003 = vmatprep.mubr.f32.mxu0 0.0
  %6004 = vmatmul.mubr.f32.gmra.mrb[0].mxu0 %v5838
  %v6005 = vpop.f32.mrb[0].mxu0
  %v6006 = vadd.f32 0.0, %v6005
  %v6007 = vpop.f32.mrb[0].mxu0
  %6008 = vmatprep.mubr.f32.mxu0 0.0
  %6009 = vmatmul.mubr.f32.gmra.mrb[0].mxu0 %v5841
  %v6010 = vpop.f32.mrb[0].mxu0
  %v6011 = vadd.f32 0.0, %v6010
  %v6012 = vpop.f32.mrb[0].mxu0
  %6013 = vmatprep.mubr.f32.mxu0 0.0
  %6014 = vmatmul.mubr.f32.gmra.mrb[0].mxu0 %v5844
  %v6015 = vpop.f32.mrb[0].mxu0
  %v6016 = vadd.f32 0.0, %v6015
  %v6017 = vpop.f32.mrb[0].mxu0
  %6018 = vmatprep.mubr.f32.mxu0 0.0
  %6019 = vmatmul.mubr.f32.gmra.mrb[0].mxu0 %v5847
  %v6020 = vpop.f32.mrb[0].mxu0
  %v6021 = vadd.f32 0.0, %v6020
  %v6022 = vpop.f32.mrb[0].mxu0
  %6023 = vmatprep.mubr.f32.mxu0 0.0
  %6024 = vmatmul.mubr.f32.gmra.mrb[0].mxu0 %v5850
  %v6025 = vpop.f32.mrb[0].mxu0
  %v6026 = vadd.f32 0.0, %v6025
  %v6027 = vpop.f32.mrb[0].mxu0
  %6028 = vmatprep.mubr.f32.mxu0 0.0
  %6029 = vmatmul.mubr.f32.gmra.mrb[0].mxu0 %v5853
  %v6030 = vpop.f32.mrb[0].mxu0
  %v6031 = vadd.f32 0.0, %v6030
  %v6032 = vpop.f32.mrb[0].mxu0
  %6033 = vmatprep.mubr.f32.mxu0 0.0
  %6034 = vmatmul.mubr.f32.gmra.mrb[0].mxu0 %v5856
  %v6035 = vpop.f32.mrb[0].mxu0
  %v6036 = vadd.f32 0.0, %v6035
  %v6037 = vpop.f32.mrb[0].mxu0
  %6038 = vmatprep.mubr.f32.mxu0 0.0
  %6039 = vmatmul.mubr.f32.gmra.mrb[0].mxu0 %v5859
  %v6040 = vpop.f32.mrb[0].mxu0
  %v6041 = vadd.f32 0.0, %v6040
  %v6042 = vpop.f32.mrb[0].mxu0
  %6043 = vmatprep.mubr.f32.mxu0 0.0
  %6044 = vmatmul.mubr.f32.gmra.mrb[0].mxu0 %v5862
  %v6045 = vpop.f32.mrb[0].mxu0
  %v6046 = vadd.f32 0.0, %v6045
  %v6047 = vpop.f32.mrb[0].mxu0
  %6048 = vmatprep.mubr.f32.mxu0 0.0
  %6049 = vmatmul.mubr.f32.gmra.mrb[0].mxu0 %v5865
  %v6050 = vpop.f32.mrb[0].mxu0
  %v6051 = vadd.f32 0.0, %v6050
  %v6052 = vpop.f32.mrb[0].mxu0
  %6053 = vmatprep.mubr.f32.mxu0 0.0
  %6054 = vmatmul.mubr.f32.gmra.mrb[0].mxu0 %v5868
  %v6055 = vpop.f32.mrb[0].mxu0
  %v6056 = vadd.f32 0.0, %v6055
  %v6057 = vpop.f32.mrb[0].mxu0
  %6058 = vmatprep.mubr.f32.mxu0 0.0
  %6059 = vmatmul.mubr.f32.gmra.mrb[0].mxu0 %v5871
  %v6060 = vpop.f32.mrb[0].mxu0
  %v6061 = vadd.f32 0.0, %v6060
  %v6062 = vpop.f32.mrb[0].mxu0
  %6063 = vmatprep.mubr.f32.mxu0 0.0
  %6064 = vmatmul.mubr.f32.gmra.mrb[0].mxu0 %v5874
  %v6065 = vpop.f32.mrb[0].mxu0
  %v6066 = vadd.f32 0.0, %v6065
  %v6067 = vpop.f32.mrb[0].mxu0
  %6068 = vmatprep.mubr.f32.mxu0 0.0
  %6069 = vmatmul.mubr.f32.gmra.mrb[0].mxu0 %v5877
  %v6070 = vpop.f32.mrb[0].mxu0
  %v6071 = vadd.f32 0.0, %v6070
  %v6072 = vpop.f32.mrb[0].mxu0
  %6073 = vmatprep.mubr.f32.mxu0 0.0
  %6074 = vmatmul.mubr.f32.gmra.mrb[0].mxu0 %v5880
  %v6075 = vpop.f32.mrb[0].mxu0
  %v6076 = vadd.f32 0.0, %v6075
  %v6077 = vpop.f32.mrb[0].mxu0
  %6078 = vmatprep.mubr.f32.mxu0 0.0
  %6079 = vmatmul.mubr.f32.gmra.mrb[0].mxu0 %v5883
  %v6080 = vpop.f32.mrb[0].mxu0
  %v6081 = vadd.f32 0.0, %v6080
  %v6082 = vpop.f32.mrb[0].mxu0
  %6083 = vmatprep.mubr.f32.mxu0 0.0
  %6084 = vmatmul.mubr.f32.gmra.mrb[0].mxu0 %v5886
  %v6085 = vpop.f32.mrb[0].mxu0
  %v6086 = vadd.f32 0.0, %v6085
  %v6087 = vpop.f32.mrb[0].mxu0
  %6088 = vmatprep.mubr.f32.mxu0 0.0
  %6089 = vmatmul.mubr.f32.gmra.mrb[0].mxu0 %v5889
  %v6090 = vpop.f32.mrb[0].mxu0
  %v6091 = vadd.f32 0.0, %v6090
  %v6092 = vpop.f32.mrb[0].mxu0
  %6093 = vmatprep.mubr.f32.mxu0 0.0
  %6094 = vmatmul.mubr.f32.gmra.mrb[0].mxu0 %v5892
  %v6095 = vpop.f32.mrb[0].mxu0
  %v6096 = vadd.f32 0.0, %v6095
  %v6097 = vpop.f32.mrb[0].mxu0
  %6098 = vmatprep.mubr.f32.mxu0 0.0
  %6099 = vmatmul.mubr.f32.gmra.mrb[0].mxu0 %v5895
  %v6100 = vpop.f32.mrb[0].mxu0
  %v6101 = vadd.f32 0.0, %v6100
  %v6102 = vpop.f32.mrb[0].mxu0
  %6103 = vmatprep.mubr.f32.mxu0 0.0
  %6104 = vmatmul.mubr.f32.gmra.mrb[0].mxu0 %v5898
  %v6105 = vpop.f32.mrb[0].mxu0
  %v6106 = vadd.f32 0.0, %v6105
  %v6107 = vpop.f32.mrb[0].mxu0
  %6108 = vmatprep.mubr.f32.mxu0 0.0
  %6109 = vmatmul.mubr.f32.gmra.mrb[0].mxu0 %v5901
  %v6110 = vpop.f32.mrb[0].mxu0
  %v6111 = vadd.f32 0.0, %v6110
  %v6112 = vpop.f32.mrb[0].mxu0
  %6113 = vmatprep.mubr.f32.mxu0 0.0
  %6114 = vmatmul.mubr.f32.gmra.mrb[0].mxu0 %v5904
  %v6115 = vpop.f32.mrb[0].mxu0
  %v6116 = vadd.f32 0.0, %v6115
  %v6117 = vpop.f32.mrb[0].mxu0
  %6118 = vmatprep.mubr.f32.mxu0 0.0
  %6119 = vmatmul.mubr.f32.gmra.mrb[0].mxu0 %v5907
  %v6120 = vpop.f32.mrb[0].mxu0
  %v6121 = vadd.f32 0.0, %v6120
  %v6122 = vpop.f32.mrb[0].mxu0
  %6123 = vmatprep.mubr.f32.mxu0 0.0
  %6124 = vmatmul.mubr.f32.gmra.mrb[0].mxu0 %v5910
  %v6125 = vpop.f32.mrb[0].mxu0
  %v6126 = vadd.f32 0.0, %v6125
  %v6127 = vpop.f32.mrb[0].mxu0
  %6128 = vmatprep.mubr.f32.mxu0 0.0
  %6129 = vmatmul.mubr.f32.gmra.mrb[0].mxu0 %v5913
  %v6130 = vpop.f32.mrb[0].mxu0
  %v6131 = vadd.f32 0.0, %v6130
  %v6132 = vpop.f32.mrb[0].mxu0
  %6133 = vmatprep.mubr.f32.mxu0 0.0
  %6134 = vmatmul.mubr.f32.gmra.mrb[0].mxu0 %v5916
  %v6135 = vpop.f32.mrb[0].mxu0
  %v6136 = vadd.f32 0.0, %v6135
  %v6137 = vpop.f32.mrb[0].mxu0
  %6138 = vmatprep.mubr.f32.mxu0 0.0
  %6139 = vmatmul.mubr.f32.gmra.mrb[0].mxu0 %v5919
  %v6140 = vpop.f32.mrb[0].mxu0
  %v6141 = vadd.f32 0.0, %v6140
  %v6142 = vpop.f32.mrb[0].mxu0
  %6143 = vmatprep.mubr.f32.mxu0 0.0
  %6144 = vmatmul.mubr.f32.gmra.mrb[0].mxu0 %v5922
  %v6145 = vpop.f32.mrb[0].mxu0
  %v6146 = vadd.f32 0.0, %v6145
  %v6147 = vpop.f32.mrb[0].mxu0
  %6148 = vdwg.mxu0
  %v6149 = vmul.f32 %v5796, %v5796
  %v6150 = vmul.f32 %v5797, %v5797
  %v6151 = vmul.f32 %v5798, %v5798
  %v6152 = vmul.f32 %v5799, %v5799
  %v6153 = vmul.f32 %v5800, %v5800
  %v6154 = vmul.f32 %v5801, %v5801
  %v6155 = vmul.f32 %v5802, %v5802
  %v6156 = vmul.f32 %v5803, %v5803
  %v6157 = vmul.f32 %v5804, %v5804
  %v6158 = vmul.f32 %v5805, %v5805
  %v6159 = vmul.f32 %v5806, %v5806
  %v6160 = vmul.f32 %v5807, %v5807
  %v6161 = vmul.f32 %v5808, %v5808
  %v6162 = vmul.f32 %v5809, %v5809
  %v6163 = vmul.f32 %v5810, %v5810
  %v6164 = vmul.f32 %v5811, %v5811
  %v6165 = vmul.f32 %v5812, %v5812
  %v6166 = vmul.f32 %v5813, %v5813
  %v6167 = vmul.f32 %v5814, %v5814
  %v6168 = vmul.f32 %v5815, %v5815
  %v6169 = vmul.f32 %v5816, %v5816
  %v6170 = vmul.f32 %v5817, %v5817
  %v6171 = vmul.f32 %v5818, %v5818
  %v6172 = vmul.f32 %v5819, %v5819
  %v6173 = vmul.f32 %v5820, %v5820
  %v6174 = vmul.f32 %v5821, %v5821
  %v6175 = vmul.f32 %v5822, %v5822
  %v6176 = vmul.f32 %v5823, %v5823
  %v6177 = vmul.f32 %v5824, %v5824
  %v6178 = vmul.f32 %v5825, %v5825
  %v6179 = vmul.f32 %v5826, %v5826
  %v6180 = vmul.f32 %v5827, %v5827
  %v6182 = vsel %vm1402, %v6149, 0
  %v6185 = vsel %vm1402, %v6150, 0
  %v6188 = vsel %vm1402, %v6151, 0
  %v6191 = vsel %vm1402, %v6152, 0
  %v6194 = vsel %vm1402, %v6153, 0
  %v6197 = vsel %vm1402, %v6154, 0
  %v6200 = vsel %vm1402, %v6155, 0
  %v6203 = vsel %vm1402, %v6156, 0
  %v6206 = vsel %vm1402, %v6157, 0
  %v6209 = vsel %vm1402, %v6158, 0
  %v6212 = vsel %vm1402, %v6159, 0
  %v6215 = vsel %vm1402, %v6160, 0
  %v6218 = vsel %vm1402, %v6161, 0
  %v6221 = vsel %vm1402, %v6162, 0
  %v6224 = vsel %vm1402, %v6163, 0
  %v6227 = vsel %vm1402, %v6164, 0
  %v6230 = vsel %vm1402, %v6165, 0
  %v6233 = vsel %vm1402, %v6166, 0
  %v6236 = vsel %vm1402, %v6167, 0
  %v6239 = vsel %vm1402, %v6168, 0
  %v6242 = vsel %vm1402, %v6169, 0
  %v6245 = vsel %vm1402, %v6170, 0
  %v6248 = vsel %vm1402, %v6171, 0
  %v6251 = vsel %vm1402, %v6172, 0
  %v6254 = vsel %vm1402, %v6173, 0
  %v6257 = vsel %vm1402, %v6174, 0
  %v6260 = vsel %vm1402, %v6175, 0
  %v6263 = vsel %vm1402, %v6176, 0
  %v6266 = vsel %vm1402, %v6177, 0
  %v6269 = vsel %vm1402, %v6178, 0
  %v6272 = vsel %vm1402, %v6179, 0
  %v6275 = vsel %vm1402, %v6180, 0
  %6277 = vmatprep.subr.mxu0 0.0
  %6278 = vmatpush1.msra.mxu0 0.0625
  %6279 = vmatprep.subr.mxu0 0.0
  %6280 = vmatpush1.msra.mxu0 0.0625
  %6281 = vmatprep.subr.mxu0 0.0
  %6282 = vmatpush1.msra.mxu0 0.0
  %6283 = vmatprep.subr.mxu0 0.0
  %6284 = vmatpush1.msra.mxu0 0.0
  %6285 = vmatprep.subr.mxu0 0.0
  %6286 = vmatpush1.msra.mxu0 0.0
  %6287 = vmatprep.subr.mxu0 0.0
  %6288 = vmatpush1.msra.mxu0 0.0
  %6289 = vmatprep.subr.mxu0 0.0
  %6290 = vmatpush1.msra.mxu0 0.0
  %6291 = vmatprep.subr.mxu0 0.0
  %6292 = vmatpush1.msra.mxu0 0.0
  %6293 = vmatprep.subr.mxu0 0.0
  %6294 = vmatpush1.msra.mxu0 0.0
  %6295 = vmatprep.subr.mxu0 0.0
  %6296 = vmatpush1.msra.mxu0 0.0
  %6297 = vmatprep.subr.mxu0 0.0
  %6298 = vmatpush1.msra.mxu0 0.0
  %6299 = vmatprep.subr.mxu0 0.0
  %6300 = vmatpush1.msra.mxu0 0.0
  %6301 = vmatprep.subr.mxu0 0.0
  %6302 = vmatpush1.msra.mxu0 0.0
  %6303 = vmatprep.subr.mxu0 0.0
  %6304 = vmatpush1.msra.mxu0 0.0
  %6305 = vmatprep.subr.mxu0 0.0
  %6306 = vmatpush1.msra.mxu0 0.0
  %6307 = vmatprep.subr.mxu0 0.0
  %6308 = vmatpush1.msra.mxu0 0.0
  %6309 = vmatprep.subr.mxu0 0.0
  %6310 = vmatpush1.msra.mxu0 0.0
  %6311 = vmatprep.subr.mxu0 0.0
  %6312 = vmatpush1.msra.mxu0 0.0
  %6313 = vmatprep.subr.mxu0 0.0
  %6314 = vmatpush1.msra.mxu0 0.0
  %6315 = vmatprep.subr.mxu0 0.0
  %6316 = vmatpush1.msra.mxu0 0.0
  %6317 = vmatprep.subr.mxu0 0.0
  %6318 = vmatpush1.msra.mxu0 0.0
  %6319 = vmatprep.subr.mxu0 0.0
  %6320 = vmatpush1.msra.mxu0 0.0
  %6321 = vmatprep.subr.mxu0 0.0
  %6322 = vmatpush1.msra.mxu0 0.0
  %6323 = vmatprep.subr.mxu0 0.0
  %6324 = vmatpush1.msra.mxu0 0.0
  %6325 = vmatprep.subr.mxu0 0.0
  %6326 = vmatpush1.msra.mxu0 0.0
  %6327 = vmatprep.subr.mxu0 0.0
  %6328 = vmatpush1.msra.mxu0 0.0
  %6329 = vmatprep.subr.mxu0 0.0
  %6330 = vmatpush1.msra.mxu0 0.0
  %6331 = vmatprep.subr.mxu0 0.0
  %6332 = vmatpush1.msra.mxu0 0.0
  %6333 = vmatprep.subr.mxu0 0.0
  %6334 = vmatpush1.msra.mxu0 0.0
  %6335 = vmatprep.subr.mxu0 0.0
  %6336 = vmatpush1.msra.mxu0 0.0
  %6337 = vmatprep.subr.mxu0 0.0
  %6338 = vmatpush1.msra.mxu0 0.0
  %6339 = vmatprep.subr.mxu0 0.0
  %6340 = vmatpush1.msra.mxu0 0.0
  %6341 = vmatprep.mubr.f32.mxu0 0.0
  %6342 = vmatmul.mubr.f32.gmra.mrb[0].mxu0 %v6182
  %v6343 = vpop.f32.mrb[0].mxu0
  %v6344 = vadd.f32 0.0, %v6343
  %v6345 = vpop.f32.mrb[0].mxu0
  %6346 = vmatprep.mubr.f32.mxu0 0.0
  %6347 = vmatmul.mubr.f32.gmra.mrb[0].mxu0 %v6185
  %v6348 = vpop.f32.mrb[0].mxu0
  %v6349 = vadd.f32 0.0, %v6348
  %v6350 = vpop.f32.mrb[0].mxu0
  %6351 = vmatprep.mubr.f32.mxu0 0.0
  %6352 = vmatmul.mubr.f32.gmra.mrb[0].mxu0 %v6188
  %v6353 = vpop.f32.mrb[0].mxu0
  %v6354 = vadd.f32 0.0, %v6353
  %v6355 = vpop.f32.mrb[0].mxu0
  %6356 = vmatprep.mubr.f32.mxu0 0.0
  %6357 = vmatmul.mubr.f32.gmra.mrb[0].mxu0 %v6191
  %v6358 = vpop.f32.mrb[0].mxu0
  %v6359 = vadd.f32 0.0, %v6358
  %v6360 = vpop.f32.mrb[0].mxu0
  %6361 = vmatprep.mubr.f32.mxu0 0.0
  %6362 = vmatmul.mubr.f32.gmra.mrb[0].mxu0 %v6194
  %v6363 = vpop.f32.mrb[0].mxu0
  %v6364 = vadd.f32 0.0, %v6363
  %v6365 = vpop.f32.mrb[0].mxu0
  %6366 = vmatprep.mubr.f32.mxu0 0.0
  %6367 = vmatmul.mubr.f32.gmra.mrb[0].mxu0 %v6197
  %v6368 = vpop.f32.mrb[0].mxu0
  %v6369 = vadd.f32 0.0, %v6368
  %v6370 = vpop.f32.mrb[0].mxu0
  %6371 = vmatprep.mubr.f32.mxu0 0.0
  %6372 = vmatmul.mubr.f32.gmra.mrb[0].mxu0 %v6200
  %v6373 = vpop.f32.mrb[0].mxu0
  %v6374 = vadd.f32 0.0, %v6373
  %v6375 = vpop.f32.mrb[0].mxu0
  %6376 = vmatprep.mubr.f32.mxu0 0.0
  %6377 = vmatmul.mubr.f32.gmra.mrb[0].mxu0 %v6203
  %v6378 = vpop.f32.mrb[0].mxu0
  %v6379 = vadd.f32 0.0, %v6378
  %v6380 = vpop.f32.mrb[0].mxu0
  %6381 = vmatprep.mubr.f32.mxu0 0.0
  %6382 = vmatmul.mubr.f32.gmra.mrb[0].mxu0 %v6206
  %v6383 = vpop.f32.mrb[0].mxu0
  %v6384 = vadd.f32 0.0, %v6383
  %v6385 = vpop.f32.mrb[0].mxu0
  %6386 = vmatprep.mubr.f32.mxu0 0.0
  %6387 = vmatmul.mubr.f32.gmra.mrb[0].mxu0 %v6209
  %v6388 = vpop.f32.mrb[0].mxu0
  %v6389 = vadd.f32 0.0, %v6388
  %v6390 = vpop.f32.mrb[0].mxu0
  %6391 = vmatprep.mubr.f32.mxu0 0.0
  %6392 = vmatmul.mubr.f32.gmra.mrb[0].mxu0 %v6212
  %v6393 = vpop.f32.mrb[0].mxu0
  %v6394 = vadd.f32 0.0, %v6393
  %v6395 = vpop.f32.mrb[0].mxu0
  %6396 = vmatprep.mubr.f32.mxu0 0.0
  %6397 = vmatmul.mubr.f32.gmra.mrb[0].mxu0 %v6215
  %v6398 = vpop.f32.mrb[0].mxu0
  %v6399 = vadd.f32 0.0, %v6398
  %v6400 = vpop.f32.mrb[0].mxu0
  %6401 = vmatprep.mubr.f32.mxu0 0.0
  %6402 = vmatmul.mubr.f32.gmra.mrb[0].mxu0 %v6218
  %v6403 = vpop.f32.mrb[0].mxu0
  %v6404 = vadd.f32 0.0, %v6403
  %v6405 = vpop.f32.mrb[0].mxu0
  %6406 = vmatprep.mubr.f32.mxu0 0.0
  %6407 = vmatmul.mubr.f32.gmra.mrb[0].mxu0 %v6221
  %v6408 = vpop.f32.mrb[0].mxu0
  %v6409 = vadd.f32 0.0, %v6408
  %v6410 = vpop.f32.mrb[0].mxu0
  %6411 = vmatprep.mubr.f32.mxu0 0.0
  %6412 = vmatmul.mubr.f32.gmra.mrb[0].mxu0 %v6224
  %v6413 = vpop.f32.mrb[0].mxu0
  %v6414 = vadd.f32 0.0, %v6413
  %v6415 = vpop.f32.mrb[0].mxu0
  %6416 = vmatprep.mubr.f32.mxu0 0.0
  %6417 = vmatmul.mubr.f32.gmra.mrb[0].mxu0 %v6227
  %v6418 = vpop.f32.mrb[0].mxu0
  %v6419 = vadd.f32 0.0, %v6418
  %v6420 = vpop.f32.mrb[0].mxu0
  %6421 = vmatprep.mubr.f32.mxu0 0.0
  %6422 = vmatmul.mubr.f32.gmra.mrb[0].mxu0 %v6230
  %v6423 = vpop.f32.mrb[0].mxu0
  %v6424 = vadd.f32 0.0, %v6423
  %v6425 = vpop.f32.mrb[0].mxu0
  %6426 = vmatprep.mubr.f32.mxu0 0.0
  %6427 = vmatmul.mubr.f32.gmra.mrb[0].mxu0 %v6233
  %v6428 = vpop.f32.mrb[0].mxu0
  %v6429 = vadd.f32 0.0, %v6428
  %v6430 = vpop.f32.mrb[0].mxu0
  %6431 = vmatprep.mubr.f32.mxu0 0.0
  %6432 = vmatmul.mubr.f32.gmra.mrb[0].mxu0 %v6236
  %v6433 = vpop.f32.mrb[0].mxu0
  %v6434 = vadd.f32 0.0, %v6433
  %v6435 = vpop.f32.mrb[0].mxu0
  %6436 = vmatprep.mubr.f32.mxu0 0.0
  %6437 = vmatmul.mubr.f32.gmra.mrb[0].mxu0 %v6239
  %v6438 = vpop.f32.mrb[0].mxu0
  %v6439 = vadd.f32 0.0, %v6438
  %v6440 = vpop.f32.mrb[0].mxu0
  %6441 = vmatprep.mubr.f32.mxu0 0.0
  %6442 = vmatmul.mubr.f32.gmra.mrb[0].mxu0 %v6242
  %v6443 = vpop.f32.mrb[0].mxu0
  %v6444 = vadd.f32 0.0, %v6443
  %v6445 = vpop.f32.mrb[0].mxu0
  %6446 = vmatprep.mubr.f32.mxu0 0.0
  %6447 = vmatmul.mubr.f32.gmra.mrb[0].mxu0 %v6245
  %v6448 = vpop.f32.mrb[0].mxu0
  %v6449 = vadd.f32 0.0, %v6448
  %v6450 = vpop.f32.mrb[0].mxu0
  %6451 = vmatprep.mubr.f32.mxu0 0.0
  %6452 = vmatmul.mubr.f32.gmra.mrb[0].mxu0 %v6248
  %v6453 = vpop.f32.mrb[0].mxu0
  %v6454 = vadd.f32 0.0, %v6453
  %v6455 = vpop.f32.mrb[0].mxu0
  %6456 = vmatprep.mubr.f32.mxu0 0.0
  %6457 = vmatmul.mubr.f32.gmra.mrb[0].mxu0 %v6251
  %v6458 = vpop.f32.mrb[0].mxu0
  %v6459 = vadd.f32 0.0, %v6458
  %v6460 = vpop.f32.mrb[0].mxu0
  %6461 = vmatprep.mubr.f32.mxu0 0.0
  %6462 = vmatmul.mubr.f32.gmra.mrb[0].mxu0 %v6254
  %v6463 = vpop.f32.mrb[0].mxu0
  %v6464 = vadd.f32 0.0, %v6463
  %v6465 = vpop.f32.mrb[0].mxu0
  %6466 = vmatprep.mubr.f32.mxu0 0.0
  %6467 = vmatmul.mubr.f32.gmra.mrb[0].mxu0 %v6257
  %v6468 = vpop.f32.mrb[0].mxu0
  %v6469 = vadd.f32 0.0, %v6468
  %v6470 = vpop.f32.mrb[0].mxu0
  %6471 = vmatprep.mubr.f32.mxu0 0.0
  %6472 = vmatmul.mubr.f32.gmra.mrb[0].mxu0 %v6260
  %v6473 = vpop.f32.mrb[0].mxu0
  %v6474 = vadd.f32 0.0, %v6473
  %v6475 = vpop.f32.mrb[0].mxu0
  %6476 = vmatprep.mubr.f32.mxu0 0.0
  %6477 = vmatmul.mubr.f32.gmra.mrb[0].mxu0 %v6263
  %v6478 = vpop.f32.mrb[0].mxu0
  %v6479 = vadd.f32 0.0, %v6478
  %v6480 = vpop.f32.mrb[0].mxu0
  %6481 = vmatprep.mubr.f32.mxu0 0.0
  %6482 = vmatmul.mubr.f32.gmra.mrb[0].mxu0 %v6266
  %v6483 = vpop.f32.mrb[0].mxu0
  %v6484 = vadd.f32 0.0, %v6483
  %v6485 = vpop.f32.mrb[0].mxu0
  %6486 = vmatprep.mubr.f32.mxu0 0.0
  %6487 = vmatmul.mubr.f32.gmra.mrb[0].mxu0 %v6269
  %v6488 = vpop.f32.mrb[0].mxu0
  %v6489 = vadd.f32 0.0, %v6488
  %v6490 = vpop.f32.mrb[0].mxu0
  %6491 = vmatprep.mubr.f32.mxu0 0.0
  %6492 = vmatmul.mubr.f32.gmra.mrb[0].mxu0 %v6272
  %v6493 = vpop.f32.mrb[0].mxu0
  %v6494 = vadd.f32 0.0, %v6493
  %v6495 = vpop.f32.mrb[0].mxu0
  %6496 = vmatprep.mubr.f32.mxu0 0.0
  %6497 = vmatmul.mubr.f32.gmra.mrb[0].mxu0 %v6275
  %v6498 = vpop.f32.mrb[0].mxu0
  %v6499 = vadd.f32 0.0, %v6498
  %v6500 = vpop.f32.mrb[0].mxu0
  %6501 = vdwg.mxu0
  %v6502 = vmul.f32 %v5991, %v5991
  %v6503 = vmul.f32 %v5996, %v5996
  %v6504 = vmul.f32 %v6001, %v6001
  %v6505 = vmul.f32 %v6006, %v6006
  %v6506 = vmul.f32 %v6011, %v6011
  %v6507 = vmul.f32 %v6016, %v6016
  %v6508 = vmul.f32 %v6021, %v6021
  %v6509 = vmul.f32 %v6026, %v6026
  %v6510 = vmul.f32 %v6031, %v6031
  %v6511 = vmul.f32 %v6036, %v6036
  %v6512 = vmul.f32 %v6041, %v6041
  %v6513 = vmul.f32 %v6046, %v6046
  %v6514 = vmul.f32 %v6051, %v6051
  %v6515 = vmul.f32 %v6056, %v6056
  %v6516 = vmul.f32 %v6061, %v6061
  %v6517 = vmul.f32 %v6066, %v6066
  %v6518 = vmul.f32 %v6071, %v6071
  %v6519 = vmul.f32 %v6076, %v6076
  %v6520 = vmul.f32 %v6081, %v6081
  %v6521 = vmul.f32 %v6086, %v6086
  %v6522 = vmul.f32 %v6091, %v6091
  %v6523 = vmul.f32 %v6096, %v6096
  %v6524 = vmul.f32 %v6101, %v6101
  %v6525 = vmul.f32 %v6106, %v6106
  %v6526 = vmul.f32 %v6111, %v6111
  %v6527 = vmul.f32 %v6116, %v6116
  %v6528 = vmul.f32 %v6121, %v6121
  %v6529 = vmul.f32 %v6126, %v6126
  %v6530 = vmul.f32 %v6131, %v6131
  %v6531 = vmul.f32 %v6136, %v6136
  %v6532 = vmul.f32 %v6141, %v6141
  %v6533 = vmul.f32 %v6146, %v6146
  %v6534 = vsub.f32 %v6344, %v6502
  %v6535 = vsub.f32 %v6349, %v6503
  %v6536 = vsub.f32 %v6354, %v6504
  %v6537 = vsub.f32 %v6359, %v6505
  %v6538 = vsub.f32 %v6364, %v6506
  %v6539 = vsub.f32 %v6369, %v6507
  %v6540 = vsub.f32 %v6374, %v6508
  %v6541 = vsub.f32 %v6379, %v6509
  %v6542 = vsub.f32 %v6384, %v6510
  %v6543 = vsub.f32 %v6389, %v6511
  %v6544 = vsub.f32 %v6394, %v6512
  %v6545 = vsub.f32 %v6399, %v6513
  %v6546 = vsub.f32 %v6404, %v6514
  %v6547 = vsub.f32 %v6409, %v6515
  %v6548 = vsub.f32 %v6414, %v6516
  %v6549 = vsub.f32 %v6419, %v6517
  %v6550 = vsub.f32 %v6424, %v6518
  %v6551 = vsub.f32 %v6429, %v6519
  %v6552 = vsub.f32 %v6434, %v6520
  %v6553 = vsub.f32 %v6439, %v6521
  %v6554 = vsub.f32 %v6444, %v6522
  %v6555 = vsub.f32 %v6449, %v6523
  %v6556 = vsub.f32 %v6454, %v6524
  %v6557 = vsub.f32 %v6459, %v6525
  %v6558 = vsub.f32 %v6464, %v6526
  %v6559 = vsub.f32 %v6469, %v6527
  %v6560 = vsub.f32 %v6474, %v6528
  %v6561 = vsub.f32 %v6479, %v6529
  %v6562 = vsub.f32 %v6484, %v6530
  %v6563 = vsub.f32 %v6489, %v6531
  %v6564 = vsub.f32 %v6494, %v6532
  %v6565 = vsub.f32 %v6499, %v6533
  %v6566 = vmax.f32 %v6534, 0.0
  %v6567 = vmax.f32 %v6535, 0.0
  %v6568 = vmax.f32 %v6536, 0.0
  %v6569 = vmax.f32 %v6537, 0.0
  %v6570 = vmax.f32 %v6538, 0.0
  %v6571 = vmax.f32 %v6539, 0.0
  %v6572 = vmax.f32 %v6540, 0.0
  %v6573 = vmax.f32 %v6541, 0.0
  %v6574 = vmax.f32 %v6542, 0.0
  %v6575 = vmax.f32 %v6543, 0.0
  %v6576 = vmax.f32 %v6544, 0.0
  %v6577 = vmax.f32 %v6545, 0.0
  %v6578 = vmax.f32 %v6546, 0.0
  %v6579 = vmax.f32 %v6547, 0.0
  %v6580 = vmax.f32 %v6548, 0.0
  %v6581 = vmax.f32 %v6549, 0.0
  %v6582 = vmax.f32 %v6550, 0.0
  %v6583 = vmax.f32 %v6551, 0.0
  %v6584 = vmax.f32 %v6552, 0.0
  %v6585 = vmax.f32 %v6553, 0.0
  %v6586 = vmax.f32 %v6554, 0.0
  %v6587 = vmax.f32 %v6555, 0.0
  %v6588 = vmax.f32 %v6556, 0.0
  %v6589 = vmax.f32 %v6557, 0.0
  %v6590 = vmax.f32 %v6558, 0.0
  %v6591 = vmax.f32 %v6559, 0.0
  %v6592 = vmax.f32 %v6560, 0.0
  %v6593 = vmax.f32 %v6561, 0.0
  %v6594 = vmax.f32 %v6562, 0.0
  %v6595 = vmax.f32 %v6563, 0.0
  %v6596 = vmax.f32 %v6564, 0.0
  %v6597 = vmax.f32 %v6565, 0.0
  %v6598 = vsub.f32 %v5796, %v5991
  %v6599 = vsub.f32 %v5797, %v5996
  %v6600 = vsub.f32 %v5798, %v6001
  %v6601 = vsub.f32 %v5799, %v6006
  %v6602 = vsub.f32 %v5800, %v6011
  %v6603 = vsub.f32 %v5801, %v6016
  %v6604 = vsub.f32 %v5802, %v6021
  %v6605 = vsub.f32 %v5803, %v6026
  %v6606 = vsub.f32 %v5804, %v6031
  %v6607 = vsub.f32 %v5805, %v6036
  %v6608 = vsub.f32 %v5806, %v6041
  %v6609 = vsub.f32 %v5807, %v6046
  %v6610 = vsub.f32 %v5808, %v6051
  %v6611 = vsub.f32 %v5809, %v6056
  %v6612 = vsub.f32 %v5810, %v6061
  %v6613 = vsub.f32 %v5811, %v6066
  %v6614 = vsub.f32 %v5812, %v6071
  %v6615 = vsub.f32 %v5813, %v6076
  %v6616 = vsub.f32 %v5814, %v6081
  %v6617 = vsub.f32 %v5815, %v6086
  %v6618 = vsub.f32 %v5816, %v6091
  %v6619 = vsub.f32 %v5817, %v6096
  %v6620 = vsub.f32 %v5818, %v6101
  %v6621 = vsub.f32 %v5819, %v6106
  %v6622 = vsub.f32 %v5820, %v6111
  %v6623 = vsub.f32 %v5821, %v6116
  %v6624 = vsub.f32 %v5822, %v6121
  %v6625 = vsub.f32 %v5823, %v6126
  %v6626 = vsub.f32 %v5824, %v6131
  %v6627 = vsub.f32 %v5825, %v6136
  %v6628 = vsub.f32 %v5826, %v6141
  %v6629 = vsub.f32 %v5827, %v6146
  %v6630 = vadd.f32 %v6566, 1e-12
  %v6631 = vadd.f32 %v6567, 1e-12
  %v6632 = vadd.f32 %v6568, 1e-12
  %v6633 = vadd.f32 %v6569, 1e-12
  %v6634 = vadd.f32 %v6570, 1e-12
  %v6635 = vadd.f32 %v6571, 1e-12
  %v6636 = vadd.f32 %v6572, 1e-12
  %v6637 = vadd.f32 %v6573, 1e-12
  %v6638 = vadd.f32 %v6574, 1e-12
  %v6639 = vadd.f32 %v6575, 1e-12
  %v6640 = vadd.f32 %v6576, 1e-12
  %v6641 = vadd.f32 %v6577, 1e-12
  %v6642 = vadd.f32 %v6578, 1e-12
  %v6643 = vadd.f32 %v6579, 1e-12
  %v6644 = vadd.f32 %v6580, 1e-12
  %v6645 = vadd.f32 %v6581, 1e-12
  %v6646 = vadd.f32 %v6582, 1e-12
  %v6647 = vadd.f32 %v6583, 1e-12
  %v6648 = vadd.f32 %v6584, 1e-12
  %v6649 = vadd.f32 %v6585, 1e-12
  %v6650 = vadd.f32 %v6586, 1e-12
  %v6651 = vadd.f32 %v6587, 1e-12
  %v6652 = vadd.f32 %v6588, 1e-12
  %v6653 = vadd.f32 %v6589, 1e-12
  %v6654 = vadd.f32 %v6590, 1e-12
  %v6655 = vadd.f32 %v6591, 1e-12
  %v6656 = vadd.f32 %v6592, 1e-12
  %v6657 = vadd.f32 %v6593, 1e-12
  %v6658 = vadd.f32 %v6594, 1e-12
  %v6659 = vadd.f32 %v6595, 1e-12
  %v6660 = vadd.f32 %v6596, 1e-12
  %v6661 = vadd.f32 %v6597, 1e-12
  %v6662 = vrsqrt.pop %v6630
  %v6663 = vrsqrt.pop %v6631
  %v6664 = vrsqrt.pop %v6632
  %v6665 = vrsqrt.pop %v6633
  %v6666 = vrsqrt.pop %v6634
  %v6667 = vrsqrt.pop %v6635
  %v6668 = vrsqrt.pop %v6636
  %v6669 = vrsqrt.pop %v6637
  %v6670 = vrsqrt.pop %v6638
  %v6671 = vrsqrt.pop %v6639
  %v6672 = vrsqrt.pop %v6640
  %v6673 = vrsqrt.pop %v6641
  %v6674 = vrsqrt.pop %v6642
  %v6675 = vrsqrt.pop %v6643
  %v6676 = vrsqrt.pop %v6644
  %v6677 = vrsqrt.pop %v6645
  %v6678 = vrsqrt.pop %v6646
  %v6679 = vrsqrt.pop %v6647
  %v6680 = vrsqrt.pop %v6648
  %v6681 = vrsqrt.pop %v6649
  %v6682 = vrsqrt.pop %v6650
  %v6683 = vrsqrt.pop %v6651
  %v6684 = vrsqrt.pop %v6652
  %v6685 = vrsqrt.pop %v6653
  %v6686 = vrsqrt.pop %v6654
  %v6687 = vrsqrt.pop %v6655
  %v6688 = vrsqrt.pop %v6656
  %v6689 = vrsqrt.pop %v6657
  %v6690 = vrsqrt.pop %v6658
  %v6691 = vrsqrt.pop %v6659
  %v6692 = vrsqrt.pop %v6660
  %v6693 = vrsqrt.pop %v6661
  %v6694 = vmul.f32 %v6598, %v6662
  %v6695 = vmul.f32 %v6599, %v6663
  %v6696 = vmul.f32 %v6600, %v6664
  %v6697 = vmul.f32 %v6601, %v6665
  %v6698 = vmul.f32 %v6602, %v6666
  %v6699 = vmul.f32 %v6603, %v6667
  %v6700 = vmul.f32 %v6604, %v6668
  %v6701 = vmul.f32 %v6605, %v6669
  %v6702 = vmul.f32 %v6606, %v6670
  %v6703 = vmul.f32 %v6607, %v6671
  %v6704 = vmul.f32 %v6608, %v6672
  %v6705 = vmul.f32 %v6609, %v6673
  %v6706 = vmul.f32 %v6610, %v6674
  %v6707 = vmul.f32 %v6611, %v6675
  %v6708 = vmul.f32 %v6612, %v6676
  %v6709 = vmul.f32 %v6613, %v6677
  %v6710 = vmul.f32 %v6614, %v6678
  %v6711 = vmul.f32 %v6615, %v6679
  %v6712 = vmul.f32 %v6616, %v6680
  %v6713 = vmul.f32 %v6617, %v6681
  %v6714 = vmul.f32 %v6618, %v6682
  %v6715 = vmul.f32 %v6619, %v6683
  %v6716 = vmul.f32 %v6620, %v6684
  %v6717 = vmul.f32 %v6621, %v6685
  %v6718 = vmul.f32 %v6622, %v6686
  %v6719 = vmul.f32 %v6623, %v6687
  %v6720 = vmul.f32 %v6624, %v6688
  %v6721 = vmul.f32 %v6625, %v6689
  %v6722 = vmul.f32 %v6626, %v6690
  %v6723 = vmul.f32 %v6627, %v6691
  %v6724 = vmul.f32 %v6628, %v6692
  %v6725 = vmul.f32 %v6629, %v6693
  %v6726 = vlaneseq
  %v6727 = vshrl.u32 %v6726, 7
  %v6728 = vsub.s32 0, %v6727
  %v6729 = vrot.slane %v35, %v6728
  %v6730 = vmul.f32 %v6729, %v6694
  %v6731 = vmul.f32 %v6729, %v6695
  %v6732 = vmul.f32 %v6729, %v6696
  %v6733 = vmul.f32 %v6729, %v6697
  %v6734 = vmul.f32 %v6729, %v6698
  %v6735 = vmul.f32 %v6729, %v6699
  %v6736 = vmul.f32 %v6729, %v6700
  %v6737 = vmul.f32 %v6729, %v6701
  %v6738 = vmul.f32 %v6729, %v6702
  %v6739 = vmul.f32 %v6729, %v6703
  %v6740 = vmul.f32 %v6729, %v6704
  %v6741 = vmul.f32 %v6729, %v6705
  %v6742 = vmul.f32 %v6729, %v6706
  %v6743 = vmul.f32 %v6729, %v6707
  %v6744 = vmul.f32 %v6729, %v6708
  %v6745 = vmul.f32 %v6729, %v6709
  %v6746 = vmul.f32 %v6729, %v6710
  %v6747 = vmul.f32 %v6729, %v6711
  %v6748 = vmul.f32 %v6729, %v6712
  %v6749 = vmul.f32 %v6729, %v6713
  %v6750 = vmul.f32 %v6729, %v6714
  %v6751 = vmul.f32 %v6729, %v6715
  %v6752 = vmul.f32 %v6729, %v6716
  %v6753 = vmul.f32 %v6729, %v6717
  %v6754 = vmul.f32 %v6729, %v6718
  %v6755 = vmul.f32 %v6729, %v6719
  %v6756 = vmul.f32 %v6729, %v6720
  %v6757 = vmul.f32 %v6729, %v6721
  %v6758 = vmul.f32 %v6729, %v6722
  %v6759 = vmul.f32 %v6729, %v6723
  %v6760 = vmul.f32 %v6729, %v6724
  %v6761 = vmul.f32 %v6729, %v6725
  %v6762 = vlaneseq
  %v6763 = vshrl.u32 %v6762, 7
  %v6764 = vsub.s32 0, %v6763
  %v6765 = vrot.slane %v36, %v6764
  %v6766 = vadd.f32 %v6730, %v6765
  %v6767 = vadd.f32 %v6731, %v6765
  %v6768 = vadd.f32 %v6732, %v6765
  %v6769 = vadd.f32 %v6733, %v6765
  %v6770 = vadd.f32 %v6734, %v6765
  %v6771 = vadd.f32 %v6735, %v6765
  %v6772 = vadd.f32 %v6736, %v6765
  %v6773 = vadd.f32 %v6737, %v6765
  %v6774 = vadd.f32 %v6738, %v6765
  %v6775 = vadd.f32 %v6739, %v6765
  %v6776 = vadd.f32 %v6740, %v6765
  %v6777 = vadd.f32 %v6741, %v6765
  %v6778 = vadd.f32 %v6742, %v6765
  %v6779 = vadd.f32 %v6743, %v6765
  %v6780 = vadd.f32 %v6744, %v6765
  %v6781 = vadd.f32 %v6745, %v6765
  %v6782 = vadd.f32 %v6746, %v6765
  %v6783 = vadd.f32 %v6747, %v6765
  %v6784 = vadd.f32 %v6748, %v6765
  %v6785 = vadd.f32 %v6749, %v6765
  %v6786 = vadd.f32 %v6750, %v6765
  %v6787 = vadd.f32 %v6751, %v6765
  %v6788 = vadd.f32 %v6752, %v6765
  %v6789 = vadd.f32 %v6753, %v6765
  %v6790 = vadd.f32 %v6754, %v6765
  %v6791 = vadd.f32 %v6755, %v6765
  %v6792 = vadd.f32 %v6756, %v6765
  %v6793 = vadd.f32 %v6757, %v6765
  %v6794 = vadd.f32 %v6758, %v6765
  %v6795 = vadd.f32 %v6759, %v6765
  %v6796 = vadd.f32 %v6760, %v6765
  %v6797 = vadd.f32 %v6761, %v6765
  %v6798 = vmax.f32 %v6766, 0.0
  %v6799 = vmax.f32 %v6767, 0.0
  %v6800 = vmax.f32 %v6768, 0.0
  %v6801 = vmax.f32 %v6769, 0.0
  %v6802 = vmax.f32 %v6770, 0.0
  %v6803 = vmax.f32 %v6771, 0.0
  %v6804 = vmax.f32 %v6772, 0.0
  %v6805 = vmax.f32 %v6773, 0.0
  %v6806 = vmax.f32 %v6774, 0.0
  %v6807 = vmax.f32 %v6775, 0.0
  %v6808 = vmax.f32 %v6776, 0.0
  %v6809 = vmax.f32 %v6777, 0.0
  %v6810 = vmax.f32 %v6778, 0.0
  %v6811 = vmax.f32 %v6779, 0.0
  %v6812 = vmax.f32 %v6780, 0.0
  %v6813 = vmax.f32 %v6781, 0.0
  %v6814 = vmax.f32 %v6782, 0.0
  %v6815 = vmax.f32 %v6783, 0.0
  %v6816 = vmax.f32 %v6784, 0.0
  %v6817 = vmax.f32 %v6785, 0.0
  %v6818 = vmax.f32 %v6786, 0.0
  %v6819 = vmax.f32 %v6787, 0.0
  %v6820 = vmax.f32 %v6788, 0.0
  %v6821 = vmax.f32 %v6789, 0.0
  %v6822 = vmax.f32 %v6790, 0.0
  %v6823 = vmax.f32 %v6791, 0.0
  %v6824 = vmax.f32 %v6792, 0.0
  %v6825 = vmax.f32 %v6793, 0.0
  %v6826 = vmax.f32 %v6794, 0.0
  %v6827 = vmax.f32 %v6795, 0.0
  %v6828 = vmax.f32 %v6796, 0.0
  %v6829 = vmax.f32 %v6797, 0.0
  %v6830 = vld [vmem:[%s7] sm:$0xff]
  %v6831 = vld [vmem:[%s7 + $0x8] sm:$0xff]
  %v6832 = vlaneseq
  %v6833 = vshrl.u32 %v6832, 7
  %v6834 = vsub.s32 0, %v6833
  %v6835 = vrot.slane %v37, %v6834
  %v6837 = vsel %vm1402, %v6798, 0
  %v6840 = vsel %vm1402, %v6799, 0
  %v6843 = vsel %vm1402, %v6800, 0
  %v6846 = vsel %vm1402, %v6801, 0
  %v6849 = vsel %vm1402, %v6802, 0
  %v6852 = vsel %vm1402, %v6803, 0
  %v6855 = vsel %vm1402, %v6804, 0
  %v6858 = vsel %vm1402, %v6805, 0
  %v6861 = vsel %vm1402, %v6806, 0
  %v6864 = vsel %vm1402, %v6807, 0
  %v6867 = vsel %vm1402, %v6808, 0
  %v6870 = vsel %vm1402, %v6809, 0
  %v6873 = vsel %vm1402, %v6810, 0
  %v6876 = vsel %vm1402, %v6811, 0
  %v6879 = vsel %vm1402, %v6812, 0
  %v6882 = vsel %vm1402, %v6813, 0
  %v6885 = vsel %vm1402, %v6814, 0
  %v6888 = vsel %vm1402, %v6815, 0
  %v6891 = vsel %vm1402, %v6816, 0
  %v6894 = vsel %vm1402, %v6817, 0
  %v6897 = vsel %vm1402, %v6818, 0
  %v6900 = vsel %vm1402, %v6819, 0
  %v6903 = vsel %vm1402, %v6820, 0
  %v6906 = vsel %vm1402, %v6821, 0
  %v6909 = vsel %vm1402, %v6822, 0
  %v6912 = vsel %vm1402, %v6823, 0
  %v6915 = vsel %vm1402, %v6824, 0
  %v6918 = vsel %vm1402, %v6825, 0
  %v6921 = vsel %vm1402, %v6826, 0
  %v6924 = vsel %vm1402, %v6827, 0
  %v6927 = vsel %vm1402, %v6828, 0
  %v6930 = vsel %vm1402, %v6829, 0
  %6932 = vmatprep.subr.mxu0 0.0
  %6933 = vmatpush1.msra.mxu0 %v6830
  %6934 = vmatprep.subr.mxu0 0.0
  %6935 = vmatpush1.msra.mxu0 %v6831
  %6936 = vmatprep.subr.mxu0 0.0
  %6937 = vmatpush1.msra.mxu0 0.0
  %6938 = vmatprep.subr.mxu0 0.0
  %6939 = vmatpush1.msra.mxu0 0.0
  %6940 = vmatprep.subr.mxu0 0.0
  %6941 = vmatpush1.msra.mxu0 0.0
  %6942 = vmatprep.subr.mxu0 0.0
  %6943 = vmatpush1.msra.mxu0 0.0
  %6944 = vmatprep.subr.mxu0 0.0
  %6945 = vmatpush1.msra.mxu0 0.0
  %6946 = vmatprep.subr.mxu0 0.0
  %6947 = vmatpush1.msra.mxu0 0.0
  %6948 = vmatprep.subr.mxu0 0.0
  %6949 = vmatpush1.msra.mxu0 0.0
  %6950 = vmatprep.subr.mxu0 0.0
  %6951 = vmatpush1.msra.mxu0 0.0
  %6952 = vmatprep.subr.mxu0 0.0
  %6953 = vmatpush1.msra.mxu0 0.0
  %6954 = vmatprep.subr.mxu0 0.0
  %6955 = vmatpush1.msra.mxu0 0.0
  %6956 = vmatprep.subr.mxu0 0.0
  %6957 = vmatpush1.msra.mxu0 0.0
  %6958 = vmatprep.subr.mxu0 0.0
  %6959 = vmatpush1.msra.mxu0 0.0
  %6960 = vmatprep.subr.mxu0 0.0
  %6961 = vmatpush1.msra.mxu0 0.0
  %6962 = vmatprep.subr.mxu0 0.0
  %6963 = vmatpush1.msra.mxu0 0.0
  %6964 = vmatprep.subr.mxu0 0.0
  %6965 = vmatpush1.msra.mxu0 0.0
  %6966 = vmatprep.subr.mxu0 0.0
  %6967 = vmatpush1.msra.mxu0 0.0
  %6968 = vmatprep.subr.mxu0 0.0
  %6969 = vmatpush1.msra.mxu0 0.0
  %6970 = vmatprep.subr.mxu0 0.0
  %6971 = vmatpush1.msra.mxu0 0.0
  %6972 = vmatprep.subr.mxu0 0.0
  %6973 = vmatpush1.msra.mxu0 0.0
  %6974 = vmatprep.subr.mxu0 0.0
  %6975 = vmatpush1.msra.mxu0 0.0
  %6976 = vmatprep.subr.mxu0 0.0
  %6977 = vmatpush1.msra.mxu0 0.0
  %6978 = vmatprep.subr.mxu0 0.0
  %6979 = vmatpush1.msra.mxu0 0.0
  %6980 = vmatprep.subr.mxu0 0.0
  %6981 = vmatpush1.msra.mxu0 0.0
  %6982 = vmatprep.subr.mxu0 0.0
  %6983 = vmatpush1.msra.mxu0 0.0
  %6984 = vmatprep.subr.mxu0 0.0
  %6985 = vmatpush1.msra.mxu0 0.0
  %6986 = vmatprep.subr.mxu0 0.0
  %6987 = vmatpush1.msra.mxu0 0.0
  %6988 = vmatprep.subr.mxu0 0.0
  %6989 = vmatpush1.msra.mxu0 0.0
  %6990 = vmatprep.subr.mxu0 0.0
  %6991 = vmatpush1.msra.mxu0 0.0
  %6992 = vmatprep.subr.mxu0 0.0
  %6993 = vmatpush1.msra.mxu0 0.0
  %6994 = vmatprep.subr.mxu0 0.0
  %6995 = vmatpush1.msra.mxu0 0.0
  %6996 = vmatprep.mubr.f32.mxu0 0.0
  %6997 = vmatmul.mubr.f32.gmra.mrb[0].mxu0 %v6837
  %v6998 = vpop.f32.mrb[0].mxu0
  %v6999 = vadd.f32 %v6835, %v6998
  %v7000 = vpop.f32.mrb[0].mxu0
  %7001 = vmatprep.mubr.f32.mxu0 0.0
  %7002 = vmatmul.mubr.f32.gmra.mrb[0].mxu0 %v6840
  %v7003 = vpop.f32.mrb[0].mxu0
  %v7004 = vadd.f32 %v6835, %v7003
  %v7005 = vpop.f32.mrb[0].mxu0
  %7006 = vmatprep.mubr.f32.mxu0 0.0
  %7007 = vmatmul.mubr.f32.gmra.mrb[0].mxu0 %v6843
  %v7008 = vpop.f32.mrb[0].mxu0
  %v7009 = vadd.f32 %v6835, %v7008
  %v7010 = vpop.f32.mrb[0].mxu0
  %7011 = vmatprep.mubr.f32.mxu0 0.0
  %7012 = vmatmul.mubr.f32.gmra.mrb[0].mxu0 %v6846
  %v7013 = vpop.f32.mrb[0].mxu0
  %v7014 = vadd.f32 %v6835, %v7013
  %v7015 = vpop.f32.mrb[0].mxu0
  %7016 = vmatprep.mubr.f32.mxu0 0.0
  %7017 = vmatmul.mubr.f32.gmra.mrb[0].mxu0 %v6849
  %v7018 = vpop.f32.mrb[0].mxu0
  %v7019 = vadd.f32 %v6835, %v7018
  %v7020 = vpop.f32.mrb[0].mxu0
  %7021 = vmatprep.mubr.f32.mxu0 0.0
  %7022 = vmatmul.mubr.f32.gmra.mrb[0].mxu0 %v6852
  %v7023 = vpop.f32.mrb[0].mxu0
  %v7024 = vadd.f32 %v6835, %v7023
  %v7025 = vpop.f32.mrb[0].mxu0
  %7026 = vmatprep.mubr.f32.mxu0 0.0
  %7027 = vmatmul.mubr.f32.gmra.mrb[0].mxu0 %v6855
  %v7028 = vpop.f32.mrb[0].mxu0
  %v7029 = vadd.f32 %v6835, %v7028
  %v7030 = vpop.f32.mrb[0].mxu0
  %7031 = vmatprep.mubr.f32.mxu0 0.0
  %7032 = vmatmul.mubr.f32.gmra.mrb[0].mxu0 %v6858
  %v7033 = vpop.f32.mrb[0].mxu0
  %v7034 = vadd.f32 %v6835, %v7033
  %v7035 = vpop.f32.mrb[0].mxu0
  %7036 = vmatprep.mubr.f32.mxu0 0.0
  %7037 = vmatmul.mubr.f32.gmra.mrb[0].mxu0 %v6861
  %v7038 = vpop.f32.mrb[0].mxu0
  %v7039 = vadd.f32 %v6835, %v7038
  %v7040 = vpop.f32.mrb[0].mxu0
  %7041 = vmatprep.mubr.f32.mxu0 0.0
  %7042 = vmatmul.mubr.f32.gmra.mrb[0].mxu0 %v6864
  %v7043 = vpop.f32.mrb[0].mxu0
  %v7044 = vadd.f32 %v6835, %v7043
  %v7045 = vpop.f32.mrb[0].mxu0
  %7046 = vmatprep.mubr.f32.mxu0 0.0
  %7047 = vmatmul.mubr.f32.gmra.mrb[0].mxu0 %v6867
  %v7048 = vpop.f32.mrb[0].mxu0
  %v7049 = vadd.f32 %v6835, %v7048
  %v7050 = vpop.f32.mrb[0].mxu0
  %7051 = vmatprep.mubr.f32.mxu0 0.0
  %7052 = vmatmul.mubr.f32.gmra.mrb[0].mxu0 %v6870
  %v7053 = vpop.f32.mrb[0].mxu0
  %v7054 = vadd.f32 %v6835, %v7053
  %v7055 = vpop.f32.mrb[0].mxu0
  %7056 = vmatprep.mubr.f32.mxu0 0.0
  %7057 = vmatmul.mubr.f32.gmra.mrb[0].mxu0 %v6873
  %v7058 = vpop.f32.mrb[0].mxu0
  %v7059 = vadd.f32 %v6835, %v7058
  %v7060 = vpop.f32.mrb[0].mxu0
  %7061 = vmatprep.mubr.f32.mxu0 0.0
  %7062 = vmatmul.mubr.f32.gmra.mrb[0].mxu0 %v6876
  %v7063 = vpop.f32.mrb[0].mxu0
  %v7064 = vadd.f32 %v6835, %v7063
  %v7065 = vpop.f32.mrb[0].mxu0
  %7066 = vmatprep.mubr.f32.mxu0 0.0
  %7067 = vmatmul.mubr.f32.gmra.mrb[0].mxu0 %v6879
  %v7068 = vpop.f32.mrb[0].mxu0
  %v7069 = vadd.f32 %v6835, %v7068
  %v7070 = vpop.f32.mrb[0].mxu0
  %7071 = vmatprep.mubr.f32.mxu0 0.0
  %7072 = vmatmul.mubr.f32.gmra.mrb[0].mxu0 %v6882
  %v7073 = vpop.f32.mrb[0].mxu0
  %v7074 = vadd.f32 %v6835, %v7073
  %v7075 = vpop.f32.mrb[0].mxu0
  %7076 = vmatprep.mubr.f32.mxu0 0.0
  %7077 = vmatmul.mubr.f32.gmra.mrb[0].mxu0 %v6885
  %v7078 = vpop.f32.mrb[0].mxu0
  %v7079 = vadd.f32 %v6835, %v7078
  %v7080 = vpop.f32.mrb[0].mxu0
  %7081 = vmatprep.mubr.f32.mxu0 0.0
  %7082 = vmatmul.mubr.f32.gmra.mrb[0].mxu0 %v6888
  %v7083 = vpop.f32.mrb[0].mxu0
  %v7084 = vadd.f32 %v6835, %v7083
  %v7085 = vpop.f32.mrb[0].mxu0
  %7086 = vmatprep.mubr.f32.mxu0 0.0
  %7087 = vmatmul.mubr.f32.gmra.mrb[0].mxu0 %v6891
  %v7088 = vpop.f32.mrb[0].mxu0
  %v7089 = vadd.f32 %v6835, %v7088
  %v7090 = vpop.f32.mrb[0].mxu0
  %7091 = vmatprep.mubr.f32.mxu0 0.0
  %7092 = vmatmul.mubr.f32.gmra.mrb[0].mxu0 %v6894
  %v7093 = vpop.f32.mrb[0].mxu0
  %v7094 = vadd.f32 %v6835, %v7093
  %v7095 = vpop.f32.mrb[0].mxu0
  %7096 = vmatprep.mubr.f32.mxu0 0.0
  %7097 = vmatmul.mubr.f32.gmra.mrb[0].mxu0 %v6897
  %v7098 = vpop.f32.mrb[0].mxu0
  %v7099 = vadd.f32 %v6835, %v7098
  %v7100 = vpop.f32.mrb[0].mxu0
  %7101 = vmatprep.mubr.f32.mxu0 0.0
  %7102 = vmatmul.mubr.f32.gmra.mrb[0].mxu0 %v6900
  %v7103 = vpop.f32.mrb[0].mxu0
  %v7104 = vadd.f32 %v6835, %v7103
  %v7105 = vpop.f32.mrb[0].mxu0
  %7106 = vmatprep.mubr.f32.mxu0 0.0
  %7107 = vmatmul.mubr.f32.gmra.mrb[0].mxu0 %v6903
  %v7108 = vpop.f32.mrb[0].mxu0
  %v7109 = vadd.f32 %v6835, %v7108
  %v7110 = vpop.f32.mrb[0].mxu0
  %7111 = vmatprep.mubr.f32.mxu0 0.0
  %7112 = vmatmul.mubr.f32.gmra.mrb[0].mxu0 %v6906
  %v7113 = vpop.f32.mrb[0].mxu0
  %v7114 = vadd.f32 %v6835, %v7113
  %v7115 = vpop.f32.mrb[0].mxu0
  %7116 = vmatprep.mubr.f32.mxu0 0.0
  %7117 = vmatmul.mubr.f32.gmra.mrb[0].mxu0 %v6909
  %v7118 = vpop.f32.mrb[0].mxu0
  %v7119 = vadd.f32 %v6835, %v7118
  %v7120 = vpop.f32.mrb[0].mxu0
  %7121 = vmatprep.mubr.f32.mxu0 0.0
  %7122 = vmatmul.mubr.f32.gmra.mrb[0].mxu0 %v6912
  %v7123 = vpop.f32.mrb[0].mxu0
  %v7124 = vadd.f32 %v6835, %v7123
  %v7125 = vpop.f32.mrb[0].mxu0
  %7126 = vmatprep.mubr.f32.mxu0 0.0
  %7127 = vmatmul.mubr.f32.gmra.mrb[0].mxu0 %v6915
  %v7128 = vpop.f32.mrb[0].mxu0
  %v7129 = vadd.f32 %v6835, %v7128
  %v7130 = vpop.f32.mrb[0].mxu0
  %7131 = vmatprep.mubr.f32.mxu0 0.0
  %7132 = vmatmul.mubr.f32.gmra.mrb[0].mxu0 %v6918
  %v7133 = vpop.f32.mrb[0].mxu0
  %v7134 = vadd.f32 %v6835, %v7133
  %v7135 = vpop.f32.mrb[0].mxu0
  %7136 = vmatprep.mubr.f32.mxu0 0.0
  %7137 = vmatmul.mubr.f32.gmra.mrb[0].mxu0 %v6921
  %v7138 = vpop.f32.mrb[0].mxu0
  %v7139 = vadd.f32 %v6835, %v7138
  %v7140 = vpop.f32.mrb[0].mxu0
  %7141 = vmatprep.mubr.f32.mxu0 0.0
  %7142 = vmatmul.mubr.f32.gmra.mrb[0].mxu0 %v6924
  %v7143 = vpop.f32.mrb[0].mxu0
  %v7144 = vadd.f32 %v6835, %v7143
  %v7145 = vpop.f32.mrb[0].mxu0
  %7146 = vmatprep.mubr.f32.mxu0 0.0
  %7147 = vmatmul.mubr.f32.gmra.mrb[0].mxu0 %v6927
  %v7148 = vpop.f32.mrb[0].mxu0
  %v7149 = vadd.f32 %v6835, %v7148
  %v7150 = vpop.f32.mrb[0].mxu0
  %7151 = vmatprep.mubr.f32.mxu0 0.0
  %7152 = vmatmul.mubr.f32.gmra.mrb[0].mxu0 %v6930
  %v7153 = vpop.f32.mrb[0].mxu0
  %v7154 = vadd.f32 %v6835, %v7153
  %v7155 = vpop.f32.mrb[0].mxu0
  %7156 = vdwg.mxu0
  %v7157 = vadd.f32 %v38, %v6999
  %v7158 = vadd.f32 %v39, %v7004
  %v7159 = vadd.f32 %v40, %v7009
  %v7160 = vadd.f32 %v41, %v7014
  %v7161 = vadd.f32 %v42, %v7019
  %v7162 = vadd.f32 %v43, %v7024
  %v7163 = vadd.f32 %v44, %v7029
  %v7164 = vadd.f32 %v45, %v7034
  %v7165 = vadd.f32 %v46, %v7039
  %v7166 = vadd.f32 %v47, %v7044
  %v7167 = vadd.f32 %v48, %v7049
  %v7168 = vadd.f32 %v49, %v7054
  %v7169 = vadd.f32 %v50, %v7059
  %v7170 = vadd.f32 %v51, %v7064
  %v7171 = vadd.f32 %v52, %v7069
  %v7172 = vadd.f32 %v53, %v7074
  %v7173 = vadd.f32 %v54, %v7079
  %v7174 = vadd.f32 %v55, %v7084
  %v7175 = vadd.f32 %v56, %v7089
  %v7176 = vadd.f32 %v57, %v7094
  %v7177 = vadd.f32 %v58, %v7099
  %v7178 = vadd.f32 %v59, %v7104
  %v7179 = vadd.f32 %v60, %v7109
  %v7180 = vadd.f32 %v61, %v7114
  %v7181 = vadd.f32 %v62, %v7119
  %v7182 = vadd.f32 %v63, %v7124
  %v7183 = vadd.f32 %v64, %v7129
  %v7184 = vadd.f32 %v65, %v7134
  %v7185 = vadd.f32 %v66, %v7139
  %v7186 = vadd.f32 %v67, %v7144
  %v7187 = vadd.f32 %v68, %v7149
  %v7188 = vadd.f32 %v69, %v7154
  %7189 = vst.msk [vmem:[%s8] sm:$0xff] %vm70, %v7157
  %7190 = vst.msk [vmem:[%s8 + $0x8] sm:$0xff] %vm70, %v7158
  %7191 = vst.msk [vmem:[%s8 + $0x10] sm:$0xff] %vm70, %v7159
  %7192 = vst.msk [vmem:[%s8 + $0x18] sm:$0xff] %vm70, %v7160
  %7193 = vst.msk [vmem:[%s8 + $0x20] sm:$0xff] %vm70, %v7161
  %7194 = vst.msk [vmem:[%s8 + $0x28] sm:$0xff] %vm70, %v7162
  %7195 = vst.msk [vmem:[%s8 + $0x30] sm:$0xff] %vm70, %v7163
  %7196 = vst.msk [vmem:[%s8 + $0x38] sm:$0xff] %vm70, %v7164
  %7197 = vst.msk [vmem:[%s8 + $0x40] sm:$0xff] %vm70, %v7165
  %7198 = vst.msk [vmem:[%s8 + $0x48] sm:$0xff] %vm70, %v7166
  %7199 = vst.msk [vmem:[%s8 + $0x50] sm:$0xff] %vm70, %v7167
  %7200 = vst.msk [vmem:[%s8 + $0x58] sm:$0xff] %vm70, %v7168
  %7201 = vst.msk [vmem:[%s8 + $0x60] sm:$0xff] %vm70, %v7169
  %7202 = vst.msk [vmem:[%s8 + $0x68] sm:$0xff] %vm70, %v7170
  %7203 = vst.msk [vmem:[%s8 + $0x70] sm:$0xff] %vm70, %v7171
  %7204 = vst.msk [vmem:[%s8 + $0x78] sm:$0xff] %vm70, %v7172
  %7205 = vst.msk [vmem:[%s8 + $0x80] sm:$0xff] %vm70, %v7173
  %7206 = vst.msk [vmem:[%s8 + $0x88] sm:$0xff] %vm70, %v7174
  %7207 = vst.msk [vmem:[%s8 + $0x90] sm:$0xff] %vm70, %v7175
  %7208 = vst.msk [vmem:[%s8 + $0x98] sm:$0xff] %vm70, %v7176
  %7209 = vst.msk [vmem:[%s8 + $0xa0] sm:$0xff] %vm70, %v7177
  %7210 = vst.msk [vmem:[%s8 + $0xa8] sm:$0xff] %vm70, %v7178
  %7211 = vst.msk [vmem:[%s8 + $0xb0] sm:$0xff] %vm70, %v7179
  %7212 = vst.msk [vmem:[%s8 + $0xb8] sm:$0xff] %vm70, %v7180
  %7213 = vst.msk [vmem:[%s8 + $0xc0] sm:$0xff] %vm70, %v7181
  %7214 = vst.msk [vmem:[%s8 + $0xc8] sm:$0xff] %vm70, %v7182
  %7215 = vst.msk [vmem:[%s8 + $0xd0] sm:$0xff] %vm70, %v7183
  %7216 = vst.msk [vmem:[%s8 + $0xd8] sm:$0xff] %vm70, %v7184
  %7217 = vst.msk [vmem:[%s8 + $0xe0] sm:$0xff] %vm70, %v7185
  %7218 = vst.msk [vmem:[%s8 + $0xe8] sm:$0xff] %vm70, %v7186
  %7219 = vst.msk [vmem:[%s8 + $0xf0] sm:$0xff] %vm70, %v7187
  %7220 = vst.msk [vmem:[%s8 + $0xf8] sm:$0xff] %vm70, %v7188
  // Predicated region
  $region34: #{tpu_custom_call.1} parent=0 // pred_check
    _
  $region35: #{tpu_custom_call.1} parent=0 // pred_check_branch
    %7222 = sbr.rel (0) target = $region37
  $region36: #{tpu_custom_call.1} parent=0 // pred_region
    _
  $region37: #{tpu_custom_call.1} parent=0 // pred_fallthru
    _
  // Predicated region
  $region38: #{tpu_custom_call.1} parent=0 // pred_check
    _
  $region39: #{tpu_custom_call.1} parent=0 // pred_check_branch
    %7224 = sbr.rel (0) target = $region41
  $region40: #{tpu_custom_call.1} parent=0 // pred_region
    _
  $region41: #{tpu_custom_call.1} parent=0 // pred_fallthru
    _

</llo_original>
